<compile_context>
chip_gen: v6e
topology: v6e:2x2x1
jax: 0.10.0
libtpu: 0.0.40
codegen_flags: <defaults>
</compile_context>

<pallas_src>
import jax
import jax.numpy as jnp
from jax import lax
from jax.experimental import pallas as pl
from jax.experimental.pallas import tpu as pltpu

HIDDEN = 128
EMBED = 50
OUT_PAD = 128       # lane-dense padding of the 1-wide sigmoid output
TIME_CHUNK = 16     # time-chunk size (second grid axis) once T exceeds it


def _round_up(n, m):
    return (n + m - 1) // m * m


def _pick_batch_tile(b_pad):
    """Prefer >=2 batch blocks (v7x megacore) before growing the tile toward 256 (v6e MXU fill)."""
    if b_pad <= 16:
        return b_pad
    return min(256, _round_up(b_pad // 2, 16))


# ----------------------- fused 2-layer LSTM + head kernel -----------------------
def _make_kernel(t_actual, t_pad, time_chunk, unroll):
    H = HIDDEN
    need_mask = (t_pad != t_actual)

    def kernel(x_ref, wih0_ref, b0_ref, whh0_ref, wih1_ref, whh1_ref, b1_ref,
               fc1w_ref, fc1b_ref, fc2w_ref, fc2b_ref,
               out_ref,
               h1_slab, c1_scr, xw_scr, h2_scr, c2_scr, max_scr):
        # x_ref    : [TC, tb, E_pad] bf16 embedded inputs for this (batch-block, time-chunk)
        # whh0/wih1/whh1 : [H, 4H] bf16 ; wih0 : [E_pad, 4H] bf16 ; b0/b1 : [1, 4H] f32
        # fc1w [H,H] bf16, fc1b [1,H] f32, fc2w [H,OUT_PAD] bf16, fc2b [1,OUT_PAD] f32
        # out_ref  : [tb, OUT_PAD] f32 (written only on the last time-chunk; column 0 is real)
        # h1_slab  : [TC+1, tb, H] bf16 (row 0 = carried-in layer-1 h; rows 1..TC written here)
        # xw_scr   : [TC, tb, 4H] f32 shared pre-activation buffer (layer-0, then layer-1->2)
        tc = time_chunk
        tb = x_ref.shape[1]
        e_pad = x_ref.shape[2]
        tchunk = pl.program_id(1)
        n_chunks = pl.num_programs(1)

        def gate_math(pre, c):
            # gate columns are pre-permuted to [i, f, o, g] -> one wide sigmoid + one tanh (EUP)
            sig = jax.nn.sigmoid(pre[:, :3 * H])
            i = sig[:, 0:H]
            f = sig[:, H:2 * H]
            o = sig[:, 2 * H:3 * H]
            g = jnp.tanh(pre[:, 3 * H:])
            c_new = f * c + i * g
            h_new = o * jnp.tanh(c_new)
            return h_new, c_new

        # ---- carried state handling at chunk entry ----
        @pl.when(tchunk == 0)
        def _():
            h1_slab[0] = jnp.zeros((tb, H), jnp.bfloat16)
            c1_scr[...] = jnp.zeros_like(c1_scr)
            h2_scr[...] = jnp.zeros_like(h2_scr)
            c2_scr[...] = jnp.zeros_like(c2_scr)
            max_scr[...] = jnp.full_like(max_scr, -jnp.inf)

        @pl.when(tchunk != 0)
        def _():
            h1_slab[0] = h1_slab[tc]        # carry layer-1 h from the previous chunk

        # ---- layer-0 input projection for the whole chunk (one big MXU matmul) ----
        xw0 = jnp.dot(x_ref[...].reshape(tc * tb, e_pad), wih0_ref[...],
                      preferred_element_type=jnp.float32) + b0_ref[...]
        xw_scr[...] = xw0.reshape(tc, tb, 4 * H)

        # ---- layer-1 recurrence: single bf16 h store per step into the slab ----
        def step1(t, carry):
            pre = xw_scr[t] + jnp.dot(h1_slab[t], whh0_ref[...],
                                      preferred_element_type=jnp.float32)
            h_new, c_new = gate_math(pre, c1_scr[...])
            c1_scr[...] = c_new
            h1_slab[t + 1] = h_new.astype(jnp.bfloat16)
            return carry

        lax.fori_loop(0, tc, step1, 0, unroll=unroll)

        # ---- layer-1 -> layer-2 input projection (one big matmul, off the sequential path) ----
        h1_all = h1_slab[pl.ds(1, tc)]                       # [TC, tb, H] bf16
        xw_scr[...] = (jnp.dot(h1_all.reshape(tc * tb, H), wih1_ref[...],
                               preferred_element_type=jnp.float32)
                       + b1_ref[...]).reshape(tc, tb, 4 * H)

        # ---- layer-2 recurrence with running (masked) max-over-time ----
        def step2(t, carry):
            pre = xw_scr[t] + jnp.dot(h2_scr[...], whh1_ref[...],
                                      preferred_element_type=jnp.float32)
            h_new, c_new = gate_math(pre, c2_scr[...])
            c2_scr[...] = c_new
            h2_scr[...] = h_new.astype(jnp.bfloat16)
            new_max = jnp.maximum(max_scr[...], h_new)
            if need_mask:
                valid = (tchunk * tc + t) < t_actual
                new_max = jnp.where(valid, new_max, max_scr[...])
            max_scr[...] = new_max
            return carry

        lax.fori_loop(0, tc, step2, 0, unroll=unroll)

        # ---- head (last chunk only): fc1 + relu, fc2 + sigmoid, lane-dense padded output ----
        @pl.when(tchunk == n_chunks - 1)
        def _():
            z = jnp.dot(max_scr[...].astype(jnp.bfloat16), fc1w_ref[...],
                        preferred_element_type=jnp.float32) + fc1b_ref[...]
            z = jnp.maximum(z, 0.0)
            logit = jnp.dot(z.astype(jnp.bfloat16), fc2w_ref[...],
                            preferred_element_type=jnp.float32) + fc2b_ref[...]
            out_ref[...] = jax.nn.sigmoid(logit)

    return kernel


def fused_lstm_head(x, kp, *, tb, time_chunk, t_actual, unroll):
    T_pad, B_pad, E_pad = x.shape
    H = HIDDEN
    assert B_pad % tb == 0 and T_pad % time_chunk == 0

    kernel = _make_kernel(t_actual, T_pad, time_chunk, unroll)

    grid_spec = pltpu.PrefetchScalarGridSpec(
        num_scalar_prefetch=0,
        grid=(B_pad // tb, T_pad // time_chunk),
        in_specs=[
            pl.BlockSpec((time_chunk, tb, E_pad), lambda b, t: (t, b, 0)),  # x (batch+time tiled)
            pl.BlockSpec((E_pad, 4 * H), lambda b, t: (0, 0)),              # wih0
            pl.BlockSpec((1, 4 * H), lambda b, t: (0, 0)),                  # b0
            pl.BlockSpec((H, 4 * H), lambda b, t: (0, 0)),                  # whh0
            pl.BlockSpec((H, 4 * H), lambda b, t: (0, 0)),                  # wih1
            pl.BlockSpec((H, 4 * H), lambda b, t: (0, 0)),                  # whh1
            pl.BlockSpec((1, 4 * H), lambda b, t: (0, 0)),                  # b1
            pl.BlockSpec((H, H), lambda b, t: (0, 0)),                      # fc1_w
            pl.BlockSpec((1, H), lambda b, t: (0, 0)),                      # fc1_b
            pl.BlockSpec((H, OUT_PAD), lambda b, t: (0, 0)),                # fc2_w (lane padded)
            pl.BlockSpec((1, OUT_PAD), lambda b, t: (0, 0)),                # fc2_b (lane padded)
        ],
        out_specs=pl.BlockSpec((tb, OUT_PAD), lambda b, t: (b, 0)),
        scratch_shapes=[
            pltpu.VMEM((time_chunk + 1, tb, H), jnp.bfloat16),   # layer-1 h slab (row 0 = carry)
            pltpu.VMEM((tb, H), jnp.float32),                    # layer-1 c state
            pltpu.VMEM((time_chunk, tb, 4 * H), jnp.float32),    # shared xw0 / xw1 pre-activations
            pltpu.VMEM((tb, H), jnp.bfloat16),                   # layer-2 h state
            pltpu.VMEM((tb, H), jnp.float32),                    # layer-2 c state
            pltpu.VMEM((tb, H), jnp.float32),                    # running max over time
        ],
    )
    return pl.pallas_call(
        kernel,
        out_shape=jax.ShapeDtypeStruct((B_pad, OUT_PAD), jnp.float32),
        grid_spec=grid_spec,
        compiler_params=pltpu.CompilerParams(
            dimension_semantics=("parallel", "arbitrary"),   # batch blocks independent; time carried
            vmem_limit_bytes=48 * 1024 * 1024,               # v7x-safe; usage is ~12 MiB at tb=256
        ),
    )(x, kp["wih0"], kp["b0"], kp["whh0"], kp["wih1"], kp["whh1"], kp["b1"],
      kp["fc1_w"], kp["fc1_b"], kp["fc2_w"], kp["fc2_b"])


# ------------------------------- param preparation -------------------------------
def prepare_kernel_params(params):
    """Reorder gate columns i,f,g,o -> i,f,o,g, cast matmul weights to bf16, zero-pad the
    embedding-input weight rows E -> 64, and lane-pad the 1-wide fc2 output to OUT_PAD columns."""
    H = HIDDEN
    E = params["wih0"].shape[0]
    E_pad = _round_up(E, 64)

    def reorder(w):
        i, f, g, o = jnp.split(w, 4, axis=-1)
        return jnp.concatenate([i, f, o, g], axis=-1)

    wih0 = jnp.zeros((E_pad, 4 * H), jnp.float32).at[:E].set(reorder(params["wih0"]))
    fc2_w = jnp.zeros((H, OUT_PAD), jnp.float32).at[:, 0:1].set(params["fc2_w"])
    fc2_b = jnp.zeros((1, OUT_PAD), jnp.float32).at[:, 0:1].set(params["fc2_b"])
    return {
        "embedding": params["embedding"],
        "wih0": wih0.astype(jnp.bfloat16),
        "whh0": reorder(params["whh0"]).astype(jnp.bfloat16),
        "b0": reorder(params["b0"]),
        "wih1": reorder(params["wih1"]).astype(jnp.bfloat16),
        "whh1": reorder(params["whh1"]).astype(jnp.bfloat16),
        "b1": reorder(params["b1"]),
        "fc1_w": params["fc1_w"].astype(jnp.bfloat16),
        "fc1_b": params["fc1_b"],
        "fc2_w": fc2_w.astype(jnp.bfloat16),
        "fc2_b": fc2_b,
    }


# --------------------------------- full forward -----------------------------------
@jax.jit
def fake_news_detector_forward(x_ids, kp):
    B, T = x_ids.shape
    E = kp["embedding"].shape[1]
    E_pad = kp["wih0"].shape[0]

    # Batch padded to a bf16-sublane-friendly multiple; tile chosen for >=2 blocks when possible.
    B_pad = _round_up(B, 16)
    tb = _pick_batch_tile(B_pad)
    B_pad = _round_up(B_pad, tb)

    # Time chunking: full sequence in one chunk when short, otherwise TIME_CHUNK-sized chunks.
    time_chunk = T if T <= TIME_CHUNK else TIME_CHUNK
    T_pad = _round_up(T, time_chunk)
    unroll = True if time_chunk <= 8 else 8

    ids = jnp.pad(x_ids, ((0, B_pad - B), (0, T_pad - T)))
    # Embedding gather straight into time-major order (transpose the tiny int ids, not the
    # embedded tensor), cast to bf16 for the in-kernel projection, zero-pad E -> E_pad.
    x = jnp.take(kp["embedding"], ids.T, axis=0).astype(jnp.bfloat16)     # [T_pad, B_pad, E]
    x = jnp.pad(x, ((0, 0), (0, 0), (0, E_pad - E)))                      # [T_pad, B_pad, E_pad]

    out_pad = fused_lstm_head(x, kp, tb=tb, time_chunk=time_chunk, t_actual=T, unroll=unroll)
    return out_pad[:B, :1]                                                # [B, 1]


# ------------------------------ pure-JAX references -------------------------------
def forward_ref(x_ids, params, matmul_dtype=jnp.float32):
    """matmul_dtype=float32 -> PyTorch-exact f32 semantics;
    matmul_dtype=bfloat16 -> mirrors the kernel's bf16-operand / f32-accumulate matmuls."""
    H = HIDDEN

    def mm(a, w):
        if matmul_dtype == jnp.float32:
            return jnp.dot(a, w, preferred_element_type=jnp.float32,
                           precision=jax.lax.Precision.HIGHEST)
        return jnp.dot(a.astype(matmul_dtype), w.astype(matmul_dtype),
                       preferred_element_type=jnp.float32)

    x = jnp.take(params["embedding"], x_ids, axis=0).astype(jnp.float32)   # [B, T, E]
    x = jnp.transpose(x, (1, 0, 2))                                        # [T, B, E]

    def lstm(x_tbe, w_ih, w_hh, b):
        T, B, _ = x_tbe.shape
        xw = mm(x_tbe.reshape(T * B, -1), w_ih).reshape(T, B, 4 * H) + b

        def step(carry, pre_x):
            h, c = carry
            gates = pre_x + mm(h, w_hh)
            i = jax.nn.sigmoid(gates[:, 0:H])
            f = jax.nn.sigmoid(gates[:, H:2 * H])
            g = jnp.tanh(gates[:, 2 * H:3 * H])
            o = jax.nn.sigmoid(gates[:, 3 * H:4 * H])
            c_new = f * c + i * g
            h_new = o * jnp.tanh(c_new)
            return (h_new, c_new), h_new

        init = (jnp.zeros((B, H), jnp.float32), jnp.zeros((B, H), jnp.float32))
        _, hs = lax.scan(step, init, xw)
        return hs

    h1 = lstm(x, params["wih0"], params["whh0"], params["b0"])
    h2 = lstm(h1, params["wih1"], params["whh1"], params["b1"])
    pooled = jnp.max(h2, axis=0)
    z = jnp.maximum(mm(pooled, params["fc1_w"]) + params["fc1_b"], 0.0)
    return jax.nn.sigmoid(mm(z, params["fc2_w"]) + params["fc2_b"])


# --------------------------------- params init ------------------------------------
def init_params(key, vocab_size, embed_size=EMBED, hidden=HIDDEN):
    ks = jax.random.split(key, 12)
    k = 1.0 / jnp.sqrt(hidden)
    u = lambda kk, shape: jax.random.uniform(kk, shape, jnp.float32, -k, k)
    return {
        # frozen embedding (original script uses GloVe; deterministic random here)
        "embedding": jax.random.normal(ks[0], (vocab_size, embed_size), jnp.float32) * 0.1,
        # layer 0: E -> 4H (weights stored pre-transposed as [in, 4H], PyTorch gate order i,f,g,o)
        "wih0": u(ks[1], (embed_size, 4 * hidden)),
        "whh0": u(ks[2], (hidden, 4 * hidden)),
        "b0": u(ks[3], (1, 4 * hidden)) + u(ks[4], (1, 4 * hidden)),   # b_ih + b_hh
        # layer 1: H -> 4H
        "wih1": u(ks[5], (hidden, 4 * hidden)),
        "whh1": u(ks[6], (hidden, 4 * hidden)),
        "b1": u(ks[7], (1, 4 * hidden)) + u(ks[8], (1, 4 * hidden)),
        # fc head
        "fc1_w": u(ks[9], (hidden, hidden)),
        "fc1_b": u(ks[10], (1, hidden)),
        "fc2_w": u(ks[11], (hidden, 1)),
        "fc2_b": jnp.zeros((1, 1), jnp.float32),
    }


if __name__ == "__main__":
    key = jax.random.PRNGKey(0)
    k_params, k_x1, k_x2 = jax.random.split(key, 3)

    vocab_size = 40
    params = init_params(k_params, vocab_size)
    kparams = prepare_kernel_params(params)

    # --- case 1: short sequence (single time chunk, fully unrolled) ---
    batch, seq = 2, 8
    x_ids = jax.random.randint(k_x1, (batch, seq), 0, vocab_size, dtype=jnp.int32)
    out = jax.block_until_ready(fake_news_detector_forward(x_ids, kparams))
    assert out.shape == (batch, 1)
    ref_bf16 = forward_ref(x_ids, params, jnp.bfloat16)
    assert jnp.allclose(out, ref_bf16, atol=2e-3, rtol=2e-3), (out, ref_bf16)
    ref_f32 = forward_ref(x_ids, params, jnp.float32)
    assert jnp.allclose(out, ref_f32, atol=5e-2, rtol=5e-2), (out, ref_f32)

    # --- case 2: longer sequence (multiple time chunks + masked tail, unroll=8) ---
    batch2, seq2 = 4, 20
    x_ids2 = jax.random.randint(k_x2, (batch2, seq2), 0, vocab_size, dtype=jnp.int32)
    out2 = jax.block_until_ready(fake_news_detector_forward(x_ids2, kparams))
    assert out2.shape == (batch2, 1)
    ref2_bf16 = forward_ref(x_ids2, params, jnp.bfloat16)
    assert jnp.allclose(out2, ref2_bf16, atol=5e-3, rtol=5e-3), (out2, ref2_bf16)
    ref2_f32 = forward_ref(x_ids2, params, jnp.float32)
    assert jnp.allclose(out2, ref2_f32, atol=1e-1, rtol=1e-1), (out2, ref2_f32)

    print("KERNEL_OK")
</pallas_src>

<mosaic_0001>
module attributes {stable_mosaic.version = 11 : i64} {
  func.func @kernel(%arg0: i32, %arg1: i32, %arg2: memref<8x16x64xbf16, #tpu.memory_space<vmem>>, %arg3: memref<64x512xbf16, #tpu.memory_space<vmem>>, %arg4: memref<1x512xf32, #tpu.memory_space<vmem>>, %arg5: memref<128x512xbf16, #tpu.memory_space<vmem>>, %arg6: memref<128x512xbf16, #tpu.memory_space<vmem>>, %arg7: memref<128x512xbf16, #tpu.memory_space<vmem>>, %arg8: memref<1x512xf32, #tpu.memory_space<vmem>>, %arg9: memref<128x128xbf16, #tpu.memory_space<vmem>>, %arg10: memref<1x128xf32, #tpu.memory_space<vmem>>, %arg11: memref<128x128xbf16, #tpu.memory_space<vmem>>, %arg12: memref<1x128xf32, #tpu.memory_space<vmem>>, %arg13: memref<16x128xf32, #tpu.memory_space<vmem>>, %arg14: memref<9x16x128xbf16, #tpu.memory_space<vmem>>, %arg15: memref<16x128xf32, #tpu.memory_space<vmem>>, %arg16: memref<8x16x512xf32, #tpu.memory_space<vmem>>, %arg17: memref<16x128xbf16, #tpu.memory_space<vmem>>, %arg18: memref<16x128xf32, #tpu.memory_space<vmem>>, %arg19: memref<16x128xf32, #tpu.memory_space<vmem>>) attributes {dimension_semantics = [#tpu.dimension_semantics<parallel>, #tpu.dimension_semantics<arbitrary>], iteration_bounds = array<i64: 1, 1>, scalar_prefetch = 0 : i64, scratch_operands = 6 : i64, tpu.core_type = #tpu.core_type<tc>, window_params = [{transform_indices = @transform_0, window_bounds = array<i64: 8, 16, 64>}, {pipeline_mode = #tpu.pipeline_mode<synchronous>, transform_indices = @transform_1, window_bounds = array<i64: 64, 512>}, {pipeline_mode = #tpu.pipeline_mode<synchronous>, transform_indices = @transform_2, window_bounds = array<i64: 1, 512>}, {pipeline_mode = #tpu.pipeline_mode<synchronous>, transform_indices = @transform_3, window_bounds = array<i64: 128, 512>}, {pipeline_mode = #tpu.pipeline_mode<synchronous>, transform_indices = @transform_4, window_bounds = array<i64: 128, 512>}, {pipeline_mode = #tpu.pipeline_mode<synchronous>, transform_indices = @transform_5, window_bounds = array<i64: 128, 512>}, {pipeline_mode = #tpu.pipeline_mode<synchronous>, transform_indices = @transform_6, window_bounds = array<i64: 1, 512>}, {pipeline_mode = #tpu.pipeline_mode<synchronous>, transform_indices = @transform_7, window_bounds = array<i64: 128, 128>}, {pipeline_mode = #tpu.pipeline_mode<synchronous>, transform_indices = @transform_8, window_bounds = array<i64: 1, 128>}, {pipeline_mode = #tpu.pipeline_mode<synchronous>, transform_indices = @transform_9, window_bounds = array<i64: 128, 128>}, {pipeline_mode = #tpu.pipeline_mode<synchronous>, transform_indices = @transform_10, window_bounds = array<i64: 1, 128>}, {transform_indices = @transform_11, window_bounds = array<i64: 16, 128>}]} {
    %c0_i32 = arith.constant 0 : i32
    %0 = arith.cmpi eq, %arg1, %c0_i32 : i32
    %1 = arith.extui %0 : i1 to i32
    %c0_i32_0 = arith.constant 0 : i32
    %2 = arith.cmpi ne, %1, %c0_i32_0 : i32
    scf.if %2 {
      %cst_298 = arith.constant 0.000000e+00 : bf16
      %531 = vector.broadcast %cst_298 : bf16 to vector<16x128xbf16>
      %c0_299 = arith.constant 0 : index
      %c0_300 = arith.constant 0 : index
      %c0_301 = arith.constant 0 : index
      %532 = vector.load %arg14[%c0_299, %c0_300, %c0_301] : memref<9x16x128xbf16, #tpu.memory_space<vmem>>, vector<1x16x128xbf16>
      %533 = vector.shape_cast %532 : vector<1x16x128xbf16> to vector<16x128xbf16>
      %534 = vector.shape_cast %531 : vector<16x128xbf16> to vector<1x16x128xbf16>
      tpu.vector_store %arg14[%c0_299, %c0_300, %c0_301], %534 {strides = array<i32>} : memref<9x16x128xbf16, #tpu.memory_space<vmem>>, vector<1x16x128xbf16>,
      %cst_302 = arith.constant 0.000000e+00 : f32
      %535 = vector.broadcast %cst_302 : f32 to vector<16x128xf32>
      %c0_303 = arith.constant 0 : index
      %c0_304 = arith.constant 0 : index
      %536 = vector.load %arg15[%c0_303, %c0_304] : memref<16x128xf32, #tpu.memory_space<vmem>>, vector<16x128xf32>
      tpu.vector_store %arg15[%c0_303, %c0_304], %535 {strides = array<i32>} : memref<16x128xf32, #tpu.memory_space<vmem>>, vector<16x128xf32>,
      %cst_305 = arith.constant 0.000000e+00 : bf16
      %537 = vector.broadcast %cst_305 : bf16 to vector<16x128xbf16>
      %c0_306 = arith.constant 0 : index
      %c0_307 = arith.constant 0 : index
      %538 = vector.load %arg17[%c0_306, %c0_307] : memref<16x128xbf16, #tpu.memory_space<vmem>>, vector<16x128xbf16>
      tpu.vector_store %arg17[%c0_306, %c0_307], %537 {strides = array<i32>} : memref<16x128xbf16, #tpu.memory_space<vmem>>, vector<16x128xbf16>,
      %cst_308 = arith.constant 0.000000e+00 : f32
      %539 = vector.broadcast %cst_308 : f32 to vector<16x128xf32>
      %c0_309 = arith.constant 0 : index
      %c0_310 = arith.constant 0 : index
      %540 = vector.load %arg18[%c0_309, %c0_310] : memref<16x128xf32, #tpu.memory_space<vmem>>, vector<16x128xf32>
      tpu.vector_store %arg18[%c0_309, %c0_310], %539 {strides = array<i32>} : memref<16x128xf32, #tpu.memory_space<vmem>>, vector<16x128xf32>,
      %cst_311 = arith.constant 0xFF800000 : f32
      %541 = vector.broadcast %cst_311 : f32 to vector<16x128xf32>
      %c0_312 = arith.constant 0 : index
      %c0_313 = arith.constant 0 : index
      %542 = vector.load %arg19[%c0_312, %c0_313] : memref<16x128xf32, #tpu.memory_space<vmem>>, vector<16x128xf32>
      tpu.vector_store %arg19[%c0_312, %c0_313], %541 {strides = array<i32>} : memref<16x128xf32, #tpu.memory_space<vmem>>, vector<16x128xf32>,
    } else {
    }
    %c0_i32_1 = arith.constant 0 : i32
    %3 = arith.cmpi ne, %arg1, %c0_i32_1 : i32
    %4 = arith.extui %3 : i1 to i32
    %c0_i32_2 = arith.constant 0 : i32
    %5 = arith.cmpi ne, %4, %c0_i32_2 : i32
    scf.if %5 {
      %c8 = arith.constant 8 : index
      %c0_298 = arith.constant 0 : index
      %c0_299 = arith.constant 0 : index
      %531 = vector.load %arg14[%c8, %c0_298, %c0_299] : memref<9x16x128xbf16, #tpu.memory_space<vmem>>, vector<1x16x128xbf16>
      %532 = vector.shape_cast %531 : vector<1x16x128xbf16> to vector<16x128xbf16>
      %c0_300 = arith.constant 0 : index
      %c0_301 = arith.constant 0 : index
      %c0_302 = arith.constant 0 : index
      %533 = vector.load %arg14[%c0_300, %c0_301, %c0_302] : memref<9x16x128xbf16, #tpu.memory_space<vmem>>, vector<1x16x128xbf16>
      %534 = vector.shape_cast %533 : vector<1x16x128xbf16> to vector<16x128xbf16>
      %535 = vector.shape_cast %532 : vector<16x128xbf16> to vector<1x16x128xbf16>
      tpu.vector_store %arg14[%c0_300, %c0_301, %c0_302], %535 {strides = array<i32>} : memref<9x16x128xbf16, #tpu.memory_space<vmem>>, vector<1x16x128xbf16>,
    } else {
    }
    %c0 = arith.constant 0 : index
    %c0_3 = arith.constant 0 : index
    %c0_4 = arith.constant 0 : index
    %6 = vector.load %arg2[%c0, %c0_3, %c0_4] : memref<8x16x64xbf16, #tpu.memory_space<vmem>>, vector<8x16x64xbf16>
    %7 = vector.shape_cast %6 : vector<8x16x64xbf16> to vector<128x64xbf16>
    %c0_5 = arith.constant 0 : index
    %c0_6 = arith.constant 0 : index
    %8 = vector.load %arg3[%c0_5, %c0_6] : memref<64x512xbf16, #tpu.memory_space<vmem>>, vector<64x512xbf16>
    %cst = arith.constant dense<0.000000e+00> : vector<128x512xf32>
    %9 = tpu.matmul %7, %8, %cst {dimension_numbers = #tpu.dot_dimension_numbers<[1], [0], [0], [1], [0, 0, 1, 1], [], []>} : vector<128x64xbf16>, vector<64x512xbf16>, vector<128x512xf32> -> vector<128x512xf32>
    %c0_7 = arith.constant 0 : index
    %c0_8 = arith.constant 0 : index
    %10 = vector.load %arg4[%c0_7, %c0_8] : memref<1x512xf32, #tpu.memory_space<vmem>>, vector<1x512xf32>
    %11 = vector.broadcast %10 : vector<1x512xf32> to vector<128x512xf32>
    %12 = arith.addf %9, %11 : vector<128x512xf32>
    %13 = vector.shape_cast %12 : vector<128x512xf32> to vector<8x16x512xf32>
    %c0_9 = arith.constant 0 : index
    %c0_10 = arith.constant 0 : index
    %c0_11 = arith.constant 0 : index
    %14 = vector.load %arg16[%c0_9, %c0_10, %c0_11] : memref<8x16x512xf32, #tpu.memory_space<vmem>>, vector<8x16x512xf32>
    tpu.vector_store %arg16[%c0_9, %c0_10, %c0_11], %13 {strides = array<i32>} : memref<8x16x512xf32, #tpu.memory_space<vmem>>, vector<8x16x512xf32>,
    %c0_i32_12 = arith.constant 0 : i32
    %15 = arith.index_cast %c0_i32_12 : i32 to index
    %c0_13 = arith.constant 0 : index
    %c0_14 = arith.constant 0 : index
    %16 = vector.load %arg16[%15, %c0_13, %c0_14] : memref<8x16x512xf32, #tpu.memory_space<vmem>>, vector<1x16x512xf32>
    %17 = vector.shape_cast %16 : vector<1x16x512xf32> to vector<16x512xf32>
    %18 = arith.index_cast %c0_i32_12 : i32 to index
    %c0_15 = arith.constant 0 : index
    %c0_16 = arith.constant 0 : index
    %19 = vector.load %arg14[%18, %c0_15, %c0_16] : memref<9x16x128xbf16, #tpu.memory_space<vmem>>, vector<1x16x128xbf16>
    %20 = vector.shape_cast %19 : vector<1x16x128xbf16> to vector<16x128xbf16>
    %c0_17 = arith.constant 0 : index
    %c0_18 = arith.constant 0 : index
    %21 = vector.load %arg5[%c0_17, %c0_18] : memref<128x512xbf16, #tpu.memory_space<vmem>>, vector<128x512xbf16>
    %cst_19 = arith.constant dense<0.000000e+00> : vector<16x512xf32>
    %22 = tpu.matmul %20, %21, %cst_19 {dimension_numbers = #tpu.dot_dimension_numbers<[1], [0], [0], [1], [0, 0, 1, 1], [], []>} : vector<16x128xbf16>, vector<128x512xbf16>, vector<16x512xf32> -> vector<16x512xf32>
    %23 = arith.addf %17, %22 : vector<16x512xf32>
    %c0_20 = arith.constant 0 : index
    %c0_21 = arith.constant 0 : index
    %24 = vector.load %arg15[%c0_20, %c0_21] : memref<16x128xf32, #tpu.memory_space<vmem>>, vector<16x128xf32>
    %25 = vector.extract_strided_slice %23 {offsets = [0, 0], sizes = [16, 384], strides = [1, 1]} : vector<16x512xf32> to vector<16x384xf32>
    %26 = arith.negf %25 : vector<16x384xf32>
    %27 = math.exp %26 : vector<16x384xf32>
    %cst_22 = arith.constant 1.000000e+00 : f32
    %28 = vector.broadcast %cst_22 : f32 to vector<16x384xf32>
    %29 = arith.addf %28, %27 : vector<16x384xf32>
    %30 = arith.divf %28, %29 : vector<16x384xf32>
    %31 = vector.extract_strided_slice %30 {offsets = [0, 0], sizes = [16, 128], strides = [1, 1]} : vector<16x384xf32> to vector<16x128xf32>
    %32 = vector.extract_strided_slice %30 {offsets = [0, 128], sizes = [16, 128], strides = [1, 1]} : vector<16x384xf32> to vector<16x128xf32>
    %33 = vector.extract_strided_slice %30 {offsets = [0, 256], sizes = [16, 128], strides = [1, 1]} : vector<16x384xf32> to vector<16x128xf32>
    %34 = vector.extract_strided_slice %23 {offsets = [0, 384], sizes = [16, 128], strides = [1, 1]} : vector<16x512xf32> to vector<16x128xf32>
    %35 = math.tanh %34 : vector<16x128xf32>
    %36 = arith.mulf %32, %24 : vector<16x128xf32>
    %37 = arith.mulf %31, %35 : vector<16x128xf32>
    %38 = arith.addf %36, %37 : vector<16x128xf32>
    %39 = math.tanh %38 : vector<16x128xf32>
    %40 = arith.mulf %33, %39 : vector<16x128xf32>
    %c0_23 = arith.constant 0 : index
    %c0_24 = arith.constant 0 : index
    %41 = vector.load %arg15[%c0_23, %c0_24] : memref<16x128xf32, #tpu.memory_space<vmem>>, vector<16x128xf32>
    tpu.vector_store %arg15[%c0_23, %c0_24], %38 {strides = array<i32>} : memref<16x128xf32, #tpu.memory_space<vmem>>, vector<16x128xf32>,
    %42 = arith.truncf %40 : vector<16x128xf32> to vector<16x128xbf16>
    %c1_i32 = arith.constant 1 : i32
    %43 = arith.addi %c0_i32_12, %c1_i32 : i32
    %44 = arith.index_cast %43 : i32 to index
    %c0_25 = arith.constant 0 : index
    %c0_26 = arith.constant 0 : index
    %45 = vector.load %arg14[%44, %c0_25, %c0_26] : memref<9x16x128xbf16, #tpu.memory_space<vmem>>, vector<1x16x128xbf16>
    %46 = vector.shape_cast %45 : vector<1x16x128xbf16> to vector<16x128xbf16>
    %47 = vector.shape_cast %42 : vector<16x128xbf16> to vector<1x16x128xbf16>
    tpu.vector_store %arg14[%44, %c0_25, %c0_26], %47 {strides = array<i32>} : memref<9x16x128xbf16, #tpu.memory_space<vmem>>, vector<1x16x128xbf16>,
    %c1_i32_27 = arith.constant 1 : i32
    %48 = arith.index_cast %c1_i32_27 : i32 to index
    %c0_28 = arith.constant 0 : index
    %c0_29 = arith.constant 0 : index
    %49 = vector.load %arg16[%48, %c0_28, %c0_29] : memref<8x16x512xf32, #tpu.memory_space<vmem>>, vector<1x16x512xf32>
    %50 = vector.shape_cast %49 : vector<1x16x512xf32> to vector<16x512xf32>
    %51 = arith.index_cast %c1_i32_27 : i32 to index
    %c0_30 = arith.constant 0 : index
    %c0_31 = arith.constant 0 : index
    %52 = vector.load %arg14[%51, %c0_30, %c0_31] : memref<9x16x128xbf16, #tpu.memory_space<vmem>>, vector<1x16x128xbf16>
    %53 = vector.shape_cast %52 : vector<1x16x128xbf16> to vector<16x128xbf16>
    %c0_32 = arith.constant 0 : index
    %c0_33 = arith.constant 0 : index
    %54 = vector.load %arg5[%c0_32, %c0_33] : memref<128x512xbf16, #tpu.memory_space<vmem>>, vector<128x512xbf16>
    %cst_34 = arith.constant dense<0.000000e+00> : vector<16x512xf32>
    %55 = tpu.matmul %53, %54, %cst_34 {dimension_numbers = #tpu.dot_dimension_numbers<[1], [0], [0], [1], [0, 0, 1, 1], [], []>} : vector<16x128xbf16>, vector<128x512xbf16>, vector<16x512xf32> -> vector<16x512xf32>
    %56 = arith.addf %50, %55 : vector<16x512xf32>
    %c0_35 = arith.constant 0 : index
    %c0_36 = arith.constant 0 : index
    %57 = vector.load %arg15[%c0_35, %c0_36] : memref<16x128xf32, #tpu.memory_space<vmem>>, vector<16x128xf32>
    %58 = vector.extract_strided_slice %56 {offsets = [0, 0], sizes = [16, 384], strides = [1, 1]} : vector<16x512xf32> to vector<16x384xf32>
    %59 = arith.negf %58 : vector<16x384xf32>
    %60 = math.exp %59 : vector<16x384xf32>
    %cst_37 = arith.constant 1.000000e+00 : f32
    %61 = vector.broadcast %cst_37 : f32 to vector<16x384xf32>
    %62 = arith.addf %61, %60 : vector<16x384xf32>
    %63 = arith.divf %61, %62 : vector<16x384xf32>
    %64 = vector.extract_strided_slice %63 {offsets = [0, 0], sizes = [16, 128], strides = [1, 1]} : vector<16x384xf32> to vector<16x128xf32>
    %65 = vector.extract_strided_slice %63 {offsets = [0, 128], sizes = [16, 128], strides = [1, 1]} : vector<16x384xf32> to vector<16x128xf32>
    %66 = vector.extract_strided_slice %63 {offsets = [0, 256], sizes = [16, 128], strides = [1, 1]} : vector<16x384xf32> to vector<16x128xf32>
    %67 = vector.extract_strided_slice %56 {offsets = [0, 384], sizes = [16, 128], strides = [1, 1]} : vector<16x512xf32> to vector<16x128xf32>
    %68 = math.tanh %67 : vector<16x128xf32>
    %69 = arith.mulf %65, %57 : vector<16x128xf32>
    %70 = arith.mulf %64, %68 : vector<16x128xf32>
    %71 = arith.addf %69, %70 : vector<16x128xf32>
    %72 = math.tanh %71 : vector<16x128xf32>
    %73 = arith.mulf %66, %72 : vector<16x128xf32>
    %c0_38 = arith.constant 0 : index
    %c0_39 = arith.constant 0 : index
    %74 = vector.load %arg15[%c0_38, %c0_39] : memref<16x128xf32, #tpu.memory_space<vmem>>, vector<16x128xf32>
    tpu.vector_store %arg15[%c0_38, %c0_39], %71 {strides = array<i32>} : memref<16x128xf32, #tpu.memory_space<vmem>>, vector<16x128xf32>,
    %75 = arith.truncf %73 : vector<16x128xf32> to vector<16x128xbf16>
    %c1_i32_40 = arith.constant 1 : i32
    %76 = arith.addi %c1_i32_27, %c1_i32_40 : i32
    %77 = arith.index_cast %76 : i32 to index
    %c0_41 = arith.constant 0 : index
    %c0_42 = arith.constant 0 : index
    %78 = vector.load %arg14[%77, %c0_41, %c0_42] : memref<9x16x128xbf16, #tpu.memory_space<vmem>>, vector<1x16x128xbf16>
    %79 = vector.shape_cast %78 : vector<1x16x128xbf16> to vector<16x128xbf16>
    %80 = vector.shape_cast %75 : vector<16x128xbf16> to vector<1x16x128xbf16>
    tpu.vector_store %arg14[%77, %c0_41, %c0_42], %80 {strides = array<i32>} : memref<9x16x128xbf16, #tpu.memory_space<vmem>>, vector<1x16x128xbf16>,
    %c2_i32 = arith.constant 2 : i32
    %81 = arith.index_cast %c2_i32 : i32 to index
    %c0_43 = arith.constant 0 : index
    %c0_44 = arith.constant 0 : index
    %82 = vector.load %arg16[%81, %c0_43, %c0_44] : memref<8x16x512xf32, #tpu.memory_space<vmem>>, vector<1x16x512xf32>
    %83 = vector.shape_cast %82 : vector<1x16x512xf32> to vector<16x512xf32>
    %84 = arith.index_cast %c2_i32 : i32 to index
    %c0_45 = arith.constant 0 : index
    %c0_46 = arith.constant 0 : index
    %85 = vector.load %arg14[%84, %c0_45, %c0_46] : memref<9x16x128xbf16, #tpu.memory_space<vmem>>, vector<1x16x128xbf16>
    %86 = vector.shape_cast %85 : vector<1x16x128xbf16> to vector<16x128xbf16>
    %c0_47 = arith.constant 0 : index
    %c0_48 = arith.constant 0 : index
    %87 = vector.load %arg5[%c0_47, %c0_48] : memref<128x512xbf16, #tpu.memory_space<vmem>>, vector<128x512xbf16>
    %cst_49 = arith.constant dense<0.000000e+00> : vector<16x512xf32>
    %88 = tpu.matmul %86, %87, %cst_49 {dimension_numbers = #tpu.dot_dimension_numbers<[1], [0], [0], [1], [0, 0, 1, 1], [], []>} : vector<16x128xbf16>, vector<128x512xbf16>, vector<16x512xf32> -> vector<16x512xf32>
    %89 = arith.addf %83, %88 : vector<16x512xf32>
    %c0_50 = arith.constant 0 : index
    %c0_51 = arith.constant 0 : index
    %90 = vector.load %arg15[%c0_50, %c0_51] : memref<16x128xf32, #tpu.memory_space<vmem>>, vector<16x128xf32>
    %91 = vector.extract_strided_slice %89 {offsets = [0, 0], sizes = [16, 384], strides = [1, 1]} : vector<16x512xf32> to vector<16x384xf32>
    %92 = arith.negf %91 : vector<16x384xf32>
    %93 = math.exp %92 : vector<16x384xf32>
    %cst_52 = arith.constant 1.000000e+00 : f32
    %94 = vector.broadcast %cst_52 : f32 to vector<16x384xf32>
    %95 = arith.addf %94, %93 : vector<16x384xf32>
    %96 = arith.divf %94, %95 : vector<16x384xf32>
    %97 = vector.extract_strided_slice %96 {offsets = [0, 0], sizes = [16, 128], strides = [1, 1]} : vector<16x384xf32> to vector<16x128xf32>
    %98 = vector.extract_strided_slice %96 {offsets = [0, 128], sizes = [16, 128], strides = [1, 1]} : vector<16x384xf32> to vector<16x128xf32>
    %99 = vector.extract_strided_slice %96 {offsets = [0, 256], sizes = [16, 128], strides = [1, 1]} : vector<16x384xf32> to vector<16x128xf32>
    %100 = vector.extract_strided_slice %89 {offsets = [0, 384], sizes = [16, 128], strides = [1, 1]} : vector<16x512xf32> to vector<16x128xf32>
    %101 = math.tanh %100 : vector<16x128xf32>
    %102 = arith.mulf %98, %90 : vector<16x128xf32>
    %103 = arith.mulf %97, %101 : vector<16x128xf32>
    %104 = arith.addf %102, %103 : vector<16x128xf32>
    %105 = math.tanh %104 : vector<16x128xf32>
    %106 = arith.mulf %99, %105 : vector<16x128xf32>
    %c0_53 = arith.constant 0 : index
    %c0_54 = arith.constant 0 : index
    %107 = vector.load %arg15[%c0_53, %c0_54] : memref<16x128xf32, #tpu.memory_space<vmem>>, vector<16x128xf32>
    tpu.vector_store %arg15[%c0_53, %c0_54], %104 {strides = array<i32>} : memref<16x128xf32, #tpu.memory_space<vmem>>, vector<16x128xf32>,
    %108 = arith.truncf %106 : vector<16x128xf32> to vector<16x128xbf16>
    %c1_i32_55 = arith.constant 1 : i32
    %109 = arith.addi %c2_i32, %c1_i32_55 : i32
    %110 = arith.index_cast %109 : i32 to index
    %c0_56 = arith.constant 0 : index
    %c0_57 = arith.constant 0 : index
    %111 = vector.load %arg14[%110, %c0_56, %c0_57] : memref<9x16x128xbf16, #tpu.memory_space<vmem>>, vector<1x16x128xbf16>
    %112 = vector.shape_cast %111 : vector<1x16x128xbf16> to vector<16x128xbf16>
    %113 = vector.shape_cast %108 : vector<16x128xbf16> to vector<1x16x128xbf16>
    tpu.vector_store %arg14[%110, %c0_56, %c0_57], %113 {strides = array<i32>} : memref<9x16x128xbf16, #tpu.memory_space<vmem>>, vector<1x16x128xbf16>,
    %c3_i32 = arith.constant 3 : i32
    %114 = arith.index_cast %c3_i32 : i32 to index
    %c0_58 = arith.constant 0 : index
    %c0_59 = arith.constant 0 : index
    %115 = vector.load %arg16[%114, %c0_58, %c0_59] : memref<8x16x512xf32, #tpu.memory_space<vmem>>, vector<1x16x512xf32>
    %116 = vector.shape_cast %115 : vector<1x16x512xf32> to vector<16x512xf32>
    %117 = arith.index_cast %c3_i32 : i32 to index
    %c0_60 = arith.constant 0 : index
    %c0_61 = arith.constant 0 : index
    %118 = vector.load %arg14[%117, %c0_60, %c0_61] : memref<9x16x128xbf16, #tpu.memory_space<vmem>>, vector<1x16x128xbf16>
    %119 = vector.shape_cast %118 : vector<1x16x128xbf16> to vector<16x128xbf16>
    %c0_62 = arith.constant 0 : index
    %c0_63 = arith.constant 0 : index
    %120 = vector.load %arg5[%c0_62, %c0_63] : memref<128x512xbf16, #tpu.memory_space<vmem>>, vector<128x512xbf16>
    %cst_64 = arith.constant dense<0.000000e+00> : vector<16x512xf32>
    %121 = tpu.matmul %119, %120, %cst_64 {dimension_numbers = #tpu.dot_dimension_numbers<[1], [0], [0], [1], [0, 0, 1, 1], [], []>} : vector<16x128xbf16>, vector<128x512xbf16>, vector<16x512xf32> -> vector<16x512xf32>
    %122 = arith.addf %116, %121 : vector<16x512xf32>
    %c0_65 = arith.constant 0 : index
    %c0_66 = arith.constant 0 : index
    %123 = vector.load %arg15[%c0_65, %c0_66] : memref<16x128xf32, #tpu.memory_space<vmem>>, vector<16x128xf32>
    %124 = vector.extract_strided_slice %122 {offsets = [0, 0], sizes = [16, 384], strides = [1, 1]} : vector<16x512xf32> to vector<16x384xf32>
    %125 = arith.negf %124 : vector<16x384xf32>
    %126 = math.exp %125 : vector<16x384xf32>
    %cst_67 = arith.constant 1.000000e+00 : f32
    %127 = vector.broadcast %cst_67 : f32 to vector<16x384xf32>
    %128 = arith.addf %127, %126 : vector<16x384xf32>
    %129 = arith.divf %127, %128 : vector<16x384xf32>
    %130 = vector.extract_strided_slice %129 {offsets = [0, 0], sizes = [16, 128], strides = [1, 1]} : vector<16x384xf32> to vector<16x128xf32>
    %131 = vector.extract_strided_slice %129 {offsets = [0, 128], sizes = [16, 128], strides = [1, 1]} : vector<16x384xf32> to vector<16x128xf32>
    %132 = vector.extract_strided_slice %129 {offsets = [0, 256], sizes = [16, 128], strides = [1, 1]} : vector<16x384xf32> to vector<16x128xf32>
    %133 = vector.extract_strided_slice %122 {offsets = [0, 384], sizes = [16, 128], strides = [1, 1]} : vector<16x512xf32> to vector<16x128xf32>
    %134 = math.tanh %133 : vector<16x128xf32>
    %135 = arith.mulf %131, %123 : vector<16x128xf32>
    %136 = arith.mulf %130, %134 : vector<16x128xf32>
    %137 = arith.addf %135, %136 : vector<16x128xf32>
    %138 = math.tanh %137 : vector<16x128xf32>
    %139 = arith.mulf %132, %138 : vector<16x128xf32>
    %c0_68 = arith.constant 0 : index
    %c0_69 = arith.constant 0 : index
    %140 = vector.load %arg15[%c0_68, %c0_69] : memref<16x128xf32, #tpu.memory_space<vmem>>, vector<16x128xf32>
    tpu.vector_store %arg15[%c0_68, %c0_69], %137 {strides = array<i32>} : memref<16x128xf32, #tpu.memory_space<vmem>>, vector<16x128xf32>,
    %141 = arith.truncf %139 : vector<16x128xf32> to vector<16x128xbf16>
    %c1_i32_70 = arith.constant 1 : i32
    %142 = arith.addi %c3_i32, %c1_i32_70 : i32
    %143 = arith.index_cast %142 : i32 to index
    %c0_71 = arith.constant 0 : index
    %c0_72 = arith.constant 0 : index
    %144 = vector.load %arg14[%143, %c0_71, %c0_72] : memref<9x16x128xbf16, #tpu.memory_space<vmem>>, vector<1x16x128xbf16>
    %145 = vector.shape_cast %144 : vector<1x16x128xbf16> to vector<16x128xbf16>
    %146 = vector.shape_cast %141 : vector<16x128xbf16> to vector<1x16x128xbf16>
    tpu.vector_store %arg14[%143, %c0_71, %c0_72], %146 {strides = array<i32>} : memref<9x16x128xbf16, #tpu.memory_space<vmem>>, vector<1x16x128xbf16>,
    %c4_i32 = arith.constant 4 : i32
    %147 = arith.index_cast %c4_i32 : i32 to index
    %c0_73 = arith.constant 0 : index
    %c0_74 = arith.constant 0 : index
    %148 = vector.load %arg16[%147, %c0_73, %c0_74] : memref<8x16x512xf32, #tpu.memory_space<vmem>>, vector<1x16x512xf32>
    %149 = vector.shape_cast %148 : vector<1x16x512xf32> to vector<16x512xf32>
    %150 = arith.index_cast %c4_i32 : i32 to index
    %c0_75 = arith.constant 0 : index
    %c0_76 = arith.constant 0 : index
    %151 = vector.load %arg14[%150, %c0_75, %c0_76] : memref<9x16x128xbf16, #tpu.memory_space<vmem>>, vector<1x16x128xbf16>
    %152 = vector.shape_cast %151 : vector<1x16x128xbf16> to vector<16x128xbf16>
    %c0_77 = arith.constant 0 : index
    %c0_78 = arith.constant 0 : index
    %153 = vector.load %arg5[%c0_77, %c0_78] : memref<128x512xbf16, #tpu.memory_space<vmem>>, vector<128x512xbf16>
    %cst_79 = arith.constant dense<0.000000e+00> : vector<16x512xf32>
    %154 = tpu.matmul %152, %153, %cst_79 {dimension_numbers = #tpu.dot_dimension_numbers<[1], [0], [0], [1], [0, 0, 1, 1], [], []>} : vector<16x128xbf16>, vector<128x512xbf16>, vector<16x512xf32> -> vector<16x512xf32>
    %155 = arith.addf %149, %154 : vector<16x512xf32>
    %c0_80 = arith.constant 0 : index
    %c0_81 = arith.constant 0 : index
    %156 = vector.load %arg15[%c0_80, %c0_81] : memref<16x128xf32, #tpu.memory_space<vmem>>, vector<16x128xf32>
    %157 = vector.extract_strided_slice %155 {offsets = [0, 0], sizes = [16, 384], strides = [1, 1]} : vector<16x512xf32> to vector<16x384xf32>
    %158 = arith.negf %157 : vector<16x384xf32>
    %159 = math.exp %158 : vector<16x384xf32>
    %cst_82 = arith.constant 1.000000e+00 : f32
    %160 = vector.broadcast %cst_82 : f32 to vector<16x384xf32>
    %161 = arith.addf %160, %159 : vector<16x384xf32>
    %162 = arith.divf %160, %161 : vector<16x384xf32>
    %163 = vector.extract_strided_slice %162 {offsets = [0, 0], sizes = [16, 128], strides = [1, 1]} : vector<16x384xf32> to vector<16x128xf32>
    %164 = vector.extract_strided_slice %162 {offsets = [0, 128], sizes = [16, 128], strides = [1, 1]} : vector<16x384xf32> to vector<16x128xf32>
    %165 = vector.extract_strided_slice %162 {offsets = [0, 256], sizes = [16, 128], strides = [1, 1]} : vector<16x384xf32> to vector<16x128xf32>
    %166 = vector.extract_strided_slice %155 {offsets = [0, 384], sizes = [16, 128], strides = [1, 1]} : vector<16x512xf32> to vector<16x128xf32>
    %167 = math.tanh %166 : vector<16x128xf32>
    %168 = arith.mulf %164, %156 : vector<16x128xf32>
    %169 = arith.mulf %163, %167 : vector<16x128xf32>
    %170 = arith.addf %168, %169 : vector<16x128xf32>
    %171 = math.tanh %170 : vector<16x128xf32>
    %172 = arith.mulf %165, %171 : vector<16x128xf32>
    %c0_83 = arith.constant 0 : index
    %c0_84 = arith.constant 0 : index
    %173 = vector.load %arg15[%c0_83, %c0_84] : memref<16x128xf32, #tpu.memory_space<vmem>>, vector<16x128xf32>
    tpu.vector_store %arg15[%c0_83, %c0_84], %170 {strides = array<i32>} : memref<16x128xf32, #tpu.memory_space<vmem>>, vector<16x128xf32>,
    %174 = arith.truncf %172 : vector<16x128xf32> to vector<16x128xbf16>
    %c1_i32_85 = arith.constant 1 : i32
    %175 = arith.addi %c4_i32, %c1_i32_85 : i32
    %176 = arith.index_cast %175 : i32 to index
    %c0_86 = arith.constant 0 : index
    %c0_87 = arith.constant 0 : index
    %177 = vector.load %arg14[%176, %c0_86, %c0_87] : memref<9x16x128xbf16, #tpu.memory_space<vmem>>, vector<1x16x128xbf16>
    %178 = vector.shape_cast %177 : vector<1x16x128xbf16> to vector<16x128xbf16>
    %179 = vector.shape_cast %174 : vector<16x128xbf16> to vector<1x16x128xbf16>
    tpu.vector_store %arg14[%176, %c0_86, %c0_87], %179 {strides = array<i32>} : memref<9x16x128xbf16, #tpu.memory_space<vmem>>, vector<1x16x128xbf16>,
    %c5_i32 = arith.constant 5 : i32
    %180 = arith.index_cast %c5_i32 : i32 to index
    %c0_88 = arith.constant 0 : index
    %c0_89 = arith.constant 0 : index
    %181 = vector.load %arg16[%180, %c0_88, %c0_89] : memref<8x16x512xf32, #tpu.memory_space<vmem>>, vector<1x16x512xf32>
    %182 = vector.shape_cast %181 : vector<1x16x512xf32> to vector<16x512xf32>
    %183 = arith.index_cast %c5_i32 : i32 to index
    %c0_90 = arith.constant 0 : index
    %c0_91 = arith.constant 0 : index
    %184 = vector.load %arg14[%183, %c0_90, %c0_91] : memref<9x16x128xbf16, #tpu.memory_space<vmem>>, vector<1x16x128xbf16>
    %185 = vector.shape_cast %184 : vector<1x16x128xbf16> to vector<16x128xbf16>
    %c0_92 = arith.constant 0 : index
    %c0_93 = arith.constant 0 : index
    %186 = vector.load %arg5[%c0_92, %c0_93] : memref<128x512xbf16, #tpu.memory_space<vmem>>, vector<128x512xbf16>
    %cst_94 = arith.constant dense<0.000000e+00> : vector<16x512xf32>
    %187 = tpu.matmul %185, %186, %cst_94 {dimension_numbers = #tpu.dot_dimension_numbers<[1], [0], [0], [1], [0, 0, 1, 1], [], []>} : vector<16x128xbf16>, vector<128x512xbf16>, vector<16x512xf32> -> vector<16x512xf32>
    %188 = arith.addf %182, %187 : vector<16x512xf32>
    %c0_95 = arith.constant 0 : index
    %c0_96 = arith.constant 0 : index
    %189 = vector.load %arg15[%c0_95, %c0_96] : memref<16x128xf32, #tpu.memory_space<vmem>>, vector<16x128xf32>
    %190 = vector.extract_strided_slice %188 {offsets = [0, 0], sizes = [16, 384], strides = [1, 1]} : vector<16x512xf32> to vector<16x384xf32>
    %191 = arith.negf %190 : vector<16x384xf32>
    %192 = math.exp %191 : vector<16x384xf32>
    %cst_97 = arith.constant 1.000000e+00 : f32
    %193 = vector.broadcast %cst_97 : f32 to vector<16x384xf32>
    %194 = arith.addf %193, %192 : vector<16x384xf32>
    %195 = arith.divf %193, %194 : vector<16x384xf32>
    %196 = vector.extract_strided_slice %195 {offsets = [0, 0], sizes = [16, 128], strides = [1, 1]} : vector<16x384xf32> to vector<16x128xf32>
    %197 = vector.extract_strided_slice %195 {offsets = [0, 128], sizes = [16, 128], strides = [1, 1]} : vector<16x384xf32> to vector<16x128xf32>
    %198 = vector.extract_strided_slice %195 {offsets = [0, 256], sizes = [16, 128], strides = [1, 1]} : vector<16x384xf32> to vector<16x128xf32>
    %199 = vector.extract_strided_slice %188 {offsets = [0, 384], sizes = [16, 128], strides = [1, 1]} : vector<16x512xf32> to vector<16x128xf32>
    %200 = math.tanh %199 : vector<16x128xf32>
    %201 = arith.mulf %197, %189 : vector<16x128xf32>
    %202 = arith.mulf %196, %200 : vector<16x128xf32>
    %203 = arith.addf %201, %202 : vector<16x128xf32>
    %204 = math.tanh %203 : vector<16x128xf32>
    %205 = arith.mulf %198, %204 : vector<16x128xf32>
    %c0_98 = arith.constant 0 : index
    %c0_99 = arith.constant 0 : index
    %206 = vector.load %arg15[%c0_98, %c0_99] : memref<16x128xf32, #tpu.memory_space<vmem>>, vector<16x128xf32>
    tpu.vector_store %arg15[%c0_98, %c0_99], %203 {strides = array<i32>} : memref<16x128xf32, #tpu.memory_space<vmem>>, vector<16x128xf32>,
    %207 = arith.truncf %205 : vector<16x128xf32> to vector<16x128xbf16>
    %c1_i32_100 = arith.constant 1 : i32
    %208 = arith.addi %c5_i32, %c1_i32_100 : i32
    %209 = arith.index_cast %208 : i32 to index
    %c0_101 = arith.constant 0 : index
    %c0_102 = arith.constant 0 : index
    %210 = vector.load %arg14[%209, %c0_101, %c0_102] : memref<9x16x128xbf16, #tpu.memory_space<vmem>>, vector<1x16x128xbf16>
    %211 = vector.shape_cast %210 : vector<1x16x128xbf16> to vector<16x128xbf16>
    %212 = vector.shape_cast %207 : vector<16x128xbf16> to vector<1x16x128xbf16>
    tpu.vector_store %arg14[%209, %c0_101, %c0_102], %212 {strides = array<i32>} : memref<9x16x128xbf16, #tpu.memory_space<vmem>>, vector<1x16x128xbf16>,
    %c6_i32 = arith.constant 6 : i32
    %213 = arith.index_cast %c6_i32 : i32 to index
    %c0_103 = arith.constant 0 : index
    %c0_104 = arith.constant 0 : index
    %214 = vector.load %arg16[%213, %c0_103, %c0_104] : memref<8x16x512xf32, #tpu.memory_space<vmem>>, vector<1x16x512xf32>
    %215 = vector.shape_cast %214 : vector<1x16x512xf32> to vector<16x512xf32>
    %216 = arith.index_cast %c6_i32 : i32 to index
    %c0_105 = arith.constant 0 : index
    %c0_106 = arith.constant 0 : index
    %217 = vector.load %arg14[%216, %c0_105, %c0_106] : memref<9x16x128xbf16, #tpu.memory_space<vmem>>, vector<1x16x128xbf16>
    %218 = vector.shape_cast %217 : vector<1x16x128xbf16> to vector<16x128xbf16>
    %c0_107 = arith.constant 0 : index
    %c0_108 = arith.constant 0 : index
    %219 = vector.load %arg5[%c0_107, %c0_108] : memref<128x512xbf16, #tpu.memory_space<vmem>>, vector<128x512xbf16>
    %cst_109 = arith.constant dense<0.000000e+00> : vector<16x512xf32>
    %220 = tpu.matmul %218, %219, %cst_109 {dimension_numbers = #tpu.dot_dimension_numbers<[1], [0], [0], [1], [0, 0, 1, 1], [], []>} : vector<16x128xbf16>, vector<128x512xbf16>, vector<16x512xf32> -> vector<16x512xf32>
    %221 = arith.addf %215, %220 : vector<16x512xf32>
    %c0_110 = arith.constant 0 : index
    %c0_111 = arith.constant 0 : index
    %222 = vector.load %arg15[%c0_110, %c0_111] : memref<16x128xf32, #tpu.memory_space<vmem>>, vector<16x128xf32>
    %223 = vector.extract_strided_slice %221 {offsets = [0, 0], sizes = [16, 384], strides = [1, 1]} : vector<16x512xf32> to vector<16x384xf32>
    %224 = arith.negf %223 : vector<16x384xf32>
    %225 = math.exp %224 : vector<16x384xf32>
    %cst_112 = arith.constant 1.000000e+00 : f32
    %226 = vector.broadcast %cst_112 : f32 to vector<16x384xf32>
    %227 = arith.addf %226, %225 : vector<16x384xf32>
    %228 = arith.divf %226, %227 : vector<16x384xf32>
    %229 = vector.extract_strided_slice %228 {offsets = [0, 0], sizes = [16, 128], strides = [1, 1]} : vector<16x384xf32> to vector<16x128xf32>
    %230 = vector.extract_strided_slice %228 {offsets = [0, 128], sizes = [16, 128], strides = [1, 1]} : vector<16x384xf32> to vector<16x128xf32>
    %231 = vector.extract_strided_slice %228 {offsets = [0, 256], sizes = [16, 128], strides = [1, 1]} : vector<16x384xf32> to vector<16x128xf32>
    %232 = vector.extract_strided_slice %221 {offsets = [0, 384], sizes = [16, 128], strides = [1, 1]} : vector<16x512xf32> to vector<16x128xf32>
    %233 = math.tanh %232 : vector<16x128xf32>
    %234 = arith.mulf %230, %222 : vector<16x128xf32>
    %235 = arith.mulf %229, %233 : vector<16x128xf32>
    %236 = arith.addf %234, %235 : vector<16x128xf32>
    %237 = math.tanh %236 : vector<16x128xf32>
    %238 = arith.mulf %231, %237 : vector<16x128xf32>
    %c0_113 = arith.constant 0 : index
    %c0_114 = arith.constant 0 : index
    %239 = vector.load %arg15[%c0_113, %c0_114] : memref<16x128xf32, #tpu.memory_space<vmem>>, vector<16x128xf32>
    tpu.vector_store %arg15[%c0_113, %c0_114], %236 {strides = array<i32>} : memref<16x128xf32, #tpu.memory_space<vmem>>, vector<16x128xf32>,
    %240 = arith.truncf %238 : vector<16x128xf32> to vector<16x128xbf16>
    %c1_i32_115 = arith.constant 1 : i32
    %241 = arith.addi %c6_i32, %c1_i32_115 : i32
    %242 = arith.index_cast %241 : i32 to index
    %c0_116 = arith.constant 0 : index
    %c0_117 = arith.constant 0 : index
    %243 = vector.load %arg14[%242, %c0_116, %c0_117] : memref<9x16x128xbf16, #tpu.memory_space<vmem>>, vector<1x16x128xbf16>
    %244 = vector.shape_cast %243 : vector<1x16x128xbf16> to vector<16x128xbf16>
    %245 = vector.shape_cast %240 : vector<16x128xbf16> to vector<1x16x128xbf16>
    tpu.vector_store %arg14[%242, %c0_116, %c0_117], %245 {strides = array<i32>} : memref<9x16x128xbf16, #tpu.memory_space<vmem>>, vector<1x16x128xbf16>,
    %c7_i32 = arith.constant 7 : i32
    %246 = arith.index_cast %c7_i32 : i32 to index
    %c0_118 = arith.constant 0 : index
    %c0_119 = arith.constant 0 : index
    %247 = vector.load %arg16[%246, %c0_118, %c0_119] : memref<8x16x512xf32, #tpu.memory_space<vmem>>, vector<1x16x512xf32>
    %248 = vector.shape_cast %247 : vector<1x16x512xf32> to vector<16x512xf32>
    %249 = arith.index_cast %c7_i32 : i32 to index
    %c0_120 = arith.constant 0 : index
    %c0_121 = arith.constant 0 : index
    %250 = vector.load %arg14[%249, %c0_120, %c0_121] : memref<9x16x128xbf16, #tpu.memory_space<vmem>>, vector<1x16x128xbf16>
    %251 = vector.shape_cast %250 : vector<1x16x128xbf16> to vector<16x128xbf16>
    %c0_122 = arith.constant 0 : index
    %c0_123 = arith.constant 0 : index
    %252 = vector.load %arg5[%c0_122, %c0_123] : memref<128x512xbf16, #tpu.memory_space<vmem>>, vector<128x512xbf16>
    %cst_124 = arith.constant dense<0.000000e+00> : vector<16x512xf32>
    %253 = tpu.matmul %251, %252, %cst_124 {dimension_numbers = #tpu.dot_dimension_numbers<[1], [0], [0], [1], [0, 0, 1, 1], [], []>} : vector<16x128xbf16>, vector<128x512xbf16>, vector<16x512xf32> -> vector<16x512xf32>
    %254 = arith.addf %248, %253 : vector<16x512xf32>
    %c0_125 = arith.constant 0 : index
    %c0_126 = arith.constant 0 : index
    %255 = vector.load %arg15[%c0_125, %c0_126] : memref<16x128xf32, #tpu.memory_space<vmem>>, vector<16x128xf32>
    %256 = vector.extract_strided_slice %254 {offsets = [0, 0], sizes = [16, 384], strides = [1, 1]} : vector<16x512xf32> to vector<16x384xf32>
    %257 = arith.negf %256 : vector<16x384xf32>
    %258 = math.exp %257 : vector<16x384xf32>
    %cst_127 = arith.constant 1.000000e+00 : f32
    %259 = vector.broadcast %cst_127 : f32 to vector<16x384xf32>
    %260 = arith.addf %259, %258 : vector<16x384xf32>
    %261 = arith.divf %259, %260 : vector<16x384xf32>
    %262 = vector.extract_strided_slice %261 {offsets = [0, 0], sizes = [16, 128], strides = [1, 1]} : vector<16x384xf32> to vector<16x128xf32>
    %263 = vector.extract_strided_slice %261 {offsets = [0, 128], sizes = [16, 128], strides = [1, 1]} : vector<16x384xf32> to vector<16x128xf32>
    %264 = vector.extract_strided_slice %261 {offsets = [0, 256], sizes = [16, 128], strides = [1, 1]} : vector<16x384xf32> to vector<16x128xf32>
    %265 = vector.extract_strided_slice %254 {offsets = [0, 384], sizes = [16, 128], strides = [1, 1]} : vector<16x512xf32> to vector<16x128xf32>
    %266 = math.tanh %265 : vector<16x128xf32>
    %267 = arith.mulf %263, %255 : vector<16x128xf32>
    %268 = arith.mulf %262, %266 : vector<16x128xf32>
    %269 = arith.addf %267, %268 : vector<16x128xf32>
    %270 = math.tanh %269 : vector<16x128xf32>
    %271 = arith.mulf %264, %270 : vector<16x128xf32>
    %c0_128 = arith.constant 0 : index
    %c0_129 = arith.constant 0 : index
    %272 = vector.load %arg15[%c0_128, %c0_129] : memref<16x128xf32, #tpu.memory_space<vmem>>, vector<16x128xf32>
    tpu.vector_store %arg15[%c0_128, %c0_129], %269 {strides = array<i32>} : memref<16x128xf32, #tpu.memory_space<vmem>>, vector<16x128xf32>,
    %273 = arith.truncf %271 : vector<16x128xf32> to vector<16x128xbf16>
    %c1_i32_130 = arith.constant 1 : i32
    %274 = arith.addi %c7_i32, %c1_i32_130 : i32
    %275 = arith.index_cast %274 : i32 to index
    %c0_131 = arith.constant 0 : index
    %c0_132 = arith.constant 0 : index
    %276 = vector.load %arg14[%275, %c0_131, %c0_132] : memref<9x16x128xbf16, #tpu.memory_space<vmem>>, vector<1x16x128xbf16>
    %277 = vector.shape_cast %276 : vector<1x16x128xbf16> to vector<16x128xbf16>
    %278 = vector.shape_cast %273 : vector<16x128xbf16> to vector<1x16x128xbf16>
    tpu.vector_store %arg14[%275, %c0_131, %c0_132], %278 {strides = array<i32>} : memref<9x16x128xbf16, #tpu.memory_space<vmem>>, vector<1x16x128xbf16>,
    %c8_i32 = arith.constant 8 : i32
    %c1 = arith.constant 1 : index
    %c0_133 = arith.constant 0 : index
    %c0_134 = arith.constant 0 : index
    %279 = vector.load %arg14[%c1, %c0_133, %c0_134] : memref<9x16x128xbf16, #tpu.memory_space<vmem>>, vector<8x16x128xbf16>
    %280 = vector.shape_cast %279 : vector<8x16x128xbf16> to vector<128x128xbf16>
    %c0_135 = arith.constant 0 : index
    %c0_136 = arith.constant 0 : index
    %281 = vector.load %arg6[%c0_135, %c0_136] : memref<128x512xbf16, #tpu.memory_space<vmem>>, vector<128x512xbf16>
    %cst_137 = arith.constant dense<0.000000e+00> : vector<128x512xf32>
    %282 = tpu.matmul %280, %281, %cst_137 {dimension_numbers = #tpu.dot_dimension_numbers<[1], [0], [0], [1], [0, 0, 1, 1], [], []>} : vector<128x128xbf16>, vector<128x512xbf16>, vector<128x512xf32> -> vector<128x512xf32>
    %c0_138 = arith.constant 0 : index
    %c0_139 = arith.constant 0 : index
    %283 = vector.load %arg8[%c0_138, %c0_139] : memref<1x512xf32, #tpu.memory_space<vmem>>, vector<1x512xf32>
    %284 = vector.broadcast %283 : vector<1x512xf32> to vector<128x512xf32>
    %285 = arith.addf %282, %284 : vector<128x512xf32>
    %286 = vector.shape_cast %285 : vector<128x512xf32> to vector<8x16x512xf32>
    %c0_140 = arith.constant 0 : index
    %c0_141 = arith.constant 0 : index
    %c0_142 = arith.constant 0 : index
    %287 = vector.load %arg16[%c0_140, %c0_141, %c0_142] : memref<8x16x512xf32, #tpu.memory_space<vmem>>, vector<8x16x512xf32>
    tpu.vector_store %arg16[%c0_140, %c0_141, %c0_142], %286 {strides = array<i32>} : memref<8x16x512xf32, #tpu.memory_space<vmem>>, vector<8x16x512xf32>,
    %c0_i32_143 = arith.constant 0 : i32
    %288 = arith.index_cast %c0_i32_143 : i32 to index
    %c0_144 = arith.constant 0 : index
    %c0_145 = arith.constant 0 : index
    %289 = vector.load %arg16[%288, %c0_144, %c0_145] : memref<8x16x512xf32, #tpu.memory_space<vmem>>, vector<1x16x512xf32>
    %290 = vector.shape_cast %289 : vector<1x16x512xf32> to vector<16x512xf32>
    %c0_146 = arith.constant 0 : index
    %c0_147 = arith.constant 0 : index
    %291 = vector.load %arg17[%c0_146, %c0_147] : memref<16x128xbf16, #tpu.memory_space<vmem>>, vector<16x128xbf16>
    %c0_148 = arith.constant 0 : index
    %c0_149 = arith.constant 0 : index
    %292 = vector.load %arg7[%c0_148, %c0_149] : memref<128x512xbf16, #tpu.memory_space<vmem>>, vector<128x512xbf16>
    %cst_150 = arith.constant dense<0.000000e+00> : vector<16x512xf32>
    %293 = tpu.matmul %291, %292, %cst_150 {dimension_numbers = #tpu.dot_dimension_numbers<[1], [0], [0], [1], [0, 0, 1, 1], [], []>} : vector<16x128xbf16>, vector<128x512xbf16>, vector<16x512xf32> -> vector<16x512xf32>
    %294 = arith.addf %290, %293 : vector<16x512xf32>
    %c0_151 = arith.constant 0 : index
    %c0_152 = arith.constant 0 : index
    %295 = vector.load %arg18[%c0_151, %c0_152] : memref<16x128xf32, #tpu.memory_space<vmem>>, vector<16x128xf32>
    %296 = vector.extract_strided_slice %294 {offsets = [0, 0], sizes = [16, 384], strides = [1, 1]} : vector<16x512xf32> to vector<16x384xf32>
    %297 = arith.negf %296 : vector<16x384xf32>
    %298 = math.exp %297 : vector<16x384xf32>
    %cst_153 = arith.constant 1.000000e+00 : f32
    %299 = vector.broadcast %cst_153 : f32 to vector<16x384xf32>
    %300 = arith.addf %299, %298 : vector<16x384xf32>
    %301 = arith.divf %299, %300 : vector<16x384xf32>
    %302 = vector.extract_strided_slice %301 {offsets = [0, 0], sizes = [16, 128], strides = [1, 1]} : vector<16x384xf32> to vector<16x128xf32>
    %303 = vector.extract_strided_slice %301 {offsets = [0, 128], sizes = [16, 128], strides = [1, 1]} : vector<16x384xf32> to vector<16x128xf32>
    %304 = vector.extract_strided_slice %301 {offsets = [0, 256], sizes = [16, 128], strides = [1, 1]} : vector<16x384xf32> to vector<16x128xf32>
    %305 = vector.extract_strided_slice %294 {offsets = [0, 384], sizes = [16, 128], strides = [1, 1]} : vector<16x512xf32> to vector<16x128xf32>
    %306 = math.tanh %305 : vector<16x128xf32>
    %307 = arith.mulf %303, %295 : vector<16x128xf32>
    %308 = arith.mulf %302, %306 : vector<16x128xf32>
    %309 = arith.addf %307, %308 : vector<16x128xf32>
    %310 = math.tanh %309 : vector<16x128xf32>
    %311 = arith.mulf %304, %310 : vector<16x128xf32>
    %c0_154 = arith.constant 0 : index
    %c0_155 = arith.constant 0 : index
    %312 = vector.load %arg18[%c0_154, %c0_155] : memref<16x128xf32, #tpu.memory_space<vmem>>, vector<16x128xf32>
    tpu.vector_store %arg18[%c0_154, %c0_155], %309 {strides = array<i32>} : memref<16x128xf32, #tpu.memory_space<vmem>>, vector<16x128xf32>,
    %313 = arith.truncf %311 : vector<16x128xf32> to vector<16x128xbf16>
    %c0_156 = arith.constant 0 : index
    %c0_157 = arith.constant 0 : index
    %314 = vector.load %arg17[%c0_156, %c0_157] : memref<16x128xbf16, #tpu.memory_space<vmem>>, vector<16x128xbf16>
    tpu.vector_store %arg17[%c0_156, %c0_157], %313 {strides = array<i32>} : memref<16x128xbf16, #tpu.memory_space<vmem>>, vector<16x128xbf16>,
    %c0_158 = arith.constant 0 : index
    %c0_159 = arith.constant 0 : index
    %315 = vector.load %arg19[%c0_158, %c0_159] : memref<16x128xf32, #tpu.memory_space<vmem>>, vector<16x128xf32>
    %316 = arith.maximumf %315, %311 : vector<16x128xf32>
    %c0_160 = arith.constant 0 : index
    %c0_161 = arith.constant 0 : index
    %317 = vector.load %arg19[%c0_160, %c0_161] : memref<16x128xf32, #tpu.memory_space<vmem>>, vector<16x128xf32>
    tpu.vector_store %arg19[%c0_160, %c0_161], %316 {strides = array<i32>} : memref<16x128xf32, #tpu.memory_space<vmem>>, vector<16x128xf32>,
    %c1_i32_162 = arith.constant 1 : i32
    %318 = arith.index_cast %c1_i32_162 : i32 to index
    %c0_163 = arith.constant 0 : index
    %c0_164 = arith.constant 0 : index
    %319 = vector.load %arg16[%318, %c0_163, %c0_164] : memref<8x16x512xf32, #tpu.memory_space<vmem>>, vector<1x16x512xf32>
    %320 = vector.shape_cast %319 : vector<1x16x512xf32> to vector<16x512xf32>
    %c0_165 = arith.constant 0 : index
    %c0_166 = arith.constant 0 : index
    %321 = vector.load %arg17[%c0_165, %c0_166] : memref<16x128xbf16, #tpu.memory_space<vmem>>, vector<16x128xbf16>
    %c0_167 = arith.constant 0 : index
    %c0_168 = arith.constant 0 : index
    %322 = vector.load %arg7[%c0_167, %c0_168] : memref<128x512xbf16, #tpu.memory_space<vmem>>, vector<128x512xbf16>
    %cst_169 = arith.constant dense<0.000000e+00> : vector<16x512xf32>
    %323 = tpu.matmul %321, %322, %cst_169 {dimension_numbers = #tpu.dot_dimension_numbers<[1], [0], [0], [1], [0, 0, 1, 1], [], []>} : vector<16x128xbf16>, vector<128x512xbf16>, vector<16x512xf32> -> vector<16x512xf32>
    %324 = arith.addf %320, %323 : vector<16x512xf32>
    %c0_170 = arith.constant 0 : index
    %c0_171 = arith.constant 0 : index
    %325 = vector.load %arg18[%c0_170, %c0_171] : memref<16x128xf32, #tpu.memory_space<vmem>>, vector<16x128xf32>
    %326 = vector.extract_strided_slice %324 {offsets = [0, 0], sizes = [16, 384], strides = [1, 1]} : vector<16x512xf32> to vector<16x384xf32>
    %327 = arith.negf %326 : vector<16x384xf32>
    %328 = math.exp %327 : vector<16x384xf32>
    %cst_172 = arith.constant 1.000000e+00 : f32
    %329 = vector.broadcast %cst_172 : f32 to vector<16x384xf32>
    %330 = arith.addf %329, %328 : vector<16x384xf32>
    %331 = arith.divf %329, %330 : vector<16x384xf32>
    %332 = vector.extract_strided_slice %331 {offsets = [0, 0], sizes = [16, 128], strides = [1, 1]} : vector<16x384xf32> to vector<16x128xf32>
    %333 = vector.extract_strided_slice %331 {offsets = [0, 128], sizes = [16, 128], strides = [1, 1]} : vector<16x384xf32> to vector<16x128xf32>
    %334 = vector.extract_strided_slice %331 {offsets = [0, 256], sizes = [16, 128], strides = [1, 1]} : vector<16x384xf32> to vector<16x128xf32>
    %335 = vector.extract_strided_slice %324 {offsets = [0, 384], sizes = [16, 128], strides = [1, 1]} : vector<16x512xf32> to vector<16x128xf32>
    %336 = math.tanh %335 : vector<16x128xf32>
    %337 = arith.mulf %333, %325 : vector<16x128xf32>
    %338 = arith.mulf %332, %336 : vector<16x128xf32>
    %339 = arith.addf %337, %338 : vector<16x128xf32>
    %340 = math.tanh %339 : vector<16x128xf32>
    %341 = arith.mulf %334, %340 : vector<16x128xf32>
    %c0_173 = arith.constant 0 : index
    %c0_174 = arith.constant 0 : index
    %342 = vector.load %arg18[%c0_173, %c0_174] : memref<16x128xf32, #tpu.memory_space<vmem>>, vector<16x128xf32>
    tpu.vector_store %arg18[%c0_173, %c0_174], %339 {strides = array<i32>} : memref<16x128xf32, #tpu.memory_space<vmem>>, vector<16x128xf32>,
    %343 = arith.truncf %341 : vector<16x128xf32> to vector<16x128xbf16>
    %c0_175 = arith.constant 0 : index
    %c0_176 = arith.constant 0 : index
    %344 = vector.load %arg17[%c0_175, %c0_176] : memref<16x128xbf16, #tpu.memory_space<vmem>>, vector<16x128xbf16>
    tpu.vector_store %arg17[%c0_175, %c0_176], %343 {strides = array<i32>} : memref<16x128xbf16, #tpu.memory_space<vmem>>, vector<16x128xbf16>,
    %c0_177 = arith.constant 0 : index
    %c0_178 = arith.constant 0 : index
    %345 = vector.load %arg19[%c0_177, %c0_178] : memref<16x128xf32, #tpu.memory_space<vmem>>, vector<16x128xf32>
    %346 = arith.maximumf %345, %341 : vector<16x128xf32>
    %c0_179 = arith.constant 0 : index
    %c0_180 = arith.constant 0 : index
    %347 = vector.load %arg19[%c0_179, %c0_180] : memref<16x128xf32, #tpu.memory_space<vmem>>, vector<16x128xf32>
    tpu.vector_store %arg19[%c0_179, %c0_180], %346 {strides = array<i32>} : memref<16x128xf32, #tpu.memory_space<vmem>>, vector<16x128xf32>,
    %c2_i32_181 = arith.constant 2 : i32
    %348 = arith.index_cast %c2_i32_181 : i32 to index
    %c0_182 = arith.constant 0 : index
    %c0_183 = arith.constant 0 : index
    %349 = vector.load %arg16[%348, %c0_182, %c0_183] : memref<8x16x512xf32, #tpu.memory_space<vmem>>, vector<1x16x512xf32>
    %350 = vector.shape_cast %349 : vector<1x16x512xf32> to vector<16x512xf32>
    %c0_184 = arith.constant 0 : index
    %c0_185 = arith.constant 0 : index
    %351 = vector.load %arg17[%c0_184, %c0_185] : memref<16x128xbf16, #tpu.memory_space<vmem>>, vector<16x128xbf16>
    %c0_186 = arith.constant 0 : index
    %c0_187 = arith.constant 0 : index
    %352 = vector.load %arg7[%c0_186, %c0_187] : memref<128x512xbf16, #tpu.memory_space<vmem>>, vector<128x512xbf16>
    %cst_188 = arith.constant dense<0.000000e+00> : vector<16x512xf32>
    %353 = tpu.matmul %351, %352, %cst_188 {dimension_numbers = #tpu.dot_dimension_numbers<[1], [0], [0], [1], [0, 0, 1, 1], [], []>} : vector<16x128xbf16>, vector<128x512xbf16>, vector<16x512xf32> -> vector<16x512xf32>
    %354 = arith.addf %350, %353 : vector<16x512xf32>
    %c0_189 = arith.constant 0 : index
    %c0_190 = arith.constant 0 : index
    %355 = vector.load %arg18[%c0_189, %c0_190] : memref<16x128xf32, #tpu.memory_space<vmem>>, vector<16x128xf32>
    %356 = vector.extract_strided_slice %354 {offsets = [0, 0], sizes = [16, 384], strides = [1, 1]} : vector<16x512xf32> to vector<16x384xf32>
    %357 = arith.negf %356 : vector<16x384xf32>
    %358 = math.exp %357 : vector<16x384xf32>
    %cst_191 = arith.constant 1.000000e+00 : f32
    %359 = vector.broadcast %cst_191 : f32 to vector<16x384xf32>
    %360 = arith.addf %359, %358 : vector<16x384xf32>
    %361 = arith.divf %359, %360 : vector<16x384xf32>
    %362 = vector.extract_strided_slice %361 {offsets = [0, 0], sizes = [16, 128], strides = [1, 1]} : vector<16x384xf32> to vector<16x128xf32>
    %363 = vector.extract_strided_slice %361 {offsets = [0, 128], sizes = [16, 128], strides = [1, 1]} : vector<16x384xf32> to vector<16x128xf32>
    %364 = vector.extract_strided_slice %361 {offsets = [0, 256], sizes = [16, 128], strides = [1, 1]} : vector<16x384xf32> to vector<16x128xf32>
    %365 = vector.extract_strided_slice %354 {offsets = [0, 384], sizes = [16, 128], strides = [1, 1]} : vector<16x512xf32> to vector<16x128xf32>
    %366 = math.tanh %365 : vector<16x128xf32>
    %367 = arith.mulf %363, %355 : vector<16x128xf32>
    %368 = arith.mulf %362, %366 : vector<16x128xf32>
    %369 = arith.addf %367, %368 : vector<16x128xf32>
    %370 = math.tanh %369 : vector<16x128xf32>
    %371 = arith.mulf %364, %370 : vector<16x128xf32>
    %c0_192 = arith.constant 0 : index
    %c0_193 = arith.constant 0 : index
    %372 = vector.load %arg18[%c0_192, %c0_193] : memref<16x128xf32, #tpu.memory_space<vmem>>, vector<16x128xf32>
    tpu.vector_store %arg18[%c0_192, %c0_193], %369 {strides = array<i32>} : memref<16x128xf32, #tpu.memory_space<vmem>>, vector<16x128xf32>,
    %373 = arith.truncf %371 : vector<16x128xf32> to vector<16x128xbf16>
    %c0_194 = arith.constant 0 : index
    %c0_195 = arith.constant 0 : index
    %374 = vector.load %arg17[%c0_194, %c0_195] : memref<16x128xbf16, #tpu.memory_space<vmem>>, vector<16x128xbf16>
    tpu.vector_store %arg17[%c0_194, %c0_195], %373 {strides = array<i32>} : memref<16x128xbf16, #tpu.memory_space<vmem>>, vector<16x128xbf16>,
    %c0_196 = arith.constant 0 : index
    %c0_197 = arith.constant 0 : index
    %375 = vector.load %arg19[%c0_196, %c0_197] : memref<16x128xf32, #tpu.memory_space<vmem>>, vector<16x128xf32>
    %376 = arith.maximumf %375, %371 : vector<16x128xf32>
    %c0_198 = arith.constant 0 : index
    %c0_199 = arith.constant 0 : index
    %377 = vector.load %arg19[%c0_198, %c0_199] : memref<16x128xf32, #tpu.memory_space<vmem>>, vector<16x128xf32>
    tpu.vector_store %arg19[%c0_198, %c0_199], %376 {strides = array<i32>} : memref<16x128xf32, #tpu.memory_space<vmem>>, vector<16x128xf32>,
    %c3_i32_200 = arith.constant 3 : i32
    %378 = arith.index_cast %c3_i32_200 : i32 to index
    %c0_201 = arith.constant 0 : index
    %c0_202 = arith.constant 0 : index
    %379 = vector.load %arg16[%378, %c0_201, %c0_202] : memref<8x16x512xf32, #tpu.memory_space<vmem>>, vector<1x16x512xf32>
    %380 = vector.shape_cast %379 : vector<1x16x512xf32> to vector<16x512xf32>
    %c0_203 = arith.constant 0 : index
    %c0_204 = arith.constant 0 : index
    %381 = vector.load %arg17[%c0_203, %c0_204] : memref<16x128xbf16, #tpu.memory_space<vmem>>, vector<16x128xbf16>
    %c0_205 = arith.constant 0 : index
    %c0_206 = arith.constant 0 : index
    %382 = vector.load %arg7[%c0_205, %c0_206] : memref<128x512xbf16, #tpu.memory_space<vmem>>, vector<128x512xbf16>
    %cst_207 = arith.constant dense<0.000000e+00> : vector<16x512xf32>
    %383 = tpu.matmul %381, %382, %cst_207 {dimension_numbers = #tpu.dot_dimension_numbers<[1], [0], [0], [1], [0, 0, 1, 1], [], []>} : vector<16x128xbf16>, vector<128x512xbf16>, vector<16x512xf32> -> vector<16x512xf32>
    %384 = arith.addf %380, %383 : vector<16x512xf32>
    %c0_208 = arith.constant 0 : index
    %c0_209 = arith.constant 0 : index
    %385 = vector.load %arg18[%c0_208, %c0_209] : memref<16x128xf32, #tpu.memory_space<vmem>>, vector<16x128xf32>
    %386 = vector.extract_strided_slice %384 {offsets = [0, 0], sizes = [16, 384], strides = [1, 1]} : vector<16x512xf32> to vector<16x384xf32>
    %387 = arith.negf %386 : vector<16x384xf32>
    %388 = math.exp %387 : vector<16x384xf32>
    %cst_210 = arith.constant 1.000000e+00 : f32
    %389 = vector.broadcast %cst_210 : f32 to vector<16x384xf32>
    %390 = arith.addf %389, %388 : vector<16x384xf32>
    %391 = arith.divf %389, %390 : vector<16x384xf32>
    %392 = vector.extract_strided_slice %391 {offsets = [0, 0], sizes = [16, 128], strides = [1, 1]} : vector<16x384xf32> to vector<16x128xf32>
    %393 = vector.extract_strided_slice %391 {offsets = [0, 128], sizes = [16, 128], strides = [1, 1]} : vector<16x384xf32> to vector<16x128xf32>
    %394 = vector.extract_strided_slice %391 {offsets = [0, 256], sizes = [16, 128], strides = [1, 1]} : vector<16x384xf32> to vector<16x128xf32>
    %395 = vector.extract_strided_slice %384 {offsets = [0, 384], sizes = [16, 128], strides = [1, 1]} : vector<16x512xf32> to vector<16x128xf32>
    %396 = math.tanh %395 : vector<16x128xf32>
    %397 = arith.mulf %393, %385 : vector<16x128xf32>
    %398 = arith.mulf %392, %396 : vector<16x128xf32>
    %399 = arith.addf %397, %398 : vector<16x128xf32>
    %400 = math.tanh %399 : vector<16x128xf32>
    %401 = arith.mulf %394, %400 : vector<16x128xf32>
    %c0_211 = arith.constant 0 : index
    %c0_212 = arith.constant 0 : index
    %402 = vector.load %arg18[%c0_211, %c0_212] : memref<16x128xf32, #tpu.memory_space<vmem>>, vector<16x128xf32>
    tpu.vector_store %arg18[%c0_211, %c0_212], %399 {strides = array<i32>} : memref<16x128xf32, #tpu.memory_space<vmem>>, vector<16x128xf32>,
    %403 = arith.truncf %401 : vector<16x128xf32> to vector<16x128xbf16>
    %c0_213 = arith.constant 0 : index
    %c0_214 = arith.constant 0 : index
    %404 = vector.load %arg17[%c0_213, %c0_214] : memref<16x128xbf16, #tpu.memory_space<vmem>>, vector<16x128xbf16>
    tpu.vector_store %arg17[%c0_213, %c0_214], %403 {strides = array<i32>} : memref<16x128xbf16, #tpu.memory_space<vmem>>, vector<16x128xbf16>,
    %c0_215 = arith.constant 0 : index
    %c0_216 = arith.constant 0 : index
    %405 = vector.load %arg19[%c0_215, %c0_216] : memref<16x128xf32, #tpu.memory_space<vmem>>, vector<16x128xf32>
    %406 = arith.maximumf %405, %401 : vector<16x128xf32>
    %c0_217 = arith.constant 0 : index
    %c0_218 = arith.constant 0 : index
    %407 = vector.load %arg19[%c0_217, %c0_218] : memref<16x128xf32, #tpu.memory_space<vmem>>, vector<16x128xf32>
    tpu.vector_store %arg19[%c0_217, %c0_218], %406 {strides = array<i32>} : memref<16x128xf32, #tpu.memory_space<vmem>>, vector<16x128xf32>,
    %c4_i32_219 = arith.constant 4 : i32
    %408 = arith.index_cast %c4_i32_219 : i32 to index
    %c0_220 = arith.constant 0 : index
    %c0_221 = arith.constant 0 : index
    %409 = vector.load %arg16[%408, %c0_220, %c0_221] : memref<8x16x512xf32, #tpu.memory_space<vmem>>, vector<1x16x512xf32>
    %410 = vector.shape_cast %409 : vector<1x16x512xf32> to vector<16x512xf32>
    %c0_222 = arith.constant 0 : index
    %c0_223 = arith.constant 0 : index
    %411 = vector.load %arg17[%c0_222, %c0_223] : memref<16x128xbf16, #tpu.memory_space<vmem>>, vector<16x128xbf16>
    %c0_224 = arith.constant 0 : index
    %c0_225 = arith.constant 0 : index
    %412 = vector.load %arg7[%c0_224, %c0_225] : memref<128x512xbf16, #tpu.memory_space<vmem>>, vector<128x512xbf16>
    %cst_226 = arith.constant dense<0.000000e+00> : vector<16x512xf32>
    %413 = tpu.matmul %411, %412, %cst_226 {dimension_numbers = #tpu.dot_dimension_numbers<[1], [0], [0], [1], [0, 0, 1, 1], [], []>} : vector<16x128xbf16>, vector<128x512xbf16>, vector<16x512xf32> -> vector<16x512xf32>
    %414 = arith.addf %410, %413 : vector<16x512xf32>
    %c0_227 = arith.constant 0 : index
    %c0_228 = arith.constant 0 : index
    %415 = vector.load %arg18[%c0_227, %c0_228] : memref<16x128xf32, #tpu.memory_space<vmem>>, vector<16x128xf32>
    %416 = vector.extract_strided_slice %414 {offsets = [0, 0], sizes = [16, 384], strides = [1, 1]} : vector<16x512xf32> to vector<16x384xf32>
    %417 = arith.negf %416 : vector<16x384xf32>
    %418 = math.exp %417 : vector<16x384xf32>
    %cst_229 = arith.constant 1.000000e+00 : f32
    %419 = vector.broadcast %cst_229 : f32 to vector<16x384xf32>
    %420 = arith.addf %419, %418 : vector<16x384xf32>
    %421 = arith.divf %419, %420 : vector<16x384xf32>
    %422 = vector.extract_strided_slice %421 {offsets = [0, 0], sizes = [16, 128], strides = [1, 1]} : vector<16x384xf32> to vector<16x128xf32>
    %423 = vector.extract_strided_slice %421 {offsets = [0, 128], sizes = [16, 128], strides = [1, 1]} : vector<16x384xf32> to vector<16x128xf32>
    %424 = vector.extract_strided_slice %421 {offsets = [0, 256], sizes = [16, 128], strides = [1, 1]} : vector<16x384xf32> to vector<16x128xf32>
    %425 = vector.extract_strided_slice %414 {offsets = [0, 384], sizes = [16, 128], strides = [1, 1]} : vector<16x512xf32> to vector<16x128xf32>
    %426 = math.tanh %425 : vector<16x128xf32>
    %427 = arith.mulf %423, %415 : vector<16x128xf32>
    %428 = arith.mulf %422, %426 : vector<16x128xf32>
    %429 = arith.addf %427, %428 : vector<16x128xf32>
    %430 = math.tanh %429 : vector<16x128xf32>
    %431 = arith.mulf %424, %430 : vector<16x128xf32>
    %c0_230 = arith.constant 0 : index
    %c0_231 = arith.constant 0 : index
    %432 = vector.load %arg18[%c0_230, %c0_231] : memref<16x128xf32, #tpu.memory_space<vmem>>, vector<16x128xf32>
    tpu.vector_store %arg18[%c0_230, %c0_231], %429 {strides = array<i32>} : memref<16x128xf32, #tpu.memory_space<vmem>>, vector<16x128xf32>,
    %433 = arith.truncf %431 : vector<16x128xf32> to vector<16x128xbf16>
    %c0_232 = arith.constant 0 : index
    %c0_233 = arith.constant 0 : index
    %434 = vector.load %arg17[%c0_232, %c0_233] : memref<16x128xbf16, #tpu.memory_space<vmem>>, vector<16x128xbf16>
    tpu.vector_store %arg17[%c0_232, %c0_233], %433 {strides = array<i32>} : memref<16x128xbf16, #tpu.memory_space<vmem>>, vector<16x128xbf16>,
    %c0_234 = arith.constant 0 : index
    %c0_235 = arith.constant 0 : index
    %435 = vector.load %arg19[%c0_234, %c0_235] : memref<16x128xf32, #tpu.memory_space<vmem>>, vector<16x128xf32>
    %436 = arith.maximumf %435, %431 : vector<16x128xf32>
    %c0_236 = arith.constant 0 : index
    %c0_237 = arith.constant 0 : index
    %437 = vector.load %arg19[%c0_236, %c0_237] : memref<16x128xf32, #tpu.memory_space<vmem>>, vector<16x128xf32>
    tpu.vector_store %arg19[%c0_236, %c0_237], %436 {strides = array<i32>} : memref<16x128xf32, #tpu.memory_space<vmem>>, vector<16x128xf32>,
    %c5_i32_238 = arith.constant 5 : i32
    %438 = arith.index_cast %c5_i32_238 : i32 to index
    %c0_239 = arith.constant 0 : index
    %c0_240 = arith.constant 0 : index
    %439 = vector.load %arg16[%438, %c0_239, %c0_240] : memref<8x16x512xf32, #tpu.memory_space<vmem>>, vector<1x16x512xf32>
    %440 = vector.shape_cast %439 : vector<1x16x512xf32> to vector<16x512xf32>
    %c0_241 = arith.constant 0 : index
    %c0_242 = arith.constant 0 : index
    %441 = vector.load %arg17[%c0_241, %c0_242] : memref<16x128xbf16, #tpu.memory_space<vmem>>, vector<16x128xbf16>
    %c0_243 = arith.constant 0 : index
    %c0_244 = arith.constant 0 : index
    %442 = vector.load %arg7[%c0_243, %c0_244] : memref<128x512xbf16, #tpu.memory_space<vmem>>, vector<128x512xbf16>
    %cst_245 = arith.constant dense<0.000000e+00> : vector<16x512xf32>
    %443 = tpu.matmul %441, %442, %cst_245 {dimension_numbers = #tpu.dot_dimension_numbers<[1], [0], [0], [1], [0, 0, 1, 1], [], []>} : vector<16x128xbf16>, vector<128x512xbf16>, vector<16x512xf32> -> vector<16x512xf32>
    %444 = arith.addf %440, %443 : vector<16x512xf32>
    %c0_246 = arith.constant 0 : index
    %c0_247 = arith.constant 0 : index
    %445 = vector.load %arg18[%c0_246, %c0_247] : memref<16x128xf32, #tpu.memory_space<vmem>>, vector<16x128xf32>
    %446 = vector.extract_strided_slice %444 {offsets = [0, 0], sizes = [16, 384], strides = [1, 1]} : vector<16x512xf32> to vector<16x384xf32>
    %447 = arith.negf %446 : vector<16x384xf32>
    %448 = math.exp %447 : vector<16x384xf32>
    %cst_248 = arith.constant 1.000000e+00 : f32
    %449 = vector.broadcast %cst_248 : f32 to vector<16x384xf32>
    %450 = arith.addf %449, %448 : vector<16x384xf32>
    %451 = arith.divf %449, %450 : vector<16x384xf32>
    %452 = vector.extract_strided_slice %451 {offsets = [0, 0], sizes = [16, 128], strides = [1, 1]} : vector<16x384xf32> to vector<16x128xf32>
    %453 = vector.extract_strided_slice %451 {offsets = [0, 128], sizes = [16, 128], strides = [1, 1]} : vector<16x384xf32> to vector<16x128xf32>
    %454 = vector.extract_strided_slice %451 {offsets = [0, 256], sizes = [16, 128], strides = [1, 1]} : vector<16x384xf32> to vector<16x128xf32>
    %455 = vector.extract_strided_slice %444 {offsets = [0, 384], sizes = [16, 128], strides = [1, 1]} : vector<16x512xf32> to vector<16x128xf32>
    %456 = math.tanh %455 : vector<16x128xf32>
    %457 = arith.mulf %453, %445 : vector<16x128xf32>
    %458 = arith.mulf %452, %456 : vector<16x128xf32>
    %459 = arith.addf %457, %458 : vector<16x128xf32>
    %460 = math.tanh %459 : vector<16x128xf32>
    %461 = arith.mulf %454, %460 : vector<16x128xf32>
    %c0_249 = arith.constant 0 : index
    %c0_250 = arith.constant 0 : index
    %462 = vector.load %arg18[%c0_249, %c0_250] : memref<16x128xf32, #tpu.memory_space<vmem>>, vector<16x128xf32>
    tpu.vector_store %arg18[%c0_249, %c0_250], %459 {strides = array<i32>} : memref<16x128xf32, #tpu.memory_space<vmem>>, vector<16x128xf32>,
    %463 = arith.truncf %461 : vector<16x128xf32> to vector<16x128xbf16>
    %c0_251 = arith.constant 0 : index
    %c0_252 = arith.constant 0 : index
    %464 = vector.load %arg17[%c0_251, %c0_252] : memref<16x128xbf16, #tpu.memory_space<vmem>>, vector<16x128xbf16>
    tpu.vector_store %arg17[%c0_251, %c0_252], %463 {strides = array<i32>} : memref<16x128xbf16, #tpu.memory_space<vmem>>, vector<16x128xbf16>,
    %c0_253 = arith.constant 0 : index
    %c0_254 = arith.constant 0 : index
    %465 = vector.load %arg19[%c0_253, %c0_254] : memref<16x128xf32, #tpu.memory_space<vmem>>, vector<16x128xf32>
    %466 = arith.maximumf %465, %461 : vector<16x128xf32>
    %c0_255 = arith.constant 0 : index
    %c0_256 = arith.constant 0 : index
    %467 = vector.load %arg19[%c0_255, %c0_256] : memref<16x128xf32, #tpu.memory_space<vmem>>, vector<16x128xf32>
    tpu.vector_store %arg19[%c0_255, %c0_256], %466 {strides = array<i32>} : memref<16x128xf32, #tpu.memory_space<vmem>>, vector<16x128xf32>,
    %c6_i32_257 = arith.constant 6 : i32
    %468 = arith.index_cast %c6_i32_257 : i32 to index
    %c0_258 = arith.constant 0 : index
    %c0_259 = arith.constant 0 : index
    %469 = vector.load %arg16[%468, %c0_258, %c0_259] : memref<8x16x512xf32, #tpu.memory_space<vmem>>, vector<1x16x512xf32>
    %470 = vector.shape_cast %469 : vector<1x16x512xf32> to vector<16x512xf32>
    %c0_260 = arith.constant 0 : index
    %c0_261 = arith.constant 0 : index
    %471 = vector.load %arg17[%c0_260, %c0_261] : memref<16x128xbf16, #tpu.memory_space<vmem>>, vector<16x128xbf16>
    %c0_262 = arith.constant 0 : index
    %c0_263 = arith.constant 0 : index
    %472 = vector.load %arg7[%c0_262, %c0_263] : memref<128x512xbf16, #tpu.memory_space<vmem>>, vector<128x512xbf16>
    %cst_264 = arith.constant dense<0.000000e+00> : vector<16x512xf32>
    %473 = tpu.matmul %471, %472, %cst_264 {dimension_numbers = #tpu.dot_dimension_numbers<[1], [0], [0], [1], [0, 0, 1, 1], [], []>} : vector<16x128xbf16>, vector<128x512xbf16>, vector<16x512xf32> -> vector<16x512xf32>
    %474 = arith.addf %470, %473 : vector<16x512xf32>
    %c0_265 = arith.constant 0 : index
    %c0_266 = arith.constant 0 : index
    %475 = vector.load %arg18[%c0_265, %c0_266] : memref<16x128xf32, #tpu.memory_space<vmem>>, vector<16x128xf32>
    %476 = vector.extract_strided_slice %474 {offsets = [0, 0], sizes = [16, 384], strides = [1, 1]} : vector<16x512xf32> to vector<16x384xf32>
    %477 = arith.negf %476 : vector<16x384xf32>
    %478 = math.exp %477 : vector<16x384xf32>
    %cst_267 = arith.constant 1.000000e+00 : f32
    %479 = vector.broadcast %cst_267 : f32 to vector<16x384xf32>
    %480 = arith.addf %479, %478 : vector<16x384xf32>
    %481 = arith.divf %479, %480 : vector<16x384xf32>
    %482 = vector.extract_strided_slice %481 {offsets = [0, 0], sizes = [16, 128], strides = [1, 1]} : vector<16x384xf32> to vector<16x128xf32>
    %483 = vector.extract_strided_slice %481 {offsets = [0, 128], sizes = [16, 128], strides = [1, 1]} : vector<16x384xf32> to vector<16x128xf32>
    %484 = vector.extract_strided_slice %481 {offsets = [0, 256], sizes = [16, 128], strides = [1, 1]} : vector<16x384xf32> to vector<16x128xf32>
    %485 = vector.extract_strided_slice %474 {offsets = [0, 384], sizes = [16, 128], strides = [1, 1]} : vector<16x512xf32> to vector<16x128xf32>
    %486 = math.tanh %485 : vector<16x128xf32>
    %487 = arith.mulf %483, %475 : vector<16x128xf32>
    %488 = arith.mulf %482, %486 : vector<16x128xf32>
    %489 = arith.addf %487, %488 : vector<16x128xf32>
    %490 = math.tanh %489 : vector<16x128xf32>
    %491 = arith.mulf %484, %490 : vector<16x128xf32>
    %c0_268 = arith.constant 0 : index
    %c0_269 = arith.constant 0 : index
    %492 = vector.load %arg18[%c0_268, %c0_269] : memref<16x128xf32, #tpu.memory_space<vmem>>, vector<16x128xf32>
    tpu.vector_store %arg18[%c0_268, %c0_269], %489 {strides = array<i32>} : memref<16x128xf32, #tpu.memory_space<vmem>>, vector<16x128xf32>,
    %493 = arith.truncf %491 : vector<16x128xf32> to vector<16x128xbf16>
    %c0_270 = arith.constant 0 : index
    %c0_271 = arith.constant 0 : index
    %494 = vector.load %arg17[%c0_270, %c0_271] : memref<16x128xbf16, #tpu.memory_space<vmem>>, vector<16x128xbf16>
    tpu.vector_store %arg17[%c0_270, %c0_271], %493 {strides = array<i32>} : memref<16x128xbf16, #tpu.memory_space<vmem>>, vector<16x128xbf16>,
    %c0_272 = arith.constant 0 : index
    %c0_273 = arith.constant 0 : index
    %495 = vector.load %arg19[%c0_272, %c0_273] : memref<16x128xf32, #tpu.memory_space<vmem>>, vector<16x128xf32>
    %496 = arith.maximumf %495, %491 : vector<16x128xf32>
    %c0_274 = arith.constant 0 : index
    %c0_275 = arith.constant 0 : index
    %497 = vector.load %arg19[%c0_274, %c0_275] : memref<16x128xf32, #tpu.memory_space<vmem>>, vector<16x128xf32>
    tpu.vector_store %arg19[%c0_274, %c0_275], %496 {strides = array<i32>} : memref<16x128xf32, #tpu.memory_space<vmem>>, vector<16x128xf32>,
    %c7_i32_276 = arith.constant 7 : i32
    %498 = arith.index_cast %c7_i32_276 : i32 to index
    %c0_277 = arith.constant 0 : index
    %c0_278 = arith.constant 0 : index
    %499 = vector.load %arg16[%498, %c0_277, %c0_278] : memref<8x16x512xf32, #tpu.memory_space<vmem>>, vector<1x16x512xf32>
    %500 = vector.shape_cast %499 : vector<1x16x512xf32> to vector<16x512xf32>
    %c0_279 = arith.constant 0 : index
    %c0_280 = arith.constant 0 : index
    %501 = vector.load %arg17[%c0_279, %c0_280] : memref<16x128xbf16, #tpu.memory_space<vmem>>, vector<16x128xbf16>
    %c0_281 = arith.constant 0 : index
    %c0_282 = arith.constant 0 : index
    %502 = vector.load %arg7[%c0_281, %c0_282] : memref<128x512xbf16, #tpu.memory_space<vmem>>, vector<128x512xbf16>
    %cst_283 = arith.constant dense<0.000000e+00> : vector<16x512xf32>
    %503 = tpu.matmul %501, %502, %cst_283 {dimension_numbers = #tpu.dot_dimension_numbers<[1], [0], [0], [1], [0, 0, 1, 1], [], []>} : vector<16x128xbf16>, vector<128x512xbf16>, vector<16x512xf32> -> vector<16x512xf32>
    %504 = arith.addf %500, %503 : vector<16x512xf32>
    %c0_284 = arith.constant 0 : index
    %c0_285 = arith.constant 0 : index
    %505 = vector.load %arg18[%c0_284, %c0_285] : memref<16x128xf32, #tpu.memory_space<vmem>>, vector<16x128xf32>
    %506 = vector.extract_strided_slice %504 {offsets = [0, 0], sizes = [16, 384], strides = [1, 1]} : vector<16x512xf32> to vector<16x384xf32>
    %507 = arith.negf %506 : vector<16x384xf32>
    %508 = math.exp %507 : vector<16x384xf32>
    %cst_286 = arith.constant 1.000000e+00 : f32
    %509 = vector.broadcast %cst_286 : f32 to vector<16x384xf32>
    %510 = arith.addf %509, %508 : vector<16x384xf32>
    %511 = arith.divf %509, %510 : vector<16x384xf32>
    %512 = vector.extract_strided_slice %511 {offsets = [0, 0], sizes = [16, 128], strides = [1, 1]} : vector<16x384xf32> to vector<16x128xf32>
    %513 = vector.extract_strided_slice %511 {offsets = [0, 128], sizes = [16, 128], strides = [1, 1]} : vector<16x384xf32> to vector<16x128xf32>
    %514 = vector.extract_strided_slice %511 {offsets = [0, 256], sizes = [16, 128], strides = [1, 1]} : vector<16x384xf32> to vector<16x128xf32>
    %515 = vector.extract_strided_slice %504 {offsets = [0, 384], sizes = [16, 128], strides = [1, 1]} : vector<16x512xf32> to vector<16x128xf32>
    %516 = math.tanh %515 : vector<16x128xf32>
    %517 = arith.mulf %513, %505 : vector<16x128xf32>
    %518 = arith.mulf %512, %516 : vector<16x128xf32>
    %519 = arith.addf %517, %518 : vector<16x128xf32>
    %520 = math.tanh %519 : vector<16x128xf32>
    %521 = arith.mulf %514, %520 : vector<16x128xf32>
    %c0_287 = arith.constant 0 : index
    %c0_288 = arith.constant 0 : index
    %522 = vector.load %arg18[%c0_287, %c0_288] : memref<16x128xf32, #tpu.memory_space<vmem>>, vector<16x128xf32>
    tpu.vector_store %arg18[%c0_287, %c0_288], %519 {strides = array<i32>} : memref<16x128xf32, #tpu.memory_space<vmem>>, vector<16x128xf32>,
    %523 = arith.truncf %521 : vector<16x128xf32> to vector<16x128xbf16>
    %c0_289 = arith.constant 0 : index
    %c0_290 = arith.constant 0 : index
    %524 = vector.load %arg17[%c0_289, %c0_290] : memref<16x128xbf16, #tpu.memory_space<vmem>>, vector<16x128xbf16>
    tpu.vector_store %arg17[%c0_289, %c0_290], %523 {strides = array<i32>} : memref<16x128xbf16, #tpu.memory_space<vmem>>, vector<16x128xbf16>,
    %c0_291 = arith.constant 0 : index
    %c0_292 = arith.constant 0 : index
    %525 = vector.load %arg19[%c0_291, %c0_292] : memref<16x128xf32, #tpu.memory_space<vmem>>, vector<16x128xf32>
    %526 = arith.maximumf %525, %521 : vector<16x128xf32>
    %c0_293 = arith.constant 0 : index
    %c0_294 = arith.constant 0 : index
    %527 = vector.load %arg19[%c0_293, %c0_294] : memref<16x128xf32, #tpu.memory_space<vmem>>, vector<16x128xf32>
    tpu.vector_store %arg19[%c0_293, %c0_294], %526 {strides = array<i32>} : memref<16x128xf32, #tpu.memory_space<vmem>>, vector<16x128xf32>,
    %c8_i32_295 = arith.constant 8 : i32
    %c0_i32_296 = arith.constant 0 : i32
    %528 = arith.cmpi eq, %arg1, %c0_i32_296 : i32
    %529 = arith.extui %528 : i1 to i32
    %c0_i32_297 = arith.constant 0 : i32
    %530 = arith.cmpi ne, %529, %c0_i32_297 : i32
    scf.if %530 {
      %c0_298 = arith.constant 0 : index
      %c0_299 = arith.constant 0 : index
      %531 = vector.load %arg19[%c0_298, %c0_299] : memref<16x128xf32, #tpu.memory_space<vmem>>, vector<16x128xf32>
      %532 = arith.truncf %531 : vector<16x128xf32> to vector<16x128xbf16>
      %c0_300 = arith.constant 0 : index
      %c0_301 = arith.constant 0 : index
      %533 = vector.load %arg9[%c0_300, %c0_301] : memref<128x128xbf16, #tpu.memory_space<vmem>>, vector<128x128xbf16>
      %cst_302 = arith.constant dense<0.000000e+00> : vector<16x128xf32>
      %534 = tpu.matmul %532, %533, %cst_302 {dimension_numbers = #tpu.dot_dimension_numbers<[1], [0], [0], [1], [0, 0, 1, 1], [], []>} : vector<16x128xbf16>, vector<128x128xbf16>, vector<16x128xf32> -> vector<16x128xf32>
      %c0_303 = arith.constant 0 : index
      %c0_304 = arith.constant 0 : index
      %535 = vector.load %arg10[%c0_303, %c0_304] : memref<1x128xf32, #tpu.memory_space<vmem>>, vector<1x128xf32>
      %536 = vector.broadcast %535 : vector<1x128xf32> to vector<16x128xf32>
      %537 = arith.addf %534, %536 : vector<16x128xf32>
      %cst_305 = arith.constant 0.000000e+00 : f32
      %538 = vector.broadcast %cst_305 : f32 to vector<16x128xf32>
      %539 = arith.maximumf %537, %538 : vector<16x128xf32>
      %540 = arith.truncf %539 : vector<16x128xf32> to vector<16x128xbf16>
      %c0_306 = arith.constant 0 : index
      %c0_307 = arith.constant 0 : index
      %541 = vector.load %arg11[%c0_306, %c0_307] : memref<128x128xbf16, #tpu.memory_space<vmem>>, vector<128x128xbf16>
      %cst_308 = arith.constant dense<0.000000e+00> : vector<16x128xf32>
      %542 = tpu.matmul %540, %541, %cst_308 {dimension_numbers = #tpu.dot_dimension_numbers<[1], [0], [0], [1], [0, 0, 1, 1], [], []>} : vector<16x128xbf16>, vector<128x128xbf16>, vector<16x128xf32> -> vector<16x128xf32>
      %c0_309 = arith.constant 0 : index
      %c0_310 = arith.constant 0 : index
      %543 = vector.load %arg12[%c0_309, %c0_310] : memref<1x128xf32, #tpu.memory_space<vmem>>, vector<1x128xf32>
      %544 = vector.broadcast %543 : vector<1x128xf32> to vector<16x128xf32>
      %545 = arith.addf %542, %544 : vector<16x128xf32>
      %546 = arith.negf %545 : vector<16x128xf32>
      %547 = math.exp %546 : vector<16x128xf32>
      %cst_311 = arith.constant 1.000000e+00 : f32
      %548 = vector.broadcast %cst_311 : f32 to vector<16x128xf32>
      %549 = arith.addf %548, %547 : vector<16x128xf32>
      %550 = arith.divf %548, %549 : vector<16x128xf32>
      %c0_312 = arith.constant 0 : index
      %c0_313 = arith.constant 0 : index
      %551 = vector.load %arg13[%c0_312, %c0_313] : memref<16x128xf32, #tpu.memory_space<vmem>>, vector<16x128xf32>
      tpu.vector_store %arg13[%c0_312, %c0_313], %550 {strides = array<i32>} : memref<16x128xf32, #tpu.memory_space<vmem>>, vector<16x128xf32>,
    } else {
    }
    return
  }
  func.func @transform_0(%arg0: i32, %arg1: i32) -> (i32, i32, i32) {
    %c0_i32 = arith.constant 0 : i32
    %c0_i32_0 = arith.constant 0 : i32
    return %arg1, %arg0, %c0_i32 : i32, i32, i32
  }
  func.func @transform_1(%arg0: i32, %arg1: i32) -> (i32, i32) {
    %c0_i32 = arith.constant 0 : i32
    %c0_i32_0 = arith.constant 0 : i32
    %c0_i32_1 = arith.constant 0 : i32
    return %c0_i32, %c0_i32_0 : i32, i32
  }
  func.func @transform_2(%arg0: i32, %arg1: i32) -> (i32, i32) {
    %c0_i32 = arith.constant 0 : i32
    %c0_i32_0 = arith.constant 0 : i32
    %c0_i32_1 = arith.constant 0 : i32
    return %c0_i32, %c0_i32_0 : i32, i32
  }
  func.func @transform_3(%arg0: i32, %arg1: i32) -> (i32, i32) {
    %c0_i32 = arith.constant 0 : i32
    %c0_i32_0 = arith.constant 0 : i32
    %c0_i32_1 = arith.constant 0 : i32
    return %c0_i32, %c0_i32_0 : i32, i32
  }
  func.func @transform_4(%arg0: i32, %arg1: i32) -> (i32, i32) {
    %c0_i32 = arith.constant 0 : i32
    %c0_i32_0 = arith.constant 0 : i32
    %c0_i32_1 = arith.constant 0 : i32
    return %c0_i32, %c0_i32_0 : i32, i32
  }
  func.func @transform_5(%arg0: i32, %arg1: i32) -> (i32, i32) {
    %c0_i32 = arith.constant 0 : i32
    %c0_i32_0 = arith.constant 0 : i32
    %c0_i32_1 = arith.constant 0 : i32
    return %c0_i32, %c0_i32_0 : i32, i32
  }
  func.func @transform_6(%arg0: i32, %arg1: i32) -> (i32, i32) {
    %c0_i32 = arith.constant 0 : i32
    %c0_i32_0 = arith.constant 0 : i32
    %c0_i32_1 = arith.constant 0 : i32
    return %c0_i32, %c0_i32_0 : i32, i32
  }
  func.func @transform_7(%arg0: i32, %arg1: i32) -> (i32, i32) {
    %c0_i32 = arith.constant 0 : i32
    %c0_i32_0 = arith.constant 0 : i32
    %c0_i32_1 = arith.constant 0 : i32
    return %c0_i32, %c0_i32_0 : i32, i32
  }
  func.func @transform_8(%arg0: i32, %arg1: i32) -> (i32, i32) {
    %c0_i32 = arith.constant 0 : i32
    %c0_i32_0 = arith.constant 0 : i32
    %c0_i32_1 = arith.constant 0 : i32
    return %c0_i32, %c0_i32_0 : i32, i32
  }
  func.func @transform_9(%arg0: i32, %arg1: i32) -> (i32, i32) {
    %c0_i32 = arith.constant 0 : i32
    %c0_i32_0 = arith.constant 0 : i32
    %c0_i32_1 = arith.constant 0 : i32
    return %c0_i32, %c0_i32_0 : i32, i32
  }
  func.func @transform_10(%arg0: i32, %arg1: i32) -> (i32, i32) {
    %c0_i32 = arith.constant 0 : i32
    %c0_i32_0 = arith.constant 0 : i32
    %c0_i32_1 = arith.constant 0 : i32
    return %c0_i32, %c0_i32_0 : i32, i32
  }
  func.func @transform_11(%arg0: i32, %arg1: i32) -> (i32, i32) {
    %c0_i32 = arith.constant 0 : i32
    %c0_i32_0 = arith.constant 0 : i32
    return %arg0, %c0_i32 : i32, i32
  }
}

</mosaic_0001>

<llo_original>
// kernel: fake_news_detector_forward.1
$region0: #{fake_news_detector_forward.1}
  #allocation0 [shape = 'u32[]', space=smem, size = 0x4, offset = 0x4, fixed_abs, tag = 'smem constant byte address 0x4 - core index']
  #allocation1 [shape = 'u32[144,128]{1,0:T(1,128)}', space=vmem, size = 0x12000, scoped, tag = 'internal scratch']
  #allocation2 [shape = 'bf16[9,16,128]{2,1,0:T(8,128)(2,1)}', space=vmem, size = 0x9000, scoped, tag = 'scratch operand']
  #allocation3 [shape = 'f32[16,128]{1,0:T(8,128)}', space=vmem, size = 0x2000, scoped, tag = 'scratch operand']
  #allocation4 [shape = 'f32[8,16,512]{2,1,0:T(8,128)}', space=vmem, size = 0x40000, scoped, tag = 'scratch operand']
  #allocation5 [shape = 'bf16[16,128]{1,0:T(8,128)(2,1)}', space=vmem, size = 0x1000, scoped, tag = 'scratch operand']
  #allocation6 [shape = 'f32[16,128]{1,0:T(8,128)}', space=vmem, size = 0x2000, scoped, tag = 'scratch operand']
  #allocation7 [shape = 'f32[16,128]{1,0:T(8,128)}', space=vmem, size = 0x2000, scoped, tag = 'scratch operand']
  %s0 = inlined_call_operand.vmem [shape: bf16[8,16,64], index: 0, kind: input, shape index: {}]
  %s1 = inlined_call_operand.vmem [shape: bf16[64,512], index: 1, kind: input, shape index: {}]
  %s2 = inlined_call_operand.vmem [shape: f32[1,512], index: 2, kind: input, shape index: {}]
  %s3 = inlined_call_operand.vmem [shape: bf16[128,512], index: 3, kind: input, shape index: {}]
  %s4 = inlined_call_operand.vmem [shape: bf16[128,512], index: 4, kind: input, shape index: {}]
  %s5 = inlined_call_operand.vmem [shape: bf16[128,512], index: 5, kind: input, shape index: {}]
  %s6 = inlined_call_operand.vmem [shape: f32[1,512], index: 6, kind: input, shape index: {}]
  %s7 = inlined_call_operand.hbm [shape: bf16[128,128], index: 7, kind: input, shape index: {}]
  %s8 = inlined_call_operand.vmem [shape: f32[1,128], index: 8, kind: input, shape index: {}]
  %s9 = inlined_call_operand.hbm [shape: bf16[128,128], index: 9, kind: input, shape index: {}]
  %s10 = inlined_call_operand.vmem [shape: f32[1,128], index: 10, kind: input, shape index: {}]
  %s11 = inlined_call_operand.vmem [shape: f32[16,128], index: 11, kind: output, shape index: {}]
  %s12 = sld [smem:[#allocation0]]
  $region74: #{fake_news_detector_forward.1} parent=0
    _
  %s14 = ssub.s32 1, %s12
  %s15 = scalar_select 0, %s14, %s12
  $region1: #{fake_news_detector_forward.1} parent=0
    #allocation8 [shape = 'u8[32768]{0}', space=vmem, size = 0x8000, scoped, tag = 'input window, operand 7, single buffered']
    #allocation9 [shape = 's32[1]{0}', space=sflag, size = 0x4, scoped, tag = 'scoped memory for fake_news_detector_forward.1']
    #allocation10 [shape = 'u8[32768]{0}', space=vmem, size = 0x8000, scoped, tag = 'input window, operand 9, single buffered']
    #allocation11 [shape = 's32[1]{0}', space=sflag, size = 0x4, scoped, tag = 'scoped memory for fake_news_detector_forward.1']
    %16 = vsyncpa [#allocation9], 0
    %17 = vsyncpa [#allocation11], 0
    // Predicated region
    $region2: #{fake_news_detector_forward.1} parent=1 // pred_check
      _
    $region3: #{fake_news_detector_forward.1} parent=1 // pred_check_branch
      %19 = sbr.rel (0) target = $region5
    $region4: #{fake_news_detector_forward.1} parent=1 // pred_region
      _
    $region5: #{fake_news_detector_forward.1} parent=1 // pred_fallthru
      _
    // Predicated region
    $region6: #{fake_news_detector_forward.1} parent=1 // pred_check
      _
    $region7: #{fake_news_detector_forward.1} parent=1 // pred_check_branch
      %21 = sbr.rel (0) target = $region9
    $region8: #{fake_news_detector_forward.1} parent=1 // pred_region
      _
    $region9: #{fake_news_detector_forward.1} parent=1 // pred_fallthru
      _
    // Predicated region
    $region10: #{fake_news_detector_forward.1} parent=1 // pred_check
      _
    $region11: #{fake_news_detector_forward.1} parent=1 // pred_check_branch
      %23 = sbr.rel (0) target = $region13
    $region12: #{fake_news_detector_forward.1} parent=1 // pred_region
      _
    $region13: #{fake_news_detector_forward.1} parent=1 // pred_fallthru
      _
    // Predicated region
    $region14: #{fake_news_detector_forward.1} parent=1 // pred_check
      _
    $region15: #{fake_news_detector_forward.1} parent=1 // pred_check_branch
      %25 = sbr.rel (0) target = $region17
    $region16: #{fake_news_detector_forward.1} parent=1 // pred_region
      _
    $region17: #{fake_news_detector_forward.1} parent=1 // pred_fallthru
      _
    // Predicated region
    $region18: #{fake_news_detector_forward.1} parent=1 // pred_check
      _
    $region19: #{fake_news_detector_forward.1} parent=1 // pred_check_branch
      %27 = sbr.rel (0) target = $region21
    $region20: #{fake_news_detector_forward.1} parent=1 // pred_region
      _
    $region21: #{fake_news_detector_forward.1} parent=1 // pred_fallthru
      _
    // Predicated region
    $region22: #{fake_news_detector_forward.1} parent=1 // pred_check
      _
    $region23: #{fake_news_detector_forward.1} parent=1 // pred_check_branch
      %29 = sbr.rel (0) target = $region25
    $region24: #{fake_news_detector_forward.1} parent=1 // pred_region
      _
    $region25: #{fake_news_detector_forward.1} parent=1 // pred_fallthru
      _
    // Predicated region
    $region26: #{fake_news_detector_forward.1} parent=1 // pred_check
      _
    $region27: #{fake_news_detector_forward.1} parent=1 // pred_check_branch
      %31 = sbr.rel (0) target = $region29
    $region28: #{fake_news_detector_forward.1} parent=1 // pred_region
      _
    $region29: #{fake_news_detector_forward.1} parent=1 // pred_fallthru
      _
    // Predicated region
    $region30: #{fake_news_detector_forward.1} parent=1 // pred_check
      _
    $region31: #{fake_news_detector_forward.1} parent=1 // pred_check_branch
      %33 = sbr.rel (0) target = $region33
    $region32: #{fake_news_detector_forward.1} parent=1 // pred_region
      %s35 = ssub.s32 1024, 1024
      %36 = vsyncadd [#allocation9], %s35
      %s37 = sshll.u32 [#allocation8], 4
      %s38 = int_to_ptr.vmem [resolvable:$true] %s37
      %43 = dma.hbm_to_vmem [thread:$0]  %s7, 1024, %s38, [#allocation9], 64, 64, 4
    $region33: #{fake_news_detector_forward.1} parent=1 // pred_fallthru
      _
    // Predicated region
    $region34: #{fake_news_detector_forward.1} parent=1 // pred_check
      _
    $region35: #{fake_news_detector_forward.1} parent=1 // pred_check_branch
      %45 = sbr.rel (0) target = $region37
    $region36: #{fake_news_detector_forward.1} parent=1 // pred_region
      _
    $region37: #{fake_news_detector_forward.1} parent=1 // pred_fallthru
      _
    // Predicated region
    $region38: #{fake_news_detector_forward.1} parent=1 // pred_check
      _
    $region39: #{fake_news_detector_forward.1} parent=1 // pred_check_branch
      %47 = sbr.rel (0) target = $region41
    $region40: #{fake_news_detector_forward.1} parent=1 // pred_region
      %s49 = ssub.s32 1024, 1024
      %50 = vsyncadd [#allocation11], %s49
      %s51 = sshll.u32 [#allocation10], 4
      %s52 = int_to_ptr.vmem [resolvable:$true] %s51
      %57 = dma.hbm_to_vmem [thread:$0]  %s9, 1024, %s52, [#allocation11], 64, 64, 4
    $region41: #{fake_news_detector_forward.1} parent=1 // pred_fallthru
      _
    // Predicated region
    $region42: #{fake_news_detector_forward.1} parent=1 // pred_check
      _
    $region43: #{fake_news_detector_forward.1} parent=1 // pred_check_branch
      %59 = sbr.rel (0) target = $region45
    $region44: #{fake_news_detector_forward.1} parent=1 // pred_region
      _
    $region45: #{fake_news_detector_forward.1} parent=1 // pred_fallthru
      _
    // Predicated region
    $region46: #{fake_news_detector_forward.1} parent=1 // pred_check
      _
    $region47: #{fake_news_detector_forward.1} parent=1 // pred_check_branch
      %61 = sbr.rel (0) target = $region49
    $region48: #{fake_news_detector_forward.1} parent=1 // pred_region
      %62 = dma.done [#allocation9], 1024
    $region49: #{fake_news_detector_forward.1} parent=1 // pred_fallthru
      _
    // Predicated region
    $region50: #{fake_news_detector_forward.1} parent=1 // pred_check
      _
    $region51: #{fake_news_detector_forward.1} parent=1 // pred_check_branch
      %64 = sbr.rel (0) target = $region53
    $region52: #{fake_news_detector_forward.1} parent=1 // pred_region
      %65 = dma.done [#allocation11], 1024
    $region53: #{fake_news_detector_forward.1} parent=1 // pred_fallthru
      _
    %p67 = scmp.eq.s32.totalorder 0, 0
    // Predicated region
    $region54: #{fake_news_detector_forward.1} parent=1 // pred_check
      %p68 = pneg %p67
    $region55: #{fake_news_detector_forward.1} parent=1 // pred_check_branch
      %70 = sbr.rel (%p68) target = $region57
    $region56: #{fake_news_detector_forward.1} parent=1 // pred_region
      %71 = vst [vmem:[#allocation2] sm:$0xf] 0
      %72 = vst [vmem:[#allocation2 + $0x4] sm:$0xf] 0
      %73 = vst [vmem:[#allocation3] sm:$0xff] 0.0
      %74 = vst [vmem:[#allocation3 + $0x8] sm:$0xff] 0.0
      %75 = vst [vmem:[#allocation5] sm:$0xf] 0
      %76 = vst [vmem:[#allocation5 + $0x4] sm:$0xf] 0
      %77 = vst [vmem:[#allocation6] sm:$0xff] 0.0
      %78 = vst [vmem:[#allocation6 + $0x8] sm:$0xff] 0.0
      %79 = vst [vmem:[#allocation7] sm:$0xff] -inf
      %80 = vst [vmem:[#allocation7 + $0x8] sm:$0xff] -inf
    $region57: #{fake_news_detector_forward.1} parent=1 // pred_fallthru
      _
    %p81 = scmp.ne.s32.totalorder 0, 0
    // Predicated region
    $region58: #{fake_news_detector_forward.1} parent=1 // pred_check
      %p82 = pneg %p81
    $region59: #{fake_news_detector_forward.1} parent=1 // pred_check_branch
      %84 = sbr.rel (%p82) target = $region61
    $region60: #{fake_news_detector_forward.1} parent=1 // pred_region
      %s85 = scalar_lea.vmem [#allocation2], 64
      %v86 = vld [vmem:[%s85] sm:$0xf]
      %v87 = vld [vmem:[%s85 + $0x4] sm:$0xf]
      %88 = vst [vmem:[#allocation2] sm:$0xf] %v86
      %89 = vst [vmem:[#allocation2 + $0x4] sm:$0xf] %v87
    $region61: #{fake_news_detector_forward.1} parent=1 // pred_fallthru
      _
    %v90 = vld [vmem:[%s0] sm:$0xf]
    %v91 = vld [vmem:[%s0 + $0x4] sm:$0xf]
    %v92 = vld [vmem:[%s0 + $0x8] sm:$0xf]
    %v93 = vld [vmem:[%s0 + $0xc] sm:$0xf]
    %v94 = vld [vmem:[%s0 + $0x10] sm:$0xf]
    %v95 = vld [vmem:[%s0 + $0x14] sm:$0xf]
    %v96 = vld [vmem:[%s0 + $0x18] sm:$0xf]
    %v97 = vld [vmem:[%s0 + $0x1c] sm:$0xf]
    %v98 = vld [vmem:[%s0 + $0x20] sm:$0xf]
    %v99 = vld [vmem:[%s0 + $0x24] sm:$0xf]
    %v100 = vld [vmem:[%s0 + $0x28] sm:$0xf]
    %v101 = vld [vmem:[%s0 + $0x2c] sm:$0xf]
    %v102 = vld [vmem:[%s0 + $0x30] sm:$0xf]
    %v103 = vld [vmem:[%s0 + $0x34] sm:$0xf]
    %v104 = vld [vmem:[%s0 + $0x38] sm:$0xf]
    %v105 = vld [vmem:[%s0 + $0x3c] sm:$0xf]
    %v106 = vld [vmem:[%s1] sm:$0xff]
    %v107 = vld [vmem:[%s1 + $0x8] sm:$0xff]
    %v108 = vld [vmem:[%s1 + $0x10] sm:$0xff]
    %v109 = vld [vmem:[%s1 + $0x18] sm:$0xff]
    %v110 = vld [vmem:[%s1 + $0x20] sm:$0xff]
    %v111 = vld [vmem:[%s1 + $0x28] sm:$0xff]
    %v112 = vld [vmem:[%s1 + $0x30] sm:$0xff]
    %v113 = vld [vmem:[%s1 + $0x38] sm:$0xff]
    %v114 = vld [vmem:[%s1 + $0x40] sm:$0xff]
    %v115 = vld [vmem:[%s1 + $0x48] sm:$0xff]
    %v116 = vld [vmem:[%s1 + $0x50] sm:$0xff]
    %v117 = vld [vmem:[%s1 + $0x58] sm:$0xff]
    %v118 = vld [vmem:[%s1 + $0x60] sm:$0xff]
    %v119 = vld [vmem:[%s1 + $0x68] sm:$0xff]
    %v120 = vld [vmem:[%s1 + $0x70] sm:$0xff]
    %v121 = vld [vmem:[%s1 + $0x78] sm:$0xff]
    %v122 = vld [vmem:[%s2] sm:$0xf]
    %v124 = vlaneseq
    %v125 = vshrl.u32 %v124, 7
    %v126 = vsub.s32 0, %v125
    %v127 = vrot.slane %v122, %v126
    %v128 = vlaneseq
    %v129 = vshrl.u32 %v128, 7
    %v130 = vsub.s32 1, %v129
    %v131 = vrot.slane %v122, %v130
    %v132 = vlaneseq
    %v133 = vshrl.u32 %v132, 7
    %v134 = vsub.s32 2, %v133
    %v135 = vrot.slane %v122, %v134
    %v136 = vlaneseq
    %v137 = vshrl.u32 %v136, 7
    %v138 = vsub.s32 3, %v137
    %v139 = vrot.slane %v122, %v138
    %v160 = vunpack.c.l.b16 %v90
    %v161 = vunpack.c.l.b16 %v91
    %v162 = vunpack.c.l.b16 %v92
    %v163 = vunpack.c.l.b16 %v93
    %v164 = vunpack.c.l.b16 %v94
    %v165 = vunpack.c.l.b16 %v95
    %v166 = vunpack.c.l.b16 %v96
    %v167 = vunpack.c.l.b16 %v97
    %v168 = vunpack.c.l.b16 %v98
    %v169 = vunpack.c.l.b16 %v99
    %v170 = vunpack.c.l.b16 %v100
    %v171 = vunpack.c.l.b16 %v101
    %v172 = vunpack.c.l.b16 %v102
    %v173 = vunpack.c.l.b16 %v103
    %v174 = vunpack.c.l.b16 %v104
    %v175 = vunpack.c.l.b16 %v105
    %v176 = vpack.c.b16 %v161, %v160
    %v177 = vpack.c.b16 %v163, %v162
    %v178 = vpack.c.b16 %v165, %v164
    %v179 = vpack.c.b16 %v167, %v166
    %v180 = vpack.c.b16 %v169, %v168
    %v181 = vpack.c.b16 %v171, %v170
    %v182 = vpack.c.b16 %v173, %v172
    %v183 = vpack.c.b16 %v175, %v174
    %v200 = vunpack.c.l.b16 %v106
    %v201 = vunpack.c.h.b16 %v106
    %v202 = vunpack.c.l.b16 %v107
    %v203 = vunpack.c.h.b16 %v107
    %v204 = vunpack.c.l.b16 %v108
    %v205 = vunpack.c.h.b16 %v108
    %v206 = vunpack.c.l.b16 %v109
    %v207 = vunpack.c.h.b16 %v109
    %v208 = vunpack.c.l.b16 %v110
    %v209 = vunpack.c.h.b16 %v110
    %v210 = vunpack.c.l.b16 %v111
    %v211 = vunpack.c.h.b16 %v111
    %v212 = vunpack.c.l.b16 %v112
    %v213 = vunpack.c.h.b16 %v112
    %v214 = vunpack.c.l.b16 %v113
    %v215 = vunpack.c.h.b16 %v113
    %v216 = vunpack.c.l.b16 %v114
    %v217 = vunpack.c.h.b16 %v114
    %v218 = vunpack.c.l.b16 %v115
    %v219 = vunpack.c.h.b16 %v115
    %v220 = vunpack.c.l.b16 %v116
    %v221 = vunpack.c.h.b16 %v116
    %v222 = vunpack.c.l.b16 %v117
    %v223 = vunpack.c.h.b16 %v117
    %v224 = vunpack.c.l.b16 %v118
    %v225 = vunpack.c.h.b16 %v118
    %v226 = vunpack.c.l.b16 %v119
    %v227 = vunpack.c.h.b16 %v119
    %v228 = vunpack.c.l.b16 %v120
    %v229 = vunpack.c.h.b16 %v120
    %v230 = vunpack.c.l.b16 %v121
    %v231 = vunpack.c.h.b16 %v121
    %v232 = vpack.c.b16 %v204, %v200
    %v233 = vpack.c.b16 %v205, %v201
    %v234 = vpack.c.b16 %v206, %v202
    %v235 = vpack.c.b16 %v207, %v203
    %v236 = vpack.c.b16 %v212, %v208
    %v237 = vpack.c.b16 %v213, %v209
    %v238 = vpack.c.b16 %v214, %v210
    %v239 = vpack.c.b16 %v215, %v211
    %v240 = vpack.c.b16 %v220, %v216
    %v241 = vpack.c.b16 %v221, %v217
    %v242 = vpack.c.b16 %v222, %v218
    %v243 = vpack.c.b16 %v223, %v219
    %v244 = vpack.c.b16 %v228, %v224
    %v245 = vpack.c.b16 %v229, %v225
    %v246 = vpack.c.b16 %v230, %v226
    %v247 = vpack.c.b16 %v231, %v227
    %vm264 = vcmask 523264
    %v266 = vsel %vm264, %v176, 0
    %v269 = vsel %vm264, %v177, 0
    %v272 = vsel %vm264, %v178, 0
    %v275 = vsel %vm264, %v179, 0
    %v278 = vsel %vm264, %v180, 0
    %v281 = vsel %vm264, %v181, 0
    %v284 = vsel %vm264, %v182, 0
    %v287 = vsel %vm264, %v183, 0
    %289 = vmatprep.subr.bf16.mxu0 0
    %290 = vmatpush1.bf16.msra.mxu0 0
    %291 = vmatprep.subr.bf16.mxu0 0
    %292 = vmatpush1.bf16.msra.mxu0 0
    %293 = vmatprep.subr.bf16.mxu0 0
    %294 = vmatpush1.bf16.msra.mxu0 0
    %295 = vmatprep.subr.bf16.mxu0 0
    %296 = vmatpush1.bf16.msra.mxu0 0
    %297 = vmatprep.subr.bf16.mxu0 %v245
    %298 = vmatpush1.bf16.msra.mxu0 %v244
    %299 = vmatprep.subr.bf16.mxu0 %v241
    %300 = vmatpush1.bf16.msra.mxu0 %v240
    %301 = vmatprep.subr.bf16.mxu0 %v237
    %302 = vmatpush1.bf16.msra.mxu0 %v236
    %303 = vmatprep.subr.bf16.mxu0 %v233
    %304 = vmatpush1.bf16.msra.mxu0 %v232
    %305 = vmatprep.subr.bf16.mxu0 0
    %306 = vmatpush2.bf16.msra.mxu0 0
    %307 = vmatprep.subr.bf16.mxu0 0
    %308 = vmatpush2.bf16.msra.mxu0 0
    %309 = vmatprep.subr.bf16.mxu0 0
    %310 = vmatpush2.bf16.msra.mxu0 0
    %311 = vmatprep.subr.bf16.mxu0 0
    %312 = vmatpush2.bf16.msra.mxu0 0
    %313 = vmatprep.subr.bf16.mxu0 0
    %314 = vmatpush2.bf16.msra.mxu0 0
    %315 = vmatprep.subr.bf16.mxu0 0
    %316 = vmatpush2.bf16.msra.mxu0 0
    %317 = vmatprep.subr.bf16.mxu0 0
    %318 = vmatpush2.bf16.msra.mxu0 0
    %319 = vmatprep.subr.bf16.mxu0 0
    %320 = vmatpush2.bf16.msra.mxu0 0
    %321 = vmatprep.mubr.bf16.mxu0 0
    %322 = vmatmul.mubr.bf16.gmra.mxu0 %v266
    %v323 = vpop.f32.mrf.mxu0
    %v324 = vadd.f32 %v127, %v323
    %v325 = vpop.f32.mrf.mxu0
    %v326 = vadd.f32 %v131, %v325
    %v327 = vpop.f32.mrf.mxu0
    %v328 = vadd.f32 %v127, %v327
    %v329 = vpop.f32.mrf.mxu0
    %v330 = vadd.f32 %v131, %v329
    %331 = vmatprep.mubr.bf16.mxu0 0
    %332 = vmatmul.mubr.bf16.gmra.mxu0 %v269
    %v333 = vpop.f32.mrf.mxu0
    %v334 = vadd.f32 %v127, %v333
    %v335 = vpop.f32.mrf.mxu0
    %v336 = vadd.f32 %v131, %v335
    %v337 = vpop.f32.mrf.mxu0
    %v338 = vadd.f32 %v127, %v337
    %v339 = vpop.f32.mrf.mxu0
    %v340 = vadd.f32 %v131, %v339
    %341 = vmatprep.mubr.bf16.mxu0 0
    %342 = vmatmul.mubr.bf16.gmra.mxu0 %v272
    %v343 = vpop.f32.mrf.mxu0
    %v344 = vadd.f32 %v127, %v343
    %v345 = vpop.f32.mrf.mxu0
    %v346 = vadd.f32 %v131, %v345
    %v347 = vpop.f32.mrf.mxu0
    %v348 = vadd.f32 %v127, %v347
    %v349 = vpop.f32.mrf.mxu0
    %v350 = vadd.f32 %v131, %v349
    %351 = vmatprep.mubr.bf16.mxu0 0
    %352 = vmatmul.mubr.bf16.gmra.mxu0 %v275
    %v353 = vpop.f32.mrf.mxu0
    %v354 = vadd.f32 %v127, %v353
    %v355 = vpop.f32.mrf.mxu0
    %v356 = vadd.f32 %v131, %v355
    %v357 = vpop.f32.mrf.mxu0
    %v358 = vadd.f32 %v127, %v357
    %v359 = vpop.f32.mrf.mxu0
    %v360 = vadd.f32 %v131, %v359
    %361 = vmatprep.mubr.bf16.mxu0 0
    %362 = vmatmul.mubr.bf16.gmra.mxu0 %v278
    %v363 = vpop.f32.mrf.mxu0
    %v364 = vadd.f32 %v127, %v363
    %v365 = vpop.f32.mrf.mxu0
    %v366 = vadd.f32 %v131, %v365
    %v367 = vpop.f32.mrf.mxu0
    %v368 = vadd.f32 %v127, %v367
    %v369 = vpop.f32.mrf.mxu0
    %v370 = vadd.f32 %v131, %v369
    %371 = vmatprep.mubr.bf16.mxu0 0
    %372 = vmatmul.mubr.bf16.gmra.mxu0 %v281
    %v373 = vpop.f32.mrf.mxu0
    %v374 = vadd.f32 %v127, %v373
    %v375 = vpop.f32.mrf.mxu0
    %v376 = vadd.f32 %v131, %v375
    %v377 = vpop.f32.mrf.mxu0
    %v378 = vadd.f32 %v127, %v377
    %v379 = vpop.f32.mrf.mxu0
    %v380 = vadd.f32 %v131, %v379
    %381 = vmatprep.mubr.bf16.mxu0 0
    %382 = vmatmul.mubr.bf16.gmra.mxu0 %v284
    %v383 = vpop.f32.mrf.mxu0
    %v384 = vadd.f32 %v127, %v383
    %v385 = vpop.f32.mrf.mxu0
    %v386 = vadd.f32 %v131, %v385
    %v387 = vpop.f32.mrf.mxu0
    %v388 = vadd.f32 %v127, %v387
    %v389 = vpop.f32.mrf.mxu0
    %v390 = vadd.f32 %v131, %v389
    %391 = vmatprep.mubr.bf16.mxu0 0
    %392 = vmatmul.mubr.bf16.gmra.mxu0 %v287
    %v393 = vpop.f32.mrf.mxu0
    %v394 = vadd.f32 %v127, %v393
    %v395 = vpop.f32.mrf.mxu0
    %v396 = vadd.f32 %v131, %v395
    %v397 = vpop.f32.mrf.mxu0
    %v398 = vadd.f32 %v127, %v397
    %v399 = vpop.f32.mrf.mxu0
    %v400 = vadd.f32 %v131, %v399
    %401 = vdwg.mxu0
    %402 = vmatprep.subr.bf16.mxu0 0
    %403 = vmatpush1.bf16.msra.mxu0 0
    %404 = vmatprep.subr.bf16.mxu0 0
    %405 = vmatpush1.bf16.msra.mxu0 0
    %406 = vmatprep.subr.bf16.mxu0 0
    %407 = vmatpush1.bf16.msra.mxu0 0
    %408 = vmatprep.subr.bf16.mxu0 0
    %409 = vmatpush1.bf16.msra.mxu0 0
    %410 = vmatprep.subr.bf16.mxu0 %v247
    %411 = vmatpush1.bf16.msra.mxu0 %v246
    %412 = vmatprep.subr.bf16.mxu0 %v243
    %413 = vmatpush1.bf16.msra.mxu0 %v242
    %414 = vmatprep.subr.bf16.mxu0 %v239
    %415 = vmatpush1.bf16.msra.mxu0 %v238
    %416 = vmatprep.subr.bf16.mxu0 %v235
    %417 = vmatpush1.bf16.msra.mxu0 %v234
    %418 = vmatprep.subr.bf16.mxu0 0
    %419 = vmatpush2.bf16.msra.mxu0 0
    %420 = vmatprep.subr.bf16.mxu0 0
    %421 = vmatpush2.bf16.msra.mxu0 0
    %422 = vmatprep.subr.bf16.mxu0 0
    %423 = vmatpush2.bf16.msra.mxu0 0
    %424 = vmatprep.subr.bf16.mxu0 0
    %425 = vmatpush2.bf16.msra.mxu0 0
    %426 = vmatprep.subr.bf16.mxu0 0
    %427 = vmatpush2.bf16.msra.mxu0 0
    %428 = vmatprep.subr.bf16.mxu0 0
    %429 = vmatpush2.bf16.msra.mxu0 0
    %430 = vmatprep.subr.bf16.mxu0 0
    %431 = vmatpush2.bf16.msra.mxu0 0
    %432 = vmatprep.subr.bf16.mxu0 0
    %433 = vmatpush2.bf16.msra.mxu0 0
    %434 = vmatprep.mubr.bf16.mxu0 0
    %435 = vmatmul.mubr.bf16.gmra.mxu0 %v266
    %v436 = vpop.f32.mrf.mxu0
    %v437 = vadd.f32 %v135, %v436
    %v438 = vpop.f32.mrf.mxu0
    %v439 = vadd.f32 %v139, %v438
    %v440 = vpop.f32.mrf.mxu0
    %v441 = vadd.f32 %v135, %v440
    %v442 = vpop.f32.mrf.mxu0
    %v443 = vadd.f32 %v139, %v442
    %444 = vmatprep.mubr.bf16.mxu0 0
    %445 = vmatmul.mubr.bf16.gmra.mxu0 %v269
    %v446 = vpop.f32.mrf.mxu0
    %v447 = vadd.f32 %v135, %v446
    %v448 = vpop.f32.mrf.mxu0
    %v449 = vadd.f32 %v139, %v448
    %v450 = vpop.f32.mrf.mxu0
    %v451 = vadd.f32 %v135, %v450
    %v452 = vpop.f32.mrf.mxu0
    %v453 = vadd.f32 %v139, %v452
    %454 = vmatprep.mubr.bf16.mxu0 0
    %455 = vmatmul.mubr.bf16.gmra.mxu0 %v272
    %v456 = vpop.f32.mrf.mxu0
    %v457 = vadd.f32 %v135, %v456
    %v458 = vpop.f32.mrf.mxu0
    %v459 = vadd.f32 %v139, %v458
    %v460 = vpop.f32.mrf.mxu0
    %v461 = vadd.f32 %v135, %v460
    %v462 = vpop.f32.mrf.mxu0
    %v463 = vadd.f32 %v139, %v462
    %464 = vmatprep.mubr.bf16.mxu0 0
    %465 = vmatmul.mubr.bf16.gmra.mxu0 %v275
    %v466 = vpop.f32.mrf.mxu0
    %v467 = vadd.f32 %v135, %v466
    %v468 = vpop.f32.mrf.mxu0
    %v469 = vadd.f32 %v139, %v468
    %v470 = vpop.f32.mrf.mxu0
    %v471 = vadd.f32 %v135, %v470
    %v472 = vpop.f32.mrf.mxu0
    %v473 = vadd.f32 %v139, %v472
    %474 = vmatprep.mubr.bf16.mxu0 0
    %475 = vmatmul.mubr.bf16.gmra.mxu0 %v278
    %v476 = vpop.f32.mrf.mxu0
    %v477 = vadd.f32 %v135, %v476
    %v478 = vpop.f32.mrf.mxu0
    %v479 = vadd.f32 %v139, %v478
    %v480 = vpop.f32.mrf.mxu0
    %v481 = vadd.f32 %v135, %v480
    %v482 = vpop.f32.mrf.mxu0
    %v483 = vadd.f32 %v139, %v482
    %484 = vmatprep.mubr.bf16.mxu0 0
    %485 = vmatmul.mubr.bf16.gmra.mxu0 %v281
    %v486 = vpop.f32.mrf.mxu0
    %v487 = vadd.f32 %v135, %v486
    %v488 = vpop.f32.mrf.mxu0
    %v489 = vadd.f32 %v139, %v488
    %v490 = vpop.f32.mrf.mxu0
    %v491 = vadd.f32 %v135, %v490
    %v492 = vpop.f32.mrf.mxu0
    %v493 = vadd.f32 %v139, %v492
    %494 = vmatprep.mubr.bf16.mxu0 0
    %495 = vmatmul.mubr.bf16.gmra.mxu0 %v284
    %v496 = vpop.f32.mrf.mxu0
    %v497 = vadd.f32 %v135, %v496
    %v498 = vpop.f32.mrf.mxu0
    %v499 = vadd.f32 %v139, %v498
    %v500 = vpop.f32.mrf.mxu0
    %v501 = vadd.f32 %v135, %v500
    %v502 = vpop.f32.mrf.mxu0
    %v503 = vadd.f32 %v139, %v502
    %504 = vmatprep.mubr.bf16.mxu0 0
    %505 = vmatmul.mubr.bf16.gmra.mxu0 %v287
    %v506 = vpop.f32.mrf.mxu0
    %v507 = vadd.f32 %v135, %v506
    %v508 = vpop.f32.mrf.mxu0
    %v509 = vadd.f32 %v139, %v508
    %v510 = vpop.f32.mrf.mxu0
    %v511 = vadd.f32 %v135, %v510
    %v512 = vpop.f32.mrf.mxu0
    %v513 = vadd.f32 %v139, %v512
    %514 = vdwg.mxu0
    %515 = vst [vmem:[#allocation4] sm:$0xff] %v324
    %516 = vst [vmem:[#allocation4 + $0x8] sm:$0xff] %v326
    %517 = vst [vmem:[#allocation4 + $0x10] sm:$0xff] %v437
    %518 = vst [vmem:[#allocation4 + $0x18] sm:$0xff] %v439
    %519 = vst [vmem:[#allocation4 + $0x20] sm:$0xff] %v328
    %520 = vst [vmem:[#allocation4 + $0x28] sm:$0xff] %v330
    %521 = vst [vmem:[#allocation4 + $0x30] sm:$0xff] %v441
    %522 = vst [vmem:[#allocation4 + $0x38] sm:$0xff] %v443
    %523 = vst [vmem:[#allocation4 + $0x40] sm:$0xff] %v334
    %524 = vst [vmem:[#allocation4 + $0x48] sm:$0xff] %v336
    %525 = vst [vmem:[#allocation4 + $0x50] sm:$0xff] %v447
    %526 = vst [vmem:[#allocation4 + $0x58] sm:$0xff] %v449
    %527 = vst [vmem:[#allocation4 + $0x60] sm:$0xff] %v338
    %528 = vst [vmem:[#allocation4 + $0x68] sm:$0xff] %v340
    %529 = vst [vmem:[#allocation4 + $0x70] sm:$0xff] %v451
    %530 = vst [vmem:[#allocation4 + $0x78] sm:$0xff] %v453
    %531 = vst [vmem:[#allocation4 + $0x80] sm:$0xff] %v344
    %532 = vst [vmem:[#allocation4 + $0x88] sm:$0xff] %v346
    %533 = vst [vmem:[#allocation4 + $0x90] sm:$0xff] %v457
    %534 = vst [vmem:[#allocation4 + $0x98] sm:$0xff] %v459
    %535 = vst [vmem:[#allocation4 + $0xa0] sm:$0xff] %v348
    %536 = vst [vmem:[#allocation4 + $0xa8] sm:$0xff] %v350
    %537 = vst [vmem:[#allocation4 + $0xb0] sm:$0xff] %v461
    %538 = vst [vmem:[#allocation4 + $0xb8] sm:$0xff] %v463
    %539 = vst [vmem:[#allocation4 + $0xc0] sm:$0xff] %v354
    %540 = vst [vmem:[#allocation4 + $0xc8] sm:$0xff] %v356
    %541 = vst [vmem:[#allocation4 + $0xd0] sm:$0xff] %v467
    %542 = vst [vmem:[#allocation4 + $0xd8] sm:$0xff] %v469
    %543 = vst [vmem:[#allocation4 + $0xe0] sm:$0xff] %v358
    %544 = vst [vmem:[#allocation4 + $0xe8] sm:$0xff] %v360
    %545 = vst [vmem:[#allocation4 + $0xf0] sm:$0xff] %v471
    %546 = vst [vmem:[#allocation4 + $0xf8] sm:$0xff] %v473
    %547 = vst [vmem:[#allocation4 + $0x100] sm:$0xff] %v364
    %548 = vst [vmem:[#allocation4 + $0x108] sm:$0xff] %v366
    %549 = vst [vmem:[#allocation4 + $0x110] sm:$0xff] %v477
    %550 = vst [vmem:[#allocation4 + $0x118] sm:$0xff] %v479
    %551 = vst [vmem:[#allocation4 + $0x120] sm:$0xff] %v368
    %552 = vst [vmem:[#allocation4 + $0x128] sm:$0xff] %v370
    %553 = vst [vmem:[#allocation4 + $0x130] sm:$0xff] %v481
    %554 = vst [vmem:[#allocation4 + $0x138] sm:$0xff] %v483
    %555 = vst [vmem:[#allocation4 + $0x140] sm:$0xff] %v374
    %556 = vst [vmem:[#allocation4 + $0x148] sm:$0xff] %v376
    %557 = vst [vmem:[#allocation4 + $0x150] sm:$0xff] %v487
    %558 = vst [vmem:[#allocation4 + $0x158] sm:$0xff] %v489
    %559 = vst [vmem:[#allocation4 + $0x160] sm:$0xff] %v378
    %560 = vst [vmem:[#allocation4 + $0x168] sm:$0xff] %v380
    %561 = vst [vmem:[#allocation4 + $0x170] sm:$0xff] %v491
    %562 = vst [vmem:[#allocation4 + $0x178] sm:$0xff] %v493
    %563 = vst [vmem:[#allocation4 + $0x180] sm:$0xff] %v384
    %564 = vst [vmem:[#allocation4 + $0x188] sm:$0xff] %v386
    %565 = vst [vmem:[#allocation4 + $0x190] sm:$0xff] %v497
    %566 = vst [vmem:[#allocation4 + $0x198] sm:$0xff] %v499
    %567 = vst [vmem:[#allocation4 + $0x1a0] sm:$0xff] %v388
    %568 = vst [vmem:[#allocation4 + $0x1a8] sm:$0xff] %v390
    %569 = vst [vmem:[#allocation4 + $0x1b0] sm:$0xff] %v501
    %570 = vst [vmem:[#allocation4 + $0x1b8] sm:$0xff] %v503
    %571 = vst [vmem:[#allocation4 + $0x1c0] sm:$0xff] %v394
    %572 = vst [vmem:[#allocation4 + $0x1c8] sm:$0xff] %v396
    %573 = vst [vmem:[#allocation4 + $0x1d0] sm:$0xff] %v507
    %574 = vst [vmem:[#allocation4 + $0x1d8] sm:$0xff] %v509
    %575 = vst [vmem:[#allocation4 + $0x1e0] sm:$0xff] %v398
    %576 = vst [vmem:[#allocation4 + $0x1e8] sm:$0xff] %v400
    %577 = vst [vmem:[#allocation4 + $0x1f0] sm:$0xff] %v511
    %578 = vst [vmem:[#allocation4 + $0x1f8] sm:$0xff] %v513
    %v579 = vld [vmem:[#allocation4] sm:$0xff]
    %v580 = vld [vmem:[#allocation4 + $0x8] sm:$0xff]
    %v581 = vld [vmem:[#allocation4 + $0x10] sm:$0xff]
    %v582 = vld [vmem:[#allocation4 + $0x18] sm:$0xff]
    %v583 = vld [vmem:[#allocation4 + $0x20] sm:$0xff]
    %v584 = vld [vmem:[#allocation4 + $0x28] sm:$0xff]
    %v585 = vld [vmem:[#allocation4 + $0x30] sm:$0xff]
    %v586 = vld [vmem:[#allocation4 + $0x38] sm:$0xff]
    %v587 = vld [vmem:[#allocation2] sm:$0xf]
    %v588 = vld [vmem:[#allocation2 + $0x4] sm:$0xf]
    %v589 = vld [vmem:[%s3] sm:$0xff]
    %v590 = vld [vmem:[%s3 + $0x8] sm:$0xff]
    %v591 = vld [vmem:[%s3 + $0x10] sm:$0xff]
    %v592 = vld [vmem:[%s3 + $0x18] sm:$0xff]
    %v593 = vld [vmem:[%s3 + $0x20] sm:$0xff]
    %v594 = vld [vmem:[%s3 + $0x28] sm:$0xff]
    %v595 = vld [vmem:[%s3 + $0x30] sm:$0xff]
    %v596 = vld [vmem:[%s3 + $0x38] sm:$0xff]
    %v597 = vld [vmem:[%s3 + $0x40] sm:$0xff]
    %v598 = vld [vmem:[%s3 + $0x48] sm:$0xff]
    %v599 = vld [vmem:[%s3 + $0x50] sm:$0xff]
    %v600 = vld [vmem:[%s3 + $0x58] sm:$0xff]
    %v601 = vld [vmem:[%s3 + $0x60] sm:$0xff]
    %v602 = vld [vmem:[%s3 + $0x68] sm:$0xff]
    %v603 = vld [vmem:[%s3 + $0x70] sm:$0xff]
    %v604 = vld [vmem:[%s3 + $0x78] sm:$0xff]
    %v605 = vld [vmem:[%s3 + $0x80] sm:$0xff]
    %v606 = vld [vmem:[%s3 + $0x88] sm:$0xff]
    %v607 = vld [vmem:[%s3 + $0x90] sm:$0xff]
    %v608 = vld [vmem:[%s3 + $0x98] sm:$0xff]
    %v609 = vld [vmem:[%s3 + $0xa0] sm:$0xff]
    %v610 = vld [vmem:[%s3 + $0xa8] sm:$0xff]
    %v611 = vld [vmem:[%s3 + $0xb0] sm:$0xff]
    %v612 = vld [vmem:[%s3 + $0xb8] sm:$0xff]
    %v613 = vld [vmem:[%s3 + $0xc0] sm:$0xff]
    %v614 = vld [vmem:[%s3 + $0xc8] sm:$0xff]
    %v615 = vld [vmem:[%s3 + $0xd0] sm:$0xff]
    %v616 = vld [vmem:[%s3 + $0xd8] sm:$0xff]
    %v617 = vld [vmem:[%s3 + $0xe0] sm:$0xff]
    %v618 = vld [vmem:[%s3 + $0xe8] sm:$0xff]
    %v619 = vld [vmem:[%s3 + $0xf0] sm:$0xff]
    %v620 = vld [vmem:[%s3 + $0xf8] sm:$0xff]
    %v623 = vunpack.c.l.b16 %v587
    %v624 = vunpack.c.l.b16 %v588
    %v625 = vpack.c.b16 %v624, %v623
    %v659 = vunpack.c.l.b16 %v589
    %v660 = vunpack.c.h.b16 %v589
    %v661 = vunpack.c.l.b16 %v590
    %v662 = vunpack.c.h.b16 %v590
    %v663 = vunpack.c.l.b16 %v591
    %v664 = vunpack.c.h.b16 %v591
    %v665 = vunpack.c.l.b16 %v592
    %v666 = vunpack.c.h.b16 %v592
    %v667 = vunpack.c.l.b16 %v593
    %v668 = vunpack.c.h.b16 %v593
    %v669 = vunpack.c.l.b16 %v594
    %v670 = vunpack.c.h.b16 %v594
    %v671 = vunpack.c.l.b16 %v595
    %v672 = vunpack.c.h.b16 %v595
    %v673 = vunpack.c.l.b16 %v596
    %v674 = vunpack.c.h.b16 %v596
    %v675 = vunpack.c.l.b16 %v597
    %v676 = vunpack.c.h.b16 %v597
    %v677 = vunpack.c.l.b16 %v598
    %v678 = vunpack.c.h.b16 %v598
    %v679 = vunpack.c.l.b16 %v599
    %v680 = vunpack.c.h.b16 %v599
    %v681 = vunpack.c.l.b16 %v600
    %v682 = vunpack.c.h.b16 %v600
    %v683 = vunpack.c.l.b16 %v601
    %v684 = vunpack.c.h.b16 %v601
    %v685 = vunpack.c.l.b16 %v602
    %v686 = vunpack.c.h.b16 %v602
    %v687 = vunpack.c.l.b16 %v603
    %v688 = vunpack.c.h.b16 %v603
    %v689 = vunpack.c.l.b16 %v604
    %v690 = vunpack.c.h.b16 %v604
    %v691 = vunpack.c.l.b16 %v605
    %v692 = vunpack.c.h.b16 %v605
    %v693 = vunpack.c.l.b16 %v606
    %v694 = vunpack.c.h.b16 %v606
    %v695 = vunpack.c.l.b16 %v607
    %v696 = vunpack.c.h.b16 %v607
    %v697 = vunpack.c.l.b16 %v608
    %v698 = vunpack.c.h.b16 %v608
    %v699 = vunpack.c.l.b16 %v609
    %v700 = vunpack.c.h.b16 %v609
    %v701 = vunpack.c.l.b16 %v610
    %v702 = vunpack.c.h.b16 %v610
    %v703 = vunpack.c.l.b16 %v611
    %v704 = vunpack.c.h.b16 %v611
    %v705 = vunpack.c.l.b16 %v612
    %v706 = vunpack.c.h.b16 %v612
    %v707 = vunpack.c.l.b16 %v613
    %v708 = vunpack.c.h.b16 %v613
    %v709 = vunpack.c.l.b16 %v614
    %v710 = vunpack.c.h.b16 %v614
    %v711 = vunpack.c.l.b16 %v615
    %v712 = vunpack.c.h.b16 %v615
    %v713 = vunpack.c.l.b16 %v616
    %v714 = vunpack.c.h.b16 %v616
    %v715 = vunpack.c.l.b16 %v617
    %v716 = vunpack.c.h.b16 %v617
    %v717 = vunpack.c.l.b16 %v618
    %v718 = vunpack.c.h.b16 %v618
    %v719 = vunpack.c.l.b16 %v619
    %v720 = vunpack.c.h.b16 %v619
    %v721 = vunpack.c.l.b16 %v620
    %v722 = vunpack.c.h.b16 %v620
    %v723 = vpack.c.b16 %v663, %v659
    %v724 = vpack.c.b16 %v664, %v660
    %v725 = vpack.c.b16 %v665, %v661
    %v726 = vpack.c.b16 %v666, %v662
    %v727 = vpack.c.b16 %v671, %v667
    %v728 = vpack.c.b16 %v672, %v668
    %v729 = vpack.c.b16 %v673, %v669
    %v730 = vpack.c.b16 %v674, %v670
    %v731 = vpack.c.b16 %v679, %v675
    %v732 = vpack.c.b16 %v680, %v676
    %v733 = vpack.c.b16 %v681, %v677
    %v734 = vpack.c.b16 %v682, %v678
    %v735 = vpack.c.b16 %v687, %v683
    %v736 = vpack.c.b16 %v688, %v684
    %v737 = vpack.c.b16 %v689, %v685
    %v738 = vpack.c.b16 %v690, %v686
    %v739 = vpack.c.b16 %v695, %v691
    %v740 = vpack.c.b16 %v696, %v692
    %v741 = vpack.c.b16 %v697, %v693
    %v742 = vpack.c.b16 %v698, %v694
    %v743 = vpack.c.b16 %v703, %v699
    %v744 = vpack.c.b16 %v704, %v700
    %v745 = vpack.c.b16 %v705, %v701
    %v746 = vpack.c.b16 %v706, %v702
    %v747 = vpack.c.b16 %v711, %v707
    %v748 = vpack.c.b16 %v712, %v708
    %v749 = vpack.c.b16 %v713, %v709
    %v750 = vpack.c.b16 %v714, %v710
    %v751 = vpack.c.b16 %v719, %v715
    %v752 = vpack.c.b16 %v720, %v716
    %v753 = vpack.c.b16 %v721, %v717
    %v754 = vpack.c.b16 %v722, %v718
    %787 = vmatprep.subr.bf16.mxu0 %v752
    %788 = vmatpush1.bf16.msra.mxu0 %v751
    %789 = vmatprep.subr.bf16.mxu0 %v748
    %790 = vmatpush1.bf16.msra.mxu0 %v747
    %791 = vmatprep.subr.bf16.mxu0 %v744
    %792 = vmatpush1.bf16.msra.mxu0 %v743
    %793 = vmatprep.subr.bf16.mxu0 %v740
    %794 = vmatpush1.bf16.msra.mxu0 %v739
    %795 = vmatprep.subr.bf16.mxu0 %v736
    %796 = vmatpush1.bf16.msra.mxu0 %v735
    %797 = vmatprep.subr.bf16.mxu0 %v732
    %798 = vmatpush1.bf16.msra.mxu0 %v731
    %799 = vmatprep.subr.bf16.mxu0 %v728
    %800 = vmatpush1.bf16.msra.mxu0 %v727
    %801 = vmatprep.subr.bf16.mxu0 %v724
    %802 = vmatpush1.bf16.msra.mxu0 %v723
    %803 = vmatprep.subr.bf16.mxu0 0
    %804 = vmatpush2.bf16.msra.mxu0 0
    %805 = vmatprep.subr.bf16.mxu0 0
    %806 = vmatpush2.bf16.msra.mxu0 0
    %807 = vmatprep.subr.bf16.mxu0 0
    %808 = vmatpush2.bf16.msra.mxu0 0
    %809 = vmatprep.subr.bf16.mxu0 0
    %810 = vmatpush2.bf16.msra.mxu0 0
    %811 = vmatprep.subr.bf16.mxu0 0
    %812 = vmatpush2.bf16.msra.mxu0 0
    %813 = vmatprep.subr.bf16.mxu0 0
    %814 = vmatpush2.bf16.msra.mxu0 0
    %815 = vmatprep.subr.bf16.mxu0 0
    %816 = vmatpush2.bf16.msra.mxu0 0
    %817 = vmatprep.subr.bf16.mxu0 0
    %818 = vmatpush2.bf16.msra.mxu0 0
    %819 = vmatprep.mubr.bf16.mxu0 0
    %820 = vmatmul.mubr.bf16.gmra.mxu0 %v625
    %v821 = vpop.f32.mrf.mxu0
    %v822 = vadd.f32 0.0, %v821
    %v823 = vpop.f32.mrf.mxu0
    %v824 = vadd.f32 0.0, %v823
    %v825 = vpop.f32.mrf.mxu0
    %v826 = vadd.f32 0.0, %v825
    %v827 = vpop.f32.mrf.mxu0
    %v828 = vadd.f32 0.0, %v827
    %829 = vdwg.mxu0
    %830 = vmatprep.subr.bf16.mxu0 %v754
    %831 = vmatpush1.bf16.msra.mxu0 %v753
    %832 = vmatprep.subr.bf16.mxu0 %v750
    %833 = vmatpush1.bf16.msra.mxu0 %v749
    %834 = vmatprep.subr.bf16.mxu0 %v746
    %835 = vmatpush1.bf16.msra.mxu0 %v745
    %836 = vmatprep.subr.bf16.mxu0 %v742
    %837 = vmatpush1.bf16.msra.mxu0 %v741
    %838 = vmatprep.subr.bf16.mxu0 %v738
    %839 = vmatpush1.bf16.msra.mxu0 %v737
    %840 = vmatprep.subr.bf16.mxu0 %v734
    %841 = vmatpush1.bf16.msra.mxu0 %v733
    %842 = vmatprep.subr.bf16.mxu0 %v730
    %843 = vmatpush1.bf16.msra.mxu0 %v729
    %844 = vmatprep.subr.bf16.mxu0 %v726
    %845 = vmatpush1.bf16.msra.mxu0 %v725
    %846 = vmatprep.subr.bf16.mxu0 0
    %847 = vmatpush2.bf16.msra.mxu0 0
    %848 = vmatprep.subr.bf16.mxu0 0
    %849 = vmatpush2.bf16.msra.mxu0 0
    %850 = vmatprep.subr.bf16.mxu0 0
    %851 = vmatpush2.bf16.msra.mxu0 0
    %852 = vmatprep.subr.bf16.mxu0 0
    %853 = vmatpush2.bf16.msra.mxu0 0
    %854 = vmatprep.subr.bf16.mxu0 0
    %855 = vmatpush2.bf16.msra.mxu0 0
    %856 = vmatprep.subr.bf16.mxu0 0
    %857 = vmatpush2.bf16.msra.mxu0 0
    %858 = vmatprep.subr.bf16.mxu0 0
    %859 = vmatpush2.bf16.msra.mxu0 0
    %860 = vmatprep.subr.bf16.mxu0 0
    %861 = vmatpush2.bf16.msra.mxu0 0
    %862 = vmatprep.mubr.bf16.mxu0 0
    %863 = vmatmul.mubr.bf16.gmra.mxu0 %v625
    %v864 = vpop.f32.mrf.mxu0
    %v865 = vadd.f32 0.0, %v864
    %v866 = vpop.f32.mrf.mxu0
    %v867 = vadd.f32 0.0, %v866
    %v868 = vpop.f32.mrf.mxu0
    %v869 = vadd.f32 0.0, %v868
    %v870 = vpop.f32.mrf.mxu0
    %v871 = vadd.f32 0.0, %v870
    %872 = vdwg.mxu0
    %v873 = vadd.f32 %v579, %v822
    %v874 = vadd.f32 %v580, %v824
    %v875 = vadd.f32 %v581, %v865
    %v876 = vadd.f32 %v582, %v867
    %v877 = vadd.f32 %v583, %v826
    %v878 = vadd.f32 %v584, %v828
    %v879 = vadd.f32 %v585, %v869
    %v880 = vadd.f32 %v586, %v871
    %v881 = vld [vmem:[#allocation3] sm:$0xff]
    %v882 = vld [vmem:[#allocation3 + $0x8] sm:$0xff]
    %v883 = vxor.u32 %v873, 2147483648
    %v884 = vxor.u32 %v874, 2147483648
    %v885 = vxor.u32 %v875, 2147483648
    %v886 = vxor.u32 %v877, 2147483648
    %v887 = vxor.u32 %v878, 2147483648
    %v888 = vxor.u32 %v879, 2147483648
    %v889 = vmul.f32 %v883, 1.442695
    %v890 = vpow.pop %v889
    %v891 = vmul.f32 %v884, 1.442695
    %v892 = vpow.pop %v891
    %v893 = vmul.f32 %v885, 1.442695
    %v894 = vpow.pop %v893
    %v895 = vmul.f32 %v886, 1.442695
    %v896 = vpow.pop %v895
    %v897 = vmul.f32 %v887, 1.442695
    %v898 = vpow.pop %v897
    %v899 = vmul.f32 %v888, 1.442695
    %v900 = vpow.pop %v899
    %v901 = vadd.f32 %v890, 1.0
    %v902 = vadd.f32 %v892, 1.0
    %v903 = vadd.f32 %v894, 1.0
    %v904 = vadd.f32 %v896, 1.0
    %v905 = vadd.f32 %v898, 1.0
    %v906 = vadd.f32 %v900, 1.0
    %v907 = vrcp.pop %v901
    %v908 = vmul.f32 1.0, %v907
    %v909 = vrcp.pop %v902
    %v910 = vmul.f32 1.0, %v909
    %v911 = vrcp.pop %v903
    %v912 = vmul.f32 1.0, %v911
    %v913 = vrcp.pop %v904
    %v914 = vmul.f32 1.0, %v913
    %v915 = vrcp.pop %v905
    %v916 = vmul.f32 1.0, %v915
    %v917 = vrcp.pop %v906
    %v918 = vmul.f32 1.0, %v917
    %v919 = vtanh.pop %v876
    %v920 = vtanh.pop %v880
    %v921 = vmul.f32 %v910, %v881
    %v922 = vmul.f32 %v916, %v882
    %v923 = vmul.f32 %v908, %v919
    %v924 = vmul.f32 %v914, %v920
    %v925 = vadd.f32 %v921, %v923
    %v926 = vadd.f32 %v922, %v924
    %v927 = vtanh.pop %v925
    %v928 = vtanh.pop %v926
    %v929 = vmul.f32 %v912, %v927
    %v930 = vmul.f32 %v918, %v928
    %931 = vst [vmem:[#allocation3] sm:$0xff] %v925
    %932 = vst [vmem:[#allocation3 + $0x8] sm:$0xff] %v926
    %v933 = vpack.c.bf16 %v930, %v929
    %v935 = vunpack.c.l.b16 %v933
    %v936 = vunpack.c.h.b16 %v933
    %v937 = vpack.c.b16 %v935, %v935
    %v938 = vpack.c.b16 %v936, %v936
    %s941 = scalar_lea.vmem [#allocation2], 8
    %942 = vst [vmem:[%s941] sm:$0xf] %v937
    %943 = vst [vmem:[%s941 + $0x4] sm:$0xf] %v938
    %s944 = scalar_lea.vmem [#allocation4], 64
    %v945 = vld [vmem:[%s944] sm:$0xff]
    %v946 = vld [vmem:[%s944 + $0x8] sm:$0xff]
    %v947 = vld [vmem:[%s944 + $0x10] sm:$0xff]
    %v948 = vld [vmem:[%s944 + $0x18] sm:$0xff]
    %v949 = vld [vmem:[%s944 + $0x20] sm:$0xff]
    %v950 = vld [vmem:[%s944 + $0x28] sm:$0xff]
    %v951 = vld [vmem:[%s944 + $0x30] sm:$0xff]
    %v952 = vld [vmem:[%s944 + $0x38] sm:$0xff]
    %v953 = vld [vmem:[%s941] sm:$0xf]
    %v954 = vld [vmem:[%s941 + $0x4] sm:$0xf]
    %v955 = vld [vmem:[%s3] sm:$0xff]
    %v956 = vld [vmem:[%s3 + $0x8] sm:$0xff]
    %v957 = vld [vmem:[%s3 + $0x10] sm:$0xff]
    %v958 = vld [vmem:[%s3 + $0x18] sm:$0xff]
    %v959 = vld [vmem:[%s3 + $0x20] sm:$0xff]
    %v960 = vld [vmem:[%s3 + $0x28] sm:$0xff]
    %v961 = vld [vmem:[%s3 + $0x30] sm:$0xff]
    %v962 = vld [vmem:[%s3 + $0x38] sm:$0xff]
    %v963 = vld [vmem:[%s3 + $0x40] sm:$0xff]
    %v964 = vld [vmem:[%s3 + $0x48] sm:$0xff]
    %v965 = vld [vmem:[%s3 + $0x50] sm:$0xff]
    %v966 = vld [vmem:[%s3 + $0x58] sm:$0xff]
    %v967 = vld [vmem:[%s3 + $0x60] sm:$0xff]
    %v968 = vld [vmem:[%s3 + $0x68] sm:$0xff]
    %v969 = vld [vmem:[%s3 + $0x70] sm:$0xff]
    %v970 = vld [vmem:[%s3 + $0x78] sm:$0xff]
    %v971 = vld [vmem:[%s3 + $0x80] sm:$0xff]
    %v972 = vld [vmem:[%s3 + $0x88] sm:$0xff]
    %v973 = vld [vmem:[%s3 + $0x90] sm:$0xff]
    %v974 = vld [vmem:[%s3 + $0x98] sm:$0xff]
    %v975 = vld [vmem:[%s3 + $0xa0] sm:$0xff]
    %v976 = vld [vmem:[%s3 + $0xa8] sm:$0xff]
    %v977 = vld [vmem:[%s3 + $0xb0] sm:$0xff]
    %v978 = vld [vmem:[%s3 + $0xb8] sm:$0xff]
    %v979 = vld [vmem:[%s3 + $0xc0] sm:$0xff]
    %v980 = vld [vmem:[%s3 + $0xc8] sm:$0xff]
    %v981 = vld [vmem:[%s3 + $0xd0] sm:$0xff]
    %v982 = vld [vmem:[%s3 + $0xd8] sm:$0xff]
    %v983 = vld [vmem:[%s3 + $0xe0] sm:$0xff]
    %v984 = vld [vmem:[%s3 + $0xe8] sm:$0xff]
    %v985 = vld [vmem:[%s3 + $0xf0] sm:$0xff]
    %v986 = vld [vmem:[%s3 + $0xf8] sm:$0xff]
    %v989 = vunpack.c.l.b16 %v953
    %v990 = vunpack.c.l.b16 %v954
    %v991 = vpack.c.b16 %v990, %v989
    %v1025 = vunpack.c.l.b16 %v955
    %v1026 = vunpack.c.h.b16 %v955
    %v1027 = vunpack.c.l.b16 %v956
    %v1028 = vunpack.c.h.b16 %v956
    %v1029 = vunpack.c.l.b16 %v957
    %v1030 = vunpack.c.h.b16 %v957
    %v1031 = vunpack.c.l.b16 %v958
    %v1032 = vunpack.c.h.b16 %v958
    %v1033 = vunpack.c.l.b16 %v959
    %v1034 = vunpack.c.h.b16 %v959
    %v1035 = vunpack.c.l.b16 %v960
    %v1036 = vunpack.c.h.b16 %v960
    %v1037 = vunpack.c.l.b16 %v961
    %v1038 = vunpack.c.h.b16 %v961
    %v1039 = vunpack.c.l.b16 %v962
    %v1040 = vunpack.c.h.b16 %v962
    %v1041 = vunpack.c.l.b16 %v963
    %v1042 = vunpack.c.h.b16 %v963
    %v1043 = vunpack.c.l.b16 %v964
    %v1044 = vunpack.c.h.b16 %v964
    %v1045 = vunpack.c.l.b16 %v965
    %v1046 = vunpack.c.h.b16 %v965
    %v1047 = vunpack.c.l.b16 %v966
    %v1048 = vunpack.c.h.b16 %v966
    %v1049 = vunpack.c.l.b16 %v967
    %v1050 = vunpack.c.h.b16 %v967
    %v1051 = vunpack.c.l.b16 %v968
    %v1052 = vunpack.c.h.b16 %v968
    %v1053 = vunpack.c.l.b16 %v969
    %v1054 = vunpack.c.h.b16 %v969
    %v1055 = vunpack.c.l.b16 %v970
    %v1056 = vunpack.c.h.b16 %v970
    %v1057 = vunpack.c.l.b16 %v971
    %v1058 = vunpack.c.h.b16 %v971
    %v1059 = vunpack.c.l.b16 %v972
    %v1060 = vunpack.c.h.b16 %v972
    %v1061 = vunpack.c.l.b16 %v973
    %v1062 = vunpack.c.h.b16 %v973
    %v1063 = vunpack.c.l.b16 %v974
    %v1064 = vunpack.c.h.b16 %v974
    %v1065 = vunpack.c.l.b16 %v975
    %v1066 = vunpack.c.h.b16 %v975
    %v1067 = vunpack.c.l.b16 %v976
    %v1068 = vunpack.c.h.b16 %v976
    %v1069 = vunpack.c.l.b16 %v977
    %v1070 = vunpack.c.h.b16 %v977
    %v1071 = vunpack.c.l.b16 %v978
    %v1072 = vunpack.c.h.b16 %v978
    %v1073 = vunpack.c.l.b16 %v979
    %v1074 = vunpack.c.h.b16 %v979
    %v1075 = vunpack.c.l.b16 %v980
    %v1076 = vunpack.c.h.b16 %v980
    %v1077 = vunpack.c.l.b16 %v981
    %v1078 = vunpack.c.h.b16 %v981
    %v1079 = vunpack.c.l.b16 %v982
    %v1080 = vunpack.c.h.b16 %v982
    %v1081 = vunpack.c.l.b16 %v983
    %v1082 = vunpack.c.h.b16 %v983
    %v1083 = vunpack.c.l.b16 %v984
    %v1084 = vunpack.c.h.b16 %v984
    %v1085 = vunpack.c.l.b16 %v985
    %v1086 = vunpack.c.h.b16 %v985
    %v1087 = vunpack.c.l.b16 %v986
    %v1088 = vunpack.c.h.b16 %v986
    %v1089 = vpack.c.b16 %v1029, %v1025
    %v1090 = vpack.c.b16 %v1030, %v1026
    %v1091 = vpack.c.b16 %v1031, %v1027
    %v1092 = vpack.c.b16 %v1032, %v1028
    %v1093 = vpack.c.b16 %v1037, %v1033
    %v1094 = vpack.c.b16 %v1038, %v1034
    %v1095 = vpack.c.b16 %v1039, %v1035
    %v1096 = vpack.c.b16 %v1040, %v1036
    %v1097 = vpack.c.b16 %v1045, %v1041
    %v1098 = vpack.c.b16 %v1046, %v1042
    %v1099 = vpack.c.b16 %v1047, %v1043
    %v1100 = vpack.c.b16 %v1048, %v1044
    %v1101 = vpack.c.b16 %v1053, %v1049
    %v1102 = vpack.c.b16 %v1054, %v1050
    %v1103 = vpack.c.b16 %v1055, %v1051
    %v1104 = vpack.c.b16 %v1056, %v1052
    %v1105 = vpack.c.b16 %v1061, %v1057
    %v1106 = vpack.c.b16 %v1062, %v1058
    %v1107 = vpack.c.b16 %v1063, %v1059
    %v1108 = vpack.c.b16 %v1064, %v1060
    %v1109 = vpack.c.b16 %v1069, %v1065
    %v1110 = vpack.c.b16 %v1070, %v1066
    %v1111 = vpack.c.b16 %v1071, %v1067
    %v1112 = vpack.c.b16 %v1072, %v1068
    %v1113 = vpack.c.b16 %v1077, %v1073
    %v1114 = vpack.c.b16 %v1078, %v1074
    %v1115 = vpack.c.b16 %v1079, %v1075
    %v1116 = vpack.c.b16 %v1080, %v1076
    %v1117 = vpack.c.b16 %v1085, %v1081
    %v1118 = vpack.c.b16 %v1086, %v1082
    %v1119 = vpack.c.b16 %v1087, %v1083
    %v1120 = vpack.c.b16 %v1088, %v1084
    %1153 = vmatprep.subr.bf16.mxu0 %v1118
    %1154 = vmatpush1.bf16.msra.mxu0 %v1117
    %1155 = vmatprep.subr.bf16.mxu0 %v1114
    %1156 = vmatpush1.bf16.msra.mxu0 %v1113
    %1157 = vmatprep.subr.bf16.mxu0 %v1110
    %1158 = vmatpush1.bf16.msra.mxu0 %v1109
    %1159 = vmatprep.subr.bf16.mxu0 %v1106
    %1160 = vmatpush1.bf16.msra.mxu0 %v1105
    %1161 = vmatprep.subr.bf16.mxu0 %v1102
    %1162 = vmatpush1.bf16.msra.mxu0 %v1101
    %1163 = vmatprep.subr.bf16.mxu0 %v1098
    %1164 = vmatpush1.bf16.msra.mxu0 %v1097
    %1165 = vmatprep.subr.bf16.mxu0 %v1094
    %1166 = vmatpush1.bf16.msra.mxu0 %v1093
    %1167 = vmatprep.subr.bf16.mxu0 %v1090
    %1168 = vmatpush1.bf16.msra.mxu0 %v1089
    %1169 = vmatprep.subr.bf16.mxu0 0
    %1170 = vmatpush2.bf16.msra.mxu0 0
    %1171 = vmatprep.subr.bf16.mxu0 0
    %1172 = vmatpush2.bf16.msra.mxu0 0
    %1173 = vmatprep.subr.bf16.mxu0 0
    %1174 = vmatpush2.bf16.msra.mxu0 0
    %1175 = vmatprep.subr.bf16.mxu0 0
    %1176 = vmatpush2.bf16.msra.mxu0 0
    %1177 = vmatprep.subr.bf16.mxu0 0
    %1178 = vmatpush2.bf16.msra.mxu0 0
    %1179 = vmatprep.subr.bf16.mxu0 0
    %1180 = vmatpush2.bf16.msra.mxu0 0
    %1181 = vmatprep.subr.bf16.mxu0 0
    %1182 = vmatpush2.bf16.msra.mxu0 0
    %1183 = vmatprep.subr.bf16.mxu0 0
    %1184 = vmatpush2.bf16.msra.mxu0 0
    %1185 = vmatprep.mubr.bf16.mxu0 0
    %1186 = vmatmul.mubr.bf16.gmra.mxu0 %v991
    %v1187 = vpop.f32.mrf.mxu0
    %v1188 = vadd.f32 0.0, %v1187
    %v1189 = vpop.f32.mrf.mxu0
    %v1190 = vadd.f32 0.0, %v1189
    %v1191 = vpop.f32.mrf.mxu0
    %v1192 = vadd.f32 0.0, %v1191
    %v1193 = vpop.f32.mrf.mxu0
    %v1194 = vadd.f32 0.0, %v1193
    %1195 = vdwg.mxu0
    %1196 = vmatprep.subr.bf16.mxu0 %v1120
    %1197 = vmatpush1.bf16.msra.mxu0 %v1119
    %1198 = vmatprep.subr.bf16.mxu0 %v1116
    %1199 = vmatpush1.bf16.msra.mxu0 %v1115
    %1200 = vmatprep.subr.bf16.mxu0 %v1112
    %1201 = vmatpush1.bf16.msra.mxu0 %v1111
    %1202 = vmatprep.subr.bf16.mxu0 %v1108
    %1203 = vmatpush1.bf16.msra.mxu0 %v1107
    %1204 = vmatprep.subr.bf16.mxu0 %v1104
    %1205 = vmatpush1.bf16.msra.mxu0 %v1103
    %1206 = vmatprep.subr.bf16.mxu0 %v1100
    %1207 = vmatpush1.bf16.msra.mxu0 %v1099
    %1208 = vmatprep.subr.bf16.mxu0 %v1096
    %1209 = vmatpush1.bf16.msra.mxu0 %v1095
    %1210 = vmatprep.subr.bf16.mxu0 %v1092
    %1211 = vmatpush1.bf16.msra.mxu0 %v1091
    %1212 = vmatprep.subr.bf16.mxu0 0
    %1213 = vmatpush2.bf16.msra.mxu0 0
    %1214 = vmatprep.subr.bf16.mxu0 0
    %1215 = vmatpush2.bf16.msra.mxu0 0
    %1216 = vmatprep.subr.bf16.mxu0 0
    %1217 = vmatpush2.bf16.msra.mxu0 0
    %1218 = vmatprep.subr.bf16.mxu0 0
    %1219 = vmatpush2.bf16.msra.mxu0 0
    %1220 = vmatprep.subr.bf16.mxu0 0
    %1221 = vmatpush2.bf16.msra.mxu0 0
    %1222 = vmatprep.subr.bf16.mxu0 0
    %1223 = vmatpush2.bf16.msra.mxu0 0
    %1224 = vmatprep.subr.bf16.mxu0 0
    %1225 = vmatpush2.bf16.msra.mxu0 0
    %1226 = vmatprep.subr.bf16.mxu0 0
    %1227 = vmatpush2.bf16.msra.mxu0 0
    %1228 = vmatprep.mubr.bf16.mxu0 0
    %1229 = vmatmul.mubr.bf16.gmra.mxu0 %v991
    %v1230 = vpop.f32.mrf.mxu0
    %v1231 = vadd.f32 0.0, %v1230
    %v1232 = vpop.f32.mrf.mxu0
    %v1233 = vadd.f32 0.0, %v1232
    %v1234 = vpop.f32.mrf.mxu0
    %v1235 = vadd.f32 0.0, %v1234
    %v1236 = vpop.f32.mrf.mxu0
    %v1237 = vadd.f32 0.0, %v1236
    %1238 = vdwg.mxu0
    %v1239 = vadd.f32 %v945, %v1188
    %v1240 = vadd.f32 %v946, %v1190
    %v1241 = vadd.f32 %v947, %v1231
    %v1242 = vadd.f32 %v948, %v1233
    %v1243 = vadd.f32 %v949, %v1192
    %v1244 = vadd.f32 %v950, %v1194
    %v1245 = vadd.f32 %v951, %v1235
    %v1246 = vadd.f32 %v952, %v1237
    %v1247 = vld [vmem:[#allocation3] sm:$0xff]
    %v1248 = vld [vmem:[#allocation3 + $0x8] sm:$0xff]
    %v1249 = vxor.u32 %v1239, 2147483648
    %v1250 = vxor.u32 %v1240, 2147483648
    %v1251 = vxor.u32 %v1241, 2147483648
    %v1252 = vxor.u32 %v1243, 2147483648
    %v1253 = vxor.u32 %v1244, 2147483648
    %v1254 = vxor.u32 %v1245, 2147483648
    %v1255 = vmul.f32 %v1249, 1.442695
    %v1256 = vpow.pop %v1255
    %v1257 = vmul.f32 %v1250, 1.442695
    %v1258 = vpow.pop %v1257
    %v1259 = vmul.f32 %v1251, 1.442695
    %v1260 = vpow.pop %v1259
    %v1261 = vmul.f32 %v1252, 1.442695
    %v1262 = vpow.pop %v1261
    %v1263 = vmul.f32 %v1253, 1.442695
    %v1264 = vpow.pop %v1263
    %v1265 = vmul.f32 %v1254, 1.442695
    %v1266 = vpow.pop %v1265
    %v1267 = vadd.f32 %v1256, 1.0
    %v1268 = vadd.f32 %v1258, 1.0
    %v1269 = vadd.f32 %v1260, 1.0
    %v1270 = vadd.f32 %v1262, 1.0
    %v1271 = vadd.f32 %v1264, 1.0
    %v1272 = vadd.f32 %v1266, 1.0
    %v1273 = vrcp.pop %v1267
    %v1274 = vmul.f32 1.0, %v1273
    %v1275 = vrcp.pop %v1268
    %v1276 = vmul.f32 1.0, %v1275
    %v1277 = vrcp.pop %v1269
    %v1278 = vmul.f32 1.0, %v1277
    %v1279 = vrcp.pop %v1270
    %v1280 = vmul.f32 1.0, %v1279
    %v1281 = vrcp.pop %v1271
    %v1282 = vmul.f32 1.0, %v1281
    %v1283 = vrcp.pop %v1272
    %v1284 = vmul.f32 1.0, %v1283
    %v1285 = vtanh.pop %v1242
    %v1286 = vtanh.pop %v1246
    %v1287 = vmul.f32 %v1276, %v1247
    %v1288 = vmul.f32 %v1282, %v1248
    %v1289 = vmul.f32 %v1274, %v1285
    %v1290 = vmul.f32 %v1280, %v1286
    %v1291 = vadd.f32 %v1287, %v1289
    %v1292 = vadd.f32 %v1288, %v1290
    %v1293 = vtanh.pop %v1291
    %v1294 = vtanh.pop %v1292
    %v1295 = vmul.f32 %v1278, %v1293
    %v1296 = vmul.f32 %v1284, %v1294
    %1297 = vst [vmem:[#allocation3] sm:$0xff] %v1291
    %1298 = vst [vmem:[#allocation3 + $0x8] sm:$0xff] %v1292
    %v1299 = vpack.c.bf16 %v1296, %v1295
    %v1301 = vunpack.c.l.b16 %v1299
    %v1302 = vunpack.c.h.b16 %v1299
    %v1303 = vpack.c.b16 %v1301, %v1301
    %v1304 = vpack.c.b16 %v1302, %v1302
    %s1307 = scalar_lea.vmem [#allocation2], 16
    %1308 = vst [vmem:[%s1307] sm:$0xf] %v1303
    %1309 = vst [vmem:[%s1307 + $0x4] sm:$0xf] %v1304
    %s1310 = scalar_lea.vmem [#allocation4], 128
    %v1311 = vld [vmem:[%s1310] sm:$0xff]
    %v1312 = vld [vmem:[%s1310 + $0x8] sm:$0xff]
    %v1313 = vld [vmem:[%s1310 + $0x10] sm:$0xff]
    %v1314 = vld [vmem:[%s1310 + $0x18] sm:$0xff]
    %v1315 = vld [vmem:[%s1310 + $0x20] sm:$0xff]
    %v1316 = vld [vmem:[%s1310 + $0x28] sm:$0xff]
    %v1317 = vld [vmem:[%s1310 + $0x30] sm:$0xff]
    %v1318 = vld [vmem:[%s1310 + $0x38] sm:$0xff]
    %v1319 = vld [vmem:[%s1307] sm:$0xf]
    %v1320 = vld [vmem:[%s1307 + $0x4] sm:$0xf]
    %v1321 = vld [vmem:[%s3] sm:$0xff]
    %v1322 = vld [vmem:[%s3 + $0x8] sm:$0xff]
    %v1323 = vld [vmem:[%s3 + $0x10] sm:$0xff]
    %v1324 = vld [vmem:[%s3 + $0x18] sm:$0xff]
    %v1325 = vld [vmem:[%s3 + $0x20] sm:$0xff]
    %v1326 = vld [vmem:[%s3 + $0x28] sm:$0xff]
    %v1327 = vld [vmem:[%s3 + $0x30] sm:$0xff]
    %v1328 = vld [vmem:[%s3 + $0x38] sm:$0xff]
    %v1329 = vld [vmem:[%s3 + $0x40] sm:$0xff]
    %v1330 = vld [vmem:[%s3 + $0x48] sm:$0xff]
    %v1331 = vld [vmem:[%s3 + $0x50] sm:$0xff]
    %v1332 = vld [vmem:[%s3 + $0x58] sm:$0xff]
    %v1333 = vld [vmem:[%s3 + $0x60] sm:$0xff]
    %v1334 = vld [vmem:[%s3 + $0x68] sm:$0xff]
    %v1335 = vld [vmem:[%s3 + $0x70] sm:$0xff]
    %v1336 = vld [vmem:[%s3 + $0x78] sm:$0xff]
    %v1337 = vld [vmem:[%s3 + $0x80] sm:$0xff]
    %v1338 = vld [vmem:[%s3 + $0x88] sm:$0xff]
    %v1339 = vld [vmem:[%s3 + $0x90] sm:$0xff]
    %v1340 = vld [vmem:[%s3 + $0x98] sm:$0xff]
    %v1341 = vld [vmem:[%s3 + $0xa0] sm:$0xff]
    %v1342 = vld [vmem:[%s3 + $0xa8] sm:$0xff]
    %v1343 = vld [vmem:[%s3 + $0xb0] sm:$0xff]
    %v1344 = vld [vmem:[%s3 + $0xb8] sm:$0xff]
    %v1345 = vld [vmem:[%s3 + $0xc0] sm:$0xff]
    %v1346 = vld [vmem:[%s3 + $0xc8] sm:$0xff]
    %v1347 = vld [vmem:[%s3 + $0xd0] sm:$0xff]
    %v1348 = vld [vmem:[%s3 + $0xd8] sm:$0xff]
    %v1349 = vld [vmem:[%s3 + $0xe0] sm:$0xff]
    %v1350 = vld [vmem:[%s3 + $0xe8] sm:$0xff]
    %v1351 = vld [vmem:[%s3 + $0xf0] sm:$0xff]
    %v1352 = vld [vmem:[%s3 + $0xf8] sm:$0xff]
    %v1355 = vunpack.c.l.b16 %v1319
    %v1356 = vunpack.c.l.b16 %v1320
    %v1357 = vpack.c.b16 %v1356, %v1355
    %v1391 = vunpack.c.l.b16 %v1321
    %v1392 = vunpack.c.h.b16 %v1321
    %v1393 = vunpack.c.l.b16 %v1322
    %v1394 = vunpack.c.h.b16 %v1322
    %v1395 = vunpack.c.l.b16 %v1323
    %v1396 = vunpack.c.h.b16 %v1323
    %v1397 = vunpack.c.l.b16 %v1324
    %v1398 = vunpack.c.h.b16 %v1324
    %v1399 = vunpack.c.l.b16 %v1325
    %v1400 = vunpack.c.h.b16 %v1325
    %v1401 = vunpack.c.l.b16 %v1326
    %v1402 = vunpack.c.h.b16 %v1326
    %v1403 = vunpack.c.l.b16 %v1327
    %v1404 = vunpack.c.h.b16 %v1327
    %v1405 = vunpack.c.l.b16 %v1328
    %v1406 = vunpack.c.h.b16 %v1328
    %v1407 = vunpack.c.l.b16 %v1329
    %v1408 = vunpack.c.h.b16 %v1329
    %v1409 = vunpack.c.l.b16 %v1330
    %v1410 = vunpack.c.h.b16 %v1330
    %v1411 = vunpack.c.l.b16 %v1331
    %v1412 = vunpack.c.h.b16 %v1331
    %v1413 = vunpack.c.l.b16 %v1332
    %v1414 = vunpack.c.h.b16 %v1332
    %v1415 = vunpack.c.l.b16 %v1333
    %v1416 = vunpack.c.h.b16 %v1333
    %v1417 = vunpack.c.l.b16 %v1334
    %v1418 = vunpack.c.h.b16 %v1334
    %v1419 = vunpack.c.l.b16 %v1335
    %v1420 = vunpack.c.h.b16 %v1335
    %v1421 = vunpack.c.l.b16 %v1336
    %v1422 = vunpack.c.h.b16 %v1336
    %v1423 = vunpack.c.l.b16 %v1337
    %v1424 = vunpack.c.h.b16 %v1337
    %v1425 = vunpack.c.l.b16 %v1338
    %v1426 = vunpack.c.h.b16 %v1338
    %v1427 = vunpack.c.l.b16 %v1339
    %v1428 = vunpack.c.h.b16 %v1339
    %v1429 = vunpack.c.l.b16 %v1340
    %v1430 = vunpack.c.h.b16 %v1340
    %v1431 = vunpack.c.l.b16 %v1341
    %v1432 = vunpack.c.h.b16 %v1341
    %v1433 = vunpack.c.l.b16 %v1342
    %v1434 = vunpack.c.h.b16 %v1342
    %v1435 = vunpack.c.l.b16 %v1343
    %v1436 = vunpack.c.h.b16 %v1343
    %v1437 = vunpack.c.l.b16 %v1344
    %v1438 = vunpack.c.h.b16 %v1344
    %v1439 = vunpack.c.l.b16 %v1345
    %v1440 = vunpack.c.h.b16 %v1345
    %v1441 = vunpack.c.l.b16 %v1346
    %v1442 = vunpack.c.h.b16 %v1346
    %v1443 = vunpack.c.l.b16 %v1347
    %v1444 = vunpack.c.h.b16 %v1347
    %v1445 = vunpack.c.l.b16 %v1348
    %v1446 = vunpack.c.h.b16 %v1348
    %v1447 = vunpack.c.l.b16 %v1349
    %v1448 = vunpack.c.h.b16 %v1349
    %v1449 = vunpack.c.l.b16 %v1350
    %v1450 = vunpack.c.h.b16 %v1350
    %v1451 = vunpack.c.l.b16 %v1351
    %v1452 = vunpack.c.h.b16 %v1351
    %v1453 = vunpack.c.l.b16 %v1352
    %v1454 = vunpack.c.h.b16 %v1352
    %v1455 = vpack.c.b16 %v1395, %v1391
    %v1456 = vpack.c.b16 %v1396, %v1392
    %v1457 = vpack.c.b16 %v1397, %v1393
    %v1458 = vpack.c.b16 %v1398, %v1394
    %v1459 = vpack.c.b16 %v1403, %v1399
    %v1460 = vpack.c.b16 %v1404, %v1400
    %v1461 = vpack.c.b16 %v1405, %v1401
    %v1462 = vpack.c.b16 %v1406, %v1402
    %v1463 = vpack.c.b16 %v1411, %v1407
    %v1464 = vpack.c.b16 %v1412, %v1408
    %v1465 = vpack.c.b16 %v1413, %v1409
    %v1466 = vpack.c.b16 %v1414, %v1410
    %v1467 = vpack.c.b16 %v1419, %v1415
    %v1468 = vpack.c.b16 %v1420, %v1416
    %v1469 = vpack.c.b16 %v1421, %v1417
    %v1470 = vpack.c.b16 %v1422, %v1418
    %v1471 = vpack.c.b16 %v1427, %v1423
    %v1472 = vpack.c.b16 %v1428, %v1424
    %v1473 = vpack.c.b16 %v1429, %v1425
    %v1474 = vpack.c.b16 %v1430, %v1426
    %v1475 = vpack.c.b16 %v1435, %v1431
    %v1476 = vpack.c.b16 %v1436, %v1432
    %v1477 = vpack.c.b16 %v1437, %v1433
    %v1478 = vpack.c.b16 %v1438, %v1434
    %v1479 = vpack.c.b16 %v1443, %v1439
    %v1480 = vpack.c.b16 %v1444, %v1440
    %v1481 = vpack.c.b16 %v1445, %v1441
    %v1482 = vpack.c.b16 %v1446, %v1442
    %v1483 = vpack.c.b16 %v1451, %v1447
    %v1484 = vpack.c.b16 %v1452, %v1448
    %v1485 = vpack.c.b16 %v1453, %v1449
    %v1486 = vpack.c.b16 %v1454, %v1450
    %1519 = vmatprep.subr.bf16.mxu0 %v1484
    %1520 = vmatpush1.bf16.msra.mxu0 %v1483
    %1521 = vmatprep.subr.bf16.mxu0 %v1480
    %1522 = vmatpush1.bf16.msra.mxu0 %v1479
    %1523 = vmatprep.subr.bf16.mxu0 %v1476
    %1524 = vmatpush1.bf16.msra.mxu0 %v1475
    %1525 = vmatprep.subr.bf16.mxu0 %v1472
    %1526 = vmatpush1.bf16.msra.mxu0 %v1471
    %1527 = vmatprep.subr.bf16.mxu0 %v1468
    %1528 = vmatpush1.bf16.msra.mxu0 %v1467
    %1529 = vmatprep.subr.bf16.mxu0 %v1464
    %1530 = vmatpush1.bf16.msra.mxu0 %v1463
    %1531 = vmatprep.subr.bf16.mxu0 %v1460
    %1532 = vmatpush1.bf16.msra.mxu0 %v1459
    %1533 = vmatprep.subr.bf16.mxu0 %v1456
    %1534 = vmatpush1.bf16.msra.mxu0 %v1455
    %1535 = vmatprep.subr.bf16.mxu0 0
    %1536 = vmatpush2.bf16.msra.mxu0 0
    %1537 = vmatprep.subr.bf16.mxu0 0
    %1538 = vmatpush2.bf16.msra.mxu0 0
    %1539 = vmatprep.subr.bf16.mxu0 0
    %1540 = vmatpush2.bf16.msra.mxu0 0
    %1541 = vmatprep.subr.bf16.mxu0 0
    %1542 = vmatpush2.bf16.msra.mxu0 0
    %1543 = vmatprep.subr.bf16.mxu0 0
    %1544 = vmatpush2.bf16.msra.mxu0 0
    %1545 = vmatprep.subr.bf16.mxu0 0
    %1546 = vmatpush2.bf16.msra.mxu0 0
    %1547 = vmatprep.subr.bf16.mxu0 0
    %1548 = vmatpush2.bf16.msra.mxu0 0
    %1549 = vmatprep.subr.bf16.mxu0 0
    %1550 = vmatpush2.bf16.msra.mxu0 0
    %1551 = vmatprep.mubr.bf16.mxu0 0
    %1552 = vmatmul.mubr.bf16.gmra.mxu0 %v1357
    %v1553 = vpop.f32.mrf.mxu0
    %v1554 = vadd.f32 0.0, %v1553
    %v1555 = vpop.f32.mrf.mxu0
    %v1556 = vadd.f32 0.0, %v1555
    %v1557 = vpop.f32.mrf.mxu0
    %v1558 = vadd.f32 0.0, %v1557
    %v1559 = vpop.f32.mrf.mxu0
    %v1560 = vadd.f32 0.0, %v1559
    %1561 = vdwg.mxu0
    %1562 = vmatprep.subr.bf16.mxu0 %v1486
    %1563 = vmatpush1.bf16.msra.mxu0 %v1485
    %1564 = vmatprep.subr.bf16.mxu0 %v1482
    %1565 = vmatpush1.bf16.msra.mxu0 %v1481
    %1566 = vmatprep.subr.bf16.mxu0 %v1478
    %1567 = vmatpush1.bf16.msra.mxu0 %v1477
    %1568 = vmatprep.subr.bf16.mxu0 %v1474
    %1569 = vmatpush1.bf16.msra.mxu0 %v1473
    %1570 = vmatprep.subr.bf16.mxu0 %v1470
    %1571 = vmatpush1.bf16.msra.mxu0 %v1469
    %1572 = vmatprep.subr.bf16.mxu0 %v1466
    %1573 = vmatpush1.bf16.msra.mxu0 %v1465
    %1574 = vmatprep.subr.bf16.mxu0 %v1462
    %1575 = vmatpush1.bf16.msra.mxu0 %v1461
    %1576 = vmatprep.subr.bf16.mxu0 %v1458
    %1577 = vmatpush1.bf16.msra.mxu0 %v1457
    %1578 = vmatprep.subr.bf16.mxu0 0
    %1579 = vmatpush2.bf16.msra.mxu0 0
    %1580 = vmatprep.subr.bf16.mxu0 0
    %1581 = vmatpush2.bf16.msra.mxu0 0
    %1582 = vmatprep.subr.bf16.mxu0 0
    %1583 = vmatpush2.bf16.msra.mxu0 0
    %1584 = vmatprep.subr.bf16.mxu0 0
    %1585 = vmatpush2.bf16.msra.mxu0 0
    %1586 = vmatprep.subr.bf16.mxu0 0
    %1587 = vmatpush2.bf16.msra.mxu0 0
    %1588 = vmatprep.subr.bf16.mxu0 0
    %1589 = vmatpush2.bf16.msra.mxu0 0
    %1590 = vmatprep.subr.bf16.mxu0 0
    %1591 = vmatpush2.bf16.msra.mxu0 0
    %1592 = vmatprep.subr.bf16.mxu0 0
    %1593 = vmatpush2.bf16.msra.mxu0 0
    %1594 = vmatprep.mubr.bf16.mxu0 0
    %1595 = vmatmul.mubr.bf16.gmra.mxu0 %v1357
    %v1596 = vpop.f32.mrf.mxu0
    %v1597 = vadd.f32 0.0, %v1596
    %v1598 = vpop.f32.mrf.mxu0
    %v1599 = vadd.f32 0.0, %v1598
    %v1600 = vpop.f32.mrf.mxu0
    %v1601 = vadd.f32 0.0, %v1600
    %v1602 = vpop.f32.mrf.mxu0
    %v1603 = vadd.f32 0.0, %v1602
    %1604 = vdwg.mxu0
    %v1605 = vadd.f32 %v1311, %v1554
    %v1606 = vadd.f32 %v1312, %v1556
    %v1607 = vadd.f32 %v1313, %v1597
    %v1608 = vadd.f32 %v1314, %v1599
    %v1609 = vadd.f32 %v1315, %v1558
    %v1610 = vadd.f32 %v1316, %v1560
    %v1611 = vadd.f32 %v1317, %v1601
    %v1612 = vadd.f32 %v1318, %v1603
    %v1613 = vld [vmem:[#allocation3] sm:$0xff]
    %v1614 = vld [vmem:[#allocation3 + $0x8] sm:$0xff]
    %v1615 = vxor.u32 %v1605, 2147483648
    %v1616 = vxor.u32 %v1606, 2147483648
    %v1617 = vxor.u32 %v1607, 2147483648
    %v1618 = vxor.u32 %v1609, 2147483648
    %v1619 = vxor.u32 %v1610, 2147483648
    %v1620 = vxor.u32 %v1611, 2147483648
    %v1621 = vmul.f32 %v1615, 1.442695
    %v1622 = vpow.pop %v1621
    %v1623 = vmul.f32 %v1616, 1.442695
    %v1624 = vpow.pop %v1623
    %v1625 = vmul.f32 %v1617, 1.442695
    %v1626 = vpow.pop %v1625
    %v1627 = vmul.f32 %v1618, 1.442695
    %v1628 = vpow.pop %v1627
    %v1629 = vmul.f32 %v1619, 1.442695
    %v1630 = vpow.pop %v1629
    %v1631 = vmul.f32 %v1620, 1.442695
    %v1632 = vpow.pop %v1631
    %v1633 = vadd.f32 %v1622, 1.0
    %v1634 = vadd.f32 %v1624, 1.0
    %v1635 = vadd.f32 %v1626, 1.0
    %v1636 = vadd.f32 %v1628, 1.0
    %v1637 = vadd.f32 %v1630, 1.0
    %v1638 = vadd.f32 %v1632, 1.0
    %v1639 = vrcp.pop %v1633
    %v1640 = vmul.f32 1.0, %v1639
    %v1641 = vrcp.pop %v1634
    %v1642 = vmul.f32 1.0, %v1641
    %v1643 = vrcp.pop %v1635
    %v1644 = vmul.f32 1.0, %v1643
    %v1645 = vrcp.pop %v1636
    %v1646 = vmul.f32 1.0, %v1645
    %v1647 = vrcp.pop %v1637
    %v1648 = vmul.f32 1.0, %v1647
    %v1649 = vrcp.pop %v1638
    %v1650 = vmul.f32 1.0, %v1649
    %v1651 = vtanh.pop %v1608
    %v1652 = vtanh.pop %v1612
    %v1653 = vmul.f32 %v1642, %v1613
    %v1654 = vmul.f32 %v1648, %v1614
    %v1655 = vmul.f32 %v1640, %v1651
    %v1656 = vmul.f32 %v1646, %v1652
    %v1657 = vadd.f32 %v1653, %v1655
    %v1658 = vadd.f32 %v1654, %v1656
    %v1659 = vtanh.pop %v1657
    %v1660 = vtanh.pop %v1658
    %v1661 = vmul.f32 %v1644, %v1659
    %v1662 = vmul.f32 %v1650, %v1660
    %1663 = vst [vmem:[#allocation3] sm:$0xff] %v1657
    %1664 = vst [vmem:[#allocation3 + $0x8] sm:$0xff] %v1658
    %v1665 = vpack.c.bf16 %v1662, %v1661
    %v1667 = vunpack.c.l.b16 %v1665
    %v1668 = vunpack.c.h.b16 %v1665
    %v1669 = vpack.c.b16 %v1667, %v1667
    %v1670 = vpack.c.b16 %v1668, %v1668
    %s1673 = scalar_lea.vmem [#allocation2], 24
    %1674 = vst [vmem:[%s1673] sm:$0xf] %v1669
    %1675 = vst [vmem:[%s1673 + $0x4] sm:$0xf] %v1670
    %s1676 = scalar_lea.vmem [#allocation4], 192
    %v1677 = vld [vmem:[%s1676] sm:$0xff]
    %v1678 = vld [vmem:[%s1676 + $0x8] sm:$0xff]
    %v1679 = vld [vmem:[%s1676 + $0x10] sm:$0xff]
    %v1680 = vld [vmem:[%s1676 + $0x18] sm:$0xff]
    %v1681 = vld [vmem:[%s1676 + $0x20] sm:$0xff]
    %v1682 = vld [vmem:[%s1676 + $0x28] sm:$0xff]
    %v1683 = vld [vmem:[%s1676 + $0x30] sm:$0xff]
    %v1684 = vld [vmem:[%s1676 + $0x38] sm:$0xff]
    %v1685 = vld [vmem:[%s1673] sm:$0xf]
    %v1686 = vld [vmem:[%s1673 + $0x4] sm:$0xf]
    %v1687 = vld [vmem:[%s3] sm:$0xff]
    %v1688 = vld [vmem:[%s3 + $0x8] sm:$0xff]
    %v1689 = vld [vmem:[%s3 + $0x10] sm:$0xff]
    %v1690 = vld [vmem:[%s3 + $0x18] sm:$0xff]
    %v1691 = vld [vmem:[%s3 + $0x20] sm:$0xff]
    %v1692 = vld [vmem:[%s3 + $0x28] sm:$0xff]
    %v1693 = vld [vmem:[%s3 + $0x30] sm:$0xff]
    %v1694 = vld [vmem:[%s3 + $0x38] sm:$0xff]
    %v1695 = vld [vmem:[%s3 + $0x40] sm:$0xff]
    %v1696 = vld [vmem:[%s3 + $0x48] sm:$0xff]
    %v1697 = vld [vmem:[%s3 + $0x50] sm:$0xff]
    %v1698 = vld [vmem:[%s3 + $0x58] sm:$0xff]
    %v1699 = vld [vmem:[%s3 + $0x60] sm:$0xff]
    %v1700 = vld [vmem:[%s3 + $0x68] sm:$0xff]
    %v1701 = vld [vmem:[%s3 + $0x70] sm:$0xff]
    %v1702 = vld [vmem:[%s3 + $0x78] sm:$0xff]
    %v1703 = vld [vmem:[%s3 + $0x80] sm:$0xff]
    %v1704 = vld [vmem:[%s3 + $0x88] sm:$0xff]
    %v1705 = vld [vmem:[%s3 + $0x90] sm:$0xff]
    %v1706 = vld [vmem:[%s3 + $0x98] sm:$0xff]
    %v1707 = vld [vmem:[%s3 + $0xa0] sm:$0xff]
    %v1708 = vld [vmem:[%s3 + $0xa8] sm:$0xff]
    %v1709 = vld [vmem:[%s3 + $0xb0] sm:$0xff]
    %v1710 = vld [vmem:[%s3 + $0xb8] sm:$0xff]
    %v1711 = vld [vmem:[%s3 + $0xc0] sm:$0xff]
    %v1712 = vld [vmem:[%s3 + $0xc8] sm:$0xff]
    %v1713 = vld [vmem:[%s3 + $0xd0] sm:$0xff]
    %v1714 = vld [vmem:[%s3 + $0xd8] sm:$0xff]
    %v1715 = vld [vmem:[%s3 + $0xe0] sm:$0xff]
    %v1716 = vld [vmem:[%s3 + $0xe8] sm:$0xff]
    %v1717 = vld [vmem:[%s3 + $0xf0] sm:$0xff]
    %v1718 = vld [vmem:[%s3 + $0xf8] sm:$0xff]
    %v1721 = vunpack.c.l.b16 %v1685
    %v1722 = vunpack.c.l.b16 %v1686
    %v1723 = vpack.c.b16 %v1722, %v1721
    %v1757 = vunpack.c.l.b16 %v1687
    %v1758 = vunpack.c.h.b16 %v1687
    %v1759 = vunpack.c.l.b16 %v1688
    %v1760 = vunpack.c.h.b16 %v1688
    %v1761 = vunpack.c.l.b16 %v1689
    %v1762 = vunpack.c.h.b16 %v1689
    %v1763 = vunpack.c.l.b16 %v1690
    %v1764 = vunpack.c.h.b16 %v1690
    %v1765 = vunpack.c.l.b16 %v1691
    %v1766 = vunpack.c.h.b16 %v1691
    %v1767 = vunpack.c.l.b16 %v1692
    %v1768 = vunpack.c.h.b16 %v1692
    %v1769 = vunpack.c.l.b16 %v1693
    %v1770 = vunpack.c.h.b16 %v1693
    %v1771 = vunpack.c.l.b16 %v1694
    %v1772 = vunpack.c.h.b16 %v1694
    %v1773 = vunpack.c.l.b16 %v1695
    %v1774 = vunpack.c.h.b16 %v1695
    %v1775 = vunpack.c.l.b16 %v1696
    %v1776 = vunpack.c.h.b16 %v1696
    %v1777 = vunpack.c.l.b16 %v1697
    %v1778 = vunpack.c.h.b16 %v1697
    %v1779 = vunpack.c.l.b16 %v1698
    %v1780 = vunpack.c.h.b16 %v1698
    %v1781 = vunpack.c.l.b16 %v1699
    %v1782 = vunpack.c.h.b16 %v1699
    %v1783 = vunpack.c.l.b16 %v1700
    %v1784 = vunpack.c.h.b16 %v1700
    %v1785 = vunpack.c.l.b16 %v1701
    %v1786 = vunpack.c.h.b16 %v1701
    %v1787 = vunpack.c.l.b16 %v1702
    %v1788 = vunpack.c.h.b16 %v1702
    %v1789 = vunpack.c.l.b16 %v1703
    %v1790 = vunpack.c.h.b16 %v1703
    %v1791 = vunpack.c.l.b16 %v1704
    %v1792 = vunpack.c.h.b16 %v1704
    %v1793 = vunpack.c.l.b16 %v1705
    %v1794 = vunpack.c.h.b16 %v1705
    %v1795 = vunpack.c.l.b16 %v1706
    %v1796 = vunpack.c.h.b16 %v1706
    %v1797 = vunpack.c.l.b16 %v1707
    %v1798 = vunpack.c.h.b16 %v1707
    %v1799 = vunpack.c.l.b16 %v1708
    %v1800 = vunpack.c.h.b16 %v1708
    %v1801 = vunpack.c.l.b16 %v1709
    %v1802 = vunpack.c.h.b16 %v1709
    %v1803 = vunpack.c.l.b16 %v1710
    %v1804 = vunpack.c.h.b16 %v1710
    %v1805 = vunpack.c.l.b16 %v1711
    %v1806 = vunpack.c.h.b16 %v1711
    %v1807 = vunpack.c.l.b16 %v1712
    %v1808 = vunpack.c.h.b16 %v1712
    %v1809 = vunpack.c.l.b16 %v1713
    %v1810 = vunpack.c.h.b16 %v1713
    %v1811 = vunpack.c.l.b16 %v1714
    %v1812 = vunpack.c.h.b16 %v1714
    %v1813 = vunpack.c.l.b16 %v1715
    %v1814 = vunpack.c.h.b16 %v1715
    %v1815 = vunpack.c.l.b16 %v1716
    %v1816 = vunpack.c.h.b16 %v1716
    %v1817 = vunpack.c.l.b16 %v1717
    %v1818 = vunpack.c.h.b16 %v1717
    %v1819 = vunpack.c.l.b16 %v1718
    %v1820 = vunpack.c.h.b16 %v1718
    %v1821 = vpack.c.b16 %v1761, %v1757
    %v1822 = vpack.c.b16 %v1762, %v1758
    %v1823 = vpack.c.b16 %v1763, %v1759
    %v1824 = vpack.c.b16 %v1764, %v1760
    %v1825 = vpack.c.b16 %v1769, %v1765
    %v1826 = vpack.c.b16 %v1770, %v1766
    %v1827 = vpack.c.b16 %v1771, %v1767
    %v1828 = vpack.c.b16 %v1772, %v1768
    %v1829 = vpack.c.b16 %v1777, %v1773
    %v1830 = vpack.c.b16 %v1778, %v1774
    %v1831 = vpack.c.b16 %v1779, %v1775
    %v1832 = vpack.c.b16 %v1780, %v1776
    %v1833 = vpack.c.b16 %v1785, %v1781
    %v1834 = vpack.c.b16 %v1786, %v1782
    %v1835 = vpack.c.b16 %v1787, %v1783
    %v1836 = vpack.c.b16 %v1788, %v1784
    %v1837 = vpack.c.b16 %v1793, %v1789
    %v1838 = vpack.c.b16 %v1794, %v1790
    %v1839 = vpack.c.b16 %v1795, %v1791
    %v1840 = vpack.c.b16 %v1796, %v1792
    %v1841 = vpack.c.b16 %v1801, %v1797
    %v1842 = vpack.c.b16 %v1802, %v1798
    %v1843 = vpack.c.b16 %v1803, %v1799
    %v1844 = vpack.c.b16 %v1804, %v1800
    %v1845 = vpack.c.b16 %v1809, %v1805
    %v1846 = vpack.c.b16 %v1810, %v1806
    %v1847 = vpack.c.b16 %v1811, %v1807
    %v1848 = vpack.c.b16 %v1812, %v1808
    %v1849 = vpack.c.b16 %v1817, %v1813
    %v1850 = vpack.c.b16 %v1818, %v1814
    %v1851 = vpack.c.b16 %v1819, %v1815
    %v1852 = vpack.c.b16 %v1820, %v1816
    %1885 = vmatprep.subr.bf16.mxu0 %v1850
    %1886 = vmatpush1.bf16.msra.mxu0 %v1849
    %1887 = vmatprep.subr.bf16.mxu0 %v1846
    %1888 = vmatpush1.bf16.msra.mxu0 %v1845
    %1889 = vmatprep.subr.bf16.mxu0 %v1842
    %1890 = vmatpush1.bf16.msra.mxu0 %v1841
    %1891 = vmatprep.subr.bf16.mxu0 %v1838
    %1892 = vmatpush1.bf16.msra.mxu0 %v1837
    %1893 = vmatprep.subr.bf16.mxu0 %v1834
    %1894 = vmatpush1.bf16.msra.mxu0 %v1833
    %1895 = vmatprep.subr.bf16.mxu0 %v1830
    %1896 = vmatpush1.bf16.msra.mxu0 %v1829
    %1897 = vmatprep.subr.bf16.mxu0 %v1826
    %1898 = vmatpush1.bf16.msra.mxu0 %v1825
    %1899 = vmatprep.subr.bf16.mxu0 %v1822
    %1900 = vmatpush1.bf16.msra.mxu0 %v1821
    %1901 = vmatprep.subr.bf16.mxu0 0
    %1902 = vmatpush2.bf16.msra.mxu0 0
    %1903 = vmatprep.subr.bf16.mxu0 0
    %1904 = vmatpush2.bf16.msra.mxu0 0
    %1905 = vmatprep.subr.bf16.mxu0 0
    %1906 = vmatpush2.bf16.msra.mxu0 0
    %1907 = vmatprep.subr.bf16.mxu0 0
    %1908 = vmatpush2.bf16.msra.mxu0 0
    %1909 = vmatprep.subr.bf16.mxu0 0
    %1910 = vmatpush2.bf16.msra.mxu0 0
    %1911 = vmatprep.subr.bf16.mxu0 0
    %1912 = vmatpush2.bf16.msra.mxu0 0
    %1913 = vmatprep.subr.bf16.mxu0 0
    %1914 = vmatpush2.bf16.msra.mxu0 0
    %1915 = vmatprep.subr.bf16.mxu0 0
    %1916 = vmatpush2.bf16.msra.mxu0 0
    %1917 = vmatprep.mubr.bf16.mxu0 0
    %1918 = vmatmul.mubr.bf16.gmra.mxu0 %v1723
    %v1919 = vpop.f32.mrf.mxu0
    %v1920 = vadd.f32 0.0, %v1919
    %v1921 = vpop.f32.mrf.mxu0
    %v1922 = vadd.f32 0.0, %v1921
    %v1923 = vpop.f32.mrf.mxu0
    %v1924 = vadd.f32 0.0, %v1923
    %v1925 = vpop.f32.mrf.mxu0
    %v1926 = vadd.f32 0.0, %v1925
    %1927 = vdwg.mxu0
    %1928 = vmatprep.subr.bf16.mxu0 %v1852
    %1929 = vmatpush1.bf16.msra.mxu0 %v1851
    %1930 = vmatprep.subr.bf16.mxu0 %v1848
    %1931 = vmatpush1.bf16.msra.mxu0 %v1847
    %1932 = vmatprep.subr.bf16.mxu0 %v1844
    %1933 = vmatpush1.bf16.msra.mxu0 %v1843
    %1934 = vmatprep.subr.bf16.mxu0 %v1840
    %1935 = vmatpush1.bf16.msra.mxu0 %v1839
    %1936 = vmatprep.subr.bf16.mxu0 %v1836
    %1937 = vmatpush1.bf16.msra.mxu0 %v1835
    %1938 = vmatprep.subr.bf16.mxu0 %v1832
    %1939 = vmatpush1.bf16.msra.mxu0 %v1831
    %1940 = vmatprep.subr.bf16.mxu0 %v1828
    %1941 = vmatpush1.bf16.msra.mxu0 %v1827
    %1942 = vmatprep.subr.bf16.mxu0 %v1824
    %1943 = vmatpush1.bf16.msra.mxu0 %v1823
    %1944 = vmatprep.subr.bf16.mxu0 0
    %1945 = vmatpush2.bf16.msra.mxu0 0
    %1946 = vmatprep.subr.bf16.mxu0 0
    %1947 = vmatpush2.bf16.msra.mxu0 0
    %1948 = vmatprep.subr.bf16.mxu0 0
    %1949 = vmatpush2.bf16.msra.mxu0 0
    %1950 = vmatprep.subr.bf16.mxu0 0
    %1951 = vmatpush2.bf16.msra.mxu0 0
    %1952 = vmatprep.subr.bf16.mxu0 0
    %1953 = vmatpush2.bf16.msra.mxu0 0
    %1954 = vmatprep.subr.bf16.mxu0 0
    %1955 = vmatpush2.bf16.msra.mxu0 0
    %1956 = vmatprep.subr.bf16.mxu0 0
    %1957 = vmatpush2.bf16.msra.mxu0 0
    %1958 = vmatprep.subr.bf16.mxu0 0
    %1959 = vmatpush2.bf16.msra.mxu0 0
    %1960 = vmatprep.mubr.bf16.mxu0 0
    %1961 = vmatmul.mubr.bf16.gmra.mxu0 %v1723
    %v1962 = vpop.f32.mrf.mxu0
    %v1963 = vadd.f32 0.0, %v1962
    %v1964 = vpop.f32.mrf.mxu0
    %v1965 = vadd.f32 0.0, %v1964
    %v1966 = vpop.f32.mrf.mxu0
    %v1967 = vadd.f32 0.0, %v1966
    %v1968 = vpop.f32.mrf.mxu0
    %v1969 = vadd.f32 0.0, %v1968
    %1970 = vdwg.mxu0
    %v1971 = vadd.f32 %v1677, %v1920
    %v1972 = vadd.f32 %v1678, %v1922
    %v1973 = vadd.f32 %v1679, %v1963
    %v1974 = vadd.f32 %v1680, %v1965
    %v1975 = vadd.f32 %v1681, %v1924
    %v1976 = vadd.f32 %v1682, %v1926
    %v1977 = vadd.f32 %v1683, %v1967
    %v1978 = vadd.f32 %v1684, %v1969
    %v1979 = vld [vmem:[#allocation3] sm:$0xff]
    %v1980 = vld [vmem:[#allocation3 + $0x8] sm:$0xff]
    %v1981 = vxor.u32 %v1971, 2147483648
    %v1982 = vxor.u32 %v1972, 2147483648
    %v1983 = vxor.u32 %v1973, 2147483648
    %v1984 = vxor.u32 %v1975, 2147483648
    %v1985 = vxor.u32 %v1976, 2147483648
    %v1986 = vxor.u32 %v1977, 2147483648
    %v1987 = vmul.f32 %v1981, 1.442695
    %v1988 = vpow.pop %v1987
    %v1989 = vmul.f32 %v1982, 1.442695
    %v1990 = vpow.pop %v1989
    %v1991 = vmul.f32 %v1983, 1.442695
    %v1992 = vpow.pop %v1991
    %v1993 = vmul.f32 %v1984, 1.442695
    %v1994 = vpow.pop %v1993
    %v1995 = vmul.f32 %v1985, 1.442695
    %v1996 = vpow.pop %v1995
    %v1997 = vmul.f32 %v1986, 1.442695
    %v1998 = vpow.pop %v1997
    %v1999 = vadd.f32 %v1988, 1.0
    %v2000 = vadd.f32 %v1990, 1.0
    %v2001 = vadd.f32 %v1992, 1.0
    %v2002 = vadd.f32 %v1994, 1.0
    %v2003 = vadd.f32 %v1996, 1.0
    %v2004 = vadd.f32 %v1998, 1.0
    %v2005 = vrcp.pop %v1999
    %v2006 = vmul.f32 1.0, %v2005
    %v2007 = vrcp.pop %v2000
    %v2008 = vmul.f32 1.0, %v2007
    %v2009 = vrcp.pop %v2001
    %v2010 = vmul.f32 1.0, %v2009
    %v2011 = vrcp.pop %v2002
    %v2012 = vmul.f32 1.0, %v2011
    %v2013 = vrcp.pop %v2003
    %v2014 = vmul.f32 1.0, %v2013
    %v2015 = vrcp.pop %v2004
    %v2016 = vmul.f32 1.0, %v2015
    %v2017 = vtanh.pop %v1974
    %v2018 = vtanh.pop %v1978
    %v2019 = vmul.f32 %v2008, %v1979
    %v2020 = vmul.f32 %v2014, %v1980
    %v2021 = vmul.f32 %v2006, %v2017
    %v2022 = vmul.f32 %v2012, %v2018
    %v2023 = vadd.f32 %v2019, %v2021
    %v2024 = vadd.f32 %v2020, %v2022
    %v2025 = vtanh.pop %v2023
    %v2026 = vtanh.pop %v2024
    %v2027 = vmul.f32 %v2010, %v2025
    %v2028 = vmul.f32 %v2016, %v2026
    %2029 = vst [vmem:[#allocation3] sm:$0xff] %v2023
    %2030 = vst [vmem:[#allocation3 + $0x8] sm:$0xff] %v2024
    %v2031 = vpack.c.bf16 %v2028, %v2027
    %v2033 = vunpack.c.l.b16 %v2031
    %v2034 = vunpack.c.h.b16 %v2031
    %v2035 = vpack.c.b16 %v2033, %v2033
    %v2036 = vpack.c.b16 %v2034, %v2034
    %s2039 = scalar_lea.vmem [#allocation2], 32
    %2040 = vst [vmem:[%s2039] sm:$0xf] %v2035
    %2041 = vst [vmem:[%s2039 + $0x4] sm:$0xf] %v2036
    %s2042 = scalar_lea.vmem [#allocation4], 256
    %v2043 = vld [vmem:[%s2042] sm:$0xff]
    %v2044 = vld [vmem:[%s2042 + $0x8] sm:$0xff]
    %v2045 = vld [vmem:[%s2042 + $0x10] sm:$0xff]
    %v2046 = vld [vmem:[%s2042 + $0x18] sm:$0xff]
    %v2047 = vld [vmem:[%s2042 + $0x20] sm:$0xff]
    %v2048 = vld [vmem:[%s2042 + $0x28] sm:$0xff]
    %v2049 = vld [vmem:[%s2042 + $0x30] sm:$0xff]
    %v2050 = vld [vmem:[%s2042 + $0x38] sm:$0xff]
    %v2051 = vld [vmem:[%s2039] sm:$0xf]
    %v2052 = vld [vmem:[%s2039 + $0x4] sm:$0xf]
    %v2053 = vld [vmem:[%s3] sm:$0xff]
    %v2054 = vld [vmem:[%s3 + $0x8] sm:$0xff]
    %v2055 = vld [vmem:[%s3 + $0x10] sm:$0xff]
    %v2056 = vld [vmem:[%s3 + $0x18] sm:$0xff]
    %v2057 = vld [vmem:[%s3 + $0x20] sm:$0xff]
    %v2058 = vld [vmem:[%s3 + $0x28] sm:$0xff]
    %v2059 = vld [vmem:[%s3 + $0x30] sm:$0xff]
    %v2060 = vld [vmem:[%s3 + $0x38] sm:$0xff]
    %v2061 = vld [vmem:[%s3 + $0x40] sm:$0xff]
    %v2062 = vld [vmem:[%s3 + $0x48] sm:$0xff]
    %v2063 = vld [vmem:[%s3 + $0x50] sm:$0xff]
    %v2064 = vld [vmem:[%s3 + $0x58] sm:$0xff]
    %v2065 = vld [vmem:[%s3 + $0x60] sm:$0xff]
    %v2066 = vld [vmem:[%s3 + $0x68] sm:$0xff]
    %v2067 = vld [vmem:[%s3 + $0x70] sm:$0xff]
    %v2068 = vld [vmem:[%s3 + $0x78] sm:$0xff]
    %v2069 = vld [vmem:[%s3 + $0x80] sm:$0xff]
    %v2070 = vld [vmem:[%s3 + $0x88] sm:$0xff]
    %v2071 = vld [vmem:[%s3 + $0x90] sm:$0xff]
    %v2072 = vld [vmem:[%s3 + $0x98] sm:$0xff]
    %v2073 = vld [vmem:[%s3 + $0xa0] sm:$0xff]
    %v2074 = vld [vmem:[%s3 + $0xa8] sm:$0xff]
    %v2075 = vld [vmem:[%s3 + $0xb0] sm:$0xff]
    %v2076 = vld [vmem:[%s3 + $0xb8] sm:$0xff]
    %v2077 = vld [vmem:[%s3 + $0xc0] sm:$0xff]
    %v2078 = vld [vmem:[%s3 + $0xc8] sm:$0xff]
    %v2079 = vld [vmem:[%s3 + $0xd0] sm:$0xff]
    %v2080 = vld [vmem:[%s3 + $0xd8] sm:$0xff]
    %v2081 = vld [vmem:[%s3 + $0xe0] sm:$0xff]
    %v2082 = vld [vmem:[%s3 + $0xe8] sm:$0xff]
    %v2083 = vld [vmem:[%s3 + $0xf0] sm:$0xff]
    %v2084 = vld [vmem:[%s3 + $0xf8] sm:$0xff]
    %v2087 = vunpack.c.l.b16 %v2051
    %v2088 = vunpack.c.l.b16 %v2052
    %v2089 = vpack.c.b16 %v2088, %v2087
    %v2123 = vunpack.c.l.b16 %v2053
    %v2124 = vunpack.c.h.b16 %v2053
    %v2125 = vunpack.c.l.b16 %v2054
    %v2126 = vunpack.c.h.b16 %v2054
    %v2127 = vunpack.c.l.b16 %v2055
    %v2128 = vunpack.c.h.b16 %v2055
    %v2129 = vunpack.c.l.b16 %v2056
    %v2130 = vunpack.c.h.b16 %v2056
    %v2131 = vunpack.c.l.b16 %v2057
    %v2132 = vunpack.c.h.b16 %v2057
    %v2133 = vunpack.c.l.b16 %v2058
    %v2134 = vunpack.c.h.b16 %v2058
    %v2135 = vunpack.c.l.b16 %v2059
    %v2136 = vunpack.c.h.b16 %v2059
    %v2137 = vunpack.c.l.b16 %v2060
    %v2138 = vunpack.c.h.b16 %v2060
    %v2139 = vunpack.c.l.b16 %v2061
    %v2140 = vunpack.c.h.b16 %v2061
    %v2141 = vunpack.c.l.b16 %v2062
    %v2142 = vunpack.c.h.b16 %v2062
    %v2143 = vunpack.c.l.b16 %v2063
    %v2144 = vunpack.c.h.b16 %v2063
    %v2145 = vunpack.c.l.b16 %v2064
    %v2146 = vunpack.c.h.b16 %v2064
    %v2147 = vunpack.c.l.b16 %v2065
    %v2148 = vunpack.c.h.b16 %v2065
    %v2149 = vunpack.c.l.b16 %v2066
    %v2150 = vunpack.c.h.b16 %v2066
    %v2151 = vunpack.c.l.b16 %v2067
    %v2152 = vunpack.c.h.b16 %v2067
    %v2153 = vunpack.c.l.b16 %v2068
    %v2154 = vunpack.c.h.b16 %v2068
    %v2155 = vunpack.c.l.b16 %v2069
    %v2156 = vunpack.c.h.b16 %v2069
    %v2157 = vunpack.c.l.b16 %v2070
    %v2158 = vunpack.c.h.b16 %v2070
    %v2159 = vunpack.c.l.b16 %v2071
    %v2160 = vunpack.c.h.b16 %v2071
    %v2161 = vunpack.c.l.b16 %v2072
    %v2162 = vunpack.c.h.b16 %v2072
    %v2163 = vunpack.c.l.b16 %v2073
    %v2164 = vunpack.c.h.b16 %v2073
    %v2165 = vunpack.c.l.b16 %v2074
    %v2166 = vunpack.c.h.b16 %v2074
    %v2167 = vunpack.c.l.b16 %v2075
    %v2168 = vunpack.c.h.b16 %v2075
    %v2169 = vunpack.c.l.b16 %v2076
    %v2170 = vunpack.c.h.b16 %v2076
    %v2171 = vunpack.c.l.b16 %v2077
    %v2172 = vunpack.c.h.b16 %v2077
    %v2173 = vunpack.c.l.b16 %v2078
    %v2174 = vunpack.c.h.b16 %v2078
    %v2175 = vunpack.c.l.b16 %v2079
    %v2176 = vunpack.c.h.b16 %v2079
    %v2177 = vunpack.c.l.b16 %v2080
    %v2178 = vunpack.c.h.b16 %v2080
    %v2179 = vunpack.c.l.b16 %v2081
    %v2180 = vunpack.c.h.b16 %v2081
    %v2181 = vunpack.c.l.b16 %v2082
    %v2182 = vunpack.c.h.b16 %v2082
    %v2183 = vunpack.c.l.b16 %v2083
    %v2184 = vunpack.c.h.b16 %v2083
    %v2185 = vunpack.c.l.b16 %v2084
    %v2186 = vunpack.c.h.b16 %v2084
    %v2187 = vpack.c.b16 %v2127, %v2123
    %v2188 = vpack.c.b16 %v2128, %v2124
    %v2189 = vpack.c.b16 %v2129, %v2125
    %v2190 = vpack.c.b16 %v2130, %v2126
    %v2191 = vpack.c.b16 %v2135, %v2131
    %v2192 = vpack.c.b16 %v2136, %v2132
    %v2193 = vpack.c.b16 %v2137, %v2133
    %v2194 = vpack.c.b16 %v2138, %v2134
    %v2195 = vpack.c.b16 %v2143, %v2139
    %v2196 = vpack.c.b16 %v2144, %v2140
    %v2197 = vpack.c.b16 %v2145, %v2141
    %v2198 = vpack.c.b16 %v2146, %v2142
    %v2199 = vpack.c.b16 %v2151, %v2147
    %v2200 = vpack.c.b16 %v2152, %v2148
    %v2201 = vpack.c.b16 %v2153, %v2149
    %v2202 = vpack.c.b16 %v2154, %v2150
    %v2203 = vpack.c.b16 %v2159, %v2155
    %v2204 = vpack.c.b16 %v2160, %v2156
    %v2205 = vpack.c.b16 %v2161, %v2157
    %v2206 = vpack.c.b16 %v2162, %v2158
    %v2207 = vpack.c.b16 %v2167, %v2163
    %v2208 = vpack.c.b16 %v2168, %v2164
    %v2209 = vpack.c.b16 %v2169, %v2165
    %v2210 = vpack.c.b16 %v2170, %v2166
    %v2211 = vpack.c.b16 %v2175, %v2171
    %v2212 = vpack.c.b16 %v2176, %v2172
    %v2213 = vpack.c.b16 %v2177, %v2173
    %v2214 = vpack.c.b16 %v2178, %v2174
    %v2215 = vpack.c.b16 %v2183, %v2179
    %v2216 = vpack.c.b16 %v2184, %v2180
    %v2217 = vpack.c.b16 %v2185, %v2181
    %v2218 = vpack.c.b16 %v2186, %v2182
    %2251 = vmatprep.subr.bf16.mxu0 %v2216
    %2252 = vmatpush1.bf16.msra.mxu0 %v2215
    %2253 = vmatprep.subr.bf16.mxu0 %v2212
    %2254 = vmatpush1.bf16.msra.mxu0 %v2211
    %2255 = vmatprep.subr.bf16.mxu0 %v2208
    %2256 = vmatpush1.bf16.msra.mxu0 %v2207
    %2257 = vmatprep.subr.bf16.mxu0 %v2204
    %2258 = vmatpush1.bf16.msra.mxu0 %v2203
    %2259 = vmatprep.subr.bf16.mxu0 %v2200
    %2260 = vmatpush1.bf16.msra.mxu0 %v2199
    %2261 = vmatprep.subr.bf16.mxu0 %v2196
    %2262 = vmatpush1.bf16.msra.mxu0 %v2195
    %2263 = vmatprep.subr.bf16.mxu0 %v2192
    %2264 = vmatpush1.bf16.msra.mxu0 %v2191
    %2265 = vmatprep.subr.bf16.mxu0 %v2188
    %2266 = vmatpush1.bf16.msra.mxu0 %v2187
    %2267 = vmatprep.subr.bf16.mxu0 0
    %2268 = vmatpush2.bf16.msra.mxu0 0
    %2269 = vmatprep.subr.bf16.mxu0 0
    %2270 = vmatpush2.bf16.msra.mxu0 0
    %2271 = vmatprep.subr.bf16.mxu0 0
    %2272 = vmatpush2.bf16.msra.mxu0 0
    %2273 = vmatprep.subr.bf16.mxu0 0
    %2274 = vmatpush2.bf16.msra.mxu0 0
    %2275 = vmatprep.subr.bf16.mxu0 0
    %2276 = vmatpush2.bf16.msra.mxu0 0
    %2277 = vmatprep.subr.bf16.mxu0 0
    %2278 = vmatpush2.bf16.msra.mxu0 0
    %2279 = vmatprep.subr.bf16.mxu0 0
    %2280 = vmatpush2.bf16.msra.mxu0 0
    %2281 = vmatprep.subr.bf16.mxu0 0
    %2282 = vmatpush2.bf16.msra.mxu0 0
    %2283 = vmatprep.mubr.bf16.mxu0 0
    %2284 = vmatmul.mubr.bf16.gmra.mxu0 %v2089
    %v2285 = vpop.f32.mrf.mxu0
    %v2286 = vadd.f32 0.0, %v2285
    %v2287 = vpop.f32.mrf.mxu0
    %v2288 = vadd.f32 0.0, %v2287
    %v2289 = vpop.f32.mrf.mxu0
    %v2290 = vadd.f32 0.0, %v2289
    %v2291 = vpop.f32.mrf.mxu0
    %v2292 = vadd.f32 0.0, %v2291
    %2293 = vdwg.mxu0
    %2294 = vmatprep.subr.bf16.mxu0 %v2218
    %2295 = vmatpush1.bf16.msra.mxu0 %v2217
    %2296 = vmatprep.subr.bf16.mxu0 %v2214
    %2297 = vmatpush1.bf16.msra.mxu0 %v2213
    %2298 = vmatprep.subr.bf16.mxu0 %v2210
    %2299 = vmatpush1.bf16.msra.mxu0 %v2209
    %2300 = vmatprep.subr.bf16.mxu0 %v2206
    %2301 = vmatpush1.bf16.msra.mxu0 %v2205
    %2302 = vmatprep.subr.bf16.mxu0 %v2202
    %2303 = vmatpush1.bf16.msra.mxu0 %v2201
    %2304 = vmatprep.subr.bf16.mxu0 %v2198
    %2305 = vmatpush1.bf16.msra.mxu0 %v2197
    %2306 = vmatprep.subr.bf16.mxu0 %v2194
    %2307 = vmatpush1.bf16.msra.mxu0 %v2193
    %2308 = vmatprep.subr.bf16.mxu0 %v2190
    %2309 = vmatpush1.bf16.msra.mxu0 %v2189
    %2310 = vmatprep.subr.bf16.mxu0 0
    %2311 = vmatpush2.bf16.msra.mxu0 0
    %2312 = vmatprep.subr.bf16.mxu0 0
    %2313 = vmatpush2.bf16.msra.mxu0 0
    %2314 = vmatprep.subr.bf16.mxu0 0
    %2315 = vmatpush2.bf16.msra.mxu0 0
    %2316 = vmatprep.subr.bf16.mxu0 0
    %2317 = vmatpush2.bf16.msra.mxu0 0
    %2318 = vmatprep.subr.bf16.mxu0 0
    %2319 = vmatpush2.bf16.msra.mxu0 0
    %2320 = vmatprep.subr.bf16.mxu0 0
    %2321 = vmatpush2.bf16.msra.mxu0 0
    %2322 = vmatprep.subr.bf16.mxu0 0
    %2323 = vmatpush2.bf16.msra.mxu0 0
    %2324 = vmatprep.subr.bf16.mxu0 0
    %2325 = vmatpush2.bf16.msra.mxu0 0
    %2326 = vmatprep.mubr.bf16.mxu0 0
    %2327 = vmatmul.mubr.bf16.gmra.mxu0 %v2089
    %v2328 = vpop.f32.mrf.mxu0
    %v2329 = vadd.f32 0.0, %v2328
    %v2330 = vpop.f32.mrf.mxu0
    %v2331 = vadd.f32 0.0, %v2330
    %v2332 = vpop.f32.mrf.mxu0
    %v2333 = vadd.f32 0.0, %v2332
    %v2334 = vpop.f32.mrf.mxu0
    %v2335 = vadd.f32 0.0, %v2334
    %2336 = vdwg.mxu0
    %v2337 = vadd.f32 %v2043, %v2286
    %v2338 = vadd.f32 %v2044, %v2288
    %v2339 = vadd.f32 %v2045, %v2329
    %v2340 = vadd.f32 %v2046, %v2331
    %v2341 = vadd.f32 %v2047, %v2290
    %v2342 = vadd.f32 %v2048, %v2292
    %v2343 = vadd.f32 %v2049, %v2333
    %v2344 = vadd.f32 %v2050, %v2335
    %v2345 = vld [vmem:[#allocation3] sm:$0xff]
    %v2346 = vld [vmem:[#allocation3 + $0x8] sm:$0xff]
    %v2347 = vxor.u32 %v2337, 2147483648
    %v2348 = vxor.u32 %v2338, 2147483648
    %v2349 = vxor.u32 %v2339, 2147483648
    %v2350 = vxor.u32 %v2341, 2147483648
    %v2351 = vxor.u32 %v2342, 2147483648
    %v2352 = vxor.u32 %v2343, 2147483648
    %v2353 = vmul.f32 %v2347, 1.442695
    %v2354 = vpow.pop %v2353
    %v2355 = vmul.f32 %v2348, 1.442695
    %v2356 = vpow.pop %v2355
    %v2357 = vmul.f32 %v2349, 1.442695
    %v2358 = vpow.pop %v2357
    %v2359 = vmul.f32 %v2350, 1.442695
    %v2360 = vpow.pop %v2359
    %v2361 = vmul.f32 %v2351, 1.442695
    %v2362 = vpow.pop %v2361
    %v2363 = vmul.f32 %v2352, 1.442695
    %v2364 = vpow.pop %v2363
    %v2365 = vadd.f32 %v2354, 1.0
    %v2366 = vadd.f32 %v2356, 1.0
    %v2367 = vadd.f32 %v2358, 1.0
    %v2368 = vadd.f32 %v2360, 1.0
    %v2369 = vadd.f32 %v2362, 1.0
    %v2370 = vadd.f32 %v2364, 1.0
    %v2371 = vrcp.pop %v2365
    %v2372 = vmul.f32 1.0, %v2371
    %v2373 = vrcp.pop %v2366
    %v2374 = vmul.f32 1.0, %v2373
    %v2375 = vrcp.pop %v2367
    %v2376 = vmul.f32 1.0, %v2375
    %v2377 = vrcp.pop %v2368
    %v2378 = vmul.f32 1.0, %v2377
    %v2379 = vrcp.pop %v2369
    %v2380 = vmul.f32 1.0, %v2379
    %v2381 = vrcp.pop %v2370
    %v2382 = vmul.f32 1.0, %v2381
    %v2383 = vtanh.pop %v2340
    %v2384 = vtanh.pop %v2344
    %v2385 = vmul.f32 %v2374, %v2345
    %v2386 = vmul.f32 %v2380, %v2346
    %v2387 = vmul.f32 %v2372, %v2383
    %v2388 = vmul.f32 %v2378, %v2384
    %v2389 = vadd.f32 %v2385, %v2387
    %v2390 = vadd.f32 %v2386, %v2388
    %v2391 = vtanh.pop %v2389
    %v2392 = vtanh.pop %v2390
    %v2393 = vmul.f32 %v2376, %v2391
    %v2394 = vmul.f32 %v2382, %v2392
    %2395 = vst [vmem:[#allocation3] sm:$0xff] %v2389
    %2396 = vst [vmem:[#allocation3 + $0x8] sm:$0xff] %v2390
    %v2397 = vpack.c.bf16 %v2394, %v2393
    %v2399 = vunpack.c.l.b16 %v2397
    %v2400 = vunpack.c.h.b16 %v2397
    %v2401 = vpack.c.b16 %v2399, %v2399
    %v2402 = vpack.c.b16 %v2400, %v2400
    %s2405 = scalar_lea.vmem [#allocation2], 40
    %2406 = vst [vmem:[%s2405] sm:$0xf] %v2401
    %2407 = vst [vmem:[%s2405 + $0x4] sm:$0xf] %v2402
    %s2408 = scalar_lea.vmem [#allocation4], 320
    %v2409 = vld [vmem:[%s2408] sm:$0xff]
    %v2410 = vld [vmem:[%s2408 + $0x8] sm:$0xff]
    %v2411 = vld [vmem:[%s2408 + $0x10] sm:$0xff]
    %v2412 = vld [vmem:[%s2408 + $0x18] sm:$0xff]
    %v2413 = vld [vmem:[%s2408 + $0x20] sm:$0xff]
    %v2414 = vld [vmem:[%s2408 + $0x28] sm:$0xff]
    %v2415 = vld [vmem:[%s2408 + $0x30] sm:$0xff]
    %v2416 = vld [vmem:[%s2408 + $0x38] sm:$0xff]
    %v2417 = vld [vmem:[%s2405] sm:$0xf]
    %v2418 = vld [vmem:[%s2405 + $0x4] sm:$0xf]
    %v2419 = vld [vmem:[%s3] sm:$0xff]
    %v2420 = vld [vmem:[%s3 + $0x8] sm:$0xff]
    %v2421 = vld [vmem:[%s3 + $0x10] sm:$0xff]
    %v2422 = vld [vmem:[%s3 + $0x18] sm:$0xff]
    %v2423 = vld [vmem:[%s3 + $0x20] sm:$0xff]
    %v2424 = vld [vmem:[%s3 + $0x28] sm:$0xff]
    %v2425 = vld [vmem:[%s3 + $0x30] sm:$0xff]
    %v2426 = vld [vmem:[%s3 + $0x38] sm:$0xff]
    %v2427 = vld [vmem:[%s3 + $0x40] sm:$0xff]
    %v2428 = vld [vmem:[%s3 + $0x48] sm:$0xff]
    %v2429 = vld [vmem:[%s3 + $0x50] sm:$0xff]
    %v2430 = vld [vmem:[%s3 + $0x58] sm:$0xff]
    %v2431 = vld [vmem:[%s3 + $0x60] sm:$0xff]
    %v2432 = vld [vmem:[%s3 + $0x68] sm:$0xff]
    %v2433 = vld [vmem:[%s3 + $0x70] sm:$0xff]
    %v2434 = vld [vmem:[%s3 + $0x78] sm:$0xff]
    %v2435 = vld [vmem:[%s3 + $0x80] sm:$0xff]
    %v2436 = vld [vmem:[%s3 + $0x88] sm:$0xff]
    %v2437 = vld [vmem:[%s3 + $0x90] sm:$0xff]
    %v2438 = vld [vmem:[%s3 + $0x98] sm:$0xff]
    %v2439 = vld [vmem:[%s3 + $0xa0] sm:$0xff]
    %v2440 = vld [vmem:[%s3 + $0xa8] sm:$0xff]
    %v2441 = vld [vmem:[%s3 + $0xb0] sm:$0xff]
    %v2442 = vld [vmem:[%s3 + $0xb8] sm:$0xff]
    %v2443 = vld [vmem:[%s3 + $0xc0] sm:$0xff]
    %v2444 = vld [vmem:[%s3 + $0xc8] sm:$0xff]
    %v2445 = vld [vmem:[%s3 + $0xd0] sm:$0xff]
    %v2446 = vld [vmem:[%s3 + $0xd8] sm:$0xff]
    %v2447 = vld [vmem:[%s3 + $0xe0] sm:$0xff]
    %v2448 = vld [vmem:[%s3 + $0xe8] sm:$0xff]
    %v2449 = vld [vmem:[%s3 + $0xf0] sm:$0xff]
    %v2450 = vld [vmem:[%s3 + $0xf8] sm:$0xff]
    %v2453 = vunpack.c.l.b16 %v2417
    %v2454 = vunpack.c.l.b16 %v2418
    %v2455 = vpack.c.b16 %v2454, %v2453
    %v2489 = vunpack.c.l.b16 %v2419
    %v2490 = vunpack.c.h.b16 %v2419
    %v2491 = vunpack.c.l.b16 %v2420
    %v2492 = vunpack.c.h.b16 %v2420
    %v2493 = vunpack.c.l.b16 %v2421
    %v2494 = vunpack.c.h.b16 %v2421
    %v2495 = vunpack.c.l.b16 %v2422
    %v2496 = vunpack.c.h.b16 %v2422
    %v2497 = vunpack.c.l.b16 %v2423
    %v2498 = vunpack.c.h.b16 %v2423
    %v2499 = vunpack.c.l.b16 %v2424
    %v2500 = vunpack.c.h.b16 %v2424
    %v2501 = vunpack.c.l.b16 %v2425
    %v2502 = vunpack.c.h.b16 %v2425
    %v2503 = vunpack.c.l.b16 %v2426
    %v2504 = vunpack.c.h.b16 %v2426
    %v2505 = vunpack.c.l.b16 %v2427
    %v2506 = vunpack.c.h.b16 %v2427
    %v2507 = vunpack.c.l.b16 %v2428
    %v2508 = vunpack.c.h.b16 %v2428
    %v2509 = vunpack.c.l.b16 %v2429
    %v2510 = vunpack.c.h.b16 %v2429
    %v2511 = vunpack.c.l.b16 %v2430
    %v2512 = vunpack.c.h.b16 %v2430
    %v2513 = vunpack.c.l.b16 %v2431
    %v2514 = vunpack.c.h.b16 %v2431
    %v2515 = vunpack.c.l.b16 %v2432
    %v2516 = vunpack.c.h.b16 %v2432
    %v2517 = vunpack.c.l.b16 %v2433
    %v2518 = vunpack.c.h.b16 %v2433
    %v2519 = vunpack.c.l.b16 %v2434
    %v2520 = vunpack.c.h.b16 %v2434
    %v2521 = vunpack.c.l.b16 %v2435
    %v2522 = vunpack.c.h.b16 %v2435
    %v2523 = vunpack.c.l.b16 %v2436
    %v2524 = vunpack.c.h.b16 %v2436
    %v2525 = vunpack.c.l.b16 %v2437
    %v2526 = vunpack.c.h.b16 %v2437
    %v2527 = vunpack.c.l.b16 %v2438
    %v2528 = vunpack.c.h.b16 %v2438
    %v2529 = vunpack.c.l.b16 %v2439
    %v2530 = vunpack.c.h.b16 %v2439
    %v2531 = vunpack.c.l.b16 %v2440
    %v2532 = vunpack.c.h.b16 %v2440
    %v2533 = vunpack.c.l.b16 %v2441
    %v2534 = vunpack.c.h.b16 %v2441
    %v2535 = vunpack.c.l.b16 %v2442
    %v2536 = vunpack.c.h.b16 %v2442
    %v2537 = vunpack.c.l.b16 %v2443
    %v2538 = vunpack.c.h.b16 %v2443
    %v2539 = vunpack.c.l.b16 %v2444
    %v2540 = vunpack.c.h.b16 %v2444
    %v2541 = vunpack.c.l.b16 %v2445
    %v2542 = vunpack.c.h.b16 %v2445
    %v2543 = vunpack.c.l.b16 %v2446
    %v2544 = vunpack.c.h.b16 %v2446
    %v2545 = vunpack.c.l.b16 %v2447
    %v2546 = vunpack.c.h.b16 %v2447
    %v2547 = vunpack.c.l.b16 %v2448
    %v2548 = vunpack.c.h.b16 %v2448
    %v2549 = vunpack.c.l.b16 %v2449
    %v2550 = vunpack.c.h.b16 %v2449
    %v2551 = vunpack.c.l.b16 %v2450
    %v2552 = vunpack.c.h.b16 %v2450
    %v2553 = vpack.c.b16 %v2493, %v2489
    %v2554 = vpack.c.b16 %v2494, %v2490
    %v2555 = vpack.c.b16 %v2495, %v2491
    %v2556 = vpack.c.b16 %v2496, %v2492
    %v2557 = vpack.c.b16 %v2501, %v2497
    %v2558 = vpack.c.b16 %v2502, %v2498
    %v2559 = vpack.c.b16 %v2503, %v2499
    %v2560 = vpack.c.b16 %v2504, %v2500
    %v2561 = vpack.c.b16 %v2509, %v2505
    %v2562 = vpack.c.b16 %v2510, %v2506
    %v2563 = vpack.c.b16 %v2511, %v2507
    %v2564 = vpack.c.b16 %v2512, %v2508
    %v2565 = vpack.c.b16 %v2517, %v2513
    %v2566 = vpack.c.b16 %v2518, %v2514
    %v2567 = vpack.c.b16 %v2519, %v2515
    %v2568 = vpack.c.b16 %v2520, %v2516
    %v2569 = vpack.c.b16 %v2525, %v2521
    %v2570 = vpack.c.b16 %v2526, %v2522
    %v2571 = vpack.c.b16 %v2527, %v2523
    %v2572 = vpack.c.b16 %v2528, %v2524
    %v2573 = vpack.c.b16 %v2533, %v2529
    %v2574 = vpack.c.b16 %v2534, %v2530
    %v2575 = vpack.c.b16 %v2535, %v2531
    %v2576 = vpack.c.b16 %v2536, %v2532
    %v2577 = vpack.c.b16 %v2541, %v2537
    %v2578 = vpack.c.b16 %v2542, %v2538
    %v2579 = vpack.c.b16 %v2543, %v2539
    %v2580 = vpack.c.b16 %v2544, %v2540
    %v2581 = vpack.c.b16 %v2549, %v2545
    %v2582 = vpack.c.b16 %v2550, %v2546
    %v2583 = vpack.c.b16 %v2551, %v2547
    %v2584 = vpack.c.b16 %v2552, %v2548
    %2617 = vmatprep.subr.bf16.mxu0 %v2582
    %2618 = vmatpush1.bf16.msra.mxu0 %v2581
    %2619 = vmatprep.subr.bf16.mxu0 %v2578
    %2620 = vmatpush1.bf16.msra.mxu0 %v2577
    %2621 = vmatprep.subr.bf16.mxu0 %v2574
    %2622 = vmatpush1.bf16.msra.mxu0 %v2573
    %2623 = vmatprep.subr.bf16.mxu0 %v2570
    %2624 = vmatpush1.bf16.msra.mxu0 %v2569
    %2625 = vmatprep.subr.bf16.mxu0 %v2566
    %2626 = vmatpush1.bf16.msra.mxu0 %v2565
    %2627 = vmatprep.subr.bf16.mxu0 %v2562
    %2628 = vmatpush1.bf16.msra.mxu0 %v2561
    %2629 = vmatprep.subr.bf16.mxu0 %v2558
    %2630 = vmatpush1.bf16.msra.mxu0 %v2557
    %2631 = vmatprep.subr.bf16.mxu0 %v2554
    %2632 = vmatpush1.bf16.msra.mxu0 %v2553
    %2633 = vmatprep.subr.bf16.mxu0 0
    %2634 = vmatpush2.bf16.msra.mxu0 0
    %2635 = vmatprep.subr.bf16.mxu0 0
    %2636 = vmatpush2.bf16.msra.mxu0 0
    %2637 = vmatprep.subr.bf16.mxu0 0
    %2638 = vmatpush2.bf16.msra.mxu0 0
    %2639 = vmatprep.subr.bf16.mxu0 0
    %2640 = vmatpush2.bf16.msra.mxu0 0
    %2641 = vmatprep.subr.bf16.mxu0 0
    %2642 = vmatpush2.bf16.msra.mxu0 0
    %2643 = vmatprep.subr.bf16.mxu0 0
    %2644 = vmatpush2.bf16.msra.mxu0 0
    %2645 = vmatprep.subr.bf16.mxu0 0
    %2646 = vmatpush2.bf16.msra.mxu0 0
    %2647 = vmatprep.subr.bf16.mxu0 0
    %2648 = vmatpush2.bf16.msra.mxu0 0
    %2649 = vmatprep.mubr.bf16.mxu0 0
    %2650 = vmatmul.mubr.bf16.gmra.mxu0 %v2455
    %v2651 = vpop.f32.mrf.mxu0
    %v2652 = vadd.f32 0.0, %v2651
    %v2653 = vpop.f32.mrf.mxu0
    %v2654 = vadd.f32 0.0, %v2653
    %v2655 = vpop.f32.mrf.mxu0
    %v2656 = vadd.f32 0.0, %v2655
    %v2657 = vpop.f32.mrf.mxu0
    %v2658 = vadd.f32 0.0, %v2657
    %2659 = vdwg.mxu0
    %2660 = vmatprep.subr.bf16.mxu0 %v2584
    %2661 = vmatpush1.bf16.msra.mxu0 %v2583
    %2662 = vmatprep.subr.bf16.mxu0 %v2580
    %2663 = vmatpush1.bf16.msra.mxu0 %v2579
    %2664 = vmatprep.subr.bf16.mxu0 %v2576
    %2665 = vmatpush1.bf16.msra.mxu0 %v2575
    %2666 = vmatprep.subr.bf16.mxu0 %v2572
    %2667 = vmatpush1.bf16.msra.mxu0 %v2571
    %2668 = vmatprep.subr.bf16.mxu0 %v2568
    %2669 = vmatpush1.bf16.msra.mxu0 %v2567
    %2670 = vmatprep.subr.bf16.mxu0 %v2564
    %2671 = vmatpush1.bf16.msra.mxu0 %v2563
    %2672 = vmatprep.subr.bf16.mxu0 %v2560
    %2673 = vmatpush1.bf16.msra.mxu0 %v2559
    %2674 = vmatprep.subr.bf16.mxu0 %v2556
    %2675 = vmatpush1.bf16.msra.mxu0 %v2555
    %2676 = vmatprep.subr.bf16.mxu0 0
    %2677 = vmatpush2.bf16.msra.mxu0 0
    %2678 = vmatprep.subr.bf16.mxu0 0
    %2679 = vmatpush2.bf16.msra.mxu0 0
    %2680 = vmatprep.subr.bf16.mxu0 0
    %2681 = vmatpush2.bf16.msra.mxu0 0
    %2682 = vmatprep.subr.bf16.mxu0 0
    %2683 = vmatpush2.bf16.msra.mxu0 0
    %2684 = vmatprep.subr.bf16.mxu0 0
    %2685 = vmatpush2.bf16.msra.mxu0 0
    %2686 = vmatprep.subr.bf16.mxu0 0
    %2687 = vmatpush2.bf16.msra.mxu0 0
    %2688 = vmatprep.subr.bf16.mxu0 0
    %2689 = vmatpush2.bf16.msra.mxu0 0
    %2690 = vmatprep.subr.bf16.mxu0 0
    %2691 = vmatpush2.bf16.msra.mxu0 0
    %2692 = vmatprep.mubr.bf16.mxu0 0
    %2693 = vmatmul.mubr.bf16.gmra.mxu0 %v2455
    %v2694 = vpop.f32.mrf.mxu0
    %v2695 = vadd.f32 0.0, %v2694
    %v2696 = vpop.f32.mrf.mxu0
    %v2697 = vadd.f32 0.0, %v2696
    %v2698 = vpop.f32.mrf.mxu0
    %v2699 = vadd.f32 0.0, %v2698
    %v2700 = vpop.f32.mrf.mxu0
    %v2701 = vadd.f32 0.0, %v2700
    %2702 = vdwg.mxu0
    %v2703 = vadd.f32 %v2409, %v2652
    %v2704 = vadd.f32 %v2410, %v2654
    %v2705 = vadd.f32 %v2411, %v2695
    %v2706 = vadd.f32 %v2412, %v2697
    %v2707 = vadd.f32 %v2413, %v2656
    %v2708 = vadd.f32 %v2414, %v2658
    %v2709 = vadd.f32 %v2415, %v2699
    %v2710 = vadd.f32 %v2416, %v2701
    %v2711 = vld [vmem:[#allocation3] sm:$0xff]
    %v2712 = vld [vmem:[#allocation3 + $0x8] sm:$0xff]
    %v2713 = vxor.u32 %v2703, 2147483648
    %v2714 = vxor.u32 %v2704, 2147483648
    %v2715 = vxor.u32 %v2705, 2147483648
    %v2716 = vxor.u32 %v2707, 2147483648
    %v2717 = vxor.u32 %v2708, 2147483648
    %v2718 = vxor.u32 %v2709, 2147483648
    %v2719 = vmul.f32 %v2713, 1.442695
    %v2720 = vpow.pop %v2719
    %v2721 = vmul.f32 %v2714, 1.442695
    %v2722 = vpow.pop %v2721
    %v2723 = vmul.f32 %v2715, 1.442695
    %v2724 = vpow.pop %v2723
    %v2725 = vmul.f32 %v2716, 1.442695
    %v2726 = vpow.pop %v2725
    %v2727 = vmul.f32 %v2717, 1.442695
    %v2728 = vpow.pop %v2727
    %v2729 = vmul.f32 %v2718, 1.442695
    %v2730 = vpow.pop %v2729
    %v2731 = vadd.f32 %v2720, 1.0
    %v2732 = vadd.f32 %v2722, 1.0
    %v2733 = vadd.f32 %v2724, 1.0
    %v2734 = vadd.f32 %v2726, 1.0
    %v2735 = vadd.f32 %v2728, 1.0
    %v2736 = vadd.f32 %v2730, 1.0
    %v2737 = vrcp.pop %v2731
    %v2738 = vmul.f32 1.0, %v2737
    %v2739 = vrcp.pop %v2732
    %v2740 = vmul.f32 1.0, %v2739
    %v2741 = vrcp.pop %v2733
    %v2742 = vmul.f32 1.0, %v2741
    %v2743 = vrcp.pop %v2734
    %v2744 = vmul.f32 1.0, %v2743
    %v2745 = vrcp.pop %v2735
    %v2746 = vmul.f32 1.0, %v2745
    %v2747 = vrcp.pop %v2736
    %v2748 = vmul.f32 1.0, %v2747
    %v2749 = vtanh.pop %v2706
    %v2750 = vtanh.pop %v2710
    %v2751 = vmul.f32 %v2740, %v2711
    %v2752 = vmul.f32 %v2746, %v2712
    %v2753 = vmul.f32 %v2738, %v2749
    %v2754 = vmul.f32 %v2744, %v2750
    %v2755 = vadd.f32 %v2751, %v2753
    %v2756 = vadd.f32 %v2752, %v2754
    %v2757 = vtanh.pop %v2755
    %v2758 = vtanh.pop %v2756
    %v2759 = vmul.f32 %v2742, %v2757
    %v2760 = vmul.f32 %v2748, %v2758
    %2761 = vst [vmem:[#allocation3] sm:$0xff] %v2755
    %2762 = vst [vmem:[#allocation3 + $0x8] sm:$0xff] %v2756
    %v2763 = vpack.c.bf16 %v2760, %v2759
    %v2765 = vunpack.c.l.b16 %v2763
    %v2766 = vunpack.c.h.b16 %v2763
    %v2767 = vpack.c.b16 %v2765, %v2765
    %v2768 = vpack.c.b16 %v2766, %v2766
    %s2771 = scalar_lea.vmem [#allocation2], 48
    %2772 = vst [vmem:[%s2771] sm:$0xf] %v2767
    %2773 = vst [vmem:[%s2771 + $0x4] sm:$0xf] %v2768
    %s2774 = scalar_lea.vmem [#allocation4], 384
    %v2775 = vld [vmem:[%s2774] sm:$0xff]
    %v2776 = vld [vmem:[%s2774 + $0x8] sm:$0xff]
    %v2777 = vld [vmem:[%s2774 + $0x10] sm:$0xff]
    %v2778 = vld [vmem:[%s2774 + $0x18] sm:$0xff]
    %v2779 = vld [vmem:[%s2774 + $0x20] sm:$0xff]
    %v2780 = vld [vmem:[%s2774 + $0x28] sm:$0xff]
    %v2781 = vld [vmem:[%s2774 + $0x30] sm:$0xff]
    %v2782 = vld [vmem:[%s2774 + $0x38] sm:$0xff]
    %v2783 = vld [vmem:[%s2771] sm:$0xf]
    %v2784 = vld [vmem:[%s2771 + $0x4] sm:$0xf]
    %v2785 = vld [vmem:[%s3] sm:$0xff]
    %v2786 = vld [vmem:[%s3 + $0x8] sm:$0xff]
    %v2787 = vld [vmem:[%s3 + $0x10] sm:$0xff]
    %v2788 = vld [vmem:[%s3 + $0x18] sm:$0xff]
    %v2789 = vld [vmem:[%s3 + $0x20] sm:$0xff]
    %v2790 = vld [vmem:[%s3 + $0x28] sm:$0xff]
    %v2791 = vld [vmem:[%s3 + $0x30] sm:$0xff]
    %v2792 = vld [vmem:[%s3 + $0x38] sm:$0xff]
    %v2793 = vld [vmem:[%s3 + $0x40] sm:$0xff]
    %v2794 = vld [vmem:[%s3 + $0x48] sm:$0xff]
    %v2795 = vld [vmem:[%s3 + $0x50] sm:$0xff]
    %v2796 = vld [vmem:[%s3 + $0x58] sm:$0xff]
    %v2797 = vld [vmem:[%s3 + $0x60] sm:$0xff]
    %v2798 = vld [vmem:[%s3 + $0x68] sm:$0xff]
    %v2799 = vld [vmem:[%s3 + $0x70] sm:$0xff]
    %v2800 = vld [vmem:[%s3 + $0x78] sm:$0xff]
    %v2801 = vld [vmem:[%s3 + $0x80] sm:$0xff]
    %v2802 = vld [vmem:[%s3 + $0x88] sm:$0xff]
    %v2803 = vld [vmem:[%s3 + $0x90] sm:$0xff]
    %v2804 = vld [vmem:[%s3 + $0x98] sm:$0xff]
    %v2805 = vld [vmem:[%s3 + $0xa0] sm:$0xff]
    %v2806 = vld [vmem:[%s3 + $0xa8] sm:$0xff]
    %v2807 = vld [vmem:[%s3 + $0xb0] sm:$0xff]
    %v2808 = vld [vmem:[%s3 + $0xb8] sm:$0xff]
    %v2809 = vld [vmem:[%s3 + $0xc0] sm:$0xff]
    %v2810 = vld [vmem:[%s3 + $0xc8] sm:$0xff]
    %v2811 = vld [vmem:[%s3 + $0xd0] sm:$0xff]
    %v2812 = vld [vmem:[%s3 + $0xd8] sm:$0xff]
    %v2813 = vld [vmem:[%s3 + $0xe0] sm:$0xff]
    %v2814 = vld [vmem:[%s3 + $0xe8] sm:$0xff]
    %v2815 = vld [vmem:[%s3 + $0xf0] sm:$0xff]
    %v2816 = vld [vmem:[%s3 + $0xf8] sm:$0xff]
    %v2819 = vunpack.c.l.b16 %v2783
    %v2820 = vunpack.c.l.b16 %v2784
    %v2821 = vpack.c.b16 %v2820, %v2819
    %v2855 = vunpack.c.l.b16 %v2785
    %v2856 = vunpack.c.h.b16 %v2785
    %v2857 = vunpack.c.l.b16 %v2786
    %v2858 = vunpack.c.h.b16 %v2786
    %v2859 = vunpack.c.l.b16 %v2787
    %v2860 = vunpack.c.h.b16 %v2787
    %v2861 = vunpack.c.l.b16 %v2788
    %v2862 = vunpack.c.h.b16 %v2788
    %v2863 = vunpack.c.l.b16 %v2789
    %v2864 = vunpack.c.h.b16 %v2789
    %v2865 = vunpack.c.l.b16 %v2790
    %v2866 = vunpack.c.h.b16 %v2790
    %v2867 = vunpack.c.l.b16 %v2791
    %v2868 = vunpack.c.h.b16 %v2791
    %v2869 = vunpack.c.l.b16 %v2792
    %v2870 = vunpack.c.h.b16 %v2792
    %v2871 = vunpack.c.l.b16 %v2793
    %v2872 = vunpack.c.h.b16 %v2793
    %v2873 = vunpack.c.l.b16 %v2794
    %v2874 = vunpack.c.h.b16 %v2794
    %v2875 = vunpack.c.l.b16 %v2795
    %v2876 = vunpack.c.h.b16 %v2795
    %v2877 = vunpack.c.l.b16 %v2796
    %v2878 = vunpack.c.h.b16 %v2796
    %v2879 = vunpack.c.l.b16 %v2797
    %v2880 = vunpack.c.h.b16 %v2797
    %v2881 = vunpack.c.l.b16 %v2798
    %v2882 = vunpack.c.h.b16 %v2798
    %v2883 = vunpack.c.l.b16 %v2799
    %v2884 = vunpack.c.h.b16 %v2799
    %v2885 = vunpack.c.l.b16 %v2800
    %v2886 = vunpack.c.h.b16 %v2800
    %v2887 = vunpack.c.l.b16 %v2801
    %v2888 = vunpack.c.h.b16 %v2801
    %v2889 = vunpack.c.l.b16 %v2802
    %v2890 = vunpack.c.h.b16 %v2802
    %v2891 = vunpack.c.l.b16 %v2803
    %v2892 = vunpack.c.h.b16 %v2803
    %v2893 = vunpack.c.l.b16 %v2804
    %v2894 = vunpack.c.h.b16 %v2804
    %v2895 = vunpack.c.l.b16 %v2805
    %v2896 = vunpack.c.h.b16 %v2805
    %v2897 = vunpack.c.l.b16 %v2806
    %v2898 = vunpack.c.h.b16 %v2806
    %v2899 = vunpack.c.l.b16 %v2807
    %v2900 = vunpack.c.h.b16 %v2807
    %v2901 = vunpack.c.l.b16 %v2808
    %v2902 = vunpack.c.h.b16 %v2808
    %v2903 = vunpack.c.l.b16 %v2809
    %v2904 = vunpack.c.h.b16 %v2809
    %v2905 = vunpack.c.l.b16 %v2810
    %v2906 = vunpack.c.h.b16 %v2810
    %v2907 = vunpack.c.l.b16 %v2811
    %v2908 = vunpack.c.h.b16 %v2811
    %v2909 = vunpack.c.l.b16 %v2812
    %v2910 = vunpack.c.h.b16 %v2812
    %v2911 = vunpack.c.l.b16 %v2813
    %v2912 = vunpack.c.h.b16 %v2813
    %v2913 = vunpack.c.l.b16 %v2814
    %v2914 = vunpack.c.h.b16 %v2814
    %v2915 = vunpack.c.l.b16 %v2815
    %v2916 = vunpack.c.h.b16 %v2815
    %v2917 = vunpack.c.l.b16 %v2816
    %v2918 = vunpack.c.h.b16 %v2816
    %v2919 = vpack.c.b16 %v2859, %v2855
    %v2920 = vpack.c.b16 %v2860, %v2856
    %v2921 = vpack.c.b16 %v2861, %v2857
    %v2922 = vpack.c.b16 %v2862, %v2858
    %v2923 = vpack.c.b16 %v2867, %v2863
    %v2924 = vpack.c.b16 %v2868, %v2864
    %v2925 = vpack.c.b16 %v2869, %v2865
    %v2926 = vpack.c.b16 %v2870, %v2866
    %v2927 = vpack.c.b16 %v2875, %v2871
    %v2928 = vpack.c.b16 %v2876, %v2872
    %v2929 = vpack.c.b16 %v2877, %v2873
    %v2930 = vpack.c.b16 %v2878, %v2874
    %v2931 = vpack.c.b16 %v2883, %v2879
    %v2932 = vpack.c.b16 %v2884, %v2880
    %v2933 = vpack.c.b16 %v2885, %v2881
    %v2934 = vpack.c.b16 %v2886, %v2882
    %v2935 = vpack.c.b16 %v2891, %v2887
    %v2936 = vpack.c.b16 %v2892, %v2888
    %v2937 = vpack.c.b16 %v2893, %v2889
    %v2938 = vpack.c.b16 %v2894, %v2890
    %v2939 = vpack.c.b16 %v2899, %v2895
    %v2940 = vpack.c.b16 %v2900, %v2896
    %v2941 = vpack.c.b16 %v2901, %v2897
    %v2942 = vpack.c.b16 %v2902, %v2898
    %v2943 = vpack.c.b16 %v2907, %v2903
    %v2944 = vpack.c.b16 %v2908, %v2904
    %v2945 = vpack.c.b16 %v2909, %v2905
    %v2946 = vpack.c.b16 %v2910, %v2906
    %v2947 = vpack.c.b16 %v2915, %v2911
    %v2948 = vpack.c.b16 %v2916, %v2912
    %v2949 = vpack.c.b16 %v2917, %v2913
    %v2950 = vpack.c.b16 %v2918, %v2914
    %2983 = vmatprep.subr.bf16.mxu0 %v2948
    %2984 = vmatpush1.bf16.msra.mxu0 %v2947
    %2985 = vmatprep.subr.bf16.mxu0 %v2944
    %2986 = vmatpush1.bf16.msra.mxu0 %v2943
    %2987 = vmatprep.subr.bf16.mxu0 %v2940
    %2988 = vmatpush1.bf16.msra.mxu0 %v2939
    %2989 = vmatprep.subr.bf16.mxu0 %v2936
    %2990 = vmatpush1.bf16.msra.mxu0 %v2935
    %2991 = vmatprep.subr.bf16.mxu0 %v2932
    %2992 = vmatpush1.bf16.msra.mxu0 %v2931
    %2993 = vmatprep.subr.bf16.mxu0 %v2928
    %2994 = vmatpush1.bf16.msra.mxu0 %v2927
    %2995 = vmatprep.subr.bf16.mxu0 %v2924
    %2996 = vmatpush1.bf16.msra.mxu0 %v2923
    %2997 = vmatprep.subr.bf16.mxu0 %v2920
    %2998 = vmatpush1.bf16.msra.mxu0 %v2919
    %2999 = vmatprep.subr.bf16.mxu0 0
    %3000 = vmatpush2.bf16.msra.mxu0 0
    %3001 = vmatprep.subr.bf16.mxu0 0
    %3002 = vmatpush2.bf16.msra.mxu0 0
    %3003 = vmatprep.subr.bf16.mxu0 0
    %3004 = vmatpush2.bf16.msra.mxu0 0
    %3005 = vmatprep.subr.bf16.mxu0 0
    %3006 = vmatpush2.bf16.msra.mxu0 0
    %3007 = vmatprep.subr.bf16.mxu0 0
    %3008 = vmatpush2.bf16.msra.mxu0 0
    %3009 = vmatprep.subr.bf16.mxu0 0
    %3010 = vmatpush2.bf16.msra.mxu0 0
    %3011 = vmatprep.subr.bf16.mxu0 0
    %3012 = vmatpush2.bf16.msra.mxu0 0
    %3013 = vmatprep.subr.bf16.mxu0 0
    %3014 = vmatpush2.bf16.msra.mxu0 0
    %3015 = vmatprep.mubr.bf16.mxu0 0
    %3016 = vmatmul.mubr.bf16.gmra.mxu0 %v2821
    %v3017 = vpop.f32.mrf.mxu0
    %v3018 = vadd.f32 0.0, %v3017
    %v3019 = vpop.f32.mrf.mxu0
    %v3020 = vadd.f32 0.0, %v3019
    %v3021 = vpop.f32.mrf.mxu0
    %v3022 = vadd.f32 0.0, %v3021
    %v3023 = vpop.f32.mrf.mxu0
    %v3024 = vadd.f32 0.0, %v3023
    %3025 = vdwg.mxu0
    %3026 = vmatprep.subr.bf16.mxu0 %v2950
    %3027 = vmatpush1.bf16.msra.mxu0 %v2949
    %3028 = vmatprep.subr.bf16.mxu0 %v2946
    %3029 = vmatpush1.bf16.msra.mxu0 %v2945
    %3030 = vmatprep.subr.bf16.mxu0 %v2942
    %3031 = vmatpush1.bf16.msra.mxu0 %v2941
    %3032 = vmatprep.subr.bf16.mxu0 %v2938
    %3033 = vmatpush1.bf16.msra.mxu0 %v2937
    %3034 = vmatprep.subr.bf16.mxu0 %v2934
    %3035 = vmatpush1.bf16.msra.mxu0 %v2933
    %3036 = vmatprep.subr.bf16.mxu0 %v2930
    %3037 = vmatpush1.bf16.msra.mxu0 %v2929
    %3038 = vmatprep.subr.bf16.mxu0 %v2926
    %3039 = vmatpush1.bf16.msra.mxu0 %v2925
    %3040 = vmatprep.subr.bf16.mxu0 %v2922
    %3041 = vmatpush1.bf16.msra.mxu0 %v2921
    %3042 = vmatprep.subr.bf16.mxu0 0
    %3043 = vmatpush2.bf16.msra.mxu0 0
    %3044 = vmatprep.subr.bf16.mxu0 0
    %3045 = vmatpush2.bf16.msra.mxu0 0
    %3046 = vmatprep.subr.bf16.mxu0 0
    %3047 = vmatpush2.bf16.msra.mxu0 0
    %3048 = vmatprep.subr.bf16.mxu0 0
    %3049 = vmatpush2.bf16.msra.mxu0 0
    %3050 = vmatprep.subr.bf16.mxu0 0
    %3051 = vmatpush2.bf16.msra.mxu0 0
    %3052 = vmatprep.subr.bf16.mxu0 0
    %3053 = vmatpush2.bf16.msra.mxu0 0
    %3054 = vmatprep.subr.bf16.mxu0 0
    %3055 = vmatpush2.bf16.msra.mxu0 0
    %3056 = vmatprep.subr.bf16.mxu0 0
    %3057 = vmatpush2.bf16.msra.mxu0 0
    %3058 = vmatprep.mubr.bf16.mxu0 0
    %3059 = vmatmul.mubr.bf16.gmra.mxu0 %v2821
    %v3060 = vpop.f32.mrf.mxu0
    %v3061 = vadd.f32 0.0, %v3060
    %v3062 = vpop.f32.mrf.mxu0
    %v3063 = vadd.f32 0.0, %v3062
    %v3064 = vpop.f32.mrf.mxu0
    %v3065 = vadd.f32 0.0, %v3064
    %v3066 = vpop.f32.mrf.mxu0
    %v3067 = vadd.f32 0.0, %v3066
    %3068 = vdwg.mxu0
    %v3069 = vadd.f32 %v2775, %v3018
    %v3070 = vadd.f32 %v2776, %v3020
    %v3071 = vadd.f32 %v2777, %v3061
    %v3072 = vadd.f32 %v2778, %v3063
    %v3073 = vadd.f32 %v2779, %v3022
    %v3074 = vadd.f32 %v2780, %v3024
    %v3075 = vadd.f32 %v2781, %v3065
    %v3076 = vadd.f32 %v2782, %v3067
    %v3077 = vld [vmem:[#allocation3] sm:$0xff]
    %v3078 = vld [vmem:[#allocation3 + $0x8] sm:$0xff]
    %v3079 = vxor.u32 %v3069, 2147483648
    %v3080 = vxor.u32 %v3070, 2147483648
    %v3081 = vxor.u32 %v3071, 2147483648
    %v3082 = vxor.u32 %v3073, 2147483648
    %v3083 = vxor.u32 %v3074, 2147483648
    %v3084 = vxor.u32 %v3075, 2147483648
    %v3085 = vmul.f32 %v3079, 1.442695
    %v3086 = vpow.pop %v3085
    %v3087 = vmul.f32 %v3080, 1.442695
    %v3088 = vpow.pop %v3087
    %v3089 = vmul.f32 %v3081, 1.442695
    %v3090 = vpow.pop %v3089
    %v3091 = vmul.f32 %v3082, 1.442695
    %v3092 = vpow.pop %v3091
    %v3093 = vmul.f32 %v3083, 1.442695
    %v3094 = vpow.pop %v3093
    %v3095 = vmul.f32 %v3084, 1.442695
    %v3096 = vpow.pop %v3095
    %v3097 = vadd.f32 %v3086, 1.0
    %v3098 = vadd.f32 %v3088, 1.0
    %v3099 = vadd.f32 %v3090, 1.0
    %v3100 = vadd.f32 %v3092, 1.0
    %v3101 = vadd.f32 %v3094, 1.0
    %v3102 = vadd.f32 %v3096, 1.0
    %v3103 = vrcp.pop %v3097
    %v3104 = vmul.f32 1.0, %v3103
    %v3105 = vrcp.pop %v3098
    %v3106 = vmul.f32 1.0, %v3105
    %v3107 = vrcp.pop %v3099
    %v3108 = vmul.f32 1.0, %v3107
    %v3109 = vrcp.pop %v3100
    %v3110 = vmul.f32 1.0, %v3109
    %v3111 = vrcp.pop %v3101
    %v3112 = vmul.f32 1.0, %v3111
    %v3113 = vrcp.pop %v3102
    %v3114 = vmul.f32 1.0, %v3113
    %v3115 = vtanh.pop %v3072
    %v3116 = vtanh.pop %v3076
    %v3117 = vmul.f32 %v3106, %v3077
    %v3118 = vmul.f32 %v3112, %v3078
    %v3119 = vmul.f32 %v3104, %v3115
    %v3120 = vmul.f32 %v3110, %v3116
    %v3121 = vadd.f32 %v3117, %v3119
    %v3122 = vadd.f32 %v3118, %v3120
    %v3123 = vtanh.pop %v3121
    %v3124 = vtanh.pop %v3122
    %v3125 = vmul.f32 %v3108, %v3123
    %v3126 = vmul.f32 %v3114, %v3124
    %3127 = vst [vmem:[#allocation3] sm:$0xff] %v3121
    %3128 = vst [vmem:[#allocation3 + $0x8] sm:$0xff] %v3122
    %v3129 = vpack.c.bf16 %v3126, %v3125
    %v3131 = vunpack.c.l.b16 %v3129
    %v3132 = vunpack.c.h.b16 %v3129
    %v3133 = vpack.c.b16 %v3131, %v3131
    %v3134 = vpack.c.b16 %v3132, %v3132
    %s3137 = scalar_lea.vmem [#allocation2], 56
    %3138 = vst [vmem:[%s3137] sm:$0xf] %v3133
    %3139 = vst [vmem:[%s3137 + $0x4] sm:$0xf] %v3134
    %s3140 = scalar_lea.vmem [#allocation4], 448
    %v3141 = vld [vmem:[%s3140] sm:$0xff]
    %v3142 = vld [vmem:[%s3140 + $0x8] sm:$0xff]
    %v3143 = vld [vmem:[%s3140 + $0x10] sm:$0xff]
    %v3144 = vld [vmem:[%s3140 + $0x18] sm:$0xff]
    %v3145 = vld [vmem:[%s3140 + $0x20] sm:$0xff]
    %v3146 = vld [vmem:[%s3140 + $0x28] sm:$0xff]
    %v3147 = vld [vmem:[%s3140 + $0x30] sm:$0xff]
    %v3148 = vld [vmem:[%s3140 + $0x38] sm:$0xff]
    %v3149 = vld [vmem:[%s3137] sm:$0xf]
    %v3150 = vld [vmem:[%s3137 + $0x4] sm:$0xf]
    %v3151 = vld [vmem:[%s3] sm:$0xff]
    %v3152 = vld [vmem:[%s3 + $0x8] sm:$0xff]
    %v3153 = vld [vmem:[%s3 + $0x10] sm:$0xff]
    %v3154 = vld [vmem:[%s3 + $0x18] sm:$0xff]
    %v3155 = vld [vmem:[%s3 + $0x20] sm:$0xff]
    %v3156 = vld [vmem:[%s3 + $0x28] sm:$0xff]
    %v3157 = vld [vmem:[%s3 + $0x30] sm:$0xff]
    %v3158 = vld [vmem:[%s3 + $0x38] sm:$0xff]
    %v3159 = vld [vmem:[%s3 + $0x40] sm:$0xff]
    %v3160 = vld [vmem:[%s3 + $0x48] sm:$0xff]
    %v3161 = vld [vmem:[%s3 + $0x50] sm:$0xff]
    %v3162 = vld [vmem:[%s3 + $0x58] sm:$0xff]
    %v3163 = vld [vmem:[%s3 + $0x60] sm:$0xff]
    %v3164 = vld [vmem:[%s3 + $0x68] sm:$0xff]
    %v3165 = vld [vmem:[%s3 + $0x70] sm:$0xff]
    %v3166 = vld [vmem:[%s3 + $0x78] sm:$0xff]
    %v3167 = vld [vmem:[%s3 + $0x80] sm:$0xff]
    %v3168 = vld [vmem:[%s3 + $0x88] sm:$0xff]
    %v3169 = vld [vmem:[%s3 + $0x90] sm:$0xff]
    %v3170 = vld [vmem:[%s3 + $0x98] sm:$0xff]
    %v3171 = vld [vmem:[%s3 + $0xa0] sm:$0xff]
    %v3172 = vld [vmem:[%s3 + $0xa8] sm:$0xff]
    %v3173 = vld [vmem:[%s3 + $0xb0] sm:$0xff]
    %v3174 = vld [vmem:[%s3 + $0xb8] sm:$0xff]
    %v3175 = vld [vmem:[%s3 + $0xc0] sm:$0xff]
    %v3176 = vld [vmem:[%s3 + $0xc8] sm:$0xff]
    %v3177 = vld [vmem:[%s3 + $0xd0] sm:$0xff]
    %v3178 = vld [vmem:[%s3 + $0xd8] sm:$0xff]
    %v3179 = vld [vmem:[%s3 + $0xe0] sm:$0xff]
    %v3180 = vld [vmem:[%s3 + $0xe8] sm:$0xff]
    %v3181 = vld [vmem:[%s3 + $0xf0] sm:$0xff]
    %v3182 = vld [vmem:[%s3 + $0xf8] sm:$0xff]
    %v3185 = vunpack.c.l.b16 %v3149
    %v3186 = vunpack.c.l.b16 %v3150
    %v3187 = vpack.c.b16 %v3186, %v3185
    %v3221 = vunpack.c.l.b16 %v3151
    %v3222 = vunpack.c.h.b16 %v3151
    %v3223 = vunpack.c.l.b16 %v3152
    %v3224 = vunpack.c.h.b16 %v3152
    %v3225 = vunpack.c.l.b16 %v3153
    %v3226 = vunpack.c.h.b16 %v3153
    %v3227 = vunpack.c.l.b16 %v3154
    %v3228 = vunpack.c.h.b16 %v3154
    %v3229 = vunpack.c.l.b16 %v3155
    %v3230 = vunpack.c.h.b16 %v3155
    %v3231 = vunpack.c.l.b16 %v3156
    %v3232 = vunpack.c.h.b16 %v3156
    %v3233 = vunpack.c.l.b16 %v3157
    %v3234 = vunpack.c.h.b16 %v3157
    %v3235 = vunpack.c.l.b16 %v3158
    %v3236 = vunpack.c.h.b16 %v3158
    %v3237 = vunpack.c.l.b16 %v3159
    %v3238 = vunpack.c.h.b16 %v3159
    %v3239 = vunpack.c.l.b16 %v3160
    %v3240 = vunpack.c.h.b16 %v3160
    %v3241 = vunpack.c.l.b16 %v3161
    %v3242 = vunpack.c.h.b16 %v3161
    %v3243 = vunpack.c.l.b16 %v3162
    %v3244 = vunpack.c.h.b16 %v3162
    %v3245 = vunpack.c.l.b16 %v3163
    %v3246 = vunpack.c.h.b16 %v3163
    %v3247 = vunpack.c.l.b16 %v3164
    %v3248 = vunpack.c.h.b16 %v3164
    %v3249 = vunpack.c.l.b16 %v3165
    %v3250 = vunpack.c.h.b16 %v3165
    %v3251 = vunpack.c.l.b16 %v3166
    %v3252 = vunpack.c.h.b16 %v3166
    %v3253 = vunpack.c.l.b16 %v3167
    %v3254 = vunpack.c.h.b16 %v3167
    %v3255 = vunpack.c.l.b16 %v3168
    %v3256 = vunpack.c.h.b16 %v3168
    %v3257 = vunpack.c.l.b16 %v3169
    %v3258 = vunpack.c.h.b16 %v3169
    %v3259 = vunpack.c.l.b16 %v3170
    %v3260 = vunpack.c.h.b16 %v3170
    %v3261 = vunpack.c.l.b16 %v3171
    %v3262 = vunpack.c.h.b16 %v3171
    %v3263 = vunpack.c.l.b16 %v3172
    %v3264 = vunpack.c.h.b16 %v3172
    %v3265 = vunpack.c.l.b16 %v3173
    %v3266 = vunpack.c.h.b16 %v3173
    %v3267 = vunpack.c.l.b16 %v3174
    %v3268 = vunpack.c.h.b16 %v3174
    %v3269 = vunpack.c.l.b16 %v3175
    %v3270 = vunpack.c.h.b16 %v3175
    %v3271 = vunpack.c.l.b16 %v3176
    %v3272 = vunpack.c.h.b16 %v3176
    %v3273 = vunpack.c.l.b16 %v3177
    %v3274 = vunpack.c.h.b16 %v3177
    %v3275 = vunpack.c.l.b16 %v3178
    %v3276 = vunpack.c.h.b16 %v3178
    %v3277 = vunpack.c.l.b16 %v3179
    %v3278 = vunpack.c.h.b16 %v3179
    %v3279 = vunpack.c.l.b16 %v3180
    %v3280 = vunpack.c.h.b16 %v3180
    %v3281 = vunpack.c.l.b16 %v3181
    %v3282 = vunpack.c.h.b16 %v3181
    %v3283 = vunpack.c.l.b16 %v3182
    %v3284 = vunpack.c.h.b16 %v3182
    %v3285 = vpack.c.b16 %v3225, %v3221
    %v3286 = vpack.c.b16 %v3226, %v3222
    %v3287 = vpack.c.b16 %v3227, %v3223
    %v3288 = vpack.c.b16 %v3228, %v3224
    %v3289 = vpack.c.b16 %v3233, %v3229
    %v3290 = vpack.c.b16 %v3234, %v3230
    %v3291 = vpack.c.b16 %v3235, %v3231
    %v3292 = vpack.c.b16 %v3236, %v3232
    %v3293 = vpack.c.b16 %v3241, %v3237
    %v3294 = vpack.c.b16 %v3242, %v3238
    %v3295 = vpack.c.b16 %v3243, %v3239
    %v3296 = vpack.c.b16 %v3244, %v3240
    %v3297 = vpack.c.b16 %v3249, %v3245
    %v3298 = vpack.c.b16 %v3250, %v3246
    %v3299 = vpack.c.b16 %v3251, %v3247
    %v3300 = vpack.c.b16 %v3252, %v3248
    %v3301 = vpack.c.b16 %v3257, %v3253
    %v3302 = vpack.c.b16 %v3258, %v3254
    %v3303 = vpack.c.b16 %v3259, %v3255
    %v3304 = vpack.c.b16 %v3260, %v3256
    %v3305 = vpack.c.b16 %v3265, %v3261
    %v3306 = vpack.c.b16 %v3266, %v3262
    %v3307 = vpack.c.b16 %v3267, %v3263
    %v3308 = vpack.c.b16 %v3268, %v3264
    %v3309 = vpack.c.b16 %v3273, %v3269
    %v3310 = vpack.c.b16 %v3274, %v3270
    %v3311 = vpack.c.b16 %v3275, %v3271
    %v3312 = vpack.c.b16 %v3276, %v3272
    %v3313 = vpack.c.b16 %v3281, %v3277
    %v3314 = vpack.c.b16 %v3282, %v3278
    %v3315 = vpack.c.b16 %v3283, %v3279
    %v3316 = vpack.c.b16 %v3284, %v3280
    %3349 = vmatprep.subr.bf16.mxu0 %v3314
    %3350 = vmatpush1.bf16.msra.mxu0 %v3313
    %3351 = vmatprep.subr.bf16.mxu0 %v3310
    %3352 = vmatpush1.bf16.msra.mxu0 %v3309
    %3353 = vmatprep.subr.bf16.mxu0 %v3306
    %3354 = vmatpush1.bf16.msra.mxu0 %v3305
    %3355 = vmatprep.subr.bf16.mxu0 %v3302
    %3356 = vmatpush1.bf16.msra.mxu0 %v3301
    %3357 = vmatprep.subr.bf16.mxu0 %v3298
    %3358 = vmatpush1.bf16.msra.mxu0 %v3297
    %3359 = vmatprep.subr.bf16.mxu0 %v3294
    %3360 = vmatpush1.bf16.msra.mxu0 %v3293
    %3361 = vmatprep.subr.bf16.mxu0 %v3290
    %3362 = vmatpush1.bf16.msra.mxu0 %v3289
    %3363 = vmatprep.subr.bf16.mxu0 %v3286
    %3364 = vmatpush1.bf16.msra.mxu0 %v3285
    %3365 = vmatprep.subr.bf16.mxu0 0
    %3366 = vmatpush2.bf16.msra.mxu0 0
    %3367 = vmatprep.subr.bf16.mxu0 0
    %3368 = vmatpush2.bf16.msra.mxu0 0
    %3369 = vmatprep.subr.bf16.mxu0 0
    %3370 = vmatpush2.bf16.msra.mxu0 0
    %3371 = vmatprep.subr.bf16.mxu0 0
    %3372 = vmatpush2.bf16.msra.mxu0 0
    %3373 = vmatprep.subr.bf16.mxu0 0
    %3374 = vmatpush2.bf16.msra.mxu0 0
    %3375 = vmatprep.subr.bf16.mxu0 0
    %3376 = vmatpush2.bf16.msra.mxu0 0
    %3377 = vmatprep.subr.bf16.mxu0 0
    %3378 = vmatpush2.bf16.msra.mxu0 0
    %3379 = vmatprep.subr.bf16.mxu0 0
    %3380 = vmatpush2.bf16.msra.mxu0 0
    %3381 = vmatprep.mubr.bf16.mxu0 0
    %3382 = vmatmul.mubr.bf16.gmra.mxu0 %v3187
    %v3383 = vpop.f32.mrf.mxu0
    %v3384 = vadd.f32 0.0, %v3383
    %v3385 = vpop.f32.mrf.mxu0
    %v3386 = vadd.f32 0.0, %v3385
    %v3387 = vpop.f32.mrf.mxu0
    %v3388 = vadd.f32 0.0, %v3387
    %v3389 = vpop.f32.mrf.mxu0
    %v3390 = vadd.f32 0.0, %v3389
    %3391 = vdwg.mxu0
    %3392 = vmatprep.subr.bf16.mxu0 %v3316
    %3393 = vmatpush1.bf16.msra.mxu0 %v3315
    %3394 = vmatprep.subr.bf16.mxu0 %v3312
    %3395 = vmatpush1.bf16.msra.mxu0 %v3311
    %3396 = vmatprep.subr.bf16.mxu0 %v3308
    %3397 = vmatpush1.bf16.msra.mxu0 %v3307
    %3398 = vmatprep.subr.bf16.mxu0 %v3304
    %3399 = vmatpush1.bf16.msra.mxu0 %v3303
    %3400 = vmatprep.subr.bf16.mxu0 %v3300
    %3401 = vmatpush1.bf16.msra.mxu0 %v3299
    %3402 = vmatprep.subr.bf16.mxu0 %v3296
    %3403 = vmatpush1.bf16.msra.mxu0 %v3295
    %3404 = vmatprep.subr.bf16.mxu0 %v3292
    %3405 = vmatpush1.bf16.msra.mxu0 %v3291
    %3406 = vmatprep.subr.bf16.mxu0 %v3288
    %3407 = vmatpush1.bf16.msra.mxu0 %v3287
    %3408 = vmatprep.subr.bf16.mxu0 0
    %3409 = vmatpush2.bf16.msra.mxu0 0
    %3410 = vmatprep.subr.bf16.mxu0 0
    %3411 = vmatpush2.bf16.msra.mxu0 0
    %3412 = vmatprep.subr.bf16.mxu0 0
    %3413 = vmatpush2.bf16.msra.mxu0 0
    %3414 = vmatprep.subr.bf16.mxu0 0
    %3415 = vmatpush2.bf16.msra.mxu0 0
    %3416 = vmatprep.subr.bf16.mxu0 0
    %3417 = vmatpush2.bf16.msra.mxu0 0
    %3418 = vmatprep.subr.bf16.mxu0 0
    %3419 = vmatpush2.bf16.msra.mxu0 0
    %3420 = vmatprep.subr.bf16.mxu0 0
    %3421 = vmatpush2.bf16.msra.mxu0 0
    %3422 = vmatprep.subr.bf16.mxu0 0
    %3423 = vmatpush2.bf16.msra.mxu0 0
    %3424 = vmatprep.mubr.bf16.mxu0 0
    %3425 = vmatmul.mubr.bf16.gmra.mxu0 %v3187
    %v3426 = vpop.f32.mrf.mxu0
    %v3427 = vadd.f32 0.0, %v3426
    %v3428 = vpop.f32.mrf.mxu0
    %v3429 = vadd.f32 0.0, %v3428
    %v3430 = vpop.f32.mrf.mxu0
    %v3431 = vadd.f32 0.0, %v3430
    %v3432 = vpop.f32.mrf.mxu0
    %v3433 = vadd.f32 0.0, %v3432
    %3434 = vdwg.mxu0
    %v3435 = vadd.f32 %v3141, %v3384
    %v3436 = vadd.f32 %v3142, %v3386
    %v3437 = vadd.f32 %v3143, %v3427
    %v3438 = vadd.f32 %v3144, %v3429
    %v3439 = vadd.f32 %v3145, %v3388
    %v3440 = vadd.f32 %v3146, %v3390
    %v3441 = vadd.f32 %v3147, %v3431
    %v3442 = vadd.f32 %v3148, %v3433
    %v3443 = vld [vmem:[#allocation3] sm:$0xff]
    %v3444 = vld [vmem:[#allocation3 + $0x8] sm:$0xff]
    %v3445 = vxor.u32 %v3435, 2147483648
    %v3446 = vxor.u32 %v3436, 2147483648
    %v3447 = vxor.u32 %v3437, 2147483648
    %v3448 = vxor.u32 %v3439, 2147483648
    %v3449 = vxor.u32 %v3440, 2147483648
    %v3450 = vxor.u32 %v3441, 2147483648
    %v3451 = vmul.f32 %v3445, 1.442695
    %v3452 = vpow.pop %v3451
    %v3453 = vmul.f32 %v3446, 1.442695
    %v3454 = vpow.pop %v3453
    %v3455 = vmul.f32 %v3447, 1.442695
    %v3456 = vpow.pop %v3455
    %v3457 = vmul.f32 %v3448, 1.442695
    %v3458 = vpow.pop %v3457
    %v3459 = vmul.f32 %v3449, 1.442695
    %v3460 = vpow.pop %v3459
    %v3461 = vmul.f32 %v3450, 1.442695
    %v3462 = vpow.pop %v3461
    %v3463 = vadd.f32 %v3452, 1.0
    %v3464 = vadd.f32 %v3454, 1.0
    %v3465 = vadd.f32 %v3456, 1.0
    %v3466 = vadd.f32 %v3458, 1.0
    %v3467 = vadd.f32 %v3460, 1.0
    %v3468 = vadd.f32 %v3462, 1.0
    %v3469 = vrcp.pop %v3463
    %v3470 = vmul.f32 1.0, %v3469
    %v3471 = vrcp.pop %v3464
    %v3472 = vmul.f32 1.0, %v3471
    %v3473 = vrcp.pop %v3465
    %v3474 = vmul.f32 1.0, %v3473
    %v3475 = vrcp.pop %v3466
    %v3476 = vmul.f32 1.0, %v3475
    %v3477 = vrcp.pop %v3467
    %v3478 = vmul.f32 1.0, %v3477
    %v3479 = vrcp.pop %v3468
    %v3480 = vmul.f32 1.0, %v3479
    %v3481 = vtanh.pop %v3438
    %v3482 = vtanh.pop %v3442
    %v3483 = vmul.f32 %v3472, %v3443
    %v3484 = vmul.f32 %v3478, %v3444
    %v3485 = vmul.f32 %v3470, %v3481
    %v3486 = vmul.f32 %v3476, %v3482
    %v3487 = vadd.f32 %v3483, %v3485
    %v3488 = vadd.f32 %v3484, %v3486
    %v3489 = vtanh.pop %v3487
    %v3490 = vtanh.pop %v3488
    %v3491 = vmul.f32 %v3474, %v3489
    %v3492 = vmul.f32 %v3480, %v3490
    %3493 = vst [vmem:[#allocation3] sm:$0xff] %v3487
    %3494 = vst [vmem:[#allocation3 + $0x8] sm:$0xff] %v3488
    %v3495 = vpack.c.bf16 %v3492, %v3491
    %v3497 = vunpack.c.l.b16 %v3495
    %v3498 = vunpack.c.h.b16 %v3495
    %v3499 = vpack.c.b16 %v3497, %v3497
    %v3500 = vpack.c.b16 %v3498, %v3498
    %s3503 = scalar_lea.vmem [#allocation2], 64
    %3504 = vst [vmem:[%s3503] sm:$0xf] %v3499
    %3505 = vst [vmem:[%s3503 + $0x4] sm:$0xf] %v3500
    %v3506 = vld [vmem:[%s941] sm:$0xf]
    %v3507 = vld [vmem:[%s941 + $0x4] sm:$0xf]
    %v3508 = vld [vmem:[%s941 + $0x8] sm:$0xf]
    %v3509 = vld [vmem:[%s941 + $0xc] sm:$0xf]
    %v3510 = vld [vmem:[%s941 + $0x10] sm:$0xf]
    %v3511 = vld [vmem:[%s941 + $0x14] sm:$0xf]
    %v3512 = vld [vmem:[%s941 + $0x18] sm:$0xf]
    %v3513 = vld [vmem:[%s941 + $0x1c] sm:$0xf]
    %v3514 = vld [vmem:[%s941 + $0x20] sm:$0xf]
    %v3515 = vld [vmem:[%s941 + $0x24] sm:$0xf]
    %v3516 = vld [vmem:[%s941 + $0x28] sm:$0xf]
    %v3517 = vld [vmem:[%s941 + $0x2c] sm:$0xf]
    %v3518 = vld [vmem:[%s941 + $0x30] sm:$0xf]
    %v3519 = vld [vmem:[%s941 + $0x34] sm:$0xf]
    %v3520 = vld [vmem:[%s941 + $0x38] sm:$0xf]
    %v3521 = vld [vmem:[%s941 + $0x3c] sm:$0xf]
    %v3522 = vld [vmem:[%s4] sm:$0xff]
    %v3523 = vld [vmem:[%s4 + $0x8] sm:$0xff]
    %v3524 = vld [vmem:[%s4 + $0x10] sm:$0xff]
    %v3525 = vld [vmem:[%s4 + $0x18] sm:$0xff]
    %v3526 = vld [vmem:[%s4 + $0x20] sm:$0xff]
    %v3527 = vld [vmem:[%s4 + $0x28] sm:$0xff]
    %v3528 = vld [vmem:[%s4 + $0x30] sm:$0xff]
    %v3529 = vld [vmem:[%s4 + $0x38] sm:$0xff]
    %v3530 = vld [vmem:[%s4 + $0x40] sm:$0xff]
    %v3531 = vld [vmem:[%s4 + $0x48] sm:$0xff]
    %v3532 = vld [vmem:[%s4 + $0x50] sm:$0xff]
    %v3533 = vld [vmem:[%s4 + $0x58] sm:$0xff]
    %v3534 = vld [vmem:[%s4 + $0x60] sm:$0xff]
    %v3535 = vld [vmem:[%s4 + $0x68] sm:$0xff]
    %v3536 = vld [vmem:[%s4 + $0x70] sm:$0xff]
    %v3537 = vld [vmem:[%s4 + $0x78] sm:$0xff]
    %v3538 = vld [vmem:[%s4 + $0x80] sm:$0xff]
    %v3539 = vld [vmem:[%s4 + $0x88] sm:$0xff]
    %v3540 = vld [vmem:[%s4 + $0x90] sm:$0xff]
    %v3541 = vld [vmem:[%s4 + $0x98] sm:$0xff]
    %v3542 = vld [vmem:[%s4 + $0xa0] sm:$0xff]
    %v3543 = vld [vmem:[%s4 + $0xa8] sm:$0xff]
    %v3544 = vld [vmem:[%s4 + $0xb0] sm:$0xff]
    %v3545 = vld [vmem:[%s4 + $0xb8] sm:$0xff]
    %v3546 = vld [vmem:[%s4 + $0xc0] sm:$0xff]
    %v3547 = vld [vmem:[%s4 + $0xc8] sm:$0xff]
    %v3548 = vld [vmem:[%s4 + $0xd0] sm:$0xff]
    %v3549 = vld [vmem:[%s4 + $0xd8] sm:$0xff]
    %v3550 = vld [vmem:[%s4 + $0xe0] sm:$0xff]
    %v3551 = vld [vmem:[%s4 + $0xe8] sm:$0xff]
    %v3552 = vld [vmem:[%s4 + $0xf0] sm:$0xff]
    %v3553 = vld [vmem:[%s4 + $0xf8] sm:$0xff]
    %v3554 = vld [vmem:[%s6] sm:$0xf]
    %v3556 = vlaneseq
    %v3557 = vshrl.u32 %v3556, 7
    %v3558 = vsub.s32 0, %v3557
    %v3559 = vrot.slane %v3554, %v3558
    %v3560 = vlaneseq
    %v3561 = vshrl.u32 %v3560, 7
    %v3562 = vsub.s32 1, %v3561
    %v3563 = vrot.slane %v3554, %v3562
    %v3564 = vlaneseq
    %v3565 = vshrl.u32 %v3564, 7
    %v3566 = vsub.s32 2, %v3565
    %v3567 = vrot.slane %v3554, %v3566
    %v3568 = vlaneseq
    %v3569 = vshrl.u32 %v3568, 7
    %v3570 = vsub.s32 3, %v3569
    %v3571 = vrot.slane %v3554, %v3570
    %v3592 = vunpack.c.l.b16 %v3506
    %v3593 = vunpack.c.l.b16 %v3507
    %v3594 = vunpack.c.l.b16 %v3508
    %v3595 = vunpack.c.l.b16 %v3509
    %v3596 = vunpack.c.l.b16 %v3510
    %v3597 = vunpack.c.l.b16 %v3511
    %v3598 = vunpack.c.l.b16 %v3512
    %v3599 = vunpack.c.l.b16 %v3513
    %v3600 = vunpack.c.l.b16 %v3514
    %v3601 = vunpack.c.l.b16 %v3515
    %v3602 = vunpack.c.l.b16 %v3516
    %v3603 = vunpack.c.l.b16 %v3517
    %v3604 = vunpack.c.l.b16 %v3518
    %v3605 = vunpack.c.l.b16 %v3519
    %v3606 = vunpack.c.l.b16 %v3520
    %v3607 = vunpack.c.l.b16 %v3521
    %v3608 = vpack.c.b16 %v3593, %v3592
    %v3609 = vpack.c.b16 %v3595, %v3594
    %v3610 = vpack.c.b16 %v3597, %v3596
    %v3611 = vpack.c.b16 %v3599, %v3598
    %v3612 = vpack.c.b16 %v3601, %v3600
    %v3613 = vpack.c.b16 %v3603, %v3602
    %v3614 = vpack.c.b16 %v3605, %v3604
    %v3615 = vpack.c.b16 %v3607, %v3606
    %v3656 = vunpack.c.l.b16 %v3522
    %v3657 = vunpack.c.h.b16 %v3522
    %v3658 = vunpack.c.l.b16 %v3523
    %v3659 = vunpack.c.h.b16 %v3523
    %v3660 = vunpack.c.l.b16 %v3524
    %v3661 = vunpack.c.h.b16 %v3524
    %v3662 = vunpack.c.l.b16 %v3525
    %v3663 = vunpack.c.h.b16 %v3525
    %v3664 = vunpack.c.l.b16 %v3526
    %v3665 = vunpack.c.h.b16 %v3526
    %v3666 = vunpack.c.l.b16 %v3527
    %v3667 = vunpack.c.h.b16 %v3527
    %v3668 = vunpack.c.l.b16 %v3528
    %v3669 = vunpack.c.h.b16 %v3528
    %v3670 = vunpack.c.l.b16 %v3529
    %v3671 = vunpack.c.h.b16 %v3529
    %v3672 = vunpack.c.l.b16 %v3530
    %v3673 = vunpack.c.h.b16 %v3530
    %v3674 = vunpack.c.l.b16 %v3531
    %v3675 = vunpack.c.h.b16 %v3531
    %v3676 = vunpack.c.l.b16 %v3532
    %v3677 = vunpack.c.h.b16 %v3532
    %v3678 = vunpack.c.l.b16 %v3533
    %v3679 = vunpack.c.h.b16 %v3533
    %v3680 = vunpack.c.l.b16 %v3534
    %v3681 = vunpack.c.h.b16 %v3534
    %v3682 = vunpack.c.l.b16 %v3535
    %v3683 = vunpack.c.h.b16 %v3535
    %v3684 = vunpack.c.l.b16 %v3536
    %v3685 = vunpack.c.h.b16 %v3536
    %v3686 = vunpack.c.l.b16 %v3537
    %v3687 = vunpack.c.h.b16 %v3537
    %v3688 = vunpack.c.l.b16 %v3538
    %v3689 = vunpack.c.h.b16 %v3538
    %v3690 = vunpack.c.l.b16 %v3539
    %v3691 = vunpack.c.h.b16 %v3539
    %v3692 = vunpack.c.l.b16 %v3540
    %v3693 = vunpack.c.h.b16 %v3540
    %v3694 = vunpack.c.l.b16 %v3541
    %v3695 = vunpack.c.h.b16 %v3541
    %v3696 = vunpack.c.l.b16 %v3542
    %v3697 = vunpack.c.h.b16 %v3542
    %v3698 = vunpack.c.l.b16 %v3543
    %v3699 = vunpack.c.h.b16 %v3543
    %v3700 = vunpack.c.l.b16 %v3544
    %v3701 = vunpack.c.h.b16 %v3544
    %v3702 = vunpack.c.l.b16 %v3545
    %v3703 = vunpack.c.h.b16 %v3545
    %v3704 = vunpack.c.l.b16 %v3546
    %v3705 = vunpack.c.h.b16 %v3546
    %v3706 = vunpack.c.l.b16 %v3547
    %v3707 = vunpack.c.h.b16 %v3547
    %v3708 = vunpack.c.l.b16 %v3548
    %v3709 = vunpack.c.h.b16 %v3548
    %v3710 = vunpack.c.l.b16 %v3549
    %v3711 = vunpack.c.h.b16 %v3549
    %v3712 = vunpack.c.l.b16 %v3550
    %v3713 = vunpack.c.h.b16 %v3550
    %v3714 = vunpack.c.l.b16 %v3551
    %v3715 = vunpack.c.h.b16 %v3551
    %v3716 = vunpack.c.l.b16 %v3552
    %v3717 = vunpack.c.h.b16 %v3552
    %v3718 = vunpack.c.l.b16 %v3553
    %v3719 = vunpack.c.h.b16 %v3553
    %v3720 = vpack.c.b16 %v3660, %v3656
    %v3721 = vpack.c.b16 %v3661, %v3657
    %v3722 = vpack.c.b16 %v3662, %v3658
    %v3723 = vpack.c.b16 %v3663, %v3659
    %v3724 = vpack.c.b16 %v3668, %v3664
    %v3725 = vpack.c.b16 %v3669, %v3665
    %v3726 = vpack.c.b16 %v3670, %v3666
    %v3727 = vpack.c.b16 %v3671, %v3667
    %v3728 = vpack.c.b16 %v3676, %v3672
    %v3729 = vpack.c.b16 %v3677, %v3673
    %v3730 = vpack.c.b16 %v3678, %v3674
    %v3731 = vpack.c.b16 %v3679, %v3675
    %v3732 = vpack.c.b16 %v3684, %v3680
    %v3733 = vpack.c.b16 %v3685, %v3681
    %v3734 = vpack.c.b16 %v3686, %v3682
    %v3735 = vpack.c.b16 %v3687, %v3683
    %v3736 = vpack.c.b16 %v3692, %v3688
    %v3737 = vpack.c.b16 %v3693, %v3689
    %v3738 = vpack.c.b16 %v3694, %v3690
    %v3739 = vpack.c.b16 %v3695, %v3691
    %v3740 = vpack.c.b16 %v3700, %v3696
    %v3741 = vpack.c.b16 %v3701, %v3697
    %v3742 = vpack.c.b16 %v3702, %v3698
    %v3743 = vpack.c.b16 %v3703, %v3699
    %v3744 = vpack.c.b16 %v3708, %v3704
    %v3745 = vpack.c.b16 %v3709, %v3705
    %v3746 = vpack.c.b16 %v3710, %v3706
    %v3747 = vpack.c.b16 %v3711, %v3707
    %v3748 = vpack.c.b16 %v3716, %v3712
    %v3749 = vpack.c.b16 %v3717, %v3713
    %v3750 = vpack.c.b16 %v3718, %v3714
    %v3751 = vpack.c.b16 %v3719, %v3715
    %3784 = vmatprep.subr.bf16.mxu0 %v3749
    %3785 = vmatpush1.bf16.msra.mxu0 %v3748
    %3786 = vmatprep.subr.bf16.mxu0 %v3745
    %3787 = vmatpush1.bf16.msra.mxu0 %v3744
    %3788 = vmatprep.subr.bf16.mxu0 %v3741
    %3789 = vmatpush1.bf16.msra.mxu0 %v3740
    %3790 = vmatprep.subr.bf16.mxu0 %v3737
    %3791 = vmatpush1.bf16.msra.mxu0 %v3736
    %3792 = vmatprep.subr.bf16.mxu0 %v3733
    %3793 = vmatpush1.bf16.msra.mxu0 %v3732
    %3794 = vmatprep.subr.bf16.mxu0 %v3729
    %3795 = vmatpush1.bf16.msra.mxu0 %v3728
    %3796 = vmatprep.subr.bf16.mxu0 %v3725
    %3797 = vmatpush1.bf16.msra.mxu0 %v3724
    %3798 = vmatprep.subr.bf16.mxu0 %v3721
    %3799 = vmatpush1.bf16.msra.mxu0 %v3720
    %3800 = vmatprep.subr.bf16.mxu0 0
    %3801 = vmatpush2.bf16.msra.mxu0 0
    %3802 = vmatprep.subr.bf16.mxu0 0
    %3803 = vmatpush2.bf16.msra.mxu0 0
    %3804 = vmatprep.subr.bf16.mxu0 0
    %3805 = vmatpush2.bf16.msra.mxu0 0
    %3806 = vmatprep.subr.bf16.mxu0 0
    %3807 = vmatpush2.bf16.msra.mxu0 0
    %3808 = vmatprep.subr.bf16.mxu0 0
    %3809 = vmatpush2.bf16.msra.mxu0 0
    %3810 = vmatprep.subr.bf16.mxu0 0
    %3811 = vmatpush2.bf16.msra.mxu0 0
    %3812 = vmatprep.subr.bf16.mxu0 0
    %3813 = vmatpush2.bf16.msra.mxu0 0
    %3814 = vmatprep.subr.bf16.mxu0 0
    %3815 = vmatpush2.bf16.msra.mxu0 0
    %3816 = vmatprep.mubr.bf16.mxu0 0
    %3817 = vmatmul.mubr.bf16.gmra.mxu0 %v3608
    %v3818 = vpop.f32.mrf.mxu0
    %v3819 = vadd.f32 %v3559, %v3818
    %v3820 = vpop.f32.mrf.mxu0
    %v3821 = vadd.f32 %v3563, %v3820
    %v3822 = vpop.f32.mrf.mxu0
    %v3823 = vadd.f32 %v3559, %v3822
    %v3824 = vpop.f32.mrf.mxu0
    %v3825 = vadd.f32 %v3563, %v3824
    %3826 = vmatprep.mubr.bf16.mxu0 0
    %3827 = vmatmul.mubr.bf16.gmra.mxu0 %v3609
    %v3828 = vpop.f32.mrf.mxu0
    %v3829 = vadd.f32 %v3559, %v3828
    %v3830 = vpop.f32.mrf.mxu0
    %v3831 = vadd.f32 %v3563, %v3830
    %v3832 = vpop.f32.mrf.mxu0
    %v3833 = vadd.f32 %v3559, %v3832
    %v3834 = vpop.f32.mrf.mxu0
    %v3835 = vadd.f32 %v3563, %v3834
    %3836 = vmatprep.mubr.bf16.mxu0 0
    %3837 = vmatmul.mubr.bf16.gmra.mxu0 %v3610
    %v3838 = vpop.f32.mrf.mxu0
    %v3839 = vadd.f32 %v3559, %v3838
    %v3840 = vpop.f32.mrf.mxu0
    %v3841 = vadd.f32 %v3563, %v3840
    %v3842 = vpop.f32.mrf.mxu0
    %v3843 = vadd.f32 %v3559, %v3842
    %v3844 = vpop.f32.mrf.mxu0
    %v3845 = vadd.f32 %v3563, %v3844
    %3846 = vmatprep.mubr.bf16.mxu0 0
    %3847 = vmatmul.mubr.bf16.gmra.mxu0 %v3611
    %v3848 = vpop.f32.mrf.mxu0
    %v3849 = vadd.f32 %v3559, %v3848
    %v3850 = vpop.f32.mrf.mxu0
    %v3851 = vadd.f32 %v3563, %v3850
    %v3852 = vpop.f32.mrf.mxu0
    %v3853 = vadd.f32 %v3559, %v3852
    %v3854 = vpop.f32.mrf.mxu0
    %v3855 = vadd.f32 %v3563, %v3854
    %3856 = vmatprep.mubr.bf16.mxu0 0
    %3857 = vmatmul.mubr.bf16.gmra.mxu0 %v3612
    %v3858 = vpop.f32.mrf.mxu0
    %v3859 = vadd.f32 %v3559, %v3858
    %v3860 = vpop.f32.mrf.mxu0
    %v3861 = vadd.f32 %v3563, %v3860
    %v3862 = vpop.f32.mrf.mxu0
    %v3863 = vadd.f32 %v3559, %v3862
    %v3864 = vpop.f32.mrf.mxu0
    %v3865 = vadd.f32 %v3563, %v3864
    %3866 = vmatprep.mubr.bf16.mxu0 0
    %3867 = vmatmul.mubr.bf16.gmra.mxu0 %v3613
    %v3868 = vpop.f32.mrf.mxu0
    %v3869 = vadd.f32 %v3559, %v3868
    %v3870 = vpop.f32.mrf.mxu0
    %v3871 = vadd.f32 %v3563, %v3870
    %v3872 = vpop.f32.mrf.mxu0
    %v3873 = vadd.f32 %v3559, %v3872
    %v3874 = vpop.f32.mrf.mxu0
    %v3875 = vadd.f32 %v3563, %v3874
    %3876 = vmatprep.mubr.bf16.mxu0 0
    %3877 = vmatmul.mubr.bf16.gmra.mxu0 %v3614
    %v3878 = vpop.f32.mrf.mxu0
    %v3879 = vadd.f32 %v3559, %v3878
    %v3880 = vpop.f32.mrf.mxu0
    %v3881 = vadd.f32 %v3563, %v3880
    %v3882 = vpop.f32.mrf.mxu0
    %v3883 = vadd.f32 %v3559, %v3882
    %v3884 = vpop.f32.mrf.mxu0
    %v3885 = vadd.f32 %v3563, %v3884
    %3886 = vmatprep.mubr.bf16.mxu0 0
    %3887 = vmatmul.mubr.bf16.gmra.mxu0 %v3615
    %v3888 = vpop.f32.mrf.mxu0
    %v3889 = vadd.f32 %v3559, %v3888
    %v3890 = vpop.f32.mrf.mxu0
    %v3891 = vadd.f32 %v3563, %v3890
    %v3892 = vpop.f32.mrf.mxu0
    %v3893 = vadd.f32 %v3559, %v3892
    %v3894 = vpop.f32.mrf.mxu0
    %v3895 = vadd.f32 %v3563, %v3894
    %3896 = vdwg.mxu0
    %3897 = vmatprep.subr.bf16.mxu0 %v3751
    %3898 = vmatpush1.bf16.msra.mxu0 %v3750
    %3899 = vmatprep.subr.bf16.mxu0 %v3747
    %3900 = vmatpush1.bf16.msra.mxu0 %v3746
    %3901 = vmatprep.subr.bf16.mxu0 %v3743
    %3902 = vmatpush1.bf16.msra.mxu0 %v3742
    %3903 = vmatprep.subr.bf16.mxu0 %v3739
    %3904 = vmatpush1.bf16.msra.mxu0 %v3738
    %3905 = vmatprep.subr.bf16.mxu0 %v3735
    %3906 = vmatpush1.bf16.msra.mxu0 %v3734
    %3907 = vmatprep.subr.bf16.mxu0 %v3731
    %3908 = vmatpush1.bf16.msra.mxu0 %v3730
    %3909 = vmatprep.subr.bf16.mxu0 %v3727
    %3910 = vmatpush1.bf16.msra.mxu0 %v3726
    %3911 = vmatprep.subr.bf16.mxu0 %v3723
    %3912 = vmatpush1.bf16.msra.mxu0 %v3722
    %3913 = vmatprep.subr.bf16.mxu0 0
    %3914 = vmatpush2.bf16.msra.mxu0 0
    %3915 = vmatprep.subr.bf16.mxu0 0
    %3916 = vmatpush2.bf16.msra.mxu0 0
    %3917 = vmatprep.subr.bf16.mxu0 0
    %3918 = vmatpush2.bf16.msra.mxu0 0
    %3919 = vmatprep.subr.bf16.mxu0 0
    %3920 = vmatpush2.bf16.msra.mxu0 0
    %3921 = vmatprep.subr.bf16.mxu0 0
    %3922 = vmatpush2.bf16.msra.mxu0 0
    %3923 = vmatprep.subr.bf16.mxu0 0
    %3924 = vmatpush2.bf16.msra.mxu0 0
    %3925 = vmatprep.subr.bf16.mxu0 0
    %3926 = vmatpush2.bf16.msra.mxu0 0
    %3927 = vmatprep.subr.bf16.mxu0 0
    %3928 = vmatpush2.bf16.msra.mxu0 0
    %3929 = vmatprep.mubr.bf16.mxu0 0
    %3930 = vmatmul.mubr.bf16.gmra.mxu0 %v3608
    %v3931 = vpop.f32.mrf.mxu0
    %v3932 = vadd.f32 %v3567, %v3931
    %v3933 = vpop.f32.mrf.mxu0
    %v3934 = vadd.f32 %v3571, %v3933
    %v3935 = vpop.f32.mrf.mxu0
    %v3936 = vadd.f32 %v3567, %v3935
    %v3937 = vpop.f32.mrf.mxu0
    %v3938 = vadd.f32 %v3571, %v3937
    %3939 = vmatprep.mubr.bf16.mxu0 0
    %3940 = vmatmul.mubr.bf16.gmra.mxu0 %v3609
    %v3941 = vpop.f32.mrf.mxu0
    %v3942 = vadd.f32 %v3567, %v3941
    %v3943 = vpop.f32.mrf.mxu0
    %v3944 = vadd.f32 %v3571, %v3943
    %v3945 = vpop.f32.mrf.mxu0
    %v3946 = vadd.f32 %v3567, %v3945
    %v3947 = vpop.f32.mrf.mxu0
    %v3948 = vadd.f32 %v3571, %v3947
    %3949 = vmatprep.mubr.bf16.mxu0 0
    %3950 = vmatmul.mubr.bf16.gmra.mxu0 %v3610
    %v3951 = vpop.f32.mrf.mxu0
    %v3952 = vadd.f32 %v3567, %v3951
    %v3953 = vpop.f32.mrf.mxu0
    %v3954 = vadd.f32 %v3571, %v3953
    %v3955 = vpop.f32.mrf.mxu0
    %v3956 = vadd.f32 %v3567, %v3955
    %v3957 = vpop.f32.mrf.mxu0
    %v3958 = vadd.f32 %v3571, %v3957
    %3959 = vmatprep.mubr.bf16.mxu0 0
    %3960 = vmatmul.mubr.bf16.gmra.mxu0 %v3611
    %v3961 = vpop.f32.mrf.mxu0
    %v3962 = vadd.f32 %v3567, %v3961
    %v3963 = vpop.f32.mrf.mxu0
    %v3964 = vadd.f32 %v3571, %v3963
    %v3965 = vpop.f32.mrf.mxu0
    %v3966 = vadd.f32 %v3567, %v3965
    %v3967 = vpop.f32.mrf.mxu0
    %v3968 = vadd.f32 %v3571, %v3967
    %3969 = vmatprep.mubr.bf16.mxu0 0
    %3970 = vmatmul.mubr.bf16.gmra.mxu0 %v3612
    %v3971 = vpop.f32.mrf.mxu0
    %v3972 = vadd.f32 %v3567, %v3971
    %v3973 = vpop.f32.mrf.mxu0
    %v3974 = vadd.f32 %v3571, %v3973
    %v3975 = vpop.f32.mrf.mxu0
    %v3976 = vadd.f32 %v3567, %v3975
    %v3977 = vpop.f32.mrf.mxu0
    %v3978 = vadd.f32 %v3571, %v3977
    %3979 = vmatprep.mubr.bf16.mxu0 0
    %3980 = vmatmul.mubr.bf16.gmra.mxu0 %v3613
    %v3981 = vpop.f32.mrf.mxu0
    %v3982 = vadd.f32 %v3567, %v3981
    %v3983 = vpop.f32.mrf.mxu0
    %v3984 = vadd.f32 %v3571, %v3983
    %v3985 = vpop.f32.mrf.mxu0
    %v3986 = vadd.f32 %v3567, %v3985
    %v3987 = vpop.f32.mrf.mxu0
    %v3988 = vadd.f32 %v3571, %v3987
    %3989 = vmatprep.mubr.bf16.mxu0 0
    %3990 = vmatmul.mubr.bf16.gmra.mxu0 %v3614
    %v3991 = vpop.f32.mrf.mxu0
    %v3992 = vadd.f32 %v3567, %v3991
    %v3993 = vpop.f32.mrf.mxu0
    %v3994 = vadd.f32 %v3571, %v3993
    %v3995 = vpop.f32.mrf.mxu0
    %v3996 = vadd.f32 %v3567, %v3995
    %v3997 = vpop.f32.mrf.mxu0
    %v3998 = vadd.f32 %v3571, %v3997
    %3999 = vmatprep.mubr.bf16.mxu0 0
    %4000 = vmatmul.mubr.bf16.gmra.mxu0 %v3615
    %v4001 = vpop.f32.mrf.mxu0
    %v4002 = vadd.f32 %v3567, %v4001
    %v4003 = vpop.f32.mrf.mxu0
    %v4004 = vadd.f32 %v3571, %v4003
    %v4005 = vpop.f32.mrf.mxu0
    %v4006 = vadd.f32 %v3567, %v4005
    %v4007 = vpop.f32.mrf.mxu0
    %v4008 = vadd.f32 %v3571, %v4007
    %4009 = vdwg.mxu0
    %4010 = vst [vmem:[#allocation4] sm:$0xff] %v3819
    %4011 = vst [vmem:[#allocation4 + $0x8] sm:$0xff] %v3821
    %4012 = vst [vmem:[#allocation4 + $0x10] sm:$0xff] %v3932
    %4013 = vst [vmem:[#allocation4 + $0x18] sm:$0xff] %v3934
    %4014 = vst [vmem:[#allocation4 + $0x20] sm:$0xff] %v3823
    %4015 = vst [vmem:[#allocation4 + $0x28] sm:$0xff] %v3825
    %4016 = vst [vmem:[#allocation4 + $0x30] sm:$0xff] %v3936
    %4017 = vst [vmem:[#allocation4 + $0x38] sm:$0xff] %v3938
    %4018 = vst [vmem:[#allocation4 + $0x40] sm:$0xff] %v3829
    %4019 = vst [vmem:[#allocation4 + $0x48] sm:$0xff] %v3831
    %4020 = vst [vmem:[#allocation4 + $0x50] sm:$0xff] %v3942
    %4021 = vst [vmem:[#allocation4 + $0x58] sm:$0xff] %v3944
    %4022 = vst [vmem:[#allocation4 + $0x60] sm:$0xff] %v3833
    %4023 = vst [vmem:[#allocation4 + $0x68] sm:$0xff] %v3835
    %4024 = vst [vmem:[#allocation4 + $0x70] sm:$0xff] %v3946
    %4025 = vst [vmem:[#allocation4 + $0x78] sm:$0xff] %v3948
    %4026 = vst [vmem:[#allocation4 + $0x80] sm:$0xff] %v3839
    %4027 = vst [vmem:[#allocation4 + $0x88] sm:$0xff] %v3841
    %4028 = vst [vmem:[#allocation4 + $0x90] sm:$0xff] %v3952
    %4029 = vst [vmem:[#allocation4 + $0x98] sm:$0xff] %v3954
    %4030 = vst [vmem:[#allocation4 + $0xa0] sm:$0xff] %v3843
    %4031 = vst [vmem:[#allocation4 + $0xa8] sm:$0xff] %v3845
    %4032 = vst [vmem:[#allocation4 + $0xb0] sm:$0xff] %v3956
    %4033 = vst [vmem:[#allocation4 + $0xb8] sm:$0xff] %v3958
    %4034 = vst [vmem:[#allocation4 + $0xc0] sm:$0xff] %v3849
    %4035 = vst [vmem:[#allocation4 + $0xc8] sm:$0xff] %v3851
    %4036 = vst [vmem:[#allocation4 + $0xd0] sm:$0xff] %v3962
    %4037 = vst [vmem:[#allocation4 + $0xd8] sm:$0xff] %v3964
    %4038 = vst [vmem:[#allocation4 + $0xe0] sm:$0xff] %v3853
    %4039 = vst [vmem:[#allocation4 + $0xe8] sm:$0xff] %v3855
    %4040 = vst [vmem:[#allocation4 + $0xf0] sm:$0xff] %v3966
    %4041 = vst [vmem:[#allocation4 + $0xf8] sm:$0xff] %v3968
    %4042 = vst [vmem:[#allocation4 + $0x100] sm:$0xff] %v3859
    %4043 = vst [vmem:[#allocation4 + $0x108] sm:$0xff] %v3861
    %4044 = vst [vmem:[#allocation4 + $0x110] sm:$0xff] %v3972
    %4045 = vst [vmem:[#allocation4 + $0x118] sm:$0xff] %v3974
    %4046 = vst [vmem:[#allocation4 + $0x120] sm:$0xff] %v3863
    %4047 = vst [vmem:[#allocation4 + $0x128] sm:$0xff] %v3865
    %4048 = vst [vmem:[#allocation4 + $0x130] sm:$0xff] %v3976
    %4049 = vst [vmem:[#allocation4 + $0x138] sm:$0xff] %v3978
    %4050 = vst [vmem:[#allocation4 + $0x140] sm:$0xff] %v3869
    %4051 = vst [vmem:[#allocation4 + $0x148] sm:$0xff] %v3871
    %4052 = vst [vmem:[#allocation4 + $0x150] sm:$0xff] %v3982
    %4053 = vst [vmem:[#allocation4 + $0x158] sm:$0xff] %v3984
    %4054 = vst [vmem:[#allocation4 + $0x160] sm:$0xff] %v3873
    %4055 = vst [vmem:[#allocation4 + $0x168] sm:$0xff] %v3875
    %4056 = vst [vmem:[#allocation4 + $0x170] sm:$0xff] %v3986
    %4057 = vst [vmem:[#allocation4 + $0x178] sm:$0xff] %v3988
    %4058 = vst [vmem:[#allocation4 + $0x180] sm:$0xff] %v3879
    %4059 = vst [vmem:[#allocation4 + $0x188] sm:$0xff] %v3881
    %4060 = vst [vmem:[#allocation4 + $0x190] sm:$0xff] %v3992
    %4061 = vst [vmem:[#allocation4 + $0x198] sm:$0xff] %v3994
    %4062 = vst [vmem:[#allocation4 + $0x1a0] sm:$0xff] %v3883
    %4063 = vst [vmem:[#allocation4 + $0x1a8] sm:$0xff] %v3885
    %4064 = vst [vmem:[#allocation4 + $0x1b0] sm:$0xff] %v3996
    %4065 = vst [vmem:[#allocation4 + $0x1b8] sm:$0xff] %v3998
    %4066 = vst [vmem:[#allocation4 + $0x1c0] sm:$0xff] %v3889
    %4067 = vst [vmem:[#allocation4 + $0x1c8] sm:$0xff] %v3891
    %4068 = vst [vmem:[#allocation4 + $0x1d0] sm:$0xff] %v4002
    %4069 = vst [vmem:[#allocation4 + $0x1d8] sm:$0xff] %v4004
    %4070 = vst [vmem:[#allocation4 + $0x1e0] sm:$0xff] %v3893
    %4071 = vst [vmem:[#allocation4 + $0x1e8] sm:$0xff] %v3895
    %4072 = vst [vmem:[#allocation4 + $0x1f0] sm:$0xff] %v4006
    %4073 = vst [vmem:[#allocation4 + $0x1f8] sm:$0xff] %v4008
    %v4074 = vld [vmem:[#allocation4] sm:$0xff]
    %v4075 = vld [vmem:[#allocation4 + $0x8] sm:$0xff]
    %v4076 = vld [vmem:[#allocation4 + $0x10] sm:$0xff]
    %v4077 = vld [vmem:[#allocation4 + $0x18] sm:$0xff]
    %v4078 = vld [vmem:[#allocation4 + $0x20] sm:$0xff]
    %v4079 = vld [vmem:[#allocation4 + $0x28] sm:$0xff]
    %v4080 = vld [vmem:[#allocation4 + $0x30] sm:$0xff]
    %v4081 = vld [vmem:[#allocation4 + $0x38] sm:$0xff]
    %v4082 = vld [vmem:[#allocation5] sm:$0xf]
    %v4083 = vld [vmem:[#allocation5 + $0x4] sm:$0xf]
    %v4084 = vld [vmem:[%s5] sm:$0xff]
    %v4085 = vld [vmem:[%s5 + $0x8] sm:$0xff]
    %v4086 = vld [vmem:[%s5 + $0x10] sm:$0xff]
    %v4087 = vld [vmem:[%s5 + $0x18] sm:$0xff]
    %v4088 = vld [vmem:[%s5 + $0x20] sm:$0xff]
    %v4089 = vld [vmem:[%s5 + $0x28] sm:$0xff]
    %v4090 = vld [vmem:[%s5 + $0x30] sm:$0xff]
    %v4091 = vld [vmem:[%s5 + $0x38] sm:$0xff]
    %v4092 = vld [vmem:[%s5 + $0x40] sm:$0xff]
    %v4093 = vld [vmem:[%s5 + $0x48] sm:$0xff]
    %v4094 = vld [vmem:[%s5 + $0x50] sm:$0xff]
    %v4095 = vld [vmem:[%s5 + $0x58] sm:$0xff]
    %v4096 = vld [vmem:[%s5 + $0x60] sm:$0xff]
    %v4097 = vld [vmem:[%s5 + $0x68] sm:$0xff]
    %v4098 = vld [vmem:[%s5 + $0x70] sm:$0xff]
    %v4099 = vld [vmem:[%s5 + $0x78] sm:$0xff]
    %v4100 = vld [vmem:[%s5 + $0x80] sm:$0xff]
    %v4101 = vld [vmem:[%s5 + $0x88] sm:$0xff]
    %v4102 = vld [vmem:[%s5 + $0x90] sm:$0xff]
    %v4103 = vld [vmem:[%s5 + $0x98] sm:$0xff]
    %v4104 = vld [vmem:[%s5 + $0xa0] sm:$0xff]
    %v4105 = vld [vmem:[%s5 + $0xa8] sm:$0xff]
    %v4106 = vld [vmem:[%s5 + $0xb0] sm:$0xff]
    %v4107 = vld [vmem:[%s5 + $0xb8] sm:$0xff]
    %v4108 = vld [vmem:[%s5 + $0xc0] sm:$0xff]
    %v4109 = vld [vmem:[%s5 + $0xc8] sm:$0xff]
    %v4110 = vld [vmem:[%s5 + $0xd0] sm:$0xff]
    %v4111 = vld [vmem:[%s5 + $0xd8] sm:$0xff]
    %v4112 = vld [vmem:[%s5 + $0xe0] sm:$0xff]
    %v4113 = vld [vmem:[%s5 + $0xe8] sm:$0xff]
    %v4114 = vld [vmem:[%s5 + $0xf0] sm:$0xff]
    %v4115 = vld [vmem:[%s5 + $0xf8] sm:$0xff]
    %v4118 = vunpack.c.l.b16 %v4082
    %v4119 = vunpack.c.l.b16 %v4083
    %v4120 = vpack.c.b16 %v4119, %v4118
    %v4154 = vunpack.c.l.b16 %v4084
    %v4155 = vunpack.c.h.b16 %v4084
    %v4156 = vunpack.c.l.b16 %v4085
    %v4157 = vunpack.c.h.b16 %v4085
    %v4158 = vunpack.c.l.b16 %v4086
    %v4159 = vunpack.c.h.b16 %v4086
    %v4160 = vunpack.c.l.b16 %v4087
    %v4161 = vunpack.c.h.b16 %v4087
    %v4162 = vunpack.c.l.b16 %v4088
    %v4163 = vunpack.c.h.b16 %v4088
    %v4164 = vunpack.c.l.b16 %v4089
    %v4165 = vunpack.c.h.b16 %v4089
    %v4166 = vunpack.c.l.b16 %v4090
    %v4167 = vunpack.c.h.b16 %v4090
    %v4168 = vunpack.c.l.b16 %v4091
    %v4169 = vunpack.c.h.b16 %v4091
    %v4170 = vunpack.c.l.b16 %v4092
    %v4171 = vunpack.c.h.b16 %v4092
    %v4172 = vunpack.c.l.b16 %v4093
    %v4173 = vunpack.c.h.b16 %v4093
    %v4174 = vunpack.c.l.b16 %v4094
    %v4175 = vunpack.c.h.b16 %v4094
    %v4176 = vunpack.c.l.b16 %v4095
    %v4177 = vunpack.c.h.b16 %v4095
    %v4178 = vunpack.c.l.b16 %v4096
    %v4179 = vunpack.c.h.b16 %v4096
    %v4180 = vunpack.c.l.b16 %v4097
    %v4181 = vunpack.c.h.b16 %v4097
    %v4182 = vunpack.c.l.b16 %v4098
    %v4183 = vunpack.c.h.b16 %v4098
    %v4184 = vunpack.c.l.b16 %v4099
    %v4185 = vunpack.c.h.b16 %v4099
    %v4186 = vunpack.c.l.b16 %v4100
    %v4187 = vunpack.c.h.b16 %v4100
    %v4188 = vunpack.c.l.b16 %v4101
    %v4189 = vunpack.c.h.b16 %v4101
    %v4190 = vunpack.c.l.b16 %v4102
    %v4191 = vunpack.c.h.b16 %v4102
    %v4192 = vunpack.c.l.b16 %v4103
    %v4193 = vunpack.c.h.b16 %v4103
    %v4194 = vunpack.c.l.b16 %v4104
    %v4195 = vunpack.c.h.b16 %v4104
    %v4196 = vunpack.c.l.b16 %v4105
    %v4197 = vunpack.c.h.b16 %v4105
    %v4198 = vunpack.c.l.b16 %v4106
    %v4199 = vunpack.c.h.b16 %v4106
    %v4200 = vunpack.c.l.b16 %v4107
    %v4201 = vunpack.c.h.b16 %v4107
    %v4202 = vunpack.c.l.b16 %v4108
    %v4203 = vunpack.c.h.b16 %v4108
    %v4204 = vunpack.c.l.b16 %v4109
    %v4205 = vunpack.c.h.b16 %v4109
    %v4206 = vunpack.c.l.b16 %v4110
    %v4207 = vunpack.c.h.b16 %v4110
    %v4208 = vunpack.c.l.b16 %v4111
    %v4209 = vunpack.c.h.b16 %v4111
    %v4210 = vunpack.c.l.b16 %v4112
    %v4211 = vunpack.c.h.b16 %v4112
    %v4212 = vunpack.c.l.b16 %v4113
    %v4213 = vunpack.c.h.b16 %v4113
    %v4214 = vunpack.c.l.b16 %v4114
    %v4215 = vunpack.c.h.b16 %v4114
    %v4216 = vunpack.c.l.b16 %v4115
    %v4217 = vunpack.c.h.b16 %v4115
    %v4218 = vpack.c.b16 %v4158, %v4154
    %v4219 = vpack.c.b16 %v4159, %v4155
    %v4220 = vpack.c.b16 %v4160, %v4156
    %v4221 = vpack.c.b16 %v4161, %v4157
    %v4222 = vpack.c.b16 %v4166, %v4162
    %v4223 = vpack.c.b16 %v4167, %v4163
    %v4224 = vpack.c.b16 %v4168, %v4164
    %v4225 = vpack.c.b16 %v4169, %v4165
    %v4226 = vpack.c.b16 %v4174, %v4170
    %v4227 = vpack.c.b16 %v4175, %v4171
    %v4228 = vpack.c.b16 %v4176, %v4172
    %v4229 = vpack.c.b16 %v4177, %v4173
    %v4230 = vpack.c.b16 %v4182, %v4178
    %v4231 = vpack.c.b16 %v4183, %v4179
    %v4232 = vpack.c.b16 %v4184, %v4180
    %v4233 = vpack.c.b16 %v4185, %v4181
    %v4234 = vpack.c.b16 %v4190, %v4186
    %v4235 = vpack.c.b16 %v4191, %v4187
    %v4236 = vpack.c.b16 %v4192, %v4188
    %v4237 = vpack.c.b16 %v4193, %v4189
    %v4238 = vpack.c.b16 %v4198, %v4194
    %v4239 = vpack.c.b16 %v4199, %v4195
    %v4240 = vpack.c.b16 %v4200, %v4196
    %v4241 = vpack.c.b16 %v4201, %v4197
    %v4242 = vpack.c.b16 %v4206, %v4202
    %v4243 = vpack.c.b16 %v4207, %v4203
    %v4244 = vpack.c.b16 %v4208, %v4204
    %v4245 = vpack.c.b16 %v4209, %v4205
    %v4246 = vpack.c.b16 %v4214, %v4210
    %v4247 = vpack.c.b16 %v4215, %v4211
    %v4248 = vpack.c.b16 %v4216, %v4212
    %v4249 = vpack.c.b16 %v4217, %v4213
    %4282 = vmatprep.subr.bf16.mxu0 %v4247
    %4283 = vmatpush1.bf16.msra.mxu0 %v4246
    %4284 = vmatprep.subr.bf16.mxu0 %v4243
    %4285 = vmatpush1.bf16.msra.mxu0 %v4242
    %4286 = vmatprep.subr.bf16.mxu0 %v4239
    %4287 = vmatpush1.bf16.msra.mxu0 %v4238
    %4288 = vmatprep.subr.bf16.mxu0 %v4235
    %4289 = vmatpush1.bf16.msra.mxu0 %v4234
    %4290 = vmatprep.subr.bf16.mxu0 %v4231
    %4291 = vmatpush1.bf16.msra.mxu0 %v4230
    %4292 = vmatprep.subr.bf16.mxu0 %v4227
    %4293 = vmatpush1.bf16.msra.mxu0 %v4226
    %4294 = vmatprep.subr.bf16.mxu0 %v4223
    %4295 = vmatpush1.bf16.msra.mxu0 %v4222
    %4296 = vmatprep.subr.bf16.mxu0 %v4219
    %4297 = vmatpush1.bf16.msra.mxu0 %v4218
    %4298 = vmatprep.subr.bf16.mxu0 0
    %4299 = vmatpush2.bf16.msra.mxu0 0
    %4300 = vmatprep.subr.bf16.mxu0 0
    %4301 = vmatpush2.bf16.msra.mxu0 0
    %4302 = vmatprep.subr.bf16.mxu0 0
    %4303 = vmatpush2.bf16.msra.mxu0 0
    %4304 = vmatprep.subr.bf16.mxu0 0
    %4305 = vmatpush2.bf16.msra.mxu0 0
    %4306 = vmatprep.subr.bf16.mxu0 0
    %4307 = vmatpush2.bf16.msra.mxu0 0
    %4308 = vmatprep.subr.bf16.mxu0 0
    %4309 = vmatpush2.bf16.msra.mxu0 0
    %4310 = vmatprep.subr.bf16.mxu0 0
    %4311 = vmatpush2.bf16.msra.mxu0 0
    %4312 = vmatprep.subr.bf16.mxu0 0
    %4313 = vmatpush2.bf16.msra.mxu0 0
    %4314 = vmatprep.mubr.bf16.mxu0 0
    %4315 = vmatmul.mubr.bf16.gmra.mxu0 %v4120
    %v4316 = vpop.f32.mrf.mxu0
    %v4317 = vadd.f32 0.0, %v4316
    %v4318 = vpop.f32.mrf.mxu0
    %v4319 = vadd.f32 0.0, %v4318
    %v4320 = vpop.f32.mrf.mxu0
    %v4321 = vadd.f32 0.0, %v4320
    %v4322 = vpop.f32.mrf.mxu0
    %v4323 = vadd.f32 0.0, %v4322
    %4324 = vdwg.mxu0
    %4325 = vmatprep.subr.bf16.mxu0 %v4249
    %4326 = vmatpush1.bf16.msra.mxu0 %v4248
    %4327 = vmatprep.subr.bf16.mxu0 %v4245
    %4328 = vmatpush1.bf16.msra.mxu0 %v4244
    %4329 = vmatprep.subr.bf16.mxu0 %v4241
    %4330 = vmatpush1.bf16.msra.mxu0 %v4240
    %4331 = vmatprep.subr.bf16.mxu0 %v4237
    %4332 = vmatpush1.bf16.msra.mxu0 %v4236
    %4333 = vmatprep.subr.bf16.mxu0 %v4233
    %4334 = vmatpush1.bf16.msra.mxu0 %v4232
    %4335 = vmatprep.subr.bf16.mxu0 %v4229
    %4336 = vmatpush1.bf16.msra.mxu0 %v4228
    %4337 = vmatprep.subr.bf16.mxu0 %v4225
    %4338 = vmatpush1.bf16.msra.mxu0 %v4224
    %4339 = vmatprep.subr.bf16.mxu0 %v4221
    %4340 = vmatpush1.bf16.msra.mxu0 %v4220
    %4341 = vmatprep.subr.bf16.mxu0 0
    %4342 = vmatpush2.bf16.msra.mxu0 0
    %4343 = vmatprep.subr.bf16.mxu0 0
    %4344 = vmatpush2.bf16.msra.mxu0 0
    %4345 = vmatprep.subr.bf16.mxu0 0
    %4346 = vmatpush2.bf16.msra.mxu0 0
    %4347 = vmatprep.subr.bf16.mxu0 0
    %4348 = vmatpush2.bf16.msra.mxu0 0
    %4349 = vmatprep.subr.bf16.mxu0 0
    %4350 = vmatpush2.bf16.msra.mxu0 0
    %4351 = vmatprep.subr.bf16.mxu0 0
    %4352 = vmatpush2.bf16.msra.mxu0 0
    %4353 = vmatprep.subr.bf16.mxu0 0
    %4354 = vmatpush2.bf16.msra.mxu0 0
    %4355 = vmatprep.subr.bf16.mxu0 0
    %4356 = vmatpush2.bf16.msra.mxu0 0
    %4357 = vmatprep.mubr.bf16.mxu0 0
    %4358 = vmatmul.mubr.bf16.gmra.mxu0 %v4120
    %v4359 = vpop.f32.mrf.mxu0
    %v4360 = vadd.f32 0.0, %v4359
    %v4361 = vpop.f32.mrf.mxu0
    %v4362 = vadd.f32 0.0, %v4361
    %v4363 = vpop.f32.mrf.mxu0
    %v4364 = vadd.f32 0.0, %v4363
    %v4365 = vpop.f32.mrf.mxu0
    %v4366 = vadd.f32 0.0, %v4365
    %4367 = vdwg.mxu0
    %v4368 = vadd.f32 %v4074, %v4317
    %v4369 = vadd.f32 %v4075, %v4319
    %v4370 = vadd.f32 %v4076, %v4360
    %v4371 = vadd.f32 %v4077, %v4362
    %v4372 = vadd.f32 %v4078, %v4321
    %v4373 = vadd.f32 %v4079, %v4323
    %v4374 = vadd.f32 %v4080, %v4364
    %v4375 = vadd.f32 %v4081, %v4366
    %v4376 = vld [vmem:[#allocation6] sm:$0xff]
    %v4377 = vld [vmem:[#allocation6 + $0x8] sm:$0xff]
    %v4378 = vxor.u32 %v4368, 2147483648
    %v4379 = vxor.u32 %v4369, 2147483648
    %v4380 = vxor.u32 %v4370, 2147483648
    %v4381 = vxor.u32 %v4372, 2147483648
    %v4382 = vxor.u32 %v4373, 2147483648
    %v4383 = vxor.u32 %v4374, 2147483648
    %v4384 = vmul.f32 %v4378, 1.442695
    %v4385 = vpow.pop %v4384
    %v4386 = vmul.f32 %v4379, 1.442695
    %v4387 = vpow.pop %v4386
    %v4388 = vmul.f32 %v4380, 1.442695
    %v4389 = vpow.pop %v4388
    %v4390 = vmul.f32 %v4381, 1.442695
    %v4391 = vpow.pop %v4390
    %v4392 = vmul.f32 %v4382, 1.442695
    %v4393 = vpow.pop %v4392
    %v4394 = vmul.f32 %v4383, 1.442695
    %v4395 = vpow.pop %v4394
    %v4396 = vadd.f32 %v4385, 1.0
    %v4397 = vadd.f32 %v4387, 1.0
    %v4398 = vadd.f32 %v4389, 1.0
    %v4399 = vadd.f32 %v4391, 1.0
    %v4400 = vadd.f32 %v4393, 1.0
    %v4401 = vadd.f32 %v4395, 1.0
    %v4402 = vrcp.pop %v4396
    %v4403 = vmul.f32 1.0, %v4402
    %v4404 = vrcp.pop %v4397
    %v4405 = vmul.f32 1.0, %v4404
    %v4406 = vrcp.pop %v4398
    %v4407 = vmul.f32 1.0, %v4406
    %v4408 = vrcp.pop %v4399
    %v4409 = vmul.f32 1.0, %v4408
    %v4410 = vrcp.pop %v4400
    %v4411 = vmul.f32 1.0, %v4410
    %v4412 = vrcp.pop %v4401
    %v4413 = vmul.f32 1.0, %v4412
    %v4414 = vtanh.pop %v4371
    %v4415 = vtanh.pop %v4375
    %v4416 = vmul.f32 %v4405, %v4376
    %v4417 = vmul.f32 %v4411, %v4377
    %v4418 = vmul.f32 %v4403, %v4414
    %v4419 = vmul.f32 %v4409, %v4415
    %v4420 = vadd.f32 %v4416, %v4418
    %v4421 = vadd.f32 %v4417, %v4419
    %v4422 = vtanh.pop %v4420
    %v4423 = vtanh.pop %v4421
    %v4424 = vmul.f32 %v4407, %v4422
    %v4425 = vmul.f32 %v4413, %v4423
    %4426 = vst [vmem:[#allocation6] sm:$0xff] %v4420
    %4427 = vst [vmem:[#allocation6 + $0x8] sm:$0xff] %v4421
    %v4428 = vpack.c.bf16 %v4425, %v4424
    %v4430 = vunpack.c.l.b16 %v4428
    %v4431 = vunpack.c.h.b16 %v4428
    %v4432 = vpack.c.b16 %v4430, %v4430
    %v4433 = vpack.c.b16 %v4431, %v4431
    %4436 = vst [vmem:[#allocation5] sm:$0xf] %v4432
    %4437 = vst [vmem:[#allocation5 + $0x4] sm:$0xf] %v4433
    %v4438 = vld [vmem:[#allocation7] sm:$0xff]
    %v4439 = vld [vmem:[#allocation7 + $0x8] sm:$0xff]
    %v4440 = vmax.f32 %v4438, %v4424
    %v4441 = vmax.f32 %v4439, %v4425
    %4442 = vst [vmem:[#allocation7] sm:$0xff] %v4440
    %4443 = vst [vmem:[#allocation7 + $0x8] sm:$0xff] %v4441
    %v4444 = vld [vmem:[%s944] sm:$0xff]
    %v4445 = vld [vmem:[%s944 + $0x8] sm:$0xff]
    %v4446 = vld [vmem:[%s944 + $0x10] sm:$0xff]
    %v4447 = vld [vmem:[%s944 + $0x18] sm:$0xff]
    %v4448 = vld [vmem:[%s944 + $0x20] sm:$0xff]
    %v4449 = vld [vmem:[%s944 + $0x28] sm:$0xff]
    %v4450 = vld [vmem:[%s944 + $0x30] sm:$0xff]
    %v4451 = vld [vmem:[%s944 + $0x38] sm:$0xff]
    %v4452 = vld [vmem:[#allocation5] sm:$0xf]
    %v4453 = vld [vmem:[#allocation5 + $0x4] sm:$0xf]
    %v4454 = vld [vmem:[%s5] sm:$0xff]
    %v4455 = vld [vmem:[%s5 + $0x8] sm:$0xff]
    %v4456 = vld [vmem:[%s5 + $0x10] sm:$0xff]
    %v4457 = vld [vmem:[%s5 + $0x18] sm:$0xff]
    %v4458 = vld [vmem:[%s5 + $0x20] sm:$0xff]
    %v4459 = vld [vmem:[%s5 + $0x28] sm:$0xff]
    %v4460 = vld [vmem:[%s5 + $0x30] sm:$0xff]
    %v4461 = vld [vmem:[%s5 + $0x38] sm:$0xff]
    %v4462 = vld [vmem:[%s5 + $0x40] sm:$0xff]
    %v4463 = vld [vmem:[%s5 + $0x48] sm:$0xff]
    %v4464 = vld [vmem:[%s5 + $0x50] sm:$0xff]
    %v4465 = vld [vmem:[%s5 + $0x58] sm:$0xff]
    %v4466 = vld [vmem:[%s5 + $0x60] sm:$0xff]
    %v4467 = vld [vmem:[%s5 + $0x68] sm:$0xff]
    %v4468 = vld [vmem:[%s5 + $0x70] sm:$0xff]
    %v4469 = vld [vmem:[%s5 + $0x78] sm:$0xff]
    %v4470 = vld [vmem:[%s5 + $0x80] sm:$0xff]
    %v4471 = vld [vmem:[%s5 + $0x88] sm:$0xff]
    %v4472 = vld [vmem:[%s5 + $0x90] sm:$0xff]
    %v4473 = vld [vmem:[%s5 + $0x98] sm:$0xff]
    %v4474 = vld [vmem:[%s5 + $0xa0] sm:$0xff]
    %v4475 = vld [vmem:[%s5 + $0xa8] sm:$0xff]
    %v4476 = vld [vmem:[%s5 + $0xb0] sm:$0xff]
    %v4477 = vld [vmem:[%s5 + $0xb8] sm:$0xff]
    %v4478 = vld [vmem:[%s5 + $0xc0] sm:$0xff]
    %v4479 = vld [vmem:[%s5 + $0xc8] sm:$0xff]
    %v4480 = vld [vmem:[%s5 + $0xd0] sm:$0xff]
    %v4481 = vld [vmem:[%s5 + $0xd8] sm:$0xff]
    %v4482 = vld [vmem:[%s5 + $0xe0] sm:$0xff]
    %v4483 = vld [vmem:[%s5 + $0xe8] sm:$0xff]
    %v4484 = vld [vmem:[%s5 + $0xf0] sm:$0xff]
    %v4485 = vld [vmem:[%s5 + $0xf8] sm:$0xff]
    %v4488 = vunpack.c.l.b16 %v4452
    %v4489 = vunpack.c.l.b16 %v4453
    %v4490 = vpack.c.b16 %v4489, %v4488
    %v4524 = vunpack.c.l.b16 %v4454
    %v4525 = vunpack.c.h.b16 %v4454
    %v4526 = vunpack.c.l.b16 %v4455
    %v4527 = vunpack.c.h.b16 %v4455
    %v4528 = vunpack.c.l.b16 %v4456
    %v4529 = vunpack.c.h.b16 %v4456
    %v4530 = vunpack.c.l.b16 %v4457
    %v4531 = vunpack.c.h.b16 %v4457
    %v4532 = vunpack.c.l.b16 %v4458
    %v4533 = vunpack.c.h.b16 %v4458
    %v4534 = vunpack.c.l.b16 %v4459
    %v4535 = vunpack.c.h.b16 %v4459
    %v4536 = vunpack.c.l.b16 %v4460
    %v4537 = vunpack.c.h.b16 %v4460
    %v4538 = vunpack.c.l.b16 %v4461
    %v4539 = vunpack.c.h.b16 %v4461
    %v4540 = vunpack.c.l.b16 %v4462
    %v4541 = vunpack.c.h.b16 %v4462
    %v4542 = vunpack.c.l.b16 %v4463
    %v4543 = vunpack.c.h.b16 %v4463
    %v4544 = vunpack.c.l.b16 %v4464
    %v4545 = vunpack.c.h.b16 %v4464
    %v4546 = vunpack.c.l.b16 %v4465
    %v4547 = vunpack.c.h.b16 %v4465
    %v4548 = vunpack.c.l.b16 %v4466
    %v4549 = vunpack.c.h.b16 %v4466
    %v4550 = vunpack.c.l.b16 %v4467
    %v4551 = vunpack.c.h.b16 %v4467
    %v4552 = vunpack.c.l.b16 %v4468
    %v4553 = vunpack.c.h.b16 %v4468
    %v4554 = vunpack.c.l.b16 %v4469
    %v4555 = vunpack.c.h.b16 %v4469
    %v4556 = vunpack.c.l.b16 %v4470
    %v4557 = vunpack.c.h.b16 %v4470
    %v4558 = vunpack.c.l.b16 %v4471
    %v4559 = vunpack.c.h.b16 %v4471
    %v4560 = vunpack.c.l.b16 %v4472
    %v4561 = vunpack.c.h.b16 %v4472
    %v4562 = vunpack.c.l.b16 %v4473
    %v4563 = vunpack.c.h.b16 %v4473
    %v4564 = vunpack.c.l.b16 %v4474
    %v4565 = vunpack.c.h.b16 %v4474
    %v4566 = vunpack.c.l.b16 %v4475
    %v4567 = vunpack.c.h.b16 %v4475
    %v4568 = vunpack.c.l.b16 %v4476
    %v4569 = vunpack.c.h.b16 %v4476
    %v4570 = vunpack.c.l.b16 %v4477
    %v4571 = vunpack.c.h.b16 %v4477
    %v4572 = vunpack.c.l.b16 %v4478
    %v4573 = vunpack.c.h.b16 %v4478
    %v4574 = vunpack.c.l.b16 %v4479
    %v4575 = vunpack.c.h.b16 %v4479
    %v4576 = vunpack.c.l.b16 %v4480
    %v4577 = vunpack.c.h.b16 %v4480
    %v4578 = vunpack.c.l.b16 %v4481
    %v4579 = vunpack.c.h.b16 %v4481
    %v4580 = vunpack.c.l.b16 %v4482
    %v4581 = vunpack.c.h.b16 %v4482
    %v4582 = vunpack.c.l.b16 %v4483
    %v4583 = vunpack.c.h.b16 %v4483
    %v4584 = vunpack.c.l.b16 %v4484
    %v4585 = vunpack.c.h.b16 %v4484
    %v4586 = vunpack.c.l.b16 %v4485
    %v4587 = vunpack.c.h.b16 %v4485
    %v4588 = vpack.c.b16 %v4528, %v4524
    %v4589 = vpack.c.b16 %v4529, %v4525
    %v4590 = vpack.c.b16 %v4530, %v4526
    %v4591 = vpack.c.b16 %v4531, %v4527
    %v4592 = vpack.c.b16 %v4536, %v4532
    %v4593 = vpack.c.b16 %v4537, %v4533
    %v4594 = vpack.c.b16 %v4538, %v4534
    %v4595 = vpack.c.b16 %v4539, %v4535
    %v4596 = vpack.c.b16 %v4544, %v4540
    %v4597 = vpack.c.b16 %v4545, %v4541
    %v4598 = vpack.c.b16 %v4546, %v4542
    %v4599 = vpack.c.b16 %v4547, %v4543
    %v4600 = vpack.c.b16 %v4552, %v4548
    %v4601 = vpack.c.b16 %v4553, %v4549
    %v4602 = vpack.c.b16 %v4554, %v4550
    %v4603 = vpack.c.b16 %v4555, %v4551
    %v4604 = vpack.c.b16 %v4560, %v4556
    %v4605 = vpack.c.b16 %v4561, %v4557
    %v4606 = vpack.c.b16 %v4562, %v4558
    %v4607 = vpack.c.b16 %v4563, %v4559
    %v4608 = vpack.c.b16 %v4568, %v4564
    %v4609 = vpack.c.b16 %v4569, %v4565
    %v4610 = vpack.c.b16 %v4570, %v4566
    %v4611 = vpack.c.b16 %v4571, %v4567
    %v4612 = vpack.c.b16 %v4576, %v4572
    %v4613 = vpack.c.b16 %v4577, %v4573
    %v4614 = vpack.c.b16 %v4578, %v4574
    %v4615 = vpack.c.b16 %v4579, %v4575
    %v4616 = vpack.c.b16 %v4584, %v4580
    %v4617 = vpack.c.b16 %v4585, %v4581
    %v4618 = vpack.c.b16 %v4586, %v4582
    %v4619 = vpack.c.b16 %v4587, %v4583
    %4652 = vmatprep.subr.bf16.mxu0 %v4617
    %4653 = vmatpush1.bf16.msra.mxu0 %v4616
    %4654 = vmatprep.subr.bf16.mxu0 %v4613
    %4655 = vmatpush1.bf16.msra.mxu0 %v4612
    %4656 = vmatprep.subr.bf16.mxu0 %v4609
    %4657 = vmatpush1.bf16.msra.mxu0 %v4608
    %4658 = vmatprep.subr.bf16.mxu0 %v4605
    %4659 = vmatpush1.bf16.msra.mxu0 %v4604
    %4660 = vmatprep.subr.bf16.mxu0 %v4601
    %4661 = vmatpush1.bf16.msra.mxu0 %v4600
    %4662 = vmatprep.subr.bf16.mxu0 %v4597
    %4663 = vmatpush1.bf16.msra.mxu0 %v4596
    %4664 = vmatprep.subr.bf16.mxu0 %v4593
    %4665 = vmatpush1.bf16.msra.mxu0 %v4592
    %4666 = vmatprep.subr.bf16.mxu0 %v4589
    %4667 = vmatpush1.bf16.msra.mxu0 %v4588
    %4668 = vmatprep.subr.bf16.mxu0 0
    %4669 = vmatpush2.bf16.msra.mxu0 0
    %4670 = vmatprep.subr.bf16.mxu0 0
    %4671 = vmatpush2.bf16.msra.mxu0 0
    %4672 = vmatprep.subr.bf16.mxu0 0
    %4673 = vmatpush2.bf16.msra.mxu0 0
    %4674 = vmatprep.subr.bf16.mxu0 0
    %4675 = vmatpush2.bf16.msra.mxu0 0
    %4676 = vmatprep.subr.bf16.mxu0 0
    %4677 = vmatpush2.bf16.msra.mxu0 0
    %4678 = vmatprep.subr.bf16.mxu0 0
    %4679 = vmatpush2.bf16.msra.mxu0 0
    %4680 = vmatprep.subr.bf16.mxu0 0
    %4681 = vmatpush2.bf16.msra.mxu0 0
    %4682 = vmatprep.subr.bf16.mxu0 0
    %4683 = vmatpush2.bf16.msra.mxu0 0
    %4684 = vmatprep.mubr.bf16.mxu0 0
    %4685 = vmatmul.mubr.bf16.gmra.mxu0 %v4490
    %v4686 = vpop.f32.mrf.mxu0
    %v4687 = vadd.f32 0.0, %v4686
    %v4688 = vpop.f32.mrf.mxu0
    %v4689 = vadd.f32 0.0, %v4688
    %v4690 = vpop.f32.mrf.mxu0
    %v4691 = vadd.f32 0.0, %v4690
    %v4692 = vpop.f32.mrf.mxu0
    %v4693 = vadd.f32 0.0, %v4692
    %4694 = vdwg.mxu0
    %4695 = vmatprep.subr.bf16.mxu0 %v4619
    %4696 = vmatpush1.bf16.msra.mxu0 %v4618
    %4697 = vmatprep.subr.bf16.mxu0 %v4615
    %4698 = vmatpush1.bf16.msra.mxu0 %v4614
    %4699 = vmatprep.subr.bf16.mxu0 %v4611
    %4700 = vmatpush1.bf16.msra.mxu0 %v4610
    %4701 = vmatprep.subr.bf16.mxu0 %v4607
    %4702 = vmatpush1.bf16.msra.mxu0 %v4606
    %4703 = vmatprep.subr.bf16.mxu0 %v4603
    %4704 = vmatpush1.bf16.msra.mxu0 %v4602
    %4705 = vmatprep.subr.bf16.mxu0 %v4599
    %4706 = vmatpush1.bf16.msra.mxu0 %v4598
    %4707 = vmatprep.subr.bf16.mxu0 %v4595
    %4708 = vmatpush1.bf16.msra.mxu0 %v4594
    %4709 = vmatprep.subr.bf16.mxu0 %v4591
    %4710 = vmatpush1.bf16.msra.mxu0 %v4590
    %4711 = vmatprep.subr.bf16.mxu0 0
    %4712 = vmatpush2.bf16.msra.mxu0 0
    %4713 = vmatprep.subr.bf16.mxu0 0
    %4714 = vmatpush2.bf16.msra.mxu0 0
    %4715 = vmatprep.subr.bf16.mxu0 0
    %4716 = vmatpush2.bf16.msra.mxu0 0
    %4717 = vmatprep.subr.bf16.mxu0 0
    %4718 = vmatpush2.bf16.msra.mxu0 0
    %4719 = vmatprep.subr.bf16.mxu0 0
    %4720 = vmatpush2.bf16.msra.mxu0 0
    %4721 = vmatprep.subr.bf16.mxu0 0
    %4722 = vmatpush2.bf16.msra.mxu0 0
    %4723 = vmatprep.subr.bf16.mxu0 0
    %4724 = vmatpush2.bf16.msra.mxu0 0
    %4725 = vmatprep.subr.bf16.mxu0 0
    %4726 = vmatpush2.bf16.msra.mxu0 0
    %4727 = vmatprep.mubr.bf16.mxu0 0
    %4728 = vmatmul.mubr.bf16.gmra.mxu0 %v4490
    %v4729 = vpop.f32.mrf.mxu0
    %v4730 = vadd.f32 0.0, %v4729
    %v4731 = vpop.f32.mrf.mxu0
    %v4732 = vadd.f32 0.0, %v4731
    %v4733 = vpop.f32.mrf.mxu0
    %v4734 = vadd.f32 0.0, %v4733
    %v4735 = vpop.f32.mrf.mxu0
    %v4736 = vadd.f32 0.0, %v4735
    %4737 = vdwg.mxu0
    %v4738 = vadd.f32 %v4444, %v4687
    %v4739 = vadd.f32 %v4445, %v4689
    %v4740 = vadd.f32 %v4446, %v4730
    %v4741 = vadd.f32 %v4447, %v4732
    %v4742 = vadd.f32 %v4448, %v4691
    %v4743 = vadd.f32 %v4449, %v4693
    %v4744 = vadd.f32 %v4450, %v4734
    %v4745 = vadd.f32 %v4451, %v4736
    %v4746 = vld [vmem:[#allocation6] sm:$0xff]
    %v4747 = vld [vmem:[#allocation6 + $0x8] sm:$0xff]
    %v4748 = vxor.u32 %v4738, 2147483648
    %v4749 = vxor.u32 %v4739, 2147483648
    %v4750 = vxor.u32 %v4740, 2147483648
    %v4751 = vxor.u32 %v4742, 2147483648
    %v4752 = vxor.u32 %v4743, 2147483648
    %v4753 = vxor.u32 %v4744, 2147483648
    %v4754 = vmul.f32 %v4748, 1.442695
    %v4755 = vpow.pop %v4754
    %v4756 = vmul.f32 %v4749, 1.442695
    %v4757 = vpow.pop %v4756
    %v4758 = vmul.f32 %v4750, 1.442695
    %v4759 = vpow.pop %v4758
    %v4760 = vmul.f32 %v4751, 1.442695
    %v4761 = vpow.pop %v4760
    %v4762 = vmul.f32 %v4752, 1.442695
    %v4763 = vpow.pop %v4762
    %v4764 = vmul.f32 %v4753, 1.442695
    %v4765 = vpow.pop %v4764
    %v4766 = vadd.f32 %v4755, 1.0
    %v4767 = vadd.f32 %v4757, 1.0
    %v4768 = vadd.f32 %v4759, 1.0
    %v4769 = vadd.f32 %v4761, 1.0
    %v4770 = vadd.f32 %v4763, 1.0
    %v4771 = vadd.f32 %v4765, 1.0
    %v4772 = vrcp.pop %v4766
    %v4773 = vmul.f32 1.0, %v4772
    %v4774 = vrcp.pop %v4767
    %v4775 = vmul.f32 1.0, %v4774
    %v4776 = vrcp.pop %v4768
    %v4777 = vmul.f32 1.0, %v4776
    %v4778 = vrcp.pop %v4769
    %v4779 = vmul.f32 1.0, %v4778
    %v4780 = vrcp.pop %v4770
    %v4781 = vmul.f32 1.0, %v4780
    %v4782 = vrcp.pop %v4771
    %v4783 = vmul.f32 1.0, %v4782
    %v4784 = vtanh.pop %v4741
    %v4785 = vtanh.pop %v4745
    %v4786 = vmul.f32 %v4775, %v4746
    %v4787 = vmul.f32 %v4781, %v4747
    %v4788 = vmul.f32 %v4773, %v4784
    %v4789 = vmul.f32 %v4779, %v4785
    %v4790 = vadd.f32 %v4786, %v4788
    %v4791 = vadd.f32 %v4787, %v4789
    %v4792 = vtanh.pop %v4790
    %v4793 = vtanh.pop %v4791
    %v4794 = vmul.f32 %v4777, %v4792
    %v4795 = vmul.f32 %v4783, %v4793
    %4796 = vst [vmem:[#allocation6] sm:$0xff] %v4790
    %4797 = vst [vmem:[#allocation6 + $0x8] sm:$0xff] %v4791
    %v4798 = vpack.c.bf16 %v4795, %v4794
    %v4800 = vunpack.c.l.b16 %v4798
    %v4801 = vunpack.c.h.b16 %v4798
    %v4802 = vpack.c.b16 %v4800, %v4800
    %v4803 = vpack.c.b16 %v4801, %v4801
    %4806 = vst [vmem:[#allocation5] sm:$0xf] %v4802
    %4807 = vst [vmem:[#allocation5 + $0x4] sm:$0xf] %v4803
    %v4808 = vld [vmem:[#allocation7] sm:$0xff]
    %v4809 = vld [vmem:[#allocation7 + $0x8] sm:$0xff]
    %v4810 = vmax.f32 %v4808, %v4794
    %v4811 = vmax.f32 %v4809, %v4795
    %4812 = vst [vmem:[#allocation7] sm:$0xff] %v4810
    %4813 = vst [vmem:[#allocation7 + $0x8] sm:$0xff] %v4811
    %v4814 = vld [vmem:[%s1310] sm:$0xff]
    %v4815 = vld [vmem:[%s1310 + $0x8] sm:$0xff]
    %v4816 = vld [vmem:[%s1310 + $0x10] sm:$0xff]
    %v4817 = vld [vmem:[%s1310 + $0x18] sm:$0xff]
    %v4818 = vld [vmem:[%s1310 + $0x20] sm:$0xff]
    %v4819 = vld [vmem:[%s1310 + $0x28] sm:$0xff]
    %v4820 = vld [vmem:[%s1310 + $0x30] sm:$0xff]
    %v4821 = vld [vmem:[%s1310 + $0x38] sm:$0xff]
    %v4822 = vld [vmem:[#allocation5] sm:$0xf]
    %v4823 = vld [vmem:[#allocation5 + $0x4] sm:$0xf]
    %v4824 = vld [vmem:[%s5] sm:$0xff]
    %v4825 = vld [vmem:[%s5 + $0x8] sm:$0xff]
    %v4826 = vld [vmem:[%s5 + $0x10] sm:$0xff]
    %v4827 = vld [vmem:[%s5 + $0x18] sm:$0xff]
    %v4828 = vld [vmem:[%s5 + $0x20] sm:$0xff]
    %v4829 = vld [vmem:[%s5 + $0x28] sm:$0xff]
    %v4830 = vld [vmem:[%s5 + $0x30] sm:$0xff]
    %v4831 = vld [vmem:[%s5 + $0x38] sm:$0xff]
    %v4832 = vld [vmem:[%s5 + $0x40] sm:$0xff]
    %v4833 = vld [vmem:[%s5 + $0x48] sm:$0xff]
    %v4834 = vld [vmem:[%s5 + $0x50] sm:$0xff]
    %v4835 = vld [vmem:[%s5 + $0x58] sm:$0xff]
    %v4836 = vld [vmem:[%s5 + $0x60] sm:$0xff]
    %v4837 = vld [vmem:[%s5 + $0x68] sm:$0xff]
    %v4838 = vld [vmem:[%s5 + $0x70] sm:$0xff]
    %v4839 = vld [vmem:[%s5 + $0x78] sm:$0xff]
    %v4840 = vld [vmem:[%s5 + $0x80] sm:$0xff]
    %v4841 = vld [vmem:[%s5 + $0x88] sm:$0xff]
    %v4842 = vld [vmem:[%s5 + $0x90] sm:$0xff]
    %v4843 = vld [vmem:[%s5 + $0x98] sm:$0xff]
    %v4844 = vld [vmem:[%s5 + $0xa0] sm:$0xff]
    %v4845 = vld [vmem:[%s5 + $0xa8] sm:$0xff]
    %v4846 = vld [vmem:[%s5 + $0xb0] sm:$0xff]
    %v4847 = vld [vmem:[%s5 + $0xb8] sm:$0xff]
    %v4848 = vld [vmem:[%s5 + $0xc0] sm:$0xff]
    %v4849 = vld [vmem:[%s5 + $0xc8] sm:$0xff]
    %v4850 = vld [vmem:[%s5 + $0xd0] sm:$0xff]
    %v4851 = vld [vmem:[%s5 + $0xd8] sm:$0xff]
    %v4852 = vld [vmem:[%s5 + $0xe0] sm:$0xff]
    %v4853 = vld [vmem:[%s5 + $0xe8] sm:$0xff]
    %v4854 = vld [vmem:[%s5 + $0xf0] sm:$0xff]
    %v4855 = vld [vmem:[%s5 + $0xf8] sm:$0xff]
    %v4858 = vunpack.c.l.b16 %v4822
    %v4859 = vunpack.c.l.b16 %v4823
    %v4860 = vpack.c.b16 %v4859, %v4858
    %v4894 = vunpack.c.l.b16 %v4824
    %v4895 = vunpack.c.h.b16 %v4824
    %v4896 = vunpack.c.l.b16 %v4825
    %v4897 = vunpack.c.h.b16 %v4825
    %v4898 = vunpack.c.l.b16 %v4826
    %v4899 = vunpack.c.h.b16 %v4826
    %v4900 = vunpack.c.l.b16 %v4827
    %v4901 = vunpack.c.h.b16 %v4827
    %v4902 = vunpack.c.l.b16 %v4828
    %v4903 = vunpack.c.h.b16 %v4828
    %v4904 = vunpack.c.l.b16 %v4829
    %v4905 = vunpack.c.h.b16 %v4829
    %v4906 = vunpack.c.l.b16 %v4830
    %v4907 = vunpack.c.h.b16 %v4830
    %v4908 = vunpack.c.l.b16 %v4831
    %v4909 = vunpack.c.h.b16 %v4831
    %v4910 = vunpack.c.l.b16 %v4832
    %v4911 = vunpack.c.h.b16 %v4832
    %v4912 = vunpack.c.l.b16 %v4833
    %v4913 = vunpack.c.h.b16 %v4833
    %v4914 = vunpack.c.l.b16 %v4834
    %v4915 = vunpack.c.h.b16 %v4834
    %v4916 = vunpack.c.l.b16 %v4835
    %v4917 = vunpack.c.h.b16 %v4835
    %v4918 = vunpack.c.l.b16 %v4836
    %v4919 = vunpack.c.h.b16 %v4836
    %v4920 = vunpack.c.l.b16 %v4837
    %v4921 = vunpack.c.h.b16 %v4837
    %v4922 = vunpack.c.l.b16 %v4838
    %v4923 = vunpack.c.h.b16 %v4838
    %v4924 = vunpack.c.l.b16 %v4839
    %v4925 = vunpack.c.h.b16 %v4839
    %v4926 = vunpack.c.l.b16 %v4840
    %v4927 = vunpack.c.h.b16 %v4840
    %v4928 = vunpack.c.l.b16 %v4841
    %v4929 = vunpack.c.h.b16 %v4841
    %v4930 = vunpack.c.l.b16 %v4842
    %v4931 = vunpack.c.h.b16 %v4842
    %v4932 = vunpack.c.l.b16 %v4843
    %v4933 = vunpack.c.h.b16 %v4843
    %v4934 = vunpack.c.l.b16 %v4844
    %v4935 = vunpack.c.h.b16 %v4844
    %v4936 = vunpack.c.l.b16 %v4845
    %v4937 = vunpack.c.h.b16 %v4845
    %v4938 = vunpack.c.l.b16 %v4846
    %v4939 = vunpack.c.h.b16 %v4846
    %v4940 = vunpack.c.l.b16 %v4847
    %v4941 = vunpack.c.h.b16 %v4847
    %v4942 = vunpack.c.l.b16 %v4848
    %v4943 = vunpack.c.h.b16 %v4848
    %v4944 = vunpack.c.l.b16 %v4849
    %v4945 = vunpack.c.h.b16 %v4849
    %v4946 = vunpack.c.l.b16 %v4850
    %v4947 = vunpack.c.h.b16 %v4850
    %v4948 = vunpack.c.l.b16 %v4851
    %v4949 = vunpack.c.h.b16 %v4851
    %v4950 = vunpack.c.l.b16 %v4852
    %v4951 = vunpack.c.h.b16 %v4852
    %v4952 = vunpack.c.l.b16 %v4853
    %v4953 = vunpack.c.h.b16 %v4853
    %v4954 = vunpack.c.l.b16 %v4854
    %v4955 = vunpack.c.h.b16 %v4854
    %v4956 = vunpack.c.l.b16 %v4855
    %v4957 = vunpack.c.h.b16 %v4855
    %v4958 = vpack.c.b16 %v4898, %v4894
    %v4959 = vpack.c.b16 %v4899, %v4895
    %v4960 = vpack.c.b16 %v4900, %v4896
    %v4961 = vpack.c.b16 %v4901, %v4897
    %v4962 = vpack.c.b16 %v4906, %v4902
    %v4963 = vpack.c.b16 %v4907, %v4903
    %v4964 = vpack.c.b16 %v4908, %v4904
    %v4965 = vpack.c.b16 %v4909, %v4905
    %v4966 = vpack.c.b16 %v4914, %v4910
    %v4967 = vpack.c.b16 %v4915, %v4911
    %v4968 = vpack.c.b16 %v4916, %v4912
    %v4969 = vpack.c.b16 %v4917, %v4913
    %v4970 = vpack.c.b16 %v4922, %v4918
    %v4971 = vpack.c.b16 %v4923, %v4919
    %v4972 = vpack.c.b16 %v4924, %v4920
    %v4973 = vpack.c.b16 %v4925, %v4921
    %v4974 = vpack.c.b16 %v4930, %v4926
    %v4975 = vpack.c.b16 %v4931, %v4927
    %v4976 = vpack.c.b16 %v4932, %v4928
    %v4977 = vpack.c.b16 %v4933, %v4929
    %v4978 = vpack.c.b16 %v4938, %v4934
    %v4979 = vpack.c.b16 %v4939, %v4935
    %v4980 = vpack.c.b16 %v4940, %v4936
    %v4981 = vpack.c.b16 %v4941, %v4937
    %v4982 = vpack.c.b16 %v4946, %v4942
    %v4983 = vpack.c.b16 %v4947, %v4943
    %v4984 = vpack.c.b16 %v4948, %v4944
    %v4985 = vpack.c.b16 %v4949, %v4945
    %v4986 = vpack.c.b16 %v4954, %v4950
    %v4987 = vpack.c.b16 %v4955, %v4951
    %v4988 = vpack.c.b16 %v4956, %v4952
    %v4989 = vpack.c.b16 %v4957, %v4953
    %5022 = vmatprep.subr.bf16.mxu0 %v4987
    %5023 = vmatpush1.bf16.msra.mxu0 %v4986
    %5024 = vmatprep.subr.bf16.mxu0 %v4983
    %5025 = vmatpush1.bf16.msra.mxu0 %v4982
    %5026 = vmatprep.subr.bf16.mxu0 %v4979
    %5027 = vmatpush1.bf16.msra.mxu0 %v4978
    %5028 = vmatprep.subr.bf16.mxu0 %v4975
    %5029 = vmatpush1.bf16.msra.mxu0 %v4974
    %5030 = vmatprep.subr.bf16.mxu0 %v4971
    %5031 = vmatpush1.bf16.msra.mxu0 %v4970
    %5032 = vmatprep.subr.bf16.mxu0 %v4967
    %5033 = vmatpush1.bf16.msra.mxu0 %v4966
    %5034 = vmatprep.subr.bf16.mxu0 %v4963
    %5035 = vmatpush1.bf16.msra.mxu0 %v4962
    %5036 = vmatprep.subr.bf16.mxu0 %v4959
    %5037 = vmatpush1.bf16.msra.mxu0 %v4958
    %5038 = vmatprep.subr.bf16.mxu0 0
    %5039 = vmatpush2.bf16.msra.mxu0 0
    %5040 = vmatprep.subr.bf16.mxu0 0
    %5041 = vmatpush2.bf16.msra.mxu0 0
    %5042 = vmatprep.subr.bf16.mxu0 0
    %5043 = vmatpush2.bf16.msra.mxu0 0
    %5044 = vmatprep.subr.bf16.mxu0 0
    %5045 = vmatpush2.bf16.msra.mxu0 0
    %5046 = vmatprep.subr.bf16.mxu0 0
    %5047 = vmatpush2.bf16.msra.mxu0 0
    %5048 = vmatprep.subr.bf16.mxu0 0
    %5049 = vmatpush2.bf16.msra.mxu0 0
    %5050 = vmatprep.subr.bf16.mxu0 0
    %5051 = vmatpush2.bf16.msra.mxu0 0
    %5052 = vmatprep.subr.bf16.mxu0 0
    %5053 = vmatpush2.bf16.msra.mxu0 0
    %5054 = vmatprep.mubr.bf16.mxu0 0
    %5055 = vmatmul.mubr.bf16.gmra.mxu0 %v4860
    %v5056 = vpop.f32.mrf.mxu0
    %v5057 = vadd.f32 0.0, %v5056
    %v5058 = vpop.f32.mrf.mxu0
    %v5059 = vadd.f32 0.0, %v5058
    %v5060 = vpop.f32.mrf.mxu0
    %v5061 = vadd.f32 0.0, %v5060
    %v5062 = vpop.f32.mrf.mxu0
    %v5063 = vadd.f32 0.0, %v5062
    %5064 = vdwg.mxu0
    %5065 = vmatprep.subr.bf16.mxu0 %v4989
    %5066 = vmatpush1.bf16.msra.mxu0 %v4988
    %5067 = vmatprep.subr.bf16.mxu0 %v4985
    %5068 = vmatpush1.bf16.msra.mxu0 %v4984
    %5069 = vmatprep.subr.bf16.mxu0 %v4981
    %5070 = vmatpush1.bf16.msra.mxu0 %v4980
    %5071 = vmatprep.subr.bf16.mxu0 %v4977
    %5072 = vmatpush1.bf16.msra.mxu0 %v4976
    %5073 = vmatprep.subr.bf16.mxu0 %v4973
    %5074 = vmatpush1.bf16.msra.mxu0 %v4972
    %5075 = vmatprep.subr.bf16.mxu0 %v4969
    %5076 = vmatpush1.bf16.msra.mxu0 %v4968
    %5077 = vmatprep.subr.bf16.mxu0 %v4965
    %5078 = vmatpush1.bf16.msra.mxu0 %v4964
    %5079 = vmatprep.subr.bf16.mxu0 %v4961
    %5080 = vmatpush1.bf16.msra.mxu0 %v4960
    %5081 = vmatprep.subr.bf16.mxu0 0
    %5082 = vmatpush2.bf16.msra.mxu0 0
    %5083 = vmatprep.subr.bf16.mxu0 0
    %5084 = vmatpush2.bf16.msra.mxu0 0
    %5085 = vmatprep.subr.bf16.mxu0 0
    %5086 = vmatpush2.bf16.msra.mxu0 0
    %5087 = vmatprep.subr.bf16.mxu0 0
    %5088 = vmatpush2.bf16.msra.mxu0 0
    %5089 = vmatprep.subr.bf16.mxu0 0
    %5090 = vmatpush2.bf16.msra.mxu0 0
    %5091 = vmatprep.subr.bf16.mxu0 0
    %5092 = vmatpush2.bf16.msra.mxu0 0
    %5093 = vmatprep.subr.bf16.mxu0 0
    %5094 = vmatpush2.bf16.msra.mxu0 0
    %5095 = vmatprep.subr.bf16.mxu0 0
    %5096 = vmatpush2.bf16.msra.mxu0 0
    %5097 = vmatprep.mubr.bf16.mxu0 0
    %5098 = vmatmul.mubr.bf16.gmra.mxu0 %v4860
    %v5099 = vpop.f32.mrf.mxu0
    %v5100 = vadd.f32 0.0, %v5099
    %v5101 = vpop.f32.mrf.mxu0
    %v5102 = vadd.f32 0.0, %v5101
    %v5103 = vpop.f32.mrf.mxu0
    %v5104 = vadd.f32 0.0, %v5103
    %v5105 = vpop.f32.mrf.mxu0
    %v5106 = vadd.f32 0.0, %v5105
    %5107 = vdwg.mxu0
    %v5108 = vadd.f32 %v4814, %v5057
    %v5109 = vadd.f32 %v4815, %v5059
    %v5110 = vadd.f32 %v4816, %v5100
    %v5111 = vadd.f32 %v4817, %v5102
    %v5112 = vadd.f32 %v4818, %v5061
    %v5113 = vadd.f32 %v4819, %v5063
    %v5114 = vadd.f32 %v4820, %v5104
    %v5115 = vadd.f32 %v4821, %v5106
    %v5116 = vld [vmem:[#allocation6] sm:$0xff]
    %v5117 = vld [vmem:[#allocation6 + $0x8] sm:$0xff]
    %v5118 = vxor.u32 %v5108, 2147483648
    %v5119 = vxor.u32 %v5109, 2147483648
    %v5120 = vxor.u32 %v5110, 2147483648
    %v5121 = vxor.u32 %v5112, 2147483648
    %v5122 = vxor.u32 %v5113, 2147483648
    %v5123 = vxor.u32 %v5114, 2147483648
    %v5124 = vmul.f32 %v5118, 1.442695
    %v5125 = vpow.pop %v5124
    %v5126 = vmul.f32 %v5119, 1.442695
    %v5127 = vpow.pop %v5126
    %v5128 = vmul.f32 %v5120, 1.442695
    %v5129 = vpow.pop %v5128
    %v5130 = vmul.f32 %v5121, 1.442695
    %v5131 = vpow.pop %v5130
    %v5132 = vmul.f32 %v5122, 1.442695
    %v5133 = vpow.pop %v5132
    %v5134 = vmul.f32 %v5123, 1.442695
    %v5135 = vpow.pop %v5134
    %v5136 = vadd.f32 %v5125, 1.0
    %v5137 = vadd.f32 %v5127, 1.0
    %v5138 = vadd.f32 %v5129, 1.0
    %v5139 = vadd.f32 %v5131, 1.0
    %v5140 = vadd.f32 %v5133, 1.0
    %v5141 = vadd.f32 %v5135, 1.0
    %v5142 = vrcp.pop %v5136
    %v5143 = vmul.f32 1.0, %v5142
    %v5144 = vrcp.pop %v5137
    %v5145 = vmul.f32 1.0, %v5144
    %v5146 = vrcp.pop %v5138
    %v5147 = vmul.f32 1.0, %v5146
    %v5148 = vrcp.pop %v5139
    %v5149 = vmul.f32 1.0, %v5148
    %v5150 = vrcp.pop %v5140
    %v5151 = vmul.f32 1.0, %v5150
    %v5152 = vrcp.pop %v5141
    %v5153 = vmul.f32 1.0, %v5152
    %v5154 = vtanh.pop %v5111
    %v5155 = vtanh.pop %v5115
    %v5156 = vmul.f32 %v5145, %v5116
    %v5157 = vmul.f32 %v5151, %v5117
    %v5158 = vmul.f32 %v5143, %v5154
    %v5159 = vmul.f32 %v5149, %v5155
    %v5160 = vadd.f32 %v5156, %v5158
    %v5161 = vadd.f32 %v5157, %v5159
    %v5162 = vtanh.pop %v5160
    %v5163 = vtanh.pop %v5161
    %v5164 = vmul.f32 %v5147, %v5162
    %v5165 = vmul.f32 %v5153, %v5163
    %5166 = vst [vmem:[#allocation6] sm:$0xff] %v5160
    %5167 = vst [vmem:[#allocation6 + $0x8] sm:$0xff] %v5161
    %v5168 = vpack.c.bf16 %v5165, %v5164
    %v5170 = vunpack.c.l.b16 %v5168
    %v5171 = vunpack.c.h.b16 %v5168
    %v5172 = vpack.c.b16 %v5170, %v5170
    %v5173 = vpack.c.b16 %v5171, %v5171
    %5176 = vst [vmem:[#allocation5] sm:$0xf] %v5172
    %5177 = vst [vmem:[#allocation5 + $0x4] sm:$0xf] %v5173
    %v5178 = vld [vmem:[#allocation7] sm:$0xff]
    %v5179 = vld [vmem:[#allocation7 + $0x8] sm:$0xff]
    %v5180 = vmax.f32 %v5178, %v5164
    %v5181 = vmax.f32 %v5179, %v5165
    %5182 = vst [vmem:[#allocation7] sm:$0xff] %v5180
    %5183 = vst [vmem:[#allocation7 + $0x8] sm:$0xff] %v5181
    %v5184 = vld [vmem:[%s1676] sm:$0xff]
    %v5185 = vld [vmem:[%s1676 + $0x8] sm:$0xff]
    %v5186 = vld [vmem:[%s1676 + $0x10] sm:$0xff]
    %v5187 = vld [vmem:[%s1676 + $0x18] sm:$0xff]
    %v5188 = vld [vmem:[%s1676 + $0x20] sm:$0xff]
    %v5189 = vld [vmem:[%s1676 + $0x28] sm:$0xff]
    %v5190 = vld [vmem:[%s1676 + $0x30] sm:$0xff]
    %v5191 = vld [vmem:[%s1676 + $0x38] sm:$0xff]
    %v5192 = vld [vmem:[#allocation5] sm:$0xf]
    %v5193 = vld [vmem:[#allocation5 + $0x4] sm:$0xf]
    %v5194 = vld [vmem:[%s5] sm:$0xff]
    %v5195 = vld [vmem:[%s5 + $0x8] sm:$0xff]
    %v5196 = vld [vmem:[%s5 + $0x10] sm:$0xff]
    %v5197 = vld [vmem:[%s5 + $0x18] sm:$0xff]
    %v5198 = vld [vmem:[%s5 + $0x20] sm:$0xff]
    %v5199 = vld [vmem:[%s5 + $0x28] sm:$0xff]
    %v5200 = vld [vmem:[%s5 + $0x30] sm:$0xff]
    %v5201 = vld [vmem:[%s5 + $0x38] sm:$0xff]
    %v5202 = vld [vmem:[%s5 + $0x40] sm:$0xff]
    %v5203 = vld [vmem:[%s5 + $0x48] sm:$0xff]
    %v5204 = vld [vmem:[%s5 + $0x50] sm:$0xff]
    %v5205 = vld [vmem:[%s5 + $0x58] sm:$0xff]
    %v5206 = vld [vmem:[%s5 + $0x60] sm:$0xff]
    %v5207 = vld [vmem:[%s5 + $0x68] sm:$0xff]
    %v5208 = vld [vmem:[%s5 + $0x70] sm:$0xff]
    %v5209 = vld [vmem:[%s5 + $0x78] sm:$0xff]
    %v5210 = vld [vmem:[%s5 + $0x80] sm:$0xff]
    %v5211 = vld [vmem:[%s5 + $0x88] sm:$0xff]
    %v5212 = vld [vmem:[%s5 + $0x90] sm:$0xff]
    %v5213 = vld [vmem:[%s5 + $0x98] sm:$0xff]
    %v5214 = vld [vmem:[%s5 + $0xa0] sm:$0xff]
    %v5215 = vld [vmem:[%s5 + $0xa8] sm:$0xff]
    %v5216 = vld [vmem:[%s5 + $0xb0] sm:$0xff]
    %v5217 = vld [vmem:[%s5 + $0xb8] sm:$0xff]
    %v5218 = vld [vmem:[%s5 + $0xc0] sm:$0xff]
    %v5219 = vld [vmem:[%s5 + $0xc8] sm:$0xff]
    %v5220 = vld [vmem:[%s5 + $0xd0] sm:$0xff]
    %v5221 = vld [vmem:[%s5 + $0xd8] sm:$0xff]
    %v5222 = vld [vmem:[%s5 + $0xe0] sm:$0xff]
    %v5223 = vld [vmem:[%s5 + $0xe8] sm:$0xff]
    %v5224 = vld [vmem:[%s5 + $0xf0] sm:$0xff]
    %v5225 = vld [vmem:[%s5 + $0xf8] sm:$0xff]
    %v5228 = vunpack.c.l.b16 %v5192
    %v5229 = vunpack.c.l.b16 %v5193
    %v5230 = vpack.c.b16 %v5229, %v5228
    %v5264 = vunpack.c.l.b16 %v5194
    %v5265 = vunpack.c.h.b16 %v5194
    %v5266 = vunpack.c.l.b16 %v5195
    %v5267 = vunpack.c.h.b16 %v5195
    %v5268 = vunpack.c.l.b16 %v5196
    %v5269 = vunpack.c.h.b16 %v5196
    %v5270 = vunpack.c.l.b16 %v5197
    %v5271 = vunpack.c.h.b16 %v5197
    %v5272 = vunpack.c.l.b16 %v5198
    %v5273 = vunpack.c.h.b16 %v5198
    %v5274 = vunpack.c.l.b16 %v5199
    %v5275 = vunpack.c.h.b16 %v5199
    %v5276 = vunpack.c.l.b16 %v5200
    %v5277 = vunpack.c.h.b16 %v5200
    %v5278 = vunpack.c.l.b16 %v5201
    %v5279 = vunpack.c.h.b16 %v5201
    %v5280 = vunpack.c.l.b16 %v5202
    %v5281 = vunpack.c.h.b16 %v5202
    %v5282 = vunpack.c.l.b16 %v5203
    %v5283 = vunpack.c.h.b16 %v5203
    %v5284 = vunpack.c.l.b16 %v5204
    %v5285 = vunpack.c.h.b16 %v5204
    %v5286 = vunpack.c.l.b16 %v5205
    %v5287 = vunpack.c.h.b16 %v5205
    %v5288 = vunpack.c.l.b16 %v5206
    %v5289 = vunpack.c.h.b16 %v5206
    %v5290 = vunpack.c.l.b16 %v5207
    %v5291 = vunpack.c.h.b16 %v5207
    %v5292 = vunpack.c.l.b16 %v5208
    %v5293 = vunpack.c.h.b16 %v5208
    %v5294 = vunpack.c.l.b16 %v5209
    %v5295 = vunpack.c.h.b16 %v5209
    %v5296 = vunpack.c.l.b16 %v5210
    %v5297 = vunpack.c.h.b16 %v5210
    %v5298 = vunpack.c.l.b16 %v5211
    %v5299 = vunpack.c.h.b16 %v5211
    %v5300 = vunpack.c.l.b16 %v5212
    %v5301 = vunpack.c.h.b16 %v5212
    %v5302 = vunpack.c.l.b16 %v5213
    %v5303 = vunpack.c.h.b16 %v5213
    %v5304 = vunpack.c.l.b16 %v5214
    %v5305 = vunpack.c.h.b16 %v5214
    %v5306 = vunpack.c.l.b16 %v5215
    %v5307 = vunpack.c.h.b16 %v5215
    %v5308 = vunpack.c.l.b16 %v5216
    %v5309 = vunpack.c.h.b16 %v5216
    %v5310 = vunpack.c.l.b16 %v5217
    %v5311 = vunpack.c.h.b16 %v5217
    %v5312 = vunpack.c.l.b16 %v5218
    %v5313 = vunpack.c.h.b16 %v5218
    %v5314 = vunpack.c.l.b16 %v5219
    %v5315 = vunpack.c.h.b16 %v5219
    %v5316 = vunpack.c.l.b16 %v5220
    %v5317 = vunpack.c.h.b16 %v5220
    %v5318 = vunpack.c.l.b16 %v5221
    %v5319 = vunpack.c.h.b16 %v5221
    %v5320 = vunpack.c.l.b16 %v5222
    %v5321 = vunpack.c.h.b16 %v5222
    %v5322 = vunpack.c.l.b16 %v5223
    %v5323 = vunpack.c.h.b16 %v5223
    %v5324 = vunpack.c.l.b16 %v5224
    %v5325 = vunpack.c.h.b16 %v5224
    %v5326 = vunpack.c.l.b16 %v5225
    %v5327 = vunpack.c.h.b16 %v5225
    %v5328 = vpack.c.b16 %v5268, %v5264
    %v5329 = vpack.c.b16 %v5269, %v5265
    %v5330 = vpack.c.b16 %v5270, %v5266
    %v5331 = vpack.c.b16 %v5271, %v5267
    %v5332 = vpack.c.b16 %v5276, %v5272
    %v5333 = vpack.c.b16 %v5277, %v5273
    %v5334 = vpack.c.b16 %v5278, %v5274
    %v5335 = vpack.c.b16 %v5279, %v5275
    %v5336 = vpack.c.b16 %v5284, %v5280
    %v5337 = vpack.c.b16 %v5285, %v5281
    %v5338 = vpack.c.b16 %v5286, %v5282
    %v5339 = vpack.c.b16 %v5287, %v5283
    %v5340 = vpack.c.b16 %v5292, %v5288
    %v5341 = vpack.c.b16 %v5293, %v5289
    %v5342 = vpack.c.b16 %v5294, %v5290
    %v5343 = vpack.c.b16 %v5295, %v5291
    %v5344 = vpack.c.b16 %v5300, %v5296
    %v5345 = vpack.c.b16 %v5301, %v5297
    %v5346 = vpack.c.b16 %v5302, %v5298
    %v5347 = vpack.c.b16 %v5303, %v5299
    %v5348 = vpack.c.b16 %v5308, %v5304
    %v5349 = vpack.c.b16 %v5309, %v5305
    %v5350 = vpack.c.b16 %v5310, %v5306
    %v5351 = vpack.c.b16 %v5311, %v5307
    %v5352 = vpack.c.b16 %v5316, %v5312
    %v5353 = vpack.c.b16 %v5317, %v5313
    %v5354 = vpack.c.b16 %v5318, %v5314
    %v5355 = vpack.c.b16 %v5319, %v5315
    %v5356 = vpack.c.b16 %v5324, %v5320
    %v5357 = vpack.c.b16 %v5325, %v5321
    %v5358 = vpack.c.b16 %v5326, %v5322
    %v5359 = vpack.c.b16 %v5327, %v5323
    %5392 = vmatprep.subr.bf16.mxu0 %v5357
    %5393 = vmatpush1.bf16.msra.mxu0 %v5356
    %5394 = vmatprep.subr.bf16.mxu0 %v5353
    %5395 = vmatpush1.bf16.msra.mxu0 %v5352
    %5396 = vmatprep.subr.bf16.mxu0 %v5349
    %5397 = vmatpush1.bf16.msra.mxu0 %v5348
    %5398 = vmatprep.subr.bf16.mxu0 %v5345
    %5399 = vmatpush1.bf16.msra.mxu0 %v5344
    %5400 = vmatprep.subr.bf16.mxu0 %v5341
    %5401 = vmatpush1.bf16.msra.mxu0 %v5340
    %5402 = vmatprep.subr.bf16.mxu0 %v5337
    %5403 = vmatpush1.bf16.msra.mxu0 %v5336
    %5404 = vmatprep.subr.bf16.mxu0 %v5333
    %5405 = vmatpush1.bf16.msra.mxu0 %v5332
    %5406 = vmatprep.subr.bf16.mxu0 %v5329
    %5407 = vmatpush1.bf16.msra.mxu0 %v5328
    %5408 = vmatprep.subr.bf16.mxu0 0
    %5409 = vmatpush2.bf16.msra.mxu0 0
    %5410 = vmatprep.subr.bf16.mxu0 0
    %5411 = vmatpush2.bf16.msra.mxu0 0
    %5412 = vmatprep.subr.bf16.mxu0 0
    %5413 = vmatpush2.bf16.msra.mxu0 0
    %5414 = vmatprep.subr.bf16.mxu0 0
    %5415 = vmatpush2.bf16.msra.mxu0 0
    %5416 = vmatprep.subr.bf16.mxu0 0
    %5417 = vmatpush2.bf16.msra.mxu0 0
    %5418 = vmatprep.subr.bf16.mxu0 0
    %5419 = vmatpush2.bf16.msra.mxu0 0
    %5420 = vmatprep.subr.bf16.mxu0 0
    %5421 = vmatpush2.bf16.msra.mxu0 0
    %5422 = vmatprep.subr.bf16.mxu0 0
    %5423 = vmatpush2.bf16.msra.mxu0 0
    %5424 = vmatprep.mubr.bf16.mxu0 0
    %5425 = vmatmul.mubr.bf16.gmra.mxu0 %v5230
    %v5426 = vpop.f32.mrf.mxu0
    %v5427 = vadd.f32 0.0, %v5426
    %v5428 = vpop.f32.mrf.mxu0
    %v5429 = vadd.f32 0.0, %v5428
    %v5430 = vpop.f32.mrf.mxu0
    %v5431 = vadd.f32 0.0, %v5430
    %v5432 = vpop.f32.mrf.mxu0
    %v5433 = vadd.f32 0.0, %v5432
    %5434 = vdwg.mxu0
    %5435 = vmatprep.subr.bf16.mxu0 %v5359
    %5436 = vmatpush1.bf16.msra.mxu0 %v5358
    %5437 = vmatprep.subr.bf16.mxu0 %v5355
    %5438 = vmatpush1.bf16.msra.mxu0 %v5354
    %5439 = vmatprep.subr.bf16.mxu0 %v5351
    %5440 = vmatpush1.bf16.msra.mxu0 %v5350
    %5441 = vmatprep.subr.bf16.mxu0 %v5347
    %5442 = vmatpush1.bf16.msra.mxu0 %v5346
    %5443 = vmatprep.subr.bf16.mxu0 %v5343
    %5444 = vmatpush1.bf16.msra.mxu0 %v5342
    %5445 = vmatprep.subr.bf16.mxu0 %v5339
    %5446 = vmatpush1.bf16.msra.mxu0 %v5338
    %5447 = vmatprep.subr.bf16.mxu0 %v5335
    %5448 = vmatpush1.bf16.msra.mxu0 %v5334
    %5449 = vmatprep.subr.bf16.mxu0 %v5331
    %5450 = vmatpush1.bf16.msra.mxu0 %v5330
    %5451 = vmatprep.subr.bf16.mxu0 0
    %5452 = vmatpush2.bf16.msra.mxu0 0
    %5453 = vmatprep.subr.bf16.mxu0 0
    %5454 = vmatpush2.bf16.msra.mxu0 0
    %5455 = vmatprep.subr.bf16.mxu0 0
    %5456 = vmatpush2.bf16.msra.mxu0 0
    %5457 = vmatprep.subr.bf16.mxu0 0
    %5458 = vmatpush2.bf16.msra.mxu0 0
    %5459 = vmatprep.subr.bf16.mxu0 0
    %5460 = vmatpush2.bf16.msra.mxu0 0
    %5461 = vmatprep.subr.bf16.mxu0 0
    %5462 = vmatpush2.bf16.msra.mxu0 0
    %5463 = vmatprep.subr.bf16.mxu0 0
    %5464 = vmatpush2.bf16.msra.mxu0 0
    %5465 = vmatprep.subr.bf16.mxu0 0
    %5466 = vmatpush2.bf16.msra.mxu0 0
    %5467 = vmatprep.mubr.bf16.mxu0 0
    %5468 = vmatmul.mubr.bf16.gmra.mxu0 %v5230
    %v5469 = vpop.f32.mrf.mxu0
    %v5470 = vadd.f32 0.0, %v5469
    %v5471 = vpop.f32.mrf.mxu0
    %v5472 = vadd.f32 0.0, %v5471
    %v5473 = vpop.f32.mrf.mxu0
    %v5474 = vadd.f32 0.0, %v5473
    %v5475 = vpop.f32.mrf.mxu0
    %v5476 = vadd.f32 0.0, %v5475
    %5477 = vdwg.mxu0
    %v5478 = vadd.f32 %v5184, %v5427
    %v5479 = vadd.f32 %v5185, %v5429
    %v5480 = vadd.f32 %v5186, %v5470
    %v5481 = vadd.f32 %v5187, %v5472
    %v5482 = vadd.f32 %v5188, %v5431
    %v5483 = vadd.f32 %v5189, %v5433
    %v5484 = vadd.f32 %v5190, %v5474
    %v5485 = vadd.f32 %v5191, %v5476
    %v5486 = vld [vmem:[#allocation6] sm:$0xff]
    %v5487 = vld [vmem:[#allocation6 + $0x8] sm:$0xff]
    %v5488 = vxor.u32 %v5478, 2147483648
    %v5489 = vxor.u32 %v5479, 2147483648
    %v5490 = vxor.u32 %v5480, 2147483648
    %v5491 = vxor.u32 %v5482, 2147483648
    %v5492 = vxor.u32 %v5483, 2147483648
    %v5493 = vxor.u32 %v5484, 2147483648
    %v5494 = vmul.f32 %v5488, 1.442695
    %v5495 = vpow.pop %v5494
    %v5496 = vmul.f32 %v5489, 1.442695
    %v5497 = vpow.pop %v5496
    %v5498 = vmul.f32 %v5490, 1.442695
    %v5499 = vpow.pop %v5498
    %v5500 = vmul.f32 %v5491, 1.442695
    %v5501 = vpow.pop %v5500
    %v5502 = vmul.f32 %v5492, 1.442695
    %v5503 = vpow.pop %v5502
    %v5504 = vmul.f32 %v5493, 1.442695
    %v5505 = vpow.pop %v5504
    %v5506 = vadd.f32 %v5495, 1.0
    %v5507 = vadd.f32 %v5497, 1.0
    %v5508 = vadd.f32 %v5499, 1.0
    %v5509 = vadd.f32 %v5501, 1.0
    %v5510 = vadd.f32 %v5503, 1.0
    %v5511 = vadd.f32 %v5505, 1.0
    %v5512 = vrcp.pop %v5506
    %v5513 = vmul.f32 1.0, %v5512
    %v5514 = vrcp.pop %v5507
    %v5515 = vmul.f32 1.0, %v5514
    %v5516 = vrcp.pop %v5508
    %v5517 = vmul.f32 1.0, %v5516
    %v5518 = vrcp.pop %v5509
    %v5519 = vmul.f32 1.0, %v5518
    %v5520 = vrcp.pop %v5510
    %v5521 = vmul.f32 1.0, %v5520
    %v5522 = vrcp.pop %v5511
    %v5523 = vmul.f32 1.0, %v5522
    %v5524 = vtanh.pop %v5481
    %v5525 = vtanh.pop %v5485
    %v5526 = vmul.f32 %v5515, %v5486
    %v5527 = vmul.f32 %v5521, %v5487
    %v5528 = vmul.f32 %v5513, %v5524
    %v5529 = vmul.f32 %v5519, %v5525
    %v5530 = vadd.f32 %v5526, %v5528
    %v5531 = vadd.f32 %v5527, %v5529
    %v5532 = vtanh.pop %v5530
    %v5533 = vtanh.pop %v5531
    %v5534 = vmul.f32 %v5517, %v5532
    %v5535 = vmul.f32 %v5523, %v5533
    %5536 = vst [vmem:[#allocation6] sm:$0xff] %v5530
    %5537 = vst [vmem:[#allocation6 + $0x8] sm:$0xff] %v5531
    %v5538 = vpack.c.bf16 %v5535, %v5534
    %v5540 = vunpack.c.l.b16 %v5538
    %v5541 = vunpack.c.h.b16 %v5538
    %v5542 = vpack.c.b16 %v5540, %v5540
    %v5543 = vpack.c.b16 %v5541, %v5541
    %5546 = vst [vmem:[#allocation5] sm:$0xf] %v5542
    %5547 = vst [vmem:[#allocation5 + $0x4] sm:$0xf] %v5543
    %v5548 = vld [vmem:[#allocation7] sm:$0xff]
    %v5549 = vld [vmem:[#allocation7 + $0x8] sm:$0xff]
    %v5550 = vmax.f32 %v5548, %v5534
    %v5551 = vmax.f32 %v5549, %v5535
    %5552 = vst [vmem:[#allocation7] sm:$0xff] %v5550
    %5553 = vst [vmem:[#allocation7 + $0x8] sm:$0xff] %v5551
    %v5554 = vld [vmem:[%s2042] sm:$0xff]
    %v5555 = vld [vmem:[%s2042 + $0x8] sm:$0xff]
    %v5556 = vld [vmem:[%s2042 + $0x10] sm:$0xff]
    %v5557 = vld [vmem:[%s2042 + $0x18] sm:$0xff]
    %v5558 = vld [vmem:[%s2042 + $0x20] sm:$0xff]
    %v5559 = vld [vmem:[%s2042 + $0x28] sm:$0xff]
    %v5560 = vld [vmem:[%s2042 + $0x30] sm:$0xff]
    %v5561 = vld [vmem:[%s2042 + $0x38] sm:$0xff]
    %v5562 = vld [vmem:[#allocation5] sm:$0xf]
    %v5563 = vld [vmem:[#allocation5 + $0x4] sm:$0xf]
    %v5564 = vld [vmem:[%s5] sm:$0xff]
    %v5565 = vld [vmem:[%s5 + $0x8] sm:$0xff]
    %v5566 = vld [vmem:[%s5 + $0x10] sm:$0xff]
    %v5567 = vld [vmem:[%s5 + $0x18] sm:$0xff]
    %v5568 = vld [vmem:[%s5 + $0x20] sm:$0xff]
    %v5569 = vld [vmem:[%s5 + $0x28] sm:$0xff]
    %v5570 = vld [vmem:[%s5 + $0x30] sm:$0xff]
    %v5571 = vld [vmem:[%s5 + $0x38] sm:$0xff]
    %v5572 = vld [vmem:[%s5 + $0x40] sm:$0xff]
    %v5573 = vld [vmem:[%s5 + $0x48] sm:$0xff]
    %v5574 = vld [vmem:[%s5 + $0x50] sm:$0xff]
    %v5575 = vld [vmem:[%s5 + $0x58] sm:$0xff]
    %v5576 = vld [vmem:[%s5 + $0x60] sm:$0xff]
    %v5577 = vld [vmem:[%s5 + $0x68] sm:$0xff]
    %v5578 = vld [vmem:[%s5 + $0x70] sm:$0xff]
    %v5579 = vld [vmem:[%s5 + $0x78] sm:$0xff]
    %v5580 = vld [vmem:[%s5 + $0x80] sm:$0xff]
    %v5581 = vld [vmem:[%s5 + $0x88] sm:$0xff]
    %v5582 = vld [vmem:[%s5 + $0x90] sm:$0xff]
    %v5583 = vld [vmem:[%s5 + $0x98] sm:$0xff]
    %v5584 = vld [vmem:[%s5 + $0xa0] sm:$0xff]
    %v5585 = vld [vmem:[%s5 + $0xa8] sm:$0xff]
    %v5586 = vld [vmem:[%s5 + $0xb0] sm:$0xff]
    %v5587 = vld [vmem:[%s5 + $0xb8] sm:$0xff]
    %v5588 = vld [vmem:[%s5 + $0xc0] sm:$0xff]
    %v5589 = vld [vmem:[%s5 + $0xc8] sm:$0xff]
    %v5590 = vld [vmem:[%s5 + $0xd0] sm:$0xff]
    %v5591 = vld [vmem:[%s5 + $0xd8] sm:$0xff]
    %v5592 = vld [vmem:[%s5 + $0xe0] sm:$0xff]
    %v5593 = vld [vmem:[%s5 + $0xe8] sm:$0xff]
    %v5594 = vld [vmem:[%s5 + $0xf0] sm:$0xff]
    %v5595 = vld [vmem:[%s5 + $0xf8] sm:$0xff]
    %v5598 = vunpack.c.l.b16 %v5562
    %v5599 = vunpack.c.l.b16 %v5563
    %v5600 = vpack.c.b16 %v5599, %v5598
    %v5634 = vunpack.c.l.b16 %v5564
    %v5635 = vunpack.c.h.b16 %v5564
    %v5636 = vunpack.c.l.b16 %v5565
    %v5637 = vunpack.c.h.b16 %v5565
    %v5638 = vunpack.c.l.b16 %v5566
    %v5639 = vunpack.c.h.b16 %v5566
    %v5640 = vunpack.c.l.b16 %v5567
    %v5641 = vunpack.c.h.b16 %v5567
    %v5642 = vunpack.c.l.b16 %v5568
    %v5643 = vunpack.c.h.b16 %v5568
    %v5644 = vunpack.c.l.b16 %v5569
    %v5645 = vunpack.c.h.b16 %v5569
    %v5646 = vunpack.c.l.b16 %v5570
    %v5647 = vunpack.c.h.b16 %v5570
    %v5648 = vunpack.c.l.b16 %v5571
    %v5649 = vunpack.c.h.b16 %v5571
    %v5650 = vunpack.c.l.b16 %v5572
    %v5651 = vunpack.c.h.b16 %v5572
    %v5652 = vunpack.c.l.b16 %v5573
    %v5653 = vunpack.c.h.b16 %v5573
    %v5654 = vunpack.c.l.b16 %v5574
    %v5655 = vunpack.c.h.b16 %v5574
    %v5656 = vunpack.c.l.b16 %v5575
    %v5657 = vunpack.c.h.b16 %v5575
    %v5658 = vunpack.c.l.b16 %v5576
    %v5659 = vunpack.c.h.b16 %v5576
    %v5660 = vunpack.c.l.b16 %v5577
    %v5661 = vunpack.c.h.b16 %v5577
    %v5662 = vunpack.c.l.b16 %v5578
    %v5663 = vunpack.c.h.b16 %v5578
    %v5664 = vunpack.c.l.b16 %v5579
    %v5665 = vunpack.c.h.b16 %v5579
    %v5666 = vunpack.c.l.b16 %v5580
    %v5667 = vunpack.c.h.b16 %v5580
    %v5668 = vunpack.c.l.b16 %v5581
    %v5669 = vunpack.c.h.b16 %v5581
    %v5670 = vunpack.c.l.b16 %v5582
    %v5671 = vunpack.c.h.b16 %v5582
    %v5672 = vunpack.c.l.b16 %v5583
    %v5673 = vunpack.c.h.b16 %v5583
    %v5674 = vunpack.c.l.b16 %v5584
    %v5675 = vunpack.c.h.b16 %v5584
    %v5676 = vunpack.c.l.b16 %v5585
    %v5677 = vunpack.c.h.b16 %v5585
    %v5678 = vunpack.c.l.b16 %v5586
    %v5679 = vunpack.c.h.b16 %v5586
    %v5680 = vunpack.c.l.b16 %v5587
    %v5681 = vunpack.c.h.b16 %v5587
    %v5682 = vunpack.c.l.b16 %v5588
    %v5683 = vunpack.c.h.b16 %v5588
    %v5684 = vunpack.c.l.b16 %v5589
    %v5685 = vunpack.c.h.b16 %v5589
    %v5686 = vunpack.c.l.b16 %v5590
    %v5687 = vunpack.c.h.b16 %v5590
    %v5688 = vunpack.c.l.b16 %v5591
    %v5689 = vunpack.c.h.b16 %v5591
    %v5690 = vunpack.c.l.b16 %v5592
    %v5691 = vunpack.c.h.b16 %v5592
    %v5692 = vunpack.c.l.b16 %v5593
    %v5693 = vunpack.c.h.b16 %v5593
    %v5694 = vunpack.c.l.b16 %v5594
    %v5695 = vunpack.c.h.b16 %v5594
    %v5696 = vunpack.c.l.b16 %v5595
    %v5697 = vunpack.c.h.b16 %v5595
    %v5698 = vpack.c.b16 %v5638, %v5634
    %v5699 = vpack.c.b16 %v5639, %v5635
    %v5700 = vpack.c.b16 %v5640, %v5636
    %v5701 = vpack.c.b16 %v5641, %v5637
    %v5702 = vpack.c.b16 %v5646, %v5642
    %v5703 = vpack.c.b16 %v5647, %v5643
    %v5704 = vpack.c.b16 %v5648, %v5644
    %v5705 = vpack.c.b16 %v5649, %v5645
    %v5706 = vpack.c.b16 %v5654, %v5650
    %v5707 = vpack.c.b16 %v5655, %v5651
    %v5708 = vpack.c.b16 %v5656, %v5652
    %v5709 = vpack.c.b16 %v5657, %v5653
    %v5710 = vpack.c.b16 %v5662, %v5658
    %v5711 = vpack.c.b16 %v5663, %v5659
    %v5712 = vpack.c.b16 %v5664, %v5660
    %v5713 = vpack.c.b16 %v5665, %v5661
    %v5714 = vpack.c.b16 %v5670, %v5666
    %v5715 = vpack.c.b16 %v5671, %v5667
    %v5716 = vpack.c.b16 %v5672, %v5668
    %v5717 = vpack.c.b16 %v5673, %v5669
    %v5718 = vpack.c.b16 %v5678, %v5674
    %v5719 = vpack.c.b16 %v5679, %v5675
    %v5720 = vpack.c.b16 %v5680, %v5676
    %v5721 = vpack.c.b16 %v5681, %v5677
    %v5722 = vpack.c.b16 %v5686, %v5682
    %v5723 = vpack.c.b16 %v5687, %v5683
    %v5724 = vpack.c.b16 %v5688, %v5684
    %v5725 = vpack.c.b16 %v5689, %v5685
    %v5726 = vpack.c.b16 %v5694, %v5690
    %v5727 = vpack.c.b16 %v5695, %v5691
    %v5728 = vpack.c.b16 %v5696, %v5692
    %v5729 = vpack.c.b16 %v5697, %v5693
    %5762 = vmatprep.subr.bf16.mxu0 %v5727
    %5763 = vmatpush1.bf16.msra.mxu0 %v5726
    %5764 = vmatprep.subr.bf16.mxu0 %v5723
    %5765 = vmatpush1.bf16.msra.mxu0 %v5722
    %5766 = vmatprep.subr.bf16.mxu0 %v5719
    %5767 = vmatpush1.bf16.msra.mxu0 %v5718
    %5768 = vmatprep.subr.bf16.mxu0 %v5715
    %5769 = vmatpush1.bf16.msra.mxu0 %v5714
    %5770 = vmatprep.subr.bf16.mxu0 %v5711
    %5771 = vmatpush1.bf16.msra.mxu0 %v5710
    %5772 = vmatprep.subr.bf16.mxu0 %v5707
    %5773 = vmatpush1.bf16.msra.mxu0 %v5706
    %5774 = vmatprep.subr.bf16.mxu0 %v5703
    %5775 = vmatpush1.bf16.msra.mxu0 %v5702
    %5776 = vmatprep.subr.bf16.mxu0 %v5699
    %5777 = vmatpush1.bf16.msra.mxu0 %v5698
    %5778 = vmatprep.subr.bf16.mxu0 0
    %5779 = vmatpush2.bf16.msra.mxu0 0
    %5780 = vmatprep.subr.bf16.mxu0 0
    %5781 = vmatpush2.bf16.msra.mxu0 0
    %5782 = vmatprep.subr.bf16.mxu0 0
    %5783 = vmatpush2.bf16.msra.mxu0 0
    %5784 = vmatprep.subr.bf16.mxu0 0
    %5785 = vmatpush2.bf16.msra.mxu0 0
    %5786 = vmatprep.subr.bf16.mxu0 0
    %5787 = vmatpush2.bf16.msra.mxu0 0
    %5788 = vmatprep.subr.bf16.mxu0 0
    %5789 = vmatpush2.bf16.msra.mxu0 0
    %5790 = vmatprep.subr.bf16.mxu0 0
    %5791 = vmatpush2.bf16.msra.mxu0 0
    %5792 = vmatprep.subr.bf16.mxu0 0
    %5793 = vmatpush2.bf16.msra.mxu0 0
    %5794 = vmatprep.mubr.bf16.mxu0 0
    %5795 = vmatmul.mubr.bf16.gmra.mxu0 %v5600
    %v5796 = vpop.f32.mrf.mxu0
    %v5797 = vadd.f32 0.0, %v5796
    %v5798 = vpop.f32.mrf.mxu0
    %v5799 = vadd.f32 0.0, %v5798
    %v5800 = vpop.f32.mrf.mxu0
    %v5801 = vadd.f32 0.0, %v5800
    %v5802 = vpop.f32.mrf.mxu0
    %v5803 = vadd.f32 0.0, %v5802
    %5804 = vdwg.mxu0
    %5805 = vmatprep.subr.bf16.mxu0 %v5729
    %5806 = vmatpush1.bf16.msra.mxu0 %v5728
    %5807 = vmatprep.subr.bf16.mxu0 %v5725
    %5808 = vmatpush1.bf16.msra.mxu0 %v5724
    %5809 = vmatprep.subr.bf16.mxu0 %v5721
    %5810 = vmatpush1.bf16.msra.mxu0 %v5720
    %5811 = vmatprep.subr.bf16.mxu0 %v5717
    %5812 = vmatpush1.bf16.msra.mxu0 %v5716
    %5813 = vmatprep.subr.bf16.mxu0 %v5713
    %5814 = vmatpush1.bf16.msra.mxu0 %v5712
    %5815 = vmatprep.subr.bf16.mxu0 %v5709
    %5816 = vmatpush1.bf16.msra.mxu0 %v5708
    %5817 = vmatprep.subr.bf16.mxu0 %v5705
    %5818 = vmatpush1.bf16.msra.mxu0 %v5704
    %5819 = vmatprep.subr.bf16.mxu0 %v5701
    %5820 = vmatpush1.bf16.msra.mxu0 %v5700
    %5821 = vmatprep.subr.bf16.mxu0 0
    %5822 = vmatpush2.bf16.msra.mxu0 0
    %5823 = vmatprep.subr.bf16.mxu0 0
    %5824 = vmatpush2.bf16.msra.mxu0 0
    %5825 = vmatprep.subr.bf16.mxu0 0
    %5826 = vmatpush2.bf16.msra.mxu0 0
    %5827 = vmatprep.subr.bf16.mxu0 0
    %5828 = vmatpush2.bf16.msra.mxu0 0
    %5829 = vmatprep.subr.bf16.mxu0 0
    %5830 = vmatpush2.bf16.msra.mxu0 0
    %5831 = vmatprep.subr.bf16.mxu0 0
    %5832 = vmatpush2.bf16.msra.mxu0 0
    %5833 = vmatprep.subr.bf16.mxu0 0
    %5834 = vmatpush2.bf16.msra.mxu0 0
    %5835 = vmatprep.subr.bf16.mxu0 0
    %5836 = vmatpush2.bf16.msra.mxu0 0
    %5837 = vmatprep.mubr.bf16.mxu0 0
    %5838 = vmatmul.mubr.bf16.gmra.mxu0 %v5600
    %v5839 = vpop.f32.mrf.mxu0
    %v5840 = vadd.f32 0.0, %v5839
    %v5841 = vpop.f32.mrf.mxu0
    %v5842 = vadd.f32 0.0, %v5841
    %v5843 = vpop.f32.mrf.mxu0
    %v5844 = vadd.f32 0.0, %v5843
    %v5845 = vpop.f32.mrf.mxu0
    %v5846 = vadd.f32 0.0, %v5845
    %5847 = vdwg.mxu0
    %v5848 = vadd.f32 %v5554, %v5797
    %v5849 = vadd.f32 %v5555, %v5799
    %v5850 = vadd.f32 %v5556, %v5840
    %v5851 = vadd.f32 %v5557, %v5842
    %v5852 = vadd.f32 %v5558, %v5801
    %v5853 = vadd.f32 %v5559, %v5803
    %v5854 = vadd.f32 %v5560, %v5844
    %v5855 = vadd.f32 %v5561, %v5846
    %v5856 = vld [vmem:[#allocation6] sm:$0xff]
    %v5857 = vld [vmem:[#allocation6 + $0x8] sm:$0xff]
    %v5858 = vxor.u32 %v5848, 2147483648
    %v5859 = vxor.u32 %v5849, 2147483648
    %v5860 = vxor.u32 %v5850, 2147483648
    %v5861 = vxor.u32 %v5852, 2147483648
    %v5862 = vxor.u32 %v5853, 2147483648
    %v5863 = vxor.u32 %v5854, 2147483648
    %v5864 = vmul.f32 %v5858, 1.442695
    %v5865 = vpow.pop %v5864
    %v5866 = vmul.f32 %v5859, 1.442695
    %v5867 = vpow.pop %v5866
    %v5868 = vmul.f32 %v5860, 1.442695
    %v5869 = vpow.pop %v5868
    %v5870 = vmul.f32 %v5861, 1.442695
    %v5871 = vpow.pop %v5870
    %v5872 = vmul.f32 %v5862, 1.442695
    %v5873 = vpow.pop %v5872
    %v5874 = vmul.f32 %v5863, 1.442695
    %v5875 = vpow.pop %v5874
    %v5876 = vadd.f32 %v5865, 1.0
    %v5877 = vadd.f32 %v5867, 1.0
    %v5878 = vadd.f32 %v5869, 1.0
    %v5879 = vadd.f32 %v5871, 1.0
    %v5880 = vadd.f32 %v5873, 1.0
    %v5881 = vadd.f32 %v5875, 1.0
    %v5882 = vrcp.pop %v5876
    %v5883 = vmul.f32 1.0, %v5882
    %v5884 = vrcp.pop %v5877
    %v5885 = vmul.f32 1.0, %v5884
    %v5886 = vrcp.pop %v5878
    %v5887 = vmul.f32 1.0, %v5886
    %v5888 = vrcp.pop %v5879
    %v5889 = vmul.f32 1.0, %v5888
    %v5890 = vrcp.pop %v5880
    %v5891 = vmul.f32 1.0, %v5890
    %v5892 = vrcp.pop %v5881
    %v5893 = vmul.f32 1.0, %v5892
    %v5894 = vtanh.pop %v5851
    %v5895 = vtanh.pop %v5855
    %v5896 = vmul.f32 %v5885, %v5856
    %v5897 = vmul.f32 %v5891, %v5857
    %v5898 = vmul.f32 %v5883, %v5894
    %v5899 = vmul.f32 %v5889, %v5895
    %v5900 = vadd.f32 %v5896, %v5898
    %v5901 = vadd.f32 %v5897, %v5899
    %v5902 = vtanh.pop %v5900
    %v5903 = vtanh.pop %v5901
    %v5904 = vmul.f32 %v5887, %v5902
    %v5905 = vmul.f32 %v5893, %v5903
    %5906 = vst [vmem:[#allocation6] sm:$0xff] %v5900
    %5907 = vst [vmem:[#allocation6 + $0x8] sm:$0xff] %v5901
    %v5908 = vpack.c.bf16 %v5905, %v5904
    %v5910 = vunpack.c.l.b16 %v5908
    %v5911 = vunpack.c.h.b16 %v5908
    %v5912 = vpack.c.b16 %v5910, %v5910
    %v5913 = vpack.c.b16 %v5911, %v5911
    %5916 = vst [vmem:[#allocation5] sm:$0xf] %v5912
    %5917 = vst [vmem:[#allocation5 + $0x4] sm:$0xf] %v5913
    %v5918 = vld [vmem:[#allocation7] sm:$0xff]
    %v5919 = vld [vmem:[#allocation7 + $0x8] sm:$0xff]
    %v5920 = vmax.f32 %v5918, %v5904
    %v5921 = vmax.f32 %v5919, %v5905
    %5922 = vst [vmem:[#allocation7] sm:$0xff] %v5920
    %5923 = vst [vmem:[#allocation7 + $0x8] sm:$0xff] %v5921
    %v5924 = vld [vmem:[%s2408] sm:$0xff]
    %v5925 = vld [vmem:[%s2408 + $0x8] sm:$0xff]
    %v5926 = vld [vmem:[%s2408 + $0x10] sm:$0xff]
    %v5927 = vld [vmem:[%s2408 + $0x18] sm:$0xff]
    %v5928 = vld [vmem:[%s2408 + $0x20] sm:$0xff]
    %v5929 = vld [vmem:[%s2408 + $0x28] sm:$0xff]
    %v5930 = vld [vmem:[%s2408 + $0x30] sm:$0xff]
    %v5931 = vld [vmem:[%s2408 + $0x38] sm:$0xff]
    %v5932 = vld [vmem:[#allocation5] sm:$0xf]
    %v5933 = vld [vmem:[#allocation5 + $0x4] sm:$0xf]
    %v5934 = vld [vmem:[%s5] sm:$0xff]
    %v5935 = vld [vmem:[%s5 + $0x8] sm:$0xff]
    %v5936 = vld [vmem:[%s5 + $0x10] sm:$0xff]
    %v5937 = vld [vmem:[%s5 + $0x18] sm:$0xff]
    %v5938 = vld [vmem:[%s5 + $0x20] sm:$0xff]
    %v5939 = vld [vmem:[%s5 + $0x28] sm:$0xff]
    %v5940 = vld [vmem:[%s5 + $0x30] sm:$0xff]
    %v5941 = vld [vmem:[%s5 + $0x38] sm:$0xff]
    %v5942 = vld [vmem:[%s5 + $0x40] sm:$0xff]
    %v5943 = vld [vmem:[%s5 + $0x48] sm:$0xff]
    %v5944 = vld [vmem:[%s5 + $0x50] sm:$0xff]
    %v5945 = vld [vmem:[%s5 + $0x58] sm:$0xff]
    %v5946 = vld [vmem:[%s5 + $0x60] sm:$0xff]
    %v5947 = vld [vmem:[%s5 + $0x68] sm:$0xff]
    %v5948 = vld [vmem:[%s5 + $0x70] sm:$0xff]
    %v5949 = vld [vmem:[%s5 + $0x78] sm:$0xff]
    %v5950 = vld [vmem:[%s5 + $0x80] sm:$0xff]
    %v5951 = vld [vmem:[%s5 + $0x88] sm:$0xff]
    %v5952 = vld [vmem:[%s5 + $0x90] sm:$0xff]
    %v5953 = vld [vmem:[%s5 + $0x98] sm:$0xff]
    %v5954 = vld [vmem:[%s5 + $0xa0] sm:$0xff]
    %v5955 = vld [vmem:[%s5 + $0xa8] sm:$0xff]
    %v5956 = vld [vmem:[%s5 + $0xb0] sm:$0xff]
    %v5957 = vld [vmem:[%s5 + $0xb8] sm:$0xff]
    %v5958 = vld [vmem:[%s5 + $0xc0] sm:$0xff]
    %v5959 = vld [vmem:[%s5 + $0xc8] sm:$0xff]
    %v5960 = vld [vmem:[%s5 + $0xd0] sm:$0xff]
    %v5961 = vld [vmem:[%s5 + $0xd8] sm:$0xff]
    %v5962 = vld [vmem:[%s5 + $0xe0] sm:$0xff]
    %v5963 = vld [vmem:[%s5 + $0xe8] sm:$0xff]
    %v5964 = vld [vmem:[%s5 + $0xf0] sm:$0xff]
    %v5965 = vld [vmem:[%s5 + $0xf8] sm:$0xff]
    %v5968 = vunpack.c.l.b16 %v5932
    %v5969 = vunpack.c.l.b16 %v5933
    %v5970 = vpack.c.b16 %v5969, %v5968
    %v6004 = vunpack.c.l.b16 %v5934
    %v6005 = vunpack.c.h.b16 %v5934
    %v6006 = vunpack.c.l.b16 %v5935
    %v6007 = vunpack.c.h.b16 %v5935
    %v6008 = vunpack.c.l.b16 %v5936
    %v6009 = vunpack.c.h.b16 %v5936
    %v6010 = vunpack.c.l.b16 %v5937
    %v6011 = vunpack.c.h.b16 %v5937
    %v6012 = vunpack.c.l.b16 %v5938
    %v6013 = vunpack.c.h.b16 %v5938
    %v6014 = vunpack.c.l.b16 %v5939
    %v6015 = vunpack.c.h.b16 %v5939
    %v6016 = vunpack.c.l.b16 %v5940
    %v6017 = vunpack.c.h.b16 %v5940
    %v6018 = vunpack.c.l.b16 %v5941
    %v6019 = vunpack.c.h.b16 %v5941
    %v6020 = vunpack.c.l.b16 %v5942
    %v6021 = vunpack.c.h.b16 %v5942
    %v6022 = vunpack.c.l.b16 %v5943
    %v6023 = vunpack.c.h.b16 %v5943
    %v6024 = vunpack.c.l.b16 %v5944
    %v6025 = vunpack.c.h.b16 %v5944
    %v6026 = vunpack.c.l.b16 %v5945
    %v6027 = vunpack.c.h.b16 %v5945
    %v6028 = vunpack.c.l.b16 %v5946
    %v6029 = vunpack.c.h.b16 %v5946
    %v6030 = vunpack.c.l.b16 %v5947
    %v6031 = vunpack.c.h.b16 %v5947
    %v6032 = vunpack.c.l.b16 %v5948
    %v6033 = vunpack.c.h.b16 %v5948
    %v6034 = vunpack.c.l.b16 %v5949
    %v6035 = vunpack.c.h.b16 %v5949
    %v6036 = vunpack.c.l.b16 %v5950
    %v6037 = vunpack.c.h.b16 %v5950
    %v6038 = vunpack.c.l.b16 %v5951
    %v6039 = vunpack.c.h.b16 %v5951
    %v6040 = vunpack.c.l.b16 %v5952
    %v6041 = vunpack.c.h.b16 %v5952
    %v6042 = vunpack.c.l.b16 %v5953
    %v6043 = vunpack.c.h.b16 %v5953
    %v6044 = vunpack.c.l.b16 %v5954
    %v6045 = vunpack.c.h.b16 %v5954
    %v6046 = vunpack.c.l.b16 %v5955
    %v6047 = vunpack.c.h.b16 %v5955
    %v6048 = vunpack.c.l.b16 %v5956
    %v6049 = vunpack.c.h.b16 %v5956
    %v6050 = vunpack.c.l.b16 %v5957
    %v6051 = vunpack.c.h.b16 %v5957
    %v6052 = vunpack.c.l.b16 %v5958
    %v6053 = vunpack.c.h.b16 %v5958
    %v6054 = vunpack.c.l.b16 %v5959
    %v6055 = vunpack.c.h.b16 %v5959
    %v6056 = vunpack.c.l.b16 %v5960
    %v6057 = vunpack.c.h.b16 %v5960
    %v6058 = vunpack.c.l.b16 %v5961
    %v6059 = vunpack.c.h.b16 %v5961
    %v6060 = vunpack.c.l.b16 %v5962
    %v6061 = vunpack.c.h.b16 %v5962
    %v6062 = vunpack.c.l.b16 %v5963
    %v6063 = vunpack.c.h.b16 %v5963
    %v6064 = vunpack.c.l.b16 %v5964
    %v6065 = vunpack.c.h.b16 %v5964
    %v6066 = vunpack.c.l.b16 %v5965
    %v6067 = vunpack.c.h.b16 %v5965
    %v6068 = vpack.c.b16 %v6008, %v6004
    %v6069 = vpack.c.b16 %v6009, %v6005
    %v6070 = vpack.c.b16 %v6010, %v6006
    %v6071 = vpack.c.b16 %v6011, %v6007
    %v6072 = vpack.c.b16 %v6016, %v6012
    %v6073 = vpack.c.b16 %v6017, %v6013
    %v6074 = vpack.c.b16 %v6018, %v6014
    %v6075 = vpack.c.b16 %v6019, %v6015
    %v6076 = vpack.c.b16 %v6024, %v6020
    %v6077 = vpack.c.b16 %v6025, %v6021
    %v6078 = vpack.c.b16 %v6026, %v6022
    %v6079 = vpack.c.b16 %v6027, %v6023
    %v6080 = vpack.c.b16 %v6032, %v6028
    %v6081 = vpack.c.b16 %v6033, %v6029
    %v6082 = vpack.c.b16 %v6034, %v6030
    %v6083 = vpack.c.b16 %v6035, %v6031
    %v6084 = vpack.c.b16 %v6040, %v6036
    %v6085 = vpack.c.b16 %v6041, %v6037
    %v6086 = vpack.c.b16 %v6042, %v6038
    %v6087 = vpack.c.b16 %v6043, %v6039
    %v6088 = vpack.c.b16 %v6048, %v6044
    %v6089 = vpack.c.b16 %v6049, %v6045
    %v6090 = vpack.c.b16 %v6050, %v6046
    %v6091 = vpack.c.b16 %v6051, %v6047
    %v6092 = vpack.c.b16 %v6056, %v6052
    %v6093 = vpack.c.b16 %v6057, %v6053
    %v6094 = vpack.c.b16 %v6058, %v6054
    %v6095 = vpack.c.b16 %v6059, %v6055
    %v6096 = vpack.c.b16 %v6064, %v6060
    %v6097 = vpack.c.b16 %v6065, %v6061
    %v6098 = vpack.c.b16 %v6066, %v6062
    %v6099 = vpack.c.b16 %v6067, %v6063
    %6132 = vmatprep.subr.bf16.mxu0 %v6097
    %6133 = vmatpush1.bf16.msra.mxu0 %v6096
    %6134 = vmatprep.subr.bf16.mxu0 %v6093
    %6135 = vmatpush1.bf16.msra.mxu0 %v6092
    %6136 = vmatprep.subr.bf16.mxu0 %v6089
    %6137 = vmatpush1.bf16.msra.mxu0 %v6088
    %6138 = vmatprep.subr.bf16.mxu0 %v6085
    %6139 = vmatpush1.bf16.msra.mxu0 %v6084
    %6140 = vmatprep.subr.bf16.mxu0 %v6081
    %6141 = vmatpush1.bf16.msra.mxu0 %v6080
    %6142 = vmatprep.subr.bf16.mxu0 %v6077
    %6143 = vmatpush1.bf16.msra.mxu0 %v6076
    %6144 = vmatprep.subr.bf16.mxu0 %v6073
    %6145 = vmatpush1.bf16.msra.mxu0 %v6072
    %6146 = vmatprep.subr.bf16.mxu0 %v6069
    %6147 = vmatpush1.bf16.msra.mxu0 %v6068
    %6148 = vmatprep.subr.bf16.mxu0 0
    %6149 = vmatpush2.bf16.msra.mxu0 0
    %6150 = vmatprep.subr.bf16.mxu0 0
    %6151 = vmatpush2.bf16.msra.mxu0 0
    %6152 = vmatprep.subr.bf16.mxu0 0
    %6153 = vmatpush2.bf16.msra.mxu0 0
    %6154 = vmatprep.subr.bf16.mxu0 0
    %6155 = vmatpush2.bf16.msra.mxu0 0
    %6156 = vmatprep.subr.bf16.mxu0 0
    %6157 = vmatpush2.bf16.msra.mxu0 0
    %6158 = vmatprep.subr.bf16.mxu0 0
    %6159 = vmatpush2.bf16.msra.mxu0 0
    %6160 = vmatprep.subr.bf16.mxu0 0
    %6161 = vmatpush2.bf16.msra.mxu0 0
    %6162 = vmatprep.subr.bf16.mxu0 0
    %6163 = vmatpush2.bf16.msra.mxu0 0
    %6164 = vmatprep.mubr.bf16.mxu0 0
    %6165 = vmatmul.mubr.bf16.gmra.mxu0 %v5970
    %v6166 = vpop.f32.mrf.mxu0
    %v6167 = vadd.f32 0.0, %v6166
    %v6168 = vpop.f32.mrf.mxu0
    %v6169 = vadd.f32 0.0, %v6168
    %v6170 = vpop.f32.mrf.mxu0
    %v6171 = vadd.f32 0.0, %v6170
    %v6172 = vpop.f32.mrf.mxu0
    %v6173 = vadd.f32 0.0, %v6172
    %6174 = vdwg.mxu0
    %6175 = vmatprep.subr.bf16.mxu0 %v6099
    %6176 = vmatpush1.bf16.msra.mxu0 %v6098
    %6177 = vmatprep.subr.bf16.mxu0 %v6095
    %6178 = vmatpush1.bf16.msra.mxu0 %v6094
    %6179 = vmatprep.subr.bf16.mxu0 %v6091
    %6180 = vmatpush1.bf16.msra.mxu0 %v6090
    %6181 = vmatprep.subr.bf16.mxu0 %v6087
    %6182 = vmatpush1.bf16.msra.mxu0 %v6086
    %6183 = vmatprep.subr.bf16.mxu0 %v6083
    %6184 = vmatpush1.bf16.msra.mxu0 %v6082
    %6185 = vmatprep.subr.bf16.mxu0 %v6079
    %6186 = vmatpush1.bf16.msra.mxu0 %v6078
    %6187 = vmatprep.subr.bf16.mxu0 %v6075
    %6188 = vmatpush1.bf16.msra.mxu0 %v6074
    %6189 = vmatprep.subr.bf16.mxu0 %v6071
    %6190 = vmatpush1.bf16.msra.mxu0 %v6070
    %6191 = vmatprep.subr.bf16.mxu0 0
    %6192 = vmatpush2.bf16.msra.mxu0 0
    %6193 = vmatprep.subr.bf16.mxu0 0
    %6194 = vmatpush2.bf16.msra.mxu0 0
    %6195 = vmatprep.subr.bf16.mxu0 0
    %6196 = vmatpush2.bf16.msra.mxu0 0
    %6197 = vmatprep.subr.bf16.mxu0 0
    %6198 = vmatpush2.bf16.msra.mxu0 0
    %6199 = vmatprep.subr.bf16.mxu0 0
    %6200 = vmatpush2.bf16.msra.mxu0 0
    %6201 = vmatprep.subr.bf16.mxu0 0
    %6202 = vmatpush2.bf16.msra.mxu0 0
    %6203 = vmatprep.subr.bf16.mxu0 0
    %6204 = vmatpush2.bf16.msra.mxu0 0
    %6205 = vmatprep.subr.bf16.mxu0 0
    %6206 = vmatpush2.bf16.msra.mxu0 0
    %6207 = vmatprep.mubr.bf16.mxu0 0
    %6208 = vmatmul.mubr.bf16.gmra.mxu0 %v5970
    %v6209 = vpop.f32.mrf.mxu0
    %v6210 = vadd.f32 0.0, %v6209
    %v6211 = vpop.f32.mrf.mxu0
    %v6212 = vadd.f32 0.0, %v6211
    %v6213 = vpop.f32.mrf.mxu0
    %v6214 = vadd.f32 0.0, %v6213
    %v6215 = vpop.f32.mrf.mxu0
    %v6216 = vadd.f32 0.0, %v6215
    %6217 = vdwg.mxu0
    %v6218 = vadd.f32 %v5924, %v6167
    %v6219 = vadd.f32 %v5925, %v6169
    %v6220 = vadd.f32 %v5926, %v6210
    %v6221 = vadd.f32 %v5927, %v6212
    %v6222 = vadd.f32 %v5928, %v6171
    %v6223 = vadd.f32 %v5929, %v6173
    %v6224 = vadd.f32 %v5930, %v6214
    %v6225 = vadd.f32 %v5931, %v6216
    %v6226 = vld [vmem:[#allocation6] sm:$0xff]
    %v6227 = vld [vmem:[#allocation6 + $0x8] sm:$0xff]
    %v6228 = vxor.u32 %v6218, 2147483648
    %v6229 = vxor.u32 %v6219, 2147483648
    %v6230 = vxor.u32 %v6220, 2147483648
    %v6231 = vxor.u32 %v6222, 2147483648
    %v6232 = vxor.u32 %v6223, 2147483648
    %v6233 = vxor.u32 %v6224, 2147483648
    %v6234 = vmul.f32 %v6228, 1.442695
    %v6235 = vpow.pop %v6234
    %v6236 = vmul.f32 %v6229, 1.442695
    %v6237 = vpow.pop %v6236
    %v6238 = vmul.f32 %v6230, 1.442695
    %v6239 = vpow.pop %v6238
    %v6240 = vmul.f32 %v6231, 1.442695
    %v6241 = vpow.pop %v6240
    %v6242 = vmul.f32 %v6232, 1.442695
    %v6243 = vpow.pop %v6242
    %v6244 = vmul.f32 %v6233, 1.442695
    %v6245 = vpow.pop %v6244
    %v6246 = vadd.f32 %v6235, 1.0
    %v6247 = vadd.f32 %v6237, 1.0
    %v6248 = vadd.f32 %v6239, 1.0
    %v6249 = vadd.f32 %v6241, 1.0
    %v6250 = vadd.f32 %v6243, 1.0
    %v6251 = vadd.f32 %v6245, 1.0
    %v6252 = vrcp.pop %v6246
    %v6253 = vmul.f32 1.0, %v6252
    %v6254 = vrcp.pop %v6247
    %v6255 = vmul.f32 1.0, %v6254
    %v6256 = vrcp.pop %v6248
    %v6257 = vmul.f32 1.0, %v6256
    %v6258 = vrcp.pop %v6249
    %v6259 = vmul.f32 1.0, %v6258
    %v6260 = vrcp.pop %v6250
    %v6261 = vmul.f32 1.0, %v6260
    %v6262 = vrcp.pop %v6251
    %v6263 = vmul.f32 1.0, %v6262
    %v6264 = vtanh.pop %v6221
    %v6265 = vtanh.pop %v6225
    %v6266 = vmul.f32 %v6255, %v6226
    %v6267 = vmul.f32 %v6261, %v6227
    %v6268 = vmul.f32 %v6253, %v6264
    %v6269 = vmul.f32 %v6259, %v6265
    %v6270 = vadd.f32 %v6266, %v6268
    %v6271 = vadd.f32 %v6267, %v6269
    %v6272 = vtanh.pop %v6270
    %v6273 = vtanh.pop %v6271
    %v6274 = vmul.f32 %v6257, %v6272
    %v6275 = vmul.f32 %v6263, %v6273
    %6276 = vst [vmem:[#allocation6] sm:$0xff] %v6270
    %6277 = vst [vmem:[#allocation6 + $0x8] sm:$0xff] %v6271
    %v6278 = vpack.c.bf16 %v6275, %v6274
    %v6280 = vunpack.c.l.b16 %v6278
    %v6281 = vunpack.c.h.b16 %v6278
    %v6282 = vpack.c.b16 %v6280, %v6280
    %v6283 = vpack.c.b16 %v6281, %v6281
    %6286 = vst [vmem:[#allocation5] sm:$0xf] %v6282
    %6287 = vst [vmem:[#allocation5 + $0x4] sm:$0xf] %v6283
    %v6288 = vld [vmem:[#allocation7] sm:$0xff]
    %v6289 = vld [vmem:[#allocation7 + $0x8] sm:$0xff]
    %v6290 = vmax.f32 %v6288, %v6274
    %v6291 = vmax.f32 %v6289, %v6275
    %6292 = vst [vmem:[#allocation7] sm:$0xff] %v6290
    %6293 = vst [vmem:[#allocation7 + $0x8] sm:$0xff] %v6291
    %v6294 = vld [vmem:[%s2774] sm:$0xff]
    %v6295 = vld [vmem:[%s2774 + $0x8] sm:$0xff]
    %v6296 = vld [vmem:[%s2774 + $0x10] sm:$0xff]
    %v6297 = vld [vmem:[%s2774 + $0x18] sm:$0xff]
    %v6298 = vld [vmem:[%s2774 + $0x20] sm:$0xff]
    %v6299 = vld [vmem:[%s2774 + $0x28] sm:$0xff]
    %v6300 = vld [vmem:[%s2774 + $0x30] sm:$0xff]
    %v6301 = vld [vmem:[%s2774 + $0x38] sm:$0xff]
    %v6302 = vld [vmem:[#allocation5] sm:$0xf]
    %v6303 = vld [vmem:[#allocation5 + $0x4] sm:$0xf]
    %v6304 = vld [vmem:[%s5] sm:$0xff]
    %v6305 = vld [vmem:[%s5 + $0x8] sm:$0xff]
    %v6306 = vld [vmem:[%s5 + $0x10] sm:$0xff]
    %v6307 = vld [vmem:[%s5 + $0x18] sm:$0xff]
    %v6308 = vld [vmem:[%s5 + $0x20] sm:$0xff]
    %v6309 = vld [vmem:[%s5 + $0x28] sm:$0xff]
    %v6310 = vld [vmem:[%s5 + $0x30] sm:$0xff]
    %v6311 = vld [vmem:[%s5 + $0x38] sm:$0xff]
    %v6312 = vld [vmem:[%s5 + $0x40] sm:$0xff]
    %v6313 = vld [vmem:[%s5 + $0x48] sm:$0xff]
    %v6314 = vld [vmem:[%s5 + $0x50] sm:$0xff]
    %v6315 = vld [vmem:[%s5 + $0x58] sm:$0xff]
    %v6316 = vld [vmem:[%s5 + $0x60] sm:$0xff]
    %v6317 = vld [vmem:[%s5 + $0x68] sm:$0xff]
    %v6318 = vld [vmem:[%s5 + $0x70] sm:$0xff]
    %v6319 = vld [vmem:[%s5 + $0x78] sm:$0xff]
    %v6320 = vld [vmem:[%s5 + $0x80] sm:$0xff]
    %v6321 = vld [vmem:[%s5 + $0x88] sm:$0xff]
    %v6322 = vld [vmem:[%s5 + $0x90] sm:$0xff]
    %v6323 = vld [vmem:[%s5 + $0x98] sm:$0xff]
    %v6324 = vld [vmem:[%s5 + $0xa0] sm:$0xff]
    %v6325 = vld [vmem:[%s5 + $0xa8] sm:$0xff]
    %v6326 = vld [vmem:[%s5 + $0xb0] sm:$0xff]
    %v6327 = vld [vmem:[%s5 + $0xb8] sm:$0xff]
    %v6328 = vld [vmem:[%s5 + $0xc0] sm:$0xff]
    %v6329 = vld [vmem:[%s5 + $0xc8] sm:$0xff]
    %v6330 = vld [vmem:[%s5 + $0xd0] sm:$0xff]
    %v6331 = vld [vmem:[%s5 + $0xd8] sm:$0xff]
    %v6332 = vld [vmem:[%s5 + $0xe0] sm:$0xff]
    %v6333 = vld [vmem:[%s5 + $0xe8] sm:$0xff]
    %v6334 = vld [vmem:[%s5 + $0xf0] sm:$0xff]
    %v6335 = vld [vmem:[%s5 + $0xf8] sm:$0xff]
    %v6338 = vunpack.c.l.b16 %v6302
    %v6339 = vunpack.c.l.b16 %v6303
    %v6340 = vpack.c.b16 %v6339, %v6338
    %v6374 = vunpack.c.l.b16 %v6304
    %v6375 = vunpack.c.h.b16 %v6304
    %v6376 = vunpack.c.l.b16 %v6305
    %v6377 = vunpack.c.h.b16 %v6305
    %v6378 = vunpack.c.l.b16 %v6306
    %v6379 = vunpack.c.h.b16 %v6306
    %v6380 = vunpack.c.l.b16 %v6307
    %v6381 = vunpack.c.h.b16 %v6307
    %v6382 = vunpack.c.l.b16 %v6308
    %v6383 = vunpack.c.h.b16 %v6308
    %v6384 = vunpack.c.l.b16 %v6309
    %v6385 = vunpack.c.h.b16 %v6309
    %v6386 = vunpack.c.l.b16 %v6310
    %v6387 = vunpack.c.h.b16 %v6310
    %v6388 = vunpack.c.l.b16 %v6311
    %v6389 = vunpack.c.h.b16 %v6311
    %v6390 = vunpack.c.l.b16 %v6312
    %v6391 = vunpack.c.h.b16 %v6312
    %v6392 = vunpack.c.l.b16 %v6313
    %v6393 = vunpack.c.h.b16 %v6313
    %v6394 = vunpack.c.l.b16 %v6314
    %v6395 = vunpack.c.h.b16 %v6314
    %v6396 = vunpack.c.l.b16 %v6315
    %v6397 = vunpack.c.h.b16 %v6315
    %v6398 = vunpack.c.l.b16 %v6316
    %v6399 = vunpack.c.h.b16 %v6316
    %v6400 = vunpack.c.l.b16 %v6317
    %v6401 = vunpack.c.h.b16 %v6317
    %v6402 = vunpack.c.l.b16 %v6318
    %v6403 = vunpack.c.h.b16 %v6318
    %v6404 = vunpack.c.l.b16 %v6319
    %v6405 = vunpack.c.h.b16 %v6319
    %v6406 = vunpack.c.l.b16 %v6320
    %v6407 = vunpack.c.h.b16 %v6320
    %v6408 = vunpack.c.l.b16 %v6321
    %v6409 = vunpack.c.h.b16 %v6321
    %v6410 = vunpack.c.l.b16 %v6322
    %v6411 = vunpack.c.h.b16 %v6322
    %v6412 = vunpack.c.l.b16 %v6323
    %v6413 = vunpack.c.h.b16 %v6323
    %v6414 = vunpack.c.l.b16 %v6324
    %v6415 = vunpack.c.h.b16 %v6324
    %v6416 = vunpack.c.l.b16 %v6325
    %v6417 = vunpack.c.h.b16 %v6325
    %v6418 = vunpack.c.l.b16 %v6326
    %v6419 = vunpack.c.h.b16 %v6326
    %v6420 = vunpack.c.l.b16 %v6327
    %v6421 = vunpack.c.h.b16 %v6327
    %v6422 = vunpack.c.l.b16 %v6328
    %v6423 = vunpack.c.h.b16 %v6328
    %v6424 = vunpack.c.l.b16 %v6329
    %v6425 = vunpack.c.h.b16 %v6329
    %v6426 = vunpack.c.l.b16 %v6330
    %v6427 = vunpack.c.h.b16 %v6330
    %v6428 = vunpack.c.l.b16 %v6331
    %v6429 = vunpack.c.h.b16 %v6331
    %v6430 = vunpack.c.l.b16 %v6332
    %v6431 = vunpack.c.h.b16 %v6332
    %v6432 = vunpack.c.l.b16 %v6333
    %v6433 = vunpack.c.h.b16 %v6333
    %v6434 = vunpack.c.l.b16 %v6334
    %v6435 = vunpack.c.h.b16 %v6334
    %v6436 = vunpack.c.l.b16 %v6335
    %v6437 = vunpack.c.h.b16 %v6335
    %v6438 = vpack.c.b16 %v6378, %v6374
    %v6439 = vpack.c.b16 %v6379, %v6375
    %v6440 = vpack.c.b16 %v6380, %v6376
    %v6441 = vpack.c.b16 %v6381, %v6377
    %v6442 = vpack.c.b16 %v6386, %v6382
    %v6443 = vpack.c.b16 %v6387, %v6383
    %v6444 = vpack.c.b16 %v6388, %v6384
    %v6445 = vpack.c.b16 %v6389, %v6385
    %v6446 = vpack.c.b16 %v6394, %v6390
    %v6447 = vpack.c.b16 %v6395, %v6391
    %v6448 = vpack.c.b16 %v6396, %v6392
    %v6449 = vpack.c.b16 %v6397, %v6393
    %v6450 = vpack.c.b16 %v6402, %v6398
    %v6451 = vpack.c.b16 %v6403, %v6399
    %v6452 = vpack.c.b16 %v6404, %v6400
    %v6453 = vpack.c.b16 %v6405, %v6401
    %v6454 = vpack.c.b16 %v6410, %v6406
    %v6455 = vpack.c.b16 %v6411, %v6407
    %v6456 = vpack.c.b16 %v6412, %v6408
    %v6457 = vpack.c.b16 %v6413, %v6409
    %v6458 = vpack.c.b16 %v6418, %v6414
    %v6459 = vpack.c.b16 %v6419, %v6415
    %v6460 = vpack.c.b16 %v6420, %v6416
    %v6461 = vpack.c.b16 %v6421, %v6417
    %v6462 = vpack.c.b16 %v6426, %v6422
    %v6463 = vpack.c.b16 %v6427, %v6423
    %v6464 = vpack.c.b16 %v6428, %v6424
    %v6465 = vpack.c.b16 %v6429, %v6425
    %v6466 = vpack.c.b16 %v6434, %v6430
    %v6467 = vpack.c.b16 %v6435, %v6431
    %v6468 = vpack.c.b16 %v6436, %v6432
    %v6469 = vpack.c.b16 %v6437, %v6433
    %6502 = vmatprep.subr.bf16.mxu0 %v6467
    %6503 = vmatpush1.bf16.msra.mxu0 %v6466
    %6504 = vmatprep.subr.bf16.mxu0 %v6463
    %6505 = vmatpush1.bf16.msra.mxu0 %v6462
    %6506 = vmatprep.subr.bf16.mxu0 %v6459
    %6507 = vmatpush1.bf16.msra.mxu0 %v6458
    %6508 = vmatprep.subr.bf16.mxu0 %v6455
    %6509 = vmatpush1.bf16.msra.mxu0 %v6454
    %6510 = vmatprep.subr.bf16.mxu0 %v6451
    %6511 = vmatpush1.bf16.msra.mxu0 %v6450
    %6512 = vmatprep.subr.bf16.mxu0 %v6447
    %6513 = vmatpush1.bf16.msra.mxu0 %v6446
    %6514 = vmatprep.subr.bf16.mxu0 %v6443
    %6515 = vmatpush1.bf16.msra.mxu0 %v6442
    %6516 = vmatprep.subr.bf16.mxu0 %v6439
    %6517 = vmatpush1.bf16.msra.mxu0 %v6438
    %6518 = vmatprep.subr.bf16.mxu0 0
    %6519 = vmatpush2.bf16.msra.mxu0 0
    %6520 = vmatprep.subr.bf16.mxu0 0
    %6521 = vmatpush2.bf16.msra.mxu0 0
    %6522 = vmatprep.subr.bf16.mxu0 0
    %6523 = vmatpush2.bf16.msra.mxu0 0
    %6524 = vmatprep.subr.bf16.mxu0 0
    %6525 = vmatpush2.bf16.msra.mxu0 0
    %6526 = vmatprep.subr.bf16.mxu0 0
    %6527 = vmatpush2.bf16.msra.mxu0 0
    %6528 = vmatprep.subr.bf16.mxu0 0
    %6529 = vmatpush2.bf16.msra.mxu0 0
    %6530 = vmatprep.subr.bf16.mxu0 0
    %6531 = vmatpush2.bf16.msra.mxu0 0
    %6532 = vmatprep.subr.bf16.mxu0 0
    %6533 = vmatpush2.bf16.msra.mxu0 0
    %6534 = vmatprep.mubr.bf16.mxu0 0
    %6535 = vmatmul.mubr.bf16.gmra.mxu0 %v6340
    %v6536 = vpop.f32.mrf.mxu0
    %v6537 = vadd.f32 0.0, %v6536
    %v6538 = vpop.f32.mrf.mxu0
    %v6539 = vadd.f32 0.0, %v6538
    %v6540 = vpop.f32.mrf.mxu0
    %v6541 = vadd.f32 0.0, %v6540
    %v6542 = vpop.f32.mrf.mxu0
    %v6543 = vadd.f32 0.0, %v6542
    %6544 = vdwg.mxu0
    %6545 = vmatprep.subr.bf16.mxu0 %v6469
    %6546 = vmatpush1.bf16.msra.mxu0 %v6468
    %6547 = vmatprep.subr.bf16.mxu0 %v6465
    %6548 = vmatpush1.bf16.msra.mxu0 %v6464
    %6549 = vmatprep.subr.bf16.mxu0 %v6461
    %6550 = vmatpush1.bf16.msra.mxu0 %v6460
    %6551 = vmatprep.subr.bf16.mxu0 %v6457
    %6552 = vmatpush1.bf16.msra.mxu0 %v6456
    %6553 = vmatprep.subr.bf16.mxu0 %v6453
    %6554 = vmatpush1.bf16.msra.mxu0 %v6452
    %6555 = vmatprep.subr.bf16.mxu0 %v6449
    %6556 = vmatpush1.bf16.msra.mxu0 %v6448
    %6557 = vmatprep.subr.bf16.mxu0 %v6445
    %6558 = vmatpush1.bf16.msra.mxu0 %v6444
    %6559 = vmatprep.subr.bf16.mxu0 %v6441
    %6560 = vmatpush1.bf16.msra.mxu0 %v6440
    %6561 = vmatprep.subr.bf16.mxu0 0
    %6562 = vmatpush2.bf16.msra.mxu0 0
    %6563 = vmatprep.subr.bf16.mxu0 0
    %6564 = vmatpush2.bf16.msra.mxu0 0
    %6565 = vmatprep.subr.bf16.mxu0 0
    %6566 = vmatpush2.bf16.msra.mxu0 0
    %6567 = vmatprep.subr.bf16.mxu0 0
    %6568 = vmatpush2.bf16.msra.mxu0 0
    %6569 = vmatprep.subr.bf16.mxu0 0
    %6570 = vmatpush2.bf16.msra.mxu0 0
    %6571 = vmatprep.subr.bf16.mxu0 0
    %6572 = vmatpush2.bf16.msra.mxu0 0
    %6573 = vmatprep.subr.bf16.mxu0 0
    %6574 = vmatpush2.bf16.msra.mxu0 0
    %6575 = vmatprep.subr.bf16.mxu0 0
    %6576 = vmatpush2.bf16.msra.mxu0 0
    %6577 = vmatprep.mubr.bf16.mxu0 0
    %6578 = vmatmul.mubr.bf16.gmra.mxu0 %v6340
    %v6579 = vpop.f32.mrf.mxu0
    %v6580 = vadd.f32 0.0, %v6579
    %v6581 = vpop.f32.mrf.mxu0
    %v6582 = vadd.f32 0.0, %v6581
    %v6583 = vpop.f32.mrf.mxu0
    %v6584 = vadd.f32 0.0, %v6583
    %v6585 = vpop.f32.mrf.mxu0
    %v6586 = vadd.f32 0.0, %v6585
    %6587 = vdwg.mxu0
    %v6588 = vadd.f32 %v6294, %v6537
    %v6589 = vadd.f32 %v6295, %v6539
    %v6590 = vadd.f32 %v6296, %v6580
    %v6591 = vadd.f32 %v6297, %v6582
    %v6592 = vadd.f32 %v6298, %v6541
    %v6593 = vadd.f32 %v6299, %v6543
    %v6594 = vadd.f32 %v6300, %v6584
    %v6595 = vadd.f32 %v6301, %v6586
    %v6596 = vld [vmem:[#allocation6] sm:$0xff]
    %v6597 = vld [vmem:[#allocation6 + $0x8] sm:$0xff]
    %v6598 = vxor.u32 %v6588, 2147483648
    %v6599 = vxor.u32 %v6589, 2147483648
    %v6600 = vxor.u32 %v6590, 2147483648
    %v6601 = vxor.u32 %v6592, 2147483648
    %v6602 = vxor.u32 %v6593, 2147483648
    %v6603 = vxor.u32 %v6594, 2147483648
    %v6604 = vmul.f32 %v6598, 1.442695
    %v6605 = vpow.pop %v6604
    %v6606 = vmul.f32 %v6599, 1.442695
    %v6607 = vpow.pop %v6606
    %v6608 = vmul.f32 %v6600, 1.442695
    %v6609 = vpow.pop %v6608
    %v6610 = vmul.f32 %v6601, 1.442695
    %v6611 = vpow.pop %v6610
    %v6612 = vmul.f32 %v6602, 1.442695
    %v6613 = vpow.pop %v6612
    %v6614 = vmul.f32 %v6603, 1.442695
    %v6615 = vpow.pop %v6614
    %v6616 = vadd.f32 %v6605, 1.0
    %v6617 = vadd.f32 %v6607, 1.0
    %v6618 = vadd.f32 %v6609, 1.0
    %v6619 = vadd.f32 %v6611, 1.0
    %v6620 = vadd.f32 %v6613, 1.0
    %v6621 = vadd.f32 %v6615, 1.0
    %v6622 = vrcp.pop %v6616
    %v6623 = vmul.f32 1.0, %v6622
    %v6624 = vrcp.pop %v6617
    %v6625 = vmul.f32 1.0, %v6624
    %v6626 = vrcp.pop %v6618
    %v6627 = vmul.f32 1.0, %v6626
    %v6628 = vrcp.pop %v6619
    %v6629 = vmul.f32 1.0, %v6628
    %v6630 = vrcp.pop %v6620
    %v6631 = vmul.f32 1.0, %v6630
    %v6632 = vrcp.pop %v6621
    %v6633 = vmul.f32 1.0, %v6632
    %v6634 = vtanh.pop %v6591
    %v6635 = vtanh.pop %v6595
    %v6636 = vmul.f32 %v6625, %v6596
    %v6637 = vmul.f32 %v6631, %v6597
    %v6638 = vmul.f32 %v6623, %v6634
    %v6639 = vmul.f32 %v6629, %v6635
    %v6640 = vadd.f32 %v6636, %v6638
    %v6641 = vadd.f32 %v6637, %v6639
    %v6642 = vtanh.pop %v6640
    %v6643 = vtanh.pop %v6641
    %v6644 = vmul.f32 %v6627, %v6642
    %v6645 = vmul.f32 %v6633, %v6643
    %6646 = vst [vmem:[#allocation6] sm:$0xff] %v6640
    %6647 = vst [vmem:[#allocation6 + $0x8] sm:$0xff] %v6641
    %v6648 = vpack.c.bf16 %v6645, %v6644
    %v6650 = vunpack.c.l.b16 %v6648
    %v6651 = vunpack.c.h.b16 %v6648
    %v6652 = vpack.c.b16 %v6650, %v6650
    %v6653 = vpack.c.b16 %v6651, %v6651
    %6656 = vst [vmem:[#allocation5] sm:$0xf] %v6652
    %6657 = vst [vmem:[#allocation5 + $0x4] sm:$0xf] %v6653
    %v6658 = vld [vmem:[#allocation7] sm:$0xff]
    %v6659 = vld [vmem:[#allocation7 + $0x8] sm:$0xff]
    %v6660 = vmax.f32 %v6658, %v6644
    %v6661 = vmax.f32 %v6659, %v6645
    %6662 = vst [vmem:[#allocation7] sm:$0xff] %v6660
    %6663 = vst [vmem:[#allocation7 + $0x8] sm:$0xff] %v6661
    %v6664 = vld [vmem:[%s3140] sm:$0xff]
    %v6665 = vld [vmem:[%s3140 + $0x8] sm:$0xff]
    %v6666 = vld [vmem:[%s3140 + $0x10] sm:$0xff]
    %v6667 = vld [vmem:[%s3140 + $0x18] sm:$0xff]
    %v6668 = vld [vmem:[%s3140 + $0x20] sm:$0xff]
    %v6669 = vld [vmem:[%s3140 + $0x28] sm:$0xff]
    %v6670 = vld [vmem:[%s3140 + $0x30] sm:$0xff]
    %v6671 = vld [vmem:[%s3140 + $0x38] sm:$0xff]
    %v6672 = vld [vmem:[#allocation5] sm:$0xf]
    %v6673 = vld [vmem:[#allocation5 + $0x4] sm:$0xf]
    %v6674 = vld [vmem:[%s5] sm:$0xff]
    %v6675 = vld [vmem:[%s5 + $0x8] sm:$0xff]
    %v6676 = vld [vmem:[%s5 + $0x10] sm:$0xff]
    %v6677 = vld [vmem:[%s5 + $0x18] sm:$0xff]
    %v6678 = vld [vmem:[%s5 + $0x20] sm:$0xff]
    %v6679 = vld [vmem:[%s5 + $0x28] sm:$0xff]
    %v6680 = vld [vmem:[%s5 + $0x30] sm:$0xff]
    %v6681 = vld [vmem:[%s5 + $0x38] sm:$0xff]
    %v6682 = vld [vmem:[%s5 + $0x40] sm:$0xff]
    %v6683 = vld [vmem:[%s5 + $0x48] sm:$0xff]
    %v6684 = vld [vmem:[%s5 + $0x50] sm:$0xff]
    %v6685 = vld [vmem:[%s5 + $0x58] sm:$0xff]
    %v6686 = vld [vmem:[%s5 + $0x60] sm:$0xff]
    %v6687 = vld [vmem:[%s5 + $0x68] sm:$0xff]
    %v6688 = vld [vmem:[%s5 + $0x70] sm:$0xff]
    %v6689 = vld [vmem:[%s5 + $0x78] sm:$0xff]
    %v6690 = vld [vmem:[%s5 + $0x80] sm:$0xff]
    %v6691 = vld [vmem:[%s5 + $0x88] sm:$0xff]
    %v6692 = vld [vmem:[%s5 + $0x90] sm:$0xff]
    %v6693 = vld [vmem:[%s5 + $0x98] sm:$0xff]
    %v6694 = vld [vmem:[%s5 + $0xa0] sm:$0xff]
    %v6695 = vld [vmem:[%s5 + $0xa8] sm:$0xff]
    %v6696 = vld [vmem:[%s5 + $0xb0] sm:$0xff]
    %v6697 = vld [vmem:[%s5 + $0xb8] sm:$0xff]
    %v6698 = vld [vmem:[%s5 + $0xc0] sm:$0xff]
    %v6699 = vld [vmem:[%s5 + $0xc8] sm:$0xff]
    %v6700 = vld [vmem:[%s5 + $0xd0] sm:$0xff]
    %v6701 = vld [vmem:[%s5 + $0xd8] sm:$0xff]
    %v6702 = vld [vmem:[%s5 + $0xe0] sm:$0xff]
    %v6703 = vld [vmem:[%s5 + $0xe8] sm:$0xff]
    %v6704 = vld [vmem:[%s5 + $0xf0] sm:$0xff]
    %v6705 = vld [vmem:[%s5 + $0xf8] sm:$0xff]
    %v6708 = vunpack.c.l.b16 %v6672
    %v6709 = vunpack.c.l.b16 %v6673
    %v6710 = vpack.c.b16 %v6709, %v6708
    %v6744 = vunpack.c.l.b16 %v6674
    %v6745 = vunpack.c.h.b16 %v6674
    %v6746 = vunpack.c.l.b16 %v6675
    %v6747 = vunpack.c.h.b16 %v6675
    %v6748 = vunpack.c.l.b16 %v6676
    %v6749 = vunpack.c.h.b16 %v6676
    %v6750 = vunpack.c.l.b16 %v6677
    %v6751 = vunpack.c.h.b16 %v6677
    %v6752 = vunpack.c.l.b16 %v6678
    %v6753 = vunpack.c.h.b16 %v6678
    %v6754 = vunpack.c.l.b16 %v6679
    %v6755 = vunpack.c.h.b16 %v6679
    %v6756 = vunpack.c.l.b16 %v6680
    %v6757 = vunpack.c.h.b16 %v6680
    %v6758 = vunpack.c.l.b16 %v6681
    %v6759 = vunpack.c.h.b16 %v6681
    %v6760 = vunpack.c.l.b16 %v6682
    %v6761 = vunpack.c.h.b16 %v6682
    %v6762 = vunpack.c.l.b16 %v6683
    %v6763 = vunpack.c.h.b16 %v6683
    %v6764 = vunpack.c.l.b16 %v6684
    %v6765 = vunpack.c.h.b16 %v6684
    %v6766 = vunpack.c.l.b16 %v6685
    %v6767 = vunpack.c.h.b16 %v6685
    %v6768 = vunpack.c.l.b16 %v6686
    %v6769 = vunpack.c.h.b16 %v6686
    %v6770 = vunpack.c.l.b16 %v6687
    %v6771 = vunpack.c.h.b16 %v6687
    %v6772 = vunpack.c.l.b16 %v6688
    %v6773 = vunpack.c.h.b16 %v6688
    %v6774 = vunpack.c.l.b16 %v6689
    %v6775 = vunpack.c.h.b16 %v6689
    %v6776 = vunpack.c.l.b16 %v6690
    %v6777 = vunpack.c.h.b16 %v6690
    %v6778 = vunpack.c.l.b16 %v6691
    %v6779 = vunpack.c.h.b16 %v6691
    %v6780 = vunpack.c.l.b16 %v6692
    %v6781 = vunpack.c.h.b16 %v6692
    %v6782 = vunpack.c.l.b16 %v6693
    %v6783 = vunpack.c.h.b16 %v6693
    %v6784 = vunpack.c.l.b16 %v6694
    %v6785 = vunpack.c.h.b16 %v6694
    %v6786 = vunpack.c.l.b16 %v6695
    %v6787 = vunpack.c.h.b16 %v6695
    %v6788 = vunpack.c.l.b16 %v6696
    %v6789 = vunpack.c.h.b16 %v6696
    %v6790 = vunpack.c.l.b16 %v6697
    %v6791 = vunpack.c.h.b16 %v6697
    %v6792 = vunpack.c.l.b16 %v6698
    %v6793 = vunpack.c.h.b16 %v6698
    %v6794 = vunpack.c.l.b16 %v6699
    %v6795 = vunpack.c.h.b16 %v6699
    %v6796 = vunpack.c.l.b16 %v6700
    %v6797 = vunpack.c.h.b16 %v6700
    %v6798 = vunpack.c.l.b16 %v6701
    %v6799 = vunpack.c.h.b16 %v6701
    %v6800 = vunpack.c.l.b16 %v6702
    %v6801 = vunpack.c.h.b16 %v6702
    %v6802 = vunpack.c.l.b16 %v6703
    %v6803 = vunpack.c.h.b16 %v6703
    %v6804 = vunpack.c.l.b16 %v6704
    %v6805 = vunpack.c.h.b16 %v6704
    %v6806 = vunpack.c.l.b16 %v6705
    %v6807 = vunpack.c.h.b16 %v6705
    %v6808 = vpack.c.b16 %v6748, %v6744
    %v6809 = vpack.c.b16 %v6749, %v6745
    %v6810 = vpack.c.b16 %v6750, %v6746
    %v6811 = vpack.c.b16 %v6751, %v6747
    %v6812 = vpack.c.b16 %v6756, %v6752
    %v6813 = vpack.c.b16 %v6757, %v6753
    %v6814 = vpack.c.b16 %v6758, %v6754
    %v6815 = vpack.c.b16 %v6759, %v6755
    %v6816 = vpack.c.b16 %v6764, %v6760
    %v6817 = vpack.c.b16 %v6765, %v6761
    %v6818 = vpack.c.b16 %v6766, %v6762
    %v6819 = vpack.c.b16 %v6767, %v6763
    %v6820 = vpack.c.b16 %v6772, %v6768
    %v6821 = vpack.c.b16 %v6773, %v6769
    %v6822 = vpack.c.b16 %v6774, %v6770
    %v6823 = vpack.c.b16 %v6775, %v6771
    %v6824 = vpack.c.b16 %v6780, %v6776
    %v6825 = vpack.c.b16 %v6781, %v6777
    %v6826 = vpack.c.b16 %v6782, %v6778
    %v6827 = vpack.c.b16 %v6783, %v6779
    %v6828 = vpack.c.b16 %v6788, %v6784
    %v6829 = vpack.c.b16 %v6789, %v6785
    %v6830 = vpack.c.b16 %v6790, %v6786
    %v6831 = vpack.c.b16 %v6791, %v6787
    %v6832 = vpack.c.b16 %v6796, %v6792
    %v6833 = vpack.c.b16 %v6797, %v6793
    %v6834 = vpack.c.b16 %v6798, %v6794
    %v6835 = vpack.c.b16 %v6799, %v6795
    %v6836 = vpack.c.b16 %v6804, %v6800
    %v6837 = vpack.c.b16 %v6805, %v6801
    %v6838 = vpack.c.b16 %v6806, %v6802
    %v6839 = vpack.c.b16 %v6807, %v6803
    %6872 = vmatprep.subr.bf16.mxu0 %v6837
    %6873 = vmatpush1.bf16.msra.mxu0 %v6836
    %6874 = vmatprep.subr.bf16.mxu0 %v6833
    %6875 = vmatpush1.bf16.msra.mxu0 %v6832
    %6876 = vmatprep.subr.bf16.mxu0 %v6829
    %6877 = vmatpush1.bf16.msra.mxu0 %v6828
    %6878 = vmatprep.subr.bf16.mxu0 %v6825
    %6879 = vmatpush1.bf16.msra.mxu0 %v6824
    %6880 = vmatprep.subr.bf16.mxu0 %v6821
    %6881 = vmatpush1.bf16.msra.mxu0 %v6820
    %6882 = vmatprep.subr.bf16.mxu0 %v6817
    %6883 = vmatpush1.bf16.msra.mxu0 %v6816
    %6884 = vmatprep.subr.bf16.mxu0 %v6813
    %6885 = vmatpush1.bf16.msra.mxu0 %v6812
    %6886 = vmatprep.subr.bf16.mxu0 %v6809
    %6887 = vmatpush1.bf16.msra.mxu0 %v6808
    %6888 = vmatprep.subr.bf16.mxu0 0
    %6889 = vmatpush2.bf16.msra.mxu0 0
    %6890 = vmatprep.subr.bf16.mxu0 0
    %6891 = vmatpush2.bf16.msra.mxu0 0
    %6892 = vmatprep.subr.bf16.mxu0 0
    %6893 = vmatpush2.bf16.msra.mxu0 0
    %6894 = vmatprep.subr.bf16.mxu0 0
    %6895 = vmatpush2.bf16.msra.mxu0 0
    %6896 = vmatprep.subr.bf16.mxu0 0
    %6897 = vmatpush2.bf16.msra.mxu0 0
    %6898 = vmatprep.subr.bf16.mxu0 0
    %6899 = vmatpush2.bf16.msra.mxu0 0
    %6900 = vmatprep.subr.bf16.mxu0 0
    %6901 = vmatpush2.bf16.msra.mxu0 0
    %6902 = vmatprep.subr.bf16.mxu0 0
    %6903 = vmatpush2.bf16.msra.mxu0 0
    %6904 = vmatprep.mubr.bf16.mxu0 0
    %6905 = vmatmul.mubr.bf16.gmra.mxu0 %v6710
    %v6906 = vpop.f32.mrf.mxu0
    %v6907 = vadd.f32 0.0, %v6906
    %v6908 = vpop.f32.mrf.mxu0
    %v6909 = vadd.f32 0.0, %v6908
    %v6910 = vpop.f32.mrf.mxu0
    %v6911 = vadd.f32 0.0, %v6910
    %v6912 = vpop.f32.mrf.mxu0
    %v6913 = vadd.f32 0.0, %v6912
    %6914 = vdwg.mxu0
    %6915 = vmatprep.subr.bf16.mxu0 %v6839
    %6916 = vmatpush1.bf16.msra.mxu0 %v6838
    %6917 = vmatprep.subr.bf16.mxu0 %v6835
    %6918 = vmatpush1.bf16.msra.mxu0 %v6834
    %6919 = vmatprep.subr.bf16.mxu0 %v6831
    %6920 = vmatpush1.bf16.msra.mxu0 %v6830
    %6921 = vmatprep.subr.bf16.mxu0 %v6827
    %6922 = vmatpush1.bf16.msra.mxu0 %v6826
    %6923 = vmatprep.subr.bf16.mxu0 %v6823
    %6924 = vmatpush1.bf16.msra.mxu0 %v6822
    %6925 = vmatprep.subr.bf16.mxu0 %v6819
    %6926 = vmatpush1.bf16.msra.mxu0 %v6818
    %6927 = vmatprep.subr.bf16.mxu0 %v6815
    %6928 = vmatpush1.bf16.msra.mxu0 %v6814
    %6929 = vmatprep.subr.bf16.mxu0 %v6811
    %6930 = vmatpush1.bf16.msra.mxu0 %v6810
    %6931 = vmatprep.subr.bf16.mxu0 0
    %6932 = vmatpush2.bf16.msra.mxu0 0
    %6933 = vmatprep.subr.bf16.mxu0 0
    %6934 = vmatpush2.bf16.msra.mxu0 0
    %6935 = vmatprep.subr.bf16.mxu0 0
    %6936 = vmatpush2.bf16.msra.mxu0 0
    %6937 = vmatprep.subr.bf16.mxu0 0
    %6938 = vmatpush2.bf16.msra.mxu0 0
    %6939 = vmatprep.subr.bf16.mxu0 0
    %6940 = vmatpush2.bf16.msra.mxu0 0
    %6941 = vmatprep.subr.bf16.mxu0 0
    %6942 = vmatpush2.bf16.msra.mxu0 0
    %6943 = vmatprep.subr.bf16.mxu0 0
    %6944 = vmatpush2.bf16.msra.mxu0 0
    %6945 = vmatprep.subr.bf16.mxu0 0
    %6946 = vmatpush2.bf16.msra.mxu0 0
    %6947 = vmatprep.mubr.bf16.mxu0 0
    %6948 = vmatmul.mubr.bf16.gmra.mxu0 %v6710
    %v6949 = vpop.f32.mrf.mxu0
    %v6950 = vadd.f32 0.0, %v6949
    %v6951 = vpop.f32.mrf.mxu0
    %v6952 = vadd.f32 0.0, %v6951
    %v6953 = vpop.f32.mrf.mxu0
    %v6954 = vadd.f32 0.0, %v6953
    %v6955 = vpop.f32.mrf.mxu0
    %v6956 = vadd.f32 0.0, %v6955
    %6957 = vdwg.mxu0
    %v6958 = vadd.f32 %v6664, %v6907
    %v6959 = vadd.f32 %v6665, %v6909
    %v6960 = vadd.f32 %v6666, %v6950
    %v6961 = vadd.f32 %v6667, %v6952
    %v6962 = vadd.f32 %v6668, %v6911
    %v6963 = vadd.f32 %v6669, %v6913
    %v6964 = vadd.f32 %v6670, %v6954
    %v6965 = vadd.f32 %v6671, %v6956
    %v6966 = vld [vmem:[#allocation6] sm:$0xff]
    %v6967 = vld [vmem:[#allocation6 + $0x8] sm:$0xff]
    %v6968 = vxor.u32 %v6958, 2147483648
    %v6969 = vxor.u32 %v6959, 2147483648
    %v6970 = vxor.u32 %v6960, 2147483648
    %v6971 = vxor.u32 %v6962, 2147483648
    %v6972 = vxor.u32 %v6963, 2147483648
    %v6973 = vxor.u32 %v6964, 2147483648
    %v6974 = vmul.f32 %v6968, 1.442695
    %v6975 = vpow.pop %v6974
    %v6976 = vmul.f32 %v6969, 1.442695
    %v6977 = vpow.pop %v6976
    %v6978 = vmul.f32 %v6970, 1.442695
    %v6979 = vpow.pop %v6978
    %v6980 = vmul.f32 %v6971, 1.442695
    %v6981 = vpow.pop %v6980
    %v6982 = vmul.f32 %v6972, 1.442695
    %v6983 = vpow.pop %v6982
    %v6984 = vmul.f32 %v6973, 1.442695
    %v6985 = vpow.pop %v6984
    %v6986 = vadd.f32 %v6975, 1.0
    %v6987 = vadd.f32 %v6977, 1.0
    %v6988 = vadd.f32 %v6979, 1.0
    %v6989 = vadd.f32 %v6981, 1.0
    %v6990 = vadd.f32 %v6983, 1.0
    %v6991 = vadd.f32 %v6985, 1.0
    %v6992 = vrcp.pop %v6986
    %v6993 = vmul.f32 1.0, %v6992
    %v6994 = vrcp.pop %v6987
    %v6995 = vmul.f32 1.0, %v6994
    %v6996 = vrcp.pop %v6988
    %v6997 = vmul.f32 1.0, %v6996
    %v6998 = vrcp.pop %v6989
    %v6999 = vmul.f32 1.0, %v6998
    %v7000 = vrcp.pop %v6990
    %v7001 = vmul.f32 1.0, %v7000
    %v7002 = vrcp.pop %v6991
    %v7003 = vmul.f32 1.0, %v7002
    %v7004 = vtanh.pop %v6961
    %v7005 = vtanh.pop %v6965
    %v7006 = vmul.f32 %v6995, %v6966
    %v7007 = vmul.f32 %v7001, %v6967
    %v7008 = vmul.f32 %v6993, %v7004
    %v7009 = vmul.f32 %v6999, %v7005
    %v7010 = vadd.f32 %v7006, %v7008
    %v7011 = vadd.f32 %v7007, %v7009
    %v7012 = vtanh.pop %v7010
    %v7013 = vtanh.pop %v7011
    %v7014 = vmul.f32 %v6997, %v7012
    %v7015 = vmul.f32 %v7003, %v7013
    %7016 = vst [vmem:[#allocation6] sm:$0xff] %v7010
    %7017 = vst [vmem:[#allocation6 + $0x8] sm:$0xff] %v7011
    %v7018 = vpack.c.bf16 %v7015, %v7014
    %v7020 = vunpack.c.l.b16 %v7018
    %v7021 = vunpack.c.h.b16 %v7018
    %v7022 = vpack.c.b16 %v7020, %v7020
    %v7023 = vpack.c.b16 %v7021, %v7021
    %7026 = vst [vmem:[#allocation5] sm:$0xf] %v7022
    %7027 = vst [vmem:[#allocation5 + $0x4] sm:$0xf] %v7023
    %v7028 = vld [vmem:[#allocation7] sm:$0xff]
    %v7029 = vld [vmem:[#allocation7 + $0x8] sm:$0xff]
    %v7030 = vmax.f32 %v7028, %v7014
    %v7031 = vmax.f32 %v7029, %v7015
    %7032 = vst [vmem:[#allocation7] sm:$0xff] %v7030
    %7033 = vst [vmem:[#allocation7 + $0x8] sm:$0xff] %v7031
    // Predicated region
    $region62: #{fake_news_detector_forward.1} parent=1 // pred_check
      %p7034 = pneg %p67
    $region63: #{fake_news_detector_forward.1} parent=1 // pred_check_branch
      %7036 = sbr.rel (%p7034) target = $region65
    $region64: #{fake_news_detector_forward.1} parent=1 // pred_region
      %v7037 = vld [vmem:[#allocation7] sm:$0xff]
      %v7038 = vld [vmem:[#allocation7 + $0x8] sm:$0xff]
      %v7039 = vpack.c.bf16 %v7038, %v7037
      %v7040 = vld [vmem:[#allocation8] sm:$0xf]
      %v7041 = vld [vmem:[#allocation8 + $0x4] sm:$0xf]
      %v7042 = vld [vmem:[#allocation8 + $0x8] sm:$0xf]
      %v7043 = vld [vmem:[#allocation8 + $0xc] sm:$0xf]
      %v7044 = vld [vmem:[#allocation8 + $0x10] sm:$0xf]
      %v7045 = vld [vmem:[#allocation8 + $0x14] sm:$0xf]
      %v7046 = vld [vmem:[#allocation8 + $0x18] sm:$0xf]
      %v7047 = vld [vmem:[#allocation8 + $0x1c] sm:$0xf]
      %v7048 = vld [vmem:[#allocation8 + $0x20] sm:$0xf]
      %v7049 = vld [vmem:[#allocation8 + $0x24] sm:$0xf]
      %v7050 = vld [vmem:[#allocation8 + $0x28] sm:$0xf]
      %v7051 = vld [vmem:[#allocation8 + $0x2c] sm:$0xf]
      %v7052 = vld [vmem:[#allocation8 + $0x30] sm:$0xf]
      %v7053 = vld [vmem:[#allocation8 + $0x34] sm:$0xf]
      %v7054 = vld [vmem:[#allocation8 + $0x38] sm:$0xf]
      %v7055 = vld [vmem:[#allocation8 + $0x3c] sm:$0xf]
      %v7056 = vld [vmem:[%s8] sm:$0x1]
      %v7058 = vlaneseq
      %v7059 = vshrl.u32 %v7058, 7
      %v7060 = vsub.s32 0, %v7059
      %v7061 = vrot.slane %v7056, %v7060
      %v7079 = vunpack.c.l.b16 %v7040
      %v7080 = vunpack.c.l.b16 %v7041
      %v7081 = vunpack.c.l.b16 %v7042
      %v7082 = vunpack.c.l.b16 %v7043
      %v7083 = vunpack.c.l.b16 %v7044
      %v7084 = vunpack.c.l.b16 %v7045
      %v7085 = vunpack.c.l.b16 %v7046
      %v7086 = vunpack.c.l.b16 %v7047
      %v7087 = vunpack.c.l.b16 %v7048
      %v7088 = vunpack.c.l.b16 %v7049
      %v7089 = vunpack.c.l.b16 %v7050
      %v7090 = vunpack.c.l.b16 %v7051
      %v7091 = vunpack.c.l.b16 %v7052
      %v7092 = vunpack.c.l.b16 %v7053
      %v7093 = vunpack.c.l.b16 %v7054
      %v7094 = vunpack.c.l.b16 %v7055
      %v7095 = vpack.c.b16 %v7080, %v7079
      %v7096 = vpack.c.b16 %v7082, %v7081
      %v7097 = vpack.c.b16 %v7084, %v7083
      %v7098 = vpack.c.b16 %v7086, %v7085
      %v7099 = vpack.c.b16 %v7088, %v7087
      %v7100 = vpack.c.b16 %v7090, %v7089
      %v7101 = vpack.c.b16 %v7092, %v7091
      %v7102 = vpack.c.b16 %v7094, %v7093
      %7111 = vmatprep.subr.bf16.mxu0 0
      %7112 = vmatpush1.bf16.msra.mxu0 %v7102
      %7113 = vmatprep.subr.bf16.mxu0 0
      %7114 = vmatpush1.bf16.msra.mxu0 %v7101
      %7115 = vmatprep.subr.bf16.mxu0 0
      %7116 = vmatpush1.bf16.msra.mxu0 %v7100
      %7117 = vmatprep.subr.bf16.mxu0 0
      %7118 = vmatpush1.bf16.msra.mxu0 %v7099
      %7119 = vmatprep.subr.bf16.mxu0 0
      %7120 = vmatpush1.bf16.msra.mxu0 %v7098
      %7121 = vmatprep.subr.bf16.mxu0 0
      %7122 = vmatpush1.bf16.msra.mxu0 %v7097
      %7123 = vmatprep.subr.bf16.mxu0 0
      %7124 = vmatpush1.bf16.msra.mxu0 %v7096
      %7125 = vmatprep.subr.bf16.mxu0 0
      %7126 = vmatpush1.bf16.msra.mxu0 %v7095
      %7127 = vmatprep.subr.bf16.mxu0 0
      %7128 = vmatpush2.bf16.msra.mxu0 0
      %7129 = vmatprep.subr.bf16.mxu0 0
      %7130 = vmatpush2.bf16.msra.mxu0 0
      %7131 = vmatprep.subr.bf16.mxu0 0
      %7132 = vmatpush2.bf16.msra.mxu0 0
      %7133 = vmatprep.subr.bf16.mxu0 0
      %7134 = vmatpush2.bf16.msra.mxu0 0
      %7135 = vmatprep.subr.bf16.mxu0 0
      %7136 = vmatpush2.bf16.msra.mxu0 0
      %7137 = vmatprep.subr.bf16.mxu0 0
      %7138 = vmatpush2.bf16.msra.mxu0 0
      %7139 = vmatprep.subr.bf16.mxu0 0
      %7140 = vmatpush2.bf16.msra.mxu0 0
      %7141 = vmatprep.subr.bf16.mxu0 0
      %7142 = vmatpush2.bf16.msra.mxu0 0
      %7143 = vmatprep.mubr.bf16.mxu0 0
      %7144 = vmatmul.mubr.bf16.gmra.mxu0 %v7039
      %v7145 = vpop.f32.mrf.mxu0
      %v7146 = vadd.f32 %v7061, %v7145
      %v7147 = vpop.f32.mrf.mxu0
      %v7148 = vpop.f32.mrf.mxu0
      %v7149 = vadd.f32 %v7061, %v7148
      %v7150 = vpop.f32.mrf.mxu0
      %7151 = vdwg.mxu0
      %v7152 = vmax.f32 %v7146, 0.0
      %v7153 = vmax.f32 %v7149, 0.0
      %v7154 = vpack.c.bf16 %v7153, %v7152
      %v7155 = vld [vmem:[#allocation10] sm:$0xf]
      %v7156 = vld [vmem:[#allocation10 + $0x4] sm:$0xf]
      %v7157 = vld [vmem:[#allocation10 + $0x8] sm:$0xf]
      %v7158 = vld [vmem:[#allocation10 + $0xc] sm:$0xf]
      %v7159 = vld [vmem:[#allocation10 + $0x10] sm:$0xf]
      %v7160 = vld [vmem:[#allocation10 + $0x14] sm:$0xf]
      %v7161 = vld [vmem:[#allocation10 + $0x18] sm:$0xf]
      %v7162 = vld [vmem:[#allocation10 + $0x1c] sm:$0xf]
      %v7163 = vld [vmem:[#allocation10 + $0x20] sm:$0xf]
      %v7164 = vld [vmem:[#allocation10 + $0x24] sm:$0xf]
      %v7165 = vld [vmem:[#allocation10 + $0x28] sm:$0xf]
      %v7166 = vld [vmem:[#allocation10 + $0x2c] sm:$0xf]
      %v7167 = vld [vmem:[#allocation10 + $0x30] sm:$0xf]
      %v7168 = vld [vmem:[#allocation10 + $0x34] sm:$0xf]
      %v7169 = vld [vmem:[#allocation10 + $0x38] sm:$0xf]
      %v7170 = vld [vmem:[#allocation10 + $0x3c] sm:$0xf]
      %v7171 = vld [vmem:[%s10] sm:$0x1]
      %v7173 = vlaneseq
      %v7174 = vshrl.u32 %v7173, 7
      %v7175 = vsub.s32 0, %v7174
      %v7176 = vrot.slane %v7171, %v7175
      %v7194 = vunpack.c.l.b16 %v7155
      %v7195 = vunpack.c.l.b16 %v7156
      %v7196 = vunpack.c.l.b16 %v7157
      %v7197 = vunpack.c.l.b16 %v7158
      %v7198 = vunpack.c.l.b16 %v7159
      %v7199 = vunpack.c.l.b16 %v7160
      %v7200 = vunpack.c.l.b16 %v7161
      %v7201 = vunpack.c.l.b16 %v7162
      %v7202 = vunpack.c.l.b16 %v7163
      %v7203 = vunpack.c.l.b16 %v7164
      %v7204 = vunpack.c.l.b16 %v7165
      %v7205 = vunpack.c.l.b16 %v7166
      %v7206 = vunpack.c.l.b16 %v7167
      %v7207 = vunpack.c.l.b16 %v7168
      %v7208 = vunpack.c.l.b16 %v7169
      %v7209 = vunpack.c.l.b16 %v7170
      %v7210 = vpack.c.b16 %v7195, %v7194
      %v7211 = vpack.c.b16 %v7197, %v7196
      %v7212 = vpack.c.b16 %v7199, %v7198
      %v7213 = vpack.c.b16 %v7201, %v7200
      %v7214 = vpack.c.b16 %v7203, %v7202
      %v7215 = vpack.c.b16 %v7205, %v7204
      %v7216 = vpack.c.b16 %v7207, %v7206
      %v7217 = vpack.c.b16 %v7209, %v7208
      %7226 = vmatprep.subr.bf16.mxu0 0
      %7227 = vmatpush1.bf16.msra.mxu0 %v7217
      %7228 = vmatprep.subr.bf16.mxu0 0
      %7229 = vmatpush1.bf16.msra.mxu0 %v7216
      %7230 = vmatprep.subr.bf16.mxu0 0
      %7231 = vmatpush1.bf16.msra.mxu0 %v7215
      %7232 = vmatprep.subr.bf16.mxu0 0
      %7233 = vmatpush1.bf16.msra.mxu0 %v7214
      %7234 = vmatprep.subr.bf16.mxu0 0
      %7235 = vmatpush1.bf16.msra.mxu0 %v7213
      %7236 = vmatprep.subr.bf16.mxu0 0
      %7237 = vmatpush1.bf16.msra.mxu0 %v7212
      %7238 = vmatprep.subr.bf16.mxu0 0
      %7239 = vmatpush1.bf16.msra.mxu0 %v7211
      %7240 = vmatprep.subr.bf16.mxu0 0
      %7241 = vmatpush1.bf16.msra.mxu0 %v7210
      %7242 = vmatprep.subr.bf16.mxu0 0
      %7243 = vmatpush2.bf16.msra.mxu0 0
      %7244 = vmatprep.subr.bf16.mxu0 0
      %7245 = vmatpush2.bf16.msra.mxu0 0
      %7246 = vmatprep.subr.bf16.mxu0 0
      %7247 = vmatpush2.bf16.msra.mxu0 0
      %7248 = vmatprep.subr.bf16.mxu0 0
      %7249 = vmatpush2.bf16.msra.mxu0 0
      %7250 = vmatprep.subr.bf16.mxu0 0
      %7251 = vmatpush2.bf16.msra.mxu0 0
      %7252 = vmatprep.subr.bf16.mxu0 0
      %7253 = vmatpush2.bf16.msra.mxu0 0
      %7254 = vmatprep.subr.bf16.mxu0 0
      %7255 = vmatpush2.bf16.msra.mxu0 0
      %7256 = vmatprep.subr.bf16.mxu0 0
      %7257 = vmatpush2.bf16.msra.mxu0 0
      %7258 = vmatprep.mubr.bf16.mxu0 0
      %7259 = vmatmul.mubr.bf16.gmra.mxu0 %v7154
      %v7260 = vpop.f32.mrf.mxu0
      %v7261 = vadd.f32 %v7176, %v7260
      %v7262 = vpop.f32.mrf.mxu0
      %v7263 = vpop.f32.mrf.mxu0
      %v7264 = vadd.f32 %v7176, %v7263
      %v7265 = vpop.f32.mrf.mxu0
      %7266 = vdwg.mxu0
      %v7267 = vxor.u32 %v7261, 2147483648
      %v7268 = vxor.u32 %v7264, 2147483648
      %v7269 = vmul.f32 %v7267, 1.442695
      %v7270 = vpow.pop %v7269
      %v7271 = vmul.f32 %v7268, 1.442695
      %v7272 = vpow.pop %v7271
      %v7273 = vadd.f32 %v7270, 1.0
      %v7274 = vadd.f32 %v7272, 1.0
      %v7275 = vrcp.pop %v7273
      %v7276 = vmul.f32 1.0, %v7275
      %v7277 = vrcp.pop %v7274
      %v7278 = vmul.f32 1.0, %v7277
      %7279 = vst [vmem:[%s11] sm:$0xff] %v7276
      %7280 = vst [vmem:[%s11 + $0x8] sm:$0xff] %v7278
    $region65: #{fake_news_detector_forward.1} parent=1 // pred_fallthru
      _
    // Predicated region
    $region66: #{fake_news_detector_forward.1} parent=1 // pred_check
      _
    $region67: #{fake_news_detector_forward.1} parent=1 // pred_check_branch
      %7282 = sbr.rel (0) target = $region69
    $region68: #{fake_news_detector_forward.1} parent=1 // pred_region
      _
    $region69: #{fake_news_detector_forward.1} parent=1 // pred_fallthru
      _
    // Predicated region
    $region70: #{fake_news_detector_forward.1} parent=1 // pred_check
      _
    $region71: #{fake_news_detector_forward.1} parent=1 // pred_check_branch
      %7284 = sbr.rel (0) target = $region73
    $region72: #{fake_news_detector_forward.1} parent=1 // pred_region
      _
    $region73: #{fake_news_detector_forward.1} parent=1 // pred_fallthru
      _
    %7285 = vsyncpa [#allocation9], 1
    %7286 = vsyncpa [#allocation11], 1

</llo_original>
